<compile_context>
chip_gen: v7x
topology: tpu7x:2x2x1
jax: 0.10.0
libtpu: 0.0.40
codegen_flags: <defaults>
</compile_context>

<pallas_src>
import functools

import jax
import jax.numpy as jnp
from jax.experimental import pallas as pl
from jax.experimental.pallas import tpu as pltpu


OUT_PAD = 8          # lane padding for the final (..., 1) sigmoid output
AGG_VPU_MAX_N = 32   # use the VPU aggregation path for N <= this


# ----------------------------------------------------------------------------
# Fused kernel: full GNN forward for one block of Bblk batch elements.
# ----------------------------------------------------------------------------
def _gnn_fused_kernel(*refs, num_w_groups, mlp_meta, msteps, inv_n, n, bblk,
                      use_vpu_agg):
    """refs = (x_ref, a_ref, *w_stack_refs, b_pack_ref, o_ref).

    mlp_meta: per MLP (encoder, [node, edge, node2]*msteps, output) a tuple of
              per-layer (weight_group, slot, out_width, bias_row) constants.
    """
    x_ref, a_ref = refs[0], refs[1]
    w_refs = refs[2:2 + num_w_groups]
    b_ref = refs[2 + num_w_groups]
    o_ref = refs[3 + num_w_groups]

    def run_mlp(h, meta, final_act):
        nl = len(meta)
        for i, (gi, si, out_w, li) in enumerate(meta):
            w = w_refs[gi][si]                     # (in, out_w) bf16, static index
            b = b_ref[li, :out_w]                  # (out_w,) f32
            acc = jnp.dot(h.astype(w.dtype), w,
                          preferred_element_type=jnp.float32) + b[None, :]
            if i < nl - 1 or final_act == "relu":
                h = jax.nn.relu(acc)
            else:                                  # sigmoid on the last output layer
                h = jax.nn.sigmoid(acc)
            # TODO(synk): nn.Dropout(0.35) treated as identity (eval mode).
        return h

    rows = bblk * n
    # Encoder: flatten (Bblk, N, F) -> (Bblk*N, F) to grow the MXU M dimension.
    h = x_ref[...].reshape(rows, -1)               # bf16
    h = run_mlp(h, mlp_meta[0], "relu")            # f32 activations

    if msteps > 0:
        if use_vpu_agg:
            a_f32 = a_ref[...].astype(jnp.float32)     # exact: adjacency is 0/1
        else:
            a_bf = a_ref[...]                          # bf16 MXU operand

    mi = 1
    for _ in range(msteps):
        h_node = run_mlp(h, mlp_meta[mi], "relu"); mi += 1
        h_edge = run_mlp(h, mlp_meta[mi], "relu"); mi += 1
        he = h_edge.reshape(bblk, n, -1)               # (Bblk, N, F) f32

        if use_vpu_agg:
            # Small N: VPU broadcast multiply-accumulate (keeps the MXU free
            # and avoids K=M=N tiny per-batch systolic passes).
            f = he.shape[2]
            agg = jnp.zeros((bblk, n, f), jnp.float32)
            for m_i in range(n):
                agg = agg + a_f32[:, :, m_i:m_i + 1] * he[:, m_i:m_i + 1, :]
        else:
            # Large N: native-rate bf16 MXU einsum with f32 accumulation.
            agg = jnp.einsum("bnm,bmf->bnf", a_bf, he.astype(a_bf.dtype),
                             preferred_element_type=jnp.float32)

        # (x_node + A @ x_edge) / node_size via compile-time 1/node_size.
        h = (h_node + agg.reshape(rows, -1)) * jnp.float32(inv_n)
        h = run_mlp(h, mlp_meta[mi], "relu"); mi += 1

    out = run_mlp(h, mlp_meta[mi], "sigmoid")          # (rows, OUT_PAD) f32
    # Zero the padded output lanes (so they don't hold sigmoid(0)=0.5).
    lane = jax.lax.broadcasted_iota(jnp.int32, out.shape, 1)
    out = jnp.where(lane < 1, out, 0.0)
    o_ref[...] = out.reshape(bblk, n, OUT_PAD).astype(o_ref.dtype)


# ----------------------------------------------------------------------------
# Parameter construction (deterministic, mirrors layer_generator shapes)
# ----------------------------------------------------------------------------
def init_mlp_params(key, in_f, out_f, hidden=(128, 256, 128)):
    dims = [in_f] + list(hidden) + [out_f]
    params = []
    for i in range(len(dims) - 1):
        key, kw, kb = jax.random.split(key, 3)
        w = jax.random.normal(kw, (dims[i], dims[i + 1]), jnp.float32) / jnp.sqrt(
            jnp.float32(dims[i]))
        b = 0.01 * jax.random.normal(kb, (1, dims[i + 1]), jnp.float32)
        params.append((w, b))
    return key, params


def init_gnn_params(key, n_node_feature, n_encoding_feature, n_mid_feature,
                    message_passing_steps=3, hidden=(128, 256, 128)):
    params = {}
    key, params["encoder"] = init_mlp_params(key, n_node_feature,
                                             n_encoding_feature, hidden)
    params["node"], params["edge"], params["node2"] = [], [], []
    for _ in range(message_passing_steps):
        key, p = init_mlp_params(key, n_encoding_feature, n_mid_feature, hidden)
        params["node"].append(p)
        key, p = init_mlp_params(key, n_encoding_feature, n_mid_feature, hidden)
        params["edge"].append(p)
        key, p = init_mlp_params(key, n_mid_feature, n_encoding_feature, hidden)
        params["node2"].append(p)
    key, params["output"] = init_mlp_params(key, n_encoding_feature, 1, hidden)
    return params


def prepare_params(params, msteps, weight_dtype=jnp.bfloat16, out_pad=OUT_PAD):
    """Group same-shape weights into stacked bf16 3-D arrays and pack all
    biases into one lane-dense f32 array; the 1-wide output layer is padded
    to `out_pad` columns (zero-padded, sliced back in the wrapper)."""
    mlps = [params["encoder"]]
    for s in range(msteps):
        mlps += [params["node"][s], params["edge"][s], params["node2"][s]]
    mlps.append(params["output"])

    layers = []           # flat list of (w f32, b f32 1-D)
    mlp_layer_ids = []    # per-MLP list of global layer indices
    for mi, m in enumerate(mlps):
        ids = []
        for li, (w, b) in enumerate(m):
            b = jnp.asarray(b).reshape(-1)
            if mi == len(mlps) - 1 and li == len(m) - 1:
                pad = out_pad - w.shape[1]
                w = jnp.pad(w, ((0, 0), (0, pad)))
                b = jnp.pad(b, ((0, pad),))
            ids.append(len(layers))
            layers.append((w, b))
        mlp_layer_ids.append(ids)

    # Group weights by exact shape -> a few stacked (g, in, out) bf16 arrays.
    group_idx, group_ws, slot_of = {}, [], []
    for (w, _) in layers:
        key = tuple(int(s) for s in w.shape)
        if key not in group_idx:
            group_idx[key] = len(group_ws)
            group_ws.append([])
        gi = group_idx[key]
        slot_of.append((gi, len(group_ws[gi])))
        group_ws[gi].append(w)
    w_stacks = [jnp.stack([w.astype(weight_dtype) for w in g]) for g in group_ws]

    # Pack all biases into one (n_layers, bcols) f32 array, bcols lane-aligned.
    max_out = max(int(w.shape[1]) for (w, _) in layers)
    bcols = ((max_out + 127) // 128) * 128
    b_pack = jnp.stack([jnp.pad(b.astype(jnp.float32), (0, bcols - b.shape[0]))
                        for (_, b) in layers])

    mlp_meta = tuple(
        tuple((slot_of[i][0], slot_of[i][1], int(layers[i][0].shape[1]), i)
              for i in ids)
        for ids in mlp_layer_ids)

    weight_bytes = sum(int(w.size) * w.dtype.itemsize for w in w_stacks)
    weight_bytes += int(b_pack.size) * 4
    return w_stacks, b_pack, mlp_meta, weight_bytes


# ----------------------------------------------------------------------------
# Hardware query + block-size / VMEM budgeting
# ----------------------------------------------------------------------------
def _tpu_info():
    """(num_tensorcores, vmem_capacity_bytes) with conservative fallbacks."""
    num_cores, vmem_cap = 1, None
    try:
        info = pltpu.get_tpu_info()
        for name in ("num_tensorcores", "tensorcore_count", "num_cores",
                     "cores_per_chip"):
            v = getattr(info, name, None)
            if isinstance(v, int) and 0 < v <= 16:
                num_cores = v
                break
        v = getattr(info, "vmem_capacity_bytes", None)
        if isinstance(v, int) and v > 0:
            vmem_cap = v
    except Exception:
        pass
    try:
        kind = jax.devices()[0].device_kind.lower()
    except Exception:
        kind = ""
    if num_cores == 1 and "v7" in kind:
        num_cores = 2                      # v7x: 2 TensorCores per chip
    if vmem_cap is None:
        vmem_cap = (64 << 20) if "v7" in kind else (128 << 20)
    return num_cores, vmem_cap


def _vmem_estimate_bytes(bblk, n_pad, f_in, act_w, weight_bytes, use_vpu_agg):
    rows = bblk * n_pad
    # double-buffered per-grid-step IO blocks (bf16 X/A in, f32 compact out)
    io = 2 * (rows * f_in * 2 + bblk * n_pad * n_pad * 2 + rows * OUT_PAD * 4)
    # rough count of live f32 activation slabs (h, h_node, h_edge, agg, acc)
    acts = 6 * rows * act_w * 4
    if use_vpu_agg:
        acts += bblk * n_pad * n_pad * 4   # f32 copy of A for the VPU aggregation
    return 2 * weight_bytes + io + acts    # weights double-buffered by default


def _pick_bblk(B, n_pad, num_cores, fits, target_rows=256, max_rows=512):
    """Batch-block size: aim for bblk*N in the 128-512 MXU-row range, subject
    to the VMEM budget.  Only multi-TC chips keep >= num_cores (evenly split)
    grid steps; single-TC chips may use grid=(1,)."""
    divisors = [d for d in range(1, B + 1) if B % d == 0]
    feasible = [d for d in divisors if d * n_pad <= max_rows and fits(d)]
    if not feasible:
        feasible = [1]

    def choose(cands):
        pick = cands[0]
        for d in cands:        # ascending: first divisor reaching the target
            pick = d
            if d * n_pad >= target_rows:
                break
        return pick

    bblk = choose(feasible)
    if num_cores > 1:
        multi = [d for d in feasible
                 if (B // d) >= num_cores and (B // d) % num_cores == 0]
        if multi:
            bblk = choose(multi)
    return bblk


# ----------------------------------------------------------------------------
# Full forward pass: one fused pallas_call.
# ----------------------------------------------------------------------------
def gnn_clf_forward(X, A, params, message_passing_steps=3,
                    weight_dtype=jnp.bfloat16):
    # X: (B, N, n_node_feature), A: (B, N, N)  ->  (B, N, 1)
    B, N, F_in = X.shape
    n_pad = -(-N // 8) * 8                      # sublane-align the node dim

    w_stacks, b_pack, mlp_meta, weight_bytes = prepare_params(
        params, message_passing_steps, weight_dtype, OUT_PAD)

    if n_pad != N:
        # Zero-padded nodes: adjacency rows/cols are zero so they never affect
        # real nodes; padded outputs are sliced off below.
        X = jnp.pad(X, ((0, 0), (0, n_pad - N), (0, 0)))
        A = jnp.pad(A, ((0, 0), (0, n_pad - N), (0, n_pad - N)))
    # bf16 inputs: halves X/A HBM DMA + VMEM (exact for the 0/1 adjacency).
    Xc = X.astype(jnp.bfloat16)
    Ac = A.astype(jnp.bfloat16)

    use_vpu_agg = n_pad <= AGG_VPU_MAX_N
    act_w = int(b_pack.shape[1])
    num_cores, vmem_cap = _tpu_info()
    budget = int(0.70 * vmem_cap)

    def fits(bb):
        return _vmem_estimate_bytes(bb, n_pad, F_in, act_w, weight_bytes,
                                    use_vpu_agg) <= budget

    bblk = _pick_bblk(B, n_pad, num_cores, fits)
    grid = (B // bblk,)
    inv_n = 1.0 / float(N)                      # original node count

    est = _vmem_estimate_bytes(bblk, n_pad, F_in, act_w, weight_bytes,
                               use_vpu_agg)
    vmem_limit = int(min(int(0.9 * vmem_cap), max(32 << 20, int(1.5 * est))))

    in_specs = [
        pl.BlockSpec((bblk, n_pad, F_in), lambda b: (b, 0, 0)),
        pl.BlockSpec((bblk, n_pad, n_pad), lambda b: (b, 0, 0)),
    ]
    # Stacked weights + packed biases: full-block, constant index_map -> DMA'd
    # once and VMEM-resident for the whole kernel.
    for arr in w_stacks:
        in_specs.append(pl.BlockSpec(arr.shape, lambda b, _nd=arr.ndim: (0,) * _nd))
    in_specs.append(pl.BlockSpec(b_pack.shape, lambda b: (0, 0)))

    kernel = functools.partial(
        _gnn_fused_kernel,
        num_w_groups=len(w_stacks),
        mlp_meta=mlp_meta,
        msteps=message_passing_steps,
        inv_n=inv_n,
        n=n_pad,
        bblk=bblk,
        use_vpu_agg=use_vpu_agg,
    )

    out_padded = pl.pallas_call(
        kernel,
        out_shape=jax.ShapeDtypeStruct((B, n_pad, OUT_PAD), jnp.float32),
        grid=grid,
        in_specs=in_specs,
        out_specs=pl.BlockSpec((bblk, n_pad, OUT_PAD), lambda b: (b, 0, 0)),
        compiler_params=pltpu.CompilerParams(
            dimension_semantics=("parallel",),
            vmem_limit_bytes=vmem_limit,
        ),
    )(Xc, Ac, *w_stacks, b_pack)

    return out_padded[:, :N, :1]


# ----------------------------------------------------------------------------
# Pure-JAX reference (same bf16-weight / f32-accumulation numerics)
# ----------------------------------------------------------------------------
def gnn_clf_reference(X, A, params, msteps, weight_dtype=jnp.bfloat16):
    def mlp(h, layers, final_act):
        for i, (w, b) in enumerate(layers):
            acc = jnp.dot(h.astype(weight_dtype), w.astype(weight_dtype),
                          preferred_element_type=jnp.float32) + b
            if i < len(layers) - 1 or final_act == "relu":
                h = jax.nn.relu(acc)
            else:
                h = jax.nn.sigmoid(acc)
        return h

    B, N, _ = X.shape
    outs = []
    for bi in range(B):
        h = mlp(X[bi], params["encoder"], "relu")
        for s in range(msteps):
            hn = mlp(h, params["node"][s], "relu")
            he = mlp(h, params["edge"][s], "relu")
            h = (hn + A[bi] @ he) / N
            h = mlp(h, params["node2"][s], "relu")
        outs.append(mlp(h, params["output"], "sigmoid"))
    return jnp.stack(outs)


if __name__ == "__main__":
    # small but representative shapes
    batch = 2
    node_size = 8
    n_node_feature = 16
    n_encoding_feature = 32
    n_mid_feature = 32
    message_passing_steps = 3
    hidden = (128, 256, 128)  # default hidden layer sizes from the module

    key = jax.random.PRNGKey(0)
    key, kx, ka = jax.random.split(key, 3)
    X = jax.random.normal(kx, (batch, node_size, n_node_feature), jnp.float32)
    A = (jax.random.uniform(ka, (batch, node_size, node_size), jnp.float32)
         > 0.5).astype(jnp.float32)

    params = init_gnn_params(key, n_node_feature, n_encoding_feature,
                             n_mid_feature, message_passing_steps, hidden)

    out = gnn_clf_forward(X, A, params, message_passing_steps)
    out = jax.block_until_ready(out)

    assert out.shape == (batch, node_size, 1), out.shape
    assert bool(jnp.all(jnp.isfinite(out)))
    assert bool(jnp.all((out >= 0.0) & (out <= 1.0)))  # sigmoid output

    # correctness vs matched-precision JAX reference
    ref = gnn_clf_reference(X, A, params, message_passing_steps)
    max_err = float(jnp.max(jnp.abs(out - ref)))
    assert max_err < 3e-2, f"max abs err {max_err}"

    print("KERNEL_OK")
</pallas_src>

<mosaic_0001>
module attributes {stable_mosaic.version = 11 : i64} {
  func.func @_gnn_fused_kernel(%arg0: i32, %arg1: memref<2x8x16xbf16, #tpu.memory_space<vmem>>, %arg2: memref<2x8x8xbf16, #tpu.memory_space<vmem>>, %arg3: memref<1x16x128xbf16, #tpu.memory_space<vmem>>, %arg4: memref<11x128x256xbf16, #tpu.memory_space<vmem>>, %arg5: memref<11x256x128xbf16, #tpu.memory_space<vmem>>, %arg6: memref<10x128x32xbf16, #tpu.memory_space<vmem>>, %arg7: memref<10x32x128xbf16, #tpu.memory_space<vmem>>, %arg8: memref<1x128x8xbf16, #tpu.memory_space<vmem>>, %arg9: memref<44x256xf32, #tpu.memory_space<vmem>>, %arg10: memref<2x8x8xf32, #tpu.memory_space<vmem>>) attributes {dimension_semantics = [#tpu.dimension_semantics<parallel>], iteration_bounds = array<i64: 1>, scalar_prefetch = 0 : i64, scratch_operands = 0 : i64, tpu.core_type = #tpu.core_type<tc>, window_params = [{transform_indices = @transform_0, window_bounds = array<i64: 2, 8, 16>}, {transform_indices = @transform_1, window_bounds = array<i64: 2, 8, 8>}, {pipeline_mode = #tpu.pipeline_mode<synchronous>, transform_indices = @transform_2, window_bounds = array<i64: 1, 16, 128>}, {pipeline_mode = #tpu.pipeline_mode<synchronous>, transform_indices = @transform_3, window_bounds = array<i64: 11, 128, 256>}, {pipeline_mode = #tpu.pipeline_mode<synchronous>, transform_indices = @transform_4, window_bounds = array<i64: 11, 256, 128>}, {pipeline_mode = #tpu.pipeline_mode<synchronous>, transform_indices = @transform_5, window_bounds = array<i64: 10, 128, 32>}, {pipeline_mode = #tpu.pipeline_mode<synchronous>, transform_indices = @transform_6, window_bounds = array<i64: 10, 32, 128>}, {pipeline_mode = #tpu.pipeline_mode<synchronous>, transform_indices = @transform_7, window_bounds = array<i64: 1, 128, 8>}, {pipeline_mode = #tpu.pipeline_mode<synchronous>, transform_indices = @transform_8, window_bounds = array<i64: 44, 256>}, {transform_indices = @transform_9, window_bounds = array<i64: 2, 8, 8>}]} {
    %c0 = arith.constant 0 : index
    %c0_0 = arith.constant 0 : index
    %c0_1 = arith.constant 0 : index
    %0 = vector.load %arg1[%c0, %c0_0, %c0_1] : memref<2x8x16xbf16, #tpu.memory_space<vmem>>, vector<2x8x16xbf16>
    %1 = vector.shape_cast %0 : vector<2x8x16xbf16> to vector<16x16xbf16>
    %c0_2 = arith.constant 0 : index
    %c0_3 = arith.constant 0 : index
    %c0_4 = arith.constant 0 : index
    %2 = vector.load %arg3[%c0_2, %c0_3, %c0_4] : memref<1x16x128xbf16, #tpu.memory_space<vmem>>, vector<1x16x128xbf16>
    %3 = vector.shape_cast %2 : vector<1x16x128xbf16> to vector<16x128xbf16>
    %c0_5 = arith.constant 0 : index
    %c0_6 = arith.constant 0 : index
    %4 = vector.load %arg9[%c0_5, %c0_6] : memref<44x256xf32, #tpu.memory_space<vmem>>, vector<1x128xf32>
    %5 = vector.shape_cast %4 : vector<1x128xf32> to vector<128xf32>
    %cst = arith.constant dense<0.000000e+00> : vector<16x128xf32>
    %6 = tpu.matmul %1, %3, %cst {dimension_numbers = #tpu.dot_dimension_numbers<[1], [0], [0], [1], [0, 0, 1, 1], [], []>} : vector<16x16xbf16>, vector<16x128xbf16>, vector<16x128xf32> -> vector<16x128xf32>
    %7 = vector.shape_cast %5 : vector<128xf32> to vector<1x128xf32>
    %8 = vector.broadcast %7 : vector<1x128xf32> to vector<16x128xf32>
    %9 = arith.addf %6, %8 : vector<16x128xf32>
    %cst_7 = arith.constant 0.000000e+00 : f32
    %10 = vector.broadcast %cst_7 : f32 to vector<16x128xf32>
    %11 = arith.maximumf %9, %10 : vector<16x128xf32>
    %c0_8 = arith.constant 0 : index
    %c0_9 = arith.constant 0 : index
    %c0_10 = arith.constant 0 : index
    %12 = vector.load %arg4[%c0_8, %c0_9, %c0_10] : memref<11x128x256xbf16, #tpu.memory_space<vmem>>, vector<1x128x256xbf16>
    %13 = vector.shape_cast %12 : vector<1x128x256xbf16> to vector<128x256xbf16>
    %c1 = arith.constant 1 : index
    %c0_11 = arith.constant 0 : index
    %14 = vector.load %arg9[%c1, %c0_11] : memref<44x256xf32, #tpu.memory_space<vmem>>, vector<1x256xf32>
    %15 = vector.shape_cast %14 : vector<1x256xf32> to vector<256xf32>
    %16 = arith.truncf %11 : vector<16x128xf32> to vector<16x128xbf16>
    %cst_12 = arith.constant dense<0.000000e+00> : vector<16x256xf32>
    %17 = tpu.matmul %16, %13, %cst_12 {dimension_numbers = #tpu.dot_dimension_numbers<[1], [0], [0], [1], [0, 0, 1, 1], [], []>} : vector<16x128xbf16>, vector<128x256xbf16>, vector<16x256xf32> -> vector<16x256xf32>
    %18 = vector.shape_cast %15 : vector<256xf32> to vector<1x256xf32>
    %19 = vector.broadcast %18 : vector<1x256xf32> to vector<16x256xf32>
    %20 = arith.addf %17, %19 : vector<16x256xf32>
    %cst_13 = arith.constant 0.000000e+00 : f32
    %21 = vector.broadcast %cst_13 : f32 to vector<16x256xf32>
    %22 = arith.maximumf %20, %21 : vector<16x256xf32>
    %c0_14 = arith.constant 0 : index
    %c0_15 = arith.constant 0 : index
    %c0_16 = arith.constant 0 : index
    %23 = vector.load %arg5[%c0_14, %c0_15, %c0_16] : memref<11x256x128xbf16, #tpu.memory_space<vmem>>, vector<1x256x128xbf16>
    %24 = vector.shape_cast %23 : vector<1x256x128xbf16> to vector<256x128xbf16>
    %c2 = arith.constant 2 : index
    %c0_17 = arith.constant 0 : index
    %25 = vector.load %arg9[%c2, %c0_17] : memref<44x256xf32, #tpu.memory_space<vmem>>, vector<1x128xf32>
    %26 = vector.shape_cast %25 : vector<1x128xf32> to vector<128xf32>
    %27 = arith.truncf %22 : vector<16x256xf32> to vector<16x256xbf16>
    %cst_18 = arith.constant dense<0.000000e+00> : vector<16x128xf32>
    %28 = tpu.matmul %27, %24, %cst_18 {dimension_numbers = #tpu.dot_dimension_numbers<[1], [0], [0], [1], [0, 0, 1, 1], [], []>} : vector<16x256xbf16>, vector<256x128xbf16>, vector<16x128xf32> -> vector<16x128xf32>
    %29 = vector.shape_cast %26 : vector<128xf32> to vector<1x128xf32>
    %30 = vector.broadcast %29 : vector<1x128xf32> to vector<16x128xf32>
    %31 = arith.addf %28, %30 : vector<16x128xf32>
    %cst_19 = arith.constant 0.000000e+00 : f32
    %32 = vector.broadcast %cst_19 : f32 to vector<16x128xf32>
    %33 = arith.maximumf %31, %32 : vector<16x128xf32>
    %c0_20 = arith.constant 0 : index
    %c0_21 = arith.constant 0 : index
    %c0_22 = arith.constant 0 : index
    %34 = vector.load %arg6[%c0_20, %c0_21, %c0_22] : memref<10x128x32xbf16, #tpu.memory_space<vmem>>, vector<1x128x32xbf16>
    %35 = vector.shape_cast %34 : vector<1x128x32xbf16> to vector<128x32xbf16>
    %c3 = arith.constant 3 : index
    %c0_23 = arith.constant 0 : index
    %36 = vector.load %arg9[%c3, %c0_23] : memref<44x256xf32, #tpu.memory_space<vmem>>, vector<1x32xf32>
    %37 = vector.shape_cast %36 : vector<1x32xf32> to vector<32xf32>
    %38 = arith.truncf %33 : vector<16x128xf32> to vector<16x128xbf16>
    %cst_24 = arith.constant dense<0.000000e+00> : vector<16x32xf32>
    %39 = tpu.matmul %38, %35, %cst_24 {dimension_numbers = #tpu.dot_dimension_numbers<[1], [0], [0], [1], [0, 0, 1, 1], [], []>} : vector<16x128xbf16>, vector<128x32xbf16>, vector<16x32xf32> -> vector<16x32xf32>
    %40 = vector.shape_cast %37 : vector<32xf32> to vector<1x32xf32>
    %41 = vector.broadcast %40 : vector<1x32xf32> to vector<16x32xf32>
    %42 = arith.addf %39, %41 : vector<16x32xf32>
    %cst_25 = arith.constant 0.000000e+00 : f32
    %43 = vector.broadcast %cst_25 : f32 to vector<16x32xf32>
    %44 = arith.maximumf %42, %43 : vector<16x32xf32>
    %c0_26 = arith.constant 0 : index
    %c0_27 = arith.constant 0 : index
    %c0_28 = arith.constant 0 : index
    %45 = vector.load %arg2[%c0_26, %c0_27, %c0_28] : memref<2x8x8xbf16, #tpu.memory_space<vmem>>, vector<2x8x8xbf16>
    %46 = arith.extf %45 : vector<2x8x8xbf16> to vector<2x8x8xf32>
    %c0_29 = arith.constant 0 : index
    %c0_30 = arith.constant 0 : index
    %c0_31 = arith.constant 0 : index
    %47 = vector.load %arg7[%c0_29, %c0_30, %c0_31] : memref<10x32x128xbf16, #tpu.memory_space<vmem>>, vector<1x32x128xbf16>
    %48 = vector.shape_cast %47 : vector<1x32x128xbf16> to vector<32x128xbf16>
    %c4 = arith.constant 4 : index
    %c0_32 = arith.constant 0 : index
    %49 = vector.load %arg9[%c4, %c0_32] : memref<44x256xf32, #tpu.memory_space<vmem>>, vector<1x128xf32>
    %50 = vector.shape_cast %49 : vector<1x128xf32> to vector<128xf32>
    %51 = arith.truncf %44 : vector<16x32xf32> to vector<16x32xbf16>
    %cst_33 = arith.constant dense<0.000000e+00> : vector<16x128xf32>
    %52 = tpu.matmul %51, %48, %cst_33 {dimension_numbers = #tpu.dot_dimension_numbers<[1], [0], [0], [1], [0, 0, 1, 1], [], []>} : vector<16x32xbf16>, vector<32x128xbf16>, vector<16x128xf32> -> vector<16x128xf32>
    %53 = vector.shape_cast %50 : vector<128xf32> to vector<1x128xf32>
    %54 = vector.broadcast %53 : vector<1x128xf32> to vector<16x128xf32>
    %55 = arith.addf %52, %54 : vector<16x128xf32>
    %cst_34 = arith.constant 0.000000e+00 : f32
    %56 = vector.broadcast %cst_34 : f32 to vector<16x128xf32>
    %57 = arith.maximumf %55, %56 : vector<16x128xf32>
    %c1_35 = arith.constant 1 : index
    %c0_36 = arith.constant 0 : index
    %c0_37 = arith.constant 0 : index
    %58 = vector.load %arg4[%c1_35, %c0_36, %c0_37] : memref<11x128x256xbf16, #tpu.memory_space<vmem>>, vector<1x128x256xbf16>
    %59 = vector.shape_cast %58 : vector<1x128x256xbf16> to vector<128x256xbf16>
    %c5 = arith.constant 5 : index
    %c0_38 = arith.constant 0 : index
    %60 = vector.load %arg9[%c5, %c0_38] : memref<44x256xf32, #tpu.memory_space<vmem>>, vector<1x256xf32>
    %61 = vector.shape_cast %60 : vector<1x256xf32> to vector<256xf32>
    %62 = arith.truncf %57 : vector<16x128xf32> to vector<16x128xbf16>
    %cst_39 = arith.constant dense<0.000000e+00> : vector<16x256xf32>
    %63 = tpu.matmul %62, %59, %cst_39 {dimension_numbers = #tpu.dot_dimension_numbers<[1], [0], [0], [1], [0, 0, 1, 1], [], []>} : vector<16x128xbf16>, vector<128x256xbf16>, vector<16x256xf32> -> vector<16x256xf32>
    %64 = vector.shape_cast %61 : vector<256xf32> to vector<1x256xf32>
    %65 = vector.broadcast %64 : vector<1x256xf32> to vector<16x256xf32>
    %66 = arith.addf %63, %65 : vector<16x256xf32>
    %cst_40 = arith.constant 0.000000e+00 : f32
    %67 = vector.broadcast %cst_40 : f32 to vector<16x256xf32>
    %68 = arith.maximumf %66, %67 : vector<16x256xf32>
    %c1_41 = arith.constant 1 : index
    %c0_42 = arith.constant 0 : index
    %c0_43 = arith.constant 0 : index
    %69 = vector.load %arg5[%c1_41, %c0_42, %c0_43] : memref<11x256x128xbf16, #tpu.memory_space<vmem>>, vector<1x256x128xbf16>
    %70 = vector.shape_cast %69 : vector<1x256x128xbf16> to vector<256x128xbf16>
    %c6 = arith.constant 6 : index
    %c0_44 = arith.constant 0 : index
    %71 = vector.load %arg9[%c6, %c0_44] : memref<44x256xf32, #tpu.memory_space<vmem>>, vector<1x128xf32>
    %72 = vector.shape_cast %71 : vector<1x128xf32> to vector<128xf32>
    %73 = arith.truncf %68 : vector<16x256xf32> to vector<16x256xbf16>
    %cst_45 = arith.constant dense<0.000000e+00> : vector<16x128xf32>
    %74 = tpu.matmul %73, %70, %cst_45 {dimension_numbers = #tpu.dot_dimension_numbers<[1], [0], [0], [1], [0, 0, 1, 1], [], []>} : vector<16x256xbf16>, vector<256x128xbf16>, vector<16x128xf32> -> vector<16x128xf32>
    %75 = vector.shape_cast %72 : vector<128xf32> to vector<1x128xf32>
    %76 = vector.broadcast %75 : vector<1x128xf32> to vector<16x128xf32>
    %77 = arith.addf %74, %76 : vector<16x128xf32>
    %cst_46 = arith.constant 0.000000e+00 : f32
    %78 = vector.broadcast %cst_46 : f32 to vector<16x128xf32>
    %79 = arith.maximumf %77, %78 : vector<16x128xf32>
    %c1_47 = arith.constant 1 : index
    %c0_48 = arith.constant 0 : index
    %c0_49 = arith.constant 0 : index
    %80 = vector.load %arg6[%c1_47, %c0_48, %c0_49] : memref<10x128x32xbf16, #tpu.memory_space<vmem>>, vector<1x128x32xbf16>
    %81 = vector.shape_cast %80 : vector<1x128x32xbf16> to vector<128x32xbf16>
    %c7 = arith.constant 7 : index
    %c0_50 = arith.constant 0 : index
    %82 = vector.load %arg9[%c7, %c0_50] : memref<44x256xf32, #tpu.memory_space<vmem>>, vector<1x32xf32>
    %83 = vector.shape_cast %82 : vector<1x32xf32> to vector<32xf32>
    %84 = arith.truncf %79 : vector<16x128xf32> to vector<16x128xbf16>
    %cst_51 = arith.constant dense<0.000000e+00> : vector<16x32xf32>
    %85 = tpu.matmul %84, %81, %cst_51 {dimension_numbers = #tpu.dot_dimension_numbers<[1], [0], [0], [1], [0, 0, 1, 1], [], []>} : vector<16x128xbf16>, vector<128x32xbf16>, vector<16x32xf32> -> vector<16x32xf32>
    %86 = vector.shape_cast %83 : vector<32xf32> to vector<1x32xf32>
    %87 = vector.broadcast %86 : vector<1x32xf32> to vector<16x32xf32>
    %88 = arith.addf %85, %87 : vector<16x32xf32>
    %cst_52 = arith.constant 0.000000e+00 : f32
    %89 = vector.broadcast %cst_52 : f32 to vector<16x32xf32>
    %90 = arith.maximumf %88, %89 : vector<16x32xf32>
    %c1_53 = arith.constant 1 : index
    %c0_54 = arith.constant 0 : index
    %c0_55 = arith.constant 0 : index
    %91 = vector.load %arg7[%c1_53, %c0_54, %c0_55] : memref<10x32x128xbf16, #tpu.memory_space<vmem>>, vector<1x32x128xbf16>
    %92 = vector.shape_cast %91 : vector<1x32x128xbf16> to vector<32x128xbf16>
    %c8 = arith.constant 8 : index
    %c0_56 = arith.constant 0 : index
    %93 = vector.load %arg9[%c8, %c0_56] : memref<44x256xf32, #tpu.memory_space<vmem>>, vector<1x128xf32>
    %94 = vector.shape_cast %93 : vector<1x128xf32> to vector<128xf32>
    %95 = arith.truncf %44 : vector<16x32xf32> to vector<16x32xbf16>
    %cst_57 = arith.constant dense<0.000000e+00> : vector<16x128xf32>
    %96 = tpu.matmul %95, %92, %cst_57 {dimension_numbers = #tpu.dot_dimension_numbers<[1], [0], [0], [1], [0, 0, 1, 1], [], []>} : vector<16x32xbf16>, vector<32x128xbf16>, vector<16x128xf32> -> vector<16x128xf32>
    %97 = vector.shape_cast %94 : vector<128xf32> to vector<1x128xf32>
    %98 = vector.broadcast %97 : vector<1x128xf32> to vector<16x128xf32>
    %99 = arith.addf %96, %98 : vector<16x128xf32>
    %cst_58 = arith.constant 0.000000e+00 : f32
    %100 = vector.broadcast %cst_58 : f32 to vector<16x128xf32>
    %101 = arith.maximumf %99, %100 : vector<16x128xf32>
    %c2_59 = arith.constant 2 : index
    %c0_60 = arith.constant 0 : index
    %c0_61 = arith.constant 0 : index
    %102 = vector.load %arg4[%c2_59, %c0_60, %c0_61] : memref<11x128x256xbf16, #tpu.memory_space<vmem>>, vector<1x128x256xbf16>
    %103 = vector.shape_cast %102 : vector<1x128x256xbf16> to vector<128x256xbf16>
    %c9 = arith.constant 9 : index
    %c0_62 = arith.constant 0 : index
    %104 = vector.load %arg9[%c9, %c0_62] : memref<44x256xf32, #tpu.memory_space<vmem>>, vector<1x256xf32>
    %105 = vector.shape_cast %104 : vector<1x256xf32> to vector<256xf32>
    %106 = arith.truncf %101 : vector<16x128xf32> to vector<16x128xbf16>
    %cst_63 = arith.constant dense<0.000000e+00> : vector<16x256xf32>
    %107 = tpu.matmul %106, %103, %cst_63 {dimension_numbers = #tpu.dot_dimension_numbers<[1], [0], [0], [1], [0, 0, 1, 1], [], []>} : vector<16x128xbf16>, vector<128x256xbf16>, vector<16x256xf32> -> vector<16x256xf32>
    %108 = vector.shape_cast %105 : vector<256xf32> to vector<1x256xf32>
    %109 = vector.broadcast %108 : vector<1x256xf32> to vector<16x256xf32>
    %110 = arith.addf %107, %109 : vector<16x256xf32>
    %cst_64 = arith.constant 0.000000e+00 : f32
    %111 = vector.broadcast %cst_64 : f32 to vector<16x256xf32>
    %112 = arith.maximumf %110, %111 : vector<16x256xf32>
    %c2_65 = arith.constant 2 : index
    %c0_66 = arith.constant 0 : index
    %c0_67 = arith.constant 0 : index
    %113 = vector.load %arg5[%c2_65, %c0_66, %c0_67] : memref<11x256x128xbf16, #tpu.memory_space<vmem>>, vector<1x256x128xbf16>
    %114 = vector.shape_cast %113 : vector<1x256x128xbf16> to vector<256x128xbf16>
    %c10 = arith.constant 10 : index
    %c0_68 = arith.constant 0 : index
    %115 = vector.load %arg9[%c10, %c0_68] : memref<44x256xf32, #tpu.memory_space<vmem>>, vector<1x128xf32>
    %116 = vector.shape_cast %115 : vector<1x128xf32> to vector<128xf32>
    %117 = arith.truncf %112 : vector<16x256xf32> to vector<16x256xbf16>
    %cst_69 = arith.constant dense<0.000000e+00> : vector<16x128xf32>
    %118 = tpu.matmul %117, %114, %cst_69 {dimension_numbers = #tpu.dot_dimension_numbers<[1], [0], [0], [1], [0, 0, 1, 1], [], []>} : vector<16x256xbf16>, vector<256x128xbf16>, vector<16x128xf32> -> vector<16x128xf32>
    %119 = vector.shape_cast %116 : vector<128xf32> to vector<1x128xf32>
    %120 = vector.broadcast %119 : vector<1x128xf32> to vector<16x128xf32>
    %121 = arith.addf %118, %120 : vector<16x128xf32>
    %cst_70 = arith.constant 0.000000e+00 : f32
    %122 = vector.broadcast %cst_70 : f32 to vector<16x128xf32>
    %123 = arith.maximumf %121, %122 : vector<16x128xf32>
    %c2_71 = arith.constant 2 : index
    %c0_72 = arith.constant 0 : index
    %c0_73 = arith.constant 0 : index
    %124 = vector.load %arg6[%c2_71, %c0_72, %c0_73] : memref<10x128x32xbf16, #tpu.memory_space<vmem>>, vector<1x128x32xbf16>
    %125 = vector.shape_cast %124 : vector<1x128x32xbf16> to vector<128x32xbf16>
    %c11 = arith.constant 11 : index
    %c0_74 = arith.constant 0 : index
    %126 = vector.load %arg9[%c11, %c0_74] : memref<44x256xf32, #tpu.memory_space<vmem>>, vector<1x32xf32>
    %127 = vector.shape_cast %126 : vector<1x32xf32> to vector<32xf32>
    %128 = arith.truncf %123 : vector<16x128xf32> to vector<16x128xbf16>
    %cst_75 = arith.constant dense<0.000000e+00> : vector<16x32xf32>
    %129 = tpu.matmul %128, %125, %cst_75 {dimension_numbers = #tpu.dot_dimension_numbers<[1], [0], [0], [1], [0, 0, 1, 1], [], []>} : vector<16x128xbf16>, vector<128x32xbf16>, vector<16x32xf32> -> vector<16x32xf32>
    %130 = vector.shape_cast %127 : vector<32xf32> to vector<1x32xf32>
    %131 = vector.broadcast %130 : vector<1x32xf32> to vector<16x32xf32>
    %132 = arith.addf %129, %131 : vector<16x32xf32>
    %cst_76 = arith.constant 0.000000e+00 : f32
    %133 = vector.broadcast %cst_76 : f32 to vector<16x32xf32>
    %134 = arith.maximumf %132, %133 : vector<16x32xf32>
    %135 = vector.shape_cast %134 : vector<16x32xf32> to vector<2x8x32xf32>
    %cst_77 = arith.constant 0.000000e+00 : f32
    %136 = vector.broadcast %cst_77 : f32 to vector<2x8x32xf32>
    %137 = vector.extract_strided_slice %46 {offsets = [0, 0, 0], sizes = [2, 8, 1], strides = [1, 1, 1]} : vector<2x8x8xf32> to vector<2x8x1xf32>
    %138 = vector.extract_strided_slice %135 {offsets = [0, 0, 0], sizes = [2, 1, 32], strides = [1, 1, 1]} : vector<2x8x32xf32> to vector<2x1x32xf32>
    %139 = vector.broadcast %137 : vector<2x8x1xf32> to vector<2x8x32xf32>
    %140 = vector.broadcast %138 : vector<2x1x32xf32> to vector<2x8x32xf32>
    %141 = arith.mulf %139, %140 : vector<2x8x32xf32>
    %142 = arith.addf %136, %141 : vector<2x8x32xf32>
    %143 = vector.extract_strided_slice %46 {offsets = [0, 0, 1], sizes = [2, 8, 1], strides = [1, 1, 1]} : vector<2x8x8xf32> to vector<2x8x1xf32>
    %144 = vector.extract_strided_slice %135 {offsets = [0, 1, 0], sizes = [2, 1, 32], strides = [1, 1, 1]} : vector<2x8x32xf32> to vector<2x1x32xf32>
    %145 = vector.broadcast %143 : vector<2x8x1xf32> to vector<2x8x32xf32>
    %146 = vector.broadcast %144 : vector<2x1x32xf32> to vector<2x8x32xf32>
    %147 = arith.mulf %145, %146 : vector<2x8x32xf32>
    %148 = arith.addf %142, %147 : vector<2x8x32xf32>
    %149 = vector.extract_strided_slice %46 {offsets = [0, 0, 2], sizes = [2, 8, 1], strides = [1, 1, 1]} : vector<2x8x8xf32> to vector<2x8x1xf32>
    %150 = vector.extract_strided_slice %135 {offsets = [0, 2, 0], sizes = [2, 1, 32], strides = [1, 1, 1]} : vector<2x8x32xf32> to vector<2x1x32xf32>
    %151 = vector.broadcast %149 : vector<2x8x1xf32> to vector<2x8x32xf32>
    %152 = vector.broadcast %150 : vector<2x1x32xf32> to vector<2x8x32xf32>
    %153 = arith.mulf %151, %152 : vector<2x8x32xf32>
    %154 = arith.addf %148, %153 : vector<2x8x32xf32>
    %155 = vector.extract_strided_slice %46 {offsets = [0, 0, 3], sizes = [2, 8, 1], strides = [1, 1, 1]} : vector<2x8x8xf32> to vector<2x8x1xf32>
    %156 = vector.extract_strided_slice %135 {offsets = [0, 3, 0], sizes = [2, 1, 32], strides = [1, 1, 1]} : vector<2x8x32xf32> to vector<2x1x32xf32>
    %157 = vector.broadcast %155 : vector<2x8x1xf32> to vector<2x8x32xf32>
    %158 = vector.broadcast %156 : vector<2x1x32xf32> to vector<2x8x32xf32>
    %159 = arith.mulf %157, %158 : vector<2x8x32xf32>
    %160 = arith.addf %154, %159 : vector<2x8x32xf32>
    %161 = vector.extract_strided_slice %46 {offsets = [0, 0, 4], sizes = [2, 8, 1], strides = [1, 1, 1]} : vector<2x8x8xf32> to vector<2x8x1xf32>
    %162 = vector.extract_strided_slice %135 {offsets = [0, 4, 0], sizes = [2, 1, 32], strides = [1, 1, 1]} : vector<2x8x32xf32> to vector<2x1x32xf32>
    %163 = vector.broadcast %161 : vector<2x8x1xf32> to vector<2x8x32xf32>
    %164 = vector.broadcast %162 : vector<2x1x32xf32> to vector<2x8x32xf32>
    %165 = arith.mulf %163, %164 : vector<2x8x32xf32>
    %166 = arith.addf %160, %165 : vector<2x8x32xf32>
    %167 = vector.extract_strided_slice %46 {offsets = [0, 0, 5], sizes = [2, 8, 1], strides = [1, 1, 1]} : vector<2x8x8xf32> to vector<2x8x1xf32>
    %168 = vector.extract_strided_slice %135 {offsets = [0, 5, 0], sizes = [2, 1, 32], strides = [1, 1, 1]} : vector<2x8x32xf32> to vector<2x1x32xf32>
    %169 = vector.broadcast %167 : vector<2x8x1xf32> to vector<2x8x32xf32>
    %170 = vector.broadcast %168 : vector<2x1x32xf32> to vector<2x8x32xf32>
    %171 = arith.mulf %169, %170 : vector<2x8x32xf32>
    %172 = arith.addf %166, %171 : vector<2x8x32xf32>
    %173 = vector.extract_strided_slice %46 {offsets = [0, 0, 6], sizes = [2, 8, 1], strides = [1, 1, 1]} : vector<2x8x8xf32> to vector<2x8x1xf32>
    %174 = vector.extract_strided_slice %135 {offsets = [0, 6, 0], sizes = [2, 1, 32], strides = [1, 1, 1]} : vector<2x8x32xf32> to vector<2x1x32xf32>
    %175 = vector.broadcast %173 : vector<2x8x1xf32> to vector<2x8x32xf32>
    %176 = vector.broadcast %174 : vector<2x1x32xf32> to vector<2x8x32xf32>
    %177 = arith.mulf %175, %176 : vector<2x8x32xf32>
    %178 = arith.addf %172, %177 : vector<2x8x32xf32>
    %179 = vector.extract_strided_slice %46 {offsets = [0, 0, 7], sizes = [2, 8, 1], strides = [1, 1, 1]} : vector<2x8x8xf32> to vector<2x8x1xf32>
    %180 = vector.extract_strided_slice %135 {offsets = [0, 7, 0], sizes = [2, 1, 32], strides = [1, 1, 1]} : vector<2x8x32xf32> to vector<2x1x32xf32>
    %181 = vector.broadcast %179 : vector<2x8x1xf32> to vector<2x8x32xf32>
    %182 = vector.broadcast %180 : vector<2x1x32xf32> to vector<2x8x32xf32>
    %183 = arith.mulf %181, %182 : vector<2x8x32xf32>
    %184 = arith.addf %178, %183 : vector<2x8x32xf32>
    %185 = vector.shape_cast %184 : vector<2x8x32xf32> to vector<16x32xf32>
    %186 = arith.addf %90, %185 : vector<16x32xf32>
    %cst_78 = arith.constant 1.250000e-01 : f32
    %187 = vector.broadcast %cst_78 : f32 to vector<16x32xf32>
    %188 = arith.mulf %186, %187 : vector<16x32xf32>
    %c2_79 = arith.constant 2 : index
    %c0_80 = arith.constant 0 : index
    %c0_81 = arith.constant 0 : index
    %189 = vector.load %arg7[%c2_79, %c0_80, %c0_81] : memref<10x32x128xbf16, #tpu.memory_space<vmem>>, vector<1x32x128xbf16>
    %190 = vector.shape_cast %189 : vector<1x32x128xbf16> to vector<32x128xbf16>
    %c12 = arith.constant 12 : index
    %c0_82 = arith.constant 0 : index
    %191 = vector.load %arg9[%c12, %c0_82] : memref<44x256xf32, #tpu.memory_space<vmem>>, vector<1x128xf32>
    %192 = vector.shape_cast %191 : vector<1x128xf32> to vector<128xf32>
    %193 = arith.truncf %188 : vector<16x32xf32> to vector<16x32xbf16>
    %cst_83 = arith.constant dense<0.000000e+00> : vector<16x128xf32>
    %194 = tpu.matmul %193, %190, %cst_83 {dimension_numbers = #tpu.dot_dimension_numbers<[1], [0], [0], [1], [0, 0, 1, 1], [], []>} : vector<16x32xbf16>, vector<32x128xbf16>, vector<16x128xf32> -> vector<16x128xf32>
    %195 = vector.shape_cast %192 : vector<128xf32> to vector<1x128xf32>
    %196 = vector.broadcast %195 : vector<1x128xf32> to vector<16x128xf32>
    %197 = arith.addf %194, %196 : vector<16x128xf32>
    %cst_84 = arith.constant 0.000000e+00 : f32
    %198 = vector.broadcast %cst_84 : f32 to vector<16x128xf32>
    %199 = arith.maximumf %197, %198 : vector<16x128xf32>
    %c3_85 = arith.constant 3 : index
    %c0_86 = arith.constant 0 : index
    %c0_87 = arith.constant 0 : index
    %200 = vector.load %arg4[%c3_85, %c0_86, %c0_87] : memref<11x128x256xbf16, #tpu.memory_space<vmem>>, vector<1x128x256xbf16>
    %201 = vector.shape_cast %200 : vector<1x128x256xbf16> to vector<128x256xbf16>
    %c13 = arith.constant 13 : index
    %c0_88 = arith.constant 0 : index
    %202 = vector.load %arg9[%c13, %c0_88] : memref<44x256xf32, #tpu.memory_space<vmem>>, vector<1x256xf32>
    %203 = vector.shape_cast %202 : vector<1x256xf32> to vector<256xf32>
    %204 = arith.truncf %199 : vector<16x128xf32> to vector<16x128xbf16>
    %cst_89 = arith.constant dense<0.000000e+00> : vector<16x256xf32>
    %205 = tpu.matmul %204, %201, %cst_89 {dimension_numbers = #tpu.dot_dimension_numbers<[1], [0], [0], [1], [0, 0, 1, 1], [], []>} : vector<16x128xbf16>, vector<128x256xbf16>, vector<16x256xf32> -> vector<16x256xf32>
    %206 = vector.shape_cast %203 : vector<256xf32> to vector<1x256xf32>
    %207 = vector.broadcast %206 : vector<1x256xf32> to vector<16x256xf32>
    %208 = arith.addf %205, %207 : vector<16x256xf32>
    %cst_90 = arith.constant 0.000000e+00 : f32
    %209 = vector.broadcast %cst_90 : f32 to vector<16x256xf32>
    %210 = arith.maximumf %208, %209 : vector<16x256xf32>
    %c3_91 = arith.constant 3 : index
    %c0_92 = arith.constant 0 : index
    %c0_93 = arith.constant 0 : index
    %211 = vector.load %arg5[%c3_91, %c0_92, %c0_93] : memref<11x256x128xbf16, #tpu.memory_space<vmem>>, vector<1x256x128xbf16>
    %212 = vector.shape_cast %211 : vector<1x256x128xbf16> to vector<256x128xbf16>
    %c14 = arith.constant 14 : index
    %c0_94 = arith.constant 0 : index
    %213 = vector.load %arg9[%c14, %c0_94] : memref<44x256xf32, #tpu.memory_space<vmem>>, vector<1x128xf32>
    %214 = vector.shape_cast %213 : vector<1x128xf32> to vector<128xf32>
    %215 = arith.truncf %210 : vector<16x256xf32> to vector<16x256xbf16>
    %cst_95 = arith.constant dense<0.000000e+00> : vector<16x128xf32>
    %216 = tpu.matmul %215, %212, %cst_95 {dimension_numbers = #tpu.dot_dimension_numbers<[1], [0], [0], [1], [0, 0, 1, 1], [], []>} : vector<16x256xbf16>, vector<256x128xbf16>, vector<16x128xf32> -> vector<16x128xf32>
    %217 = vector.shape_cast %214 : vector<128xf32> to vector<1x128xf32>
    %218 = vector.broadcast %217 : vector<1x128xf32> to vector<16x128xf32>
    %219 = arith.addf %216, %218 : vector<16x128xf32>
    %cst_96 = arith.constant 0.000000e+00 : f32
    %220 = vector.broadcast %cst_96 : f32 to vector<16x128xf32>
    %221 = arith.maximumf %219, %220 : vector<16x128xf32>
    %c3_97 = arith.constant 3 : index
    %c0_98 = arith.constant 0 : index
    %c0_99 = arith.constant 0 : index
    %222 = vector.load %arg6[%c3_97, %c0_98, %c0_99] : memref<10x128x32xbf16, #tpu.memory_space<vmem>>, vector<1x128x32xbf16>
    %223 = vector.shape_cast %222 : vector<1x128x32xbf16> to vector<128x32xbf16>
    %c15 = arith.constant 15 : index
    %c0_100 = arith.constant 0 : index
    %224 = vector.load %arg9[%c15, %c0_100] : memref<44x256xf32, #tpu.memory_space<vmem>>, vector<1x32xf32>
    %225 = vector.shape_cast %224 : vector<1x32xf32> to vector<32xf32>
    %226 = arith.truncf %221 : vector<16x128xf32> to vector<16x128xbf16>
    %cst_101 = arith.constant dense<0.000000e+00> : vector<16x32xf32>
    %227 = tpu.matmul %226, %223, %cst_101 {dimension_numbers = #tpu.dot_dimension_numbers<[1], [0], [0], [1], [0, 0, 1, 1], [], []>} : vector<16x128xbf16>, vector<128x32xbf16>, vector<16x32xf32> -> vector<16x32xf32>
    %228 = vector.shape_cast %225 : vector<32xf32> to vector<1x32xf32>
    %229 = vector.broadcast %228 : vector<1x32xf32> to vector<16x32xf32>
    %230 = arith.addf %227, %229 : vector<16x32xf32>
    %cst_102 = arith.constant 0.000000e+00 : f32
    %231 = vector.broadcast %cst_102 : f32 to vector<16x32xf32>
    %232 = arith.maximumf %230, %231 : vector<16x32xf32>
    %c3_103 = arith.constant 3 : index
    %c0_104 = arith.constant 0 : index
    %c0_105 = arith.constant 0 : index
    %233 = vector.load %arg7[%c3_103, %c0_104, %c0_105] : memref<10x32x128xbf16, #tpu.memory_space<vmem>>, vector<1x32x128xbf16>
    %234 = vector.shape_cast %233 : vector<1x32x128xbf16> to vector<32x128xbf16>
    %c16 = arith.constant 16 : index
    %c0_106 = arith.constant 0 : index
    %235 = vector.load %arg9[%c16, %c0_106] : memref<44x256xf32, #tpu.memory_space<vmem>>, vector<1x128xf32>
    %236 = vector.shape_cast %235 : vector<1x128xf32> to vector<128xf32>
    %237 = arith.truncf %232 : vector<16x32xf32> to vector<16x32xbf16>
    %cst_107 = arith.constant dense<0.000000e+00> : vector<16x128xf32>
    %238 = tpu.matmul %237, %234, %cst_107 {dimension_numbers = #tpu.dot_dimension_numbers<[1], [0], [0], [1], [0, 0, 1, 1], [], []>} : vector<16x32xbf16>, vector<32x128xbf16>, vector<16x128xf32> -> vector<16x128xf32>
    %239 = vector.shape_cast %236 : vector<128xf32> to vector<1x128xf32>
    %240 = vector.broadcast %239 : vector<1x128xf32> to vector<16x128xf32>
    %241 = arith.addf %238, %240 : vector<16x128xf32>
    %cst_108 = arith.constant 0.000000e+00 : f32
    %242 = vector.broadcast %cst_108 : f32 to vector<16x128xf32>
    %243 = arith.maximumf %241, %242 : vector<16x128xf32>
    %c4_109 = arith.constant 4 : index
    %c0_110 = arith.constant 0 : index
    %c0_111 = arith.constant 0 : index
    %244 = vector.load %arg4[%c4_109, %c0_110, %c0_111] : memref<11x128x256xbf16, #tpu.memory_space<vmem>>, vector<1x128x256xbf16>
    %245 = vector.shape_cast %244 : vector<1x128x256xbf16> to vector<128x256xbf16>
    %c17 = arith.constant 17 : index
    %c0_112 = arith.constant 0 : index
    %246 = vector.load %arg9[%c17, %c0_112] : memref<44x256xf32, #tpu.memory_space<vmem>>, vector<1x256xf32>
    %247 = vector.shape_cast %246 : vector<1x256xf32> to vector<256xf32>
    %248 = arith.truncf %243 : vector<16x128xf32> to vector<16x128xbf16>
    %cst_113 = arith.constant dense<0.000000e+00> : vector<16x256xf32>
    %249 = tpu.matmul %248, %245, %cst_113 {dimension_numbers = #tpu.dot_dimension_numbers<[1], [0], [0], [1], [0, 0, 1, 1], [], []>} : vector<16x128xbf16>, vector<128x256xbf16>, vector<16x256xf32> -> vector<16x256xf32>
    %250 = vector.shape_cast %247 : vector<256xf32> to vector<1x256xf32>
    %251 = vector.broadcast %250 : vector<1x256xf32> to vector<16x256xf32>
    %252 = arith.addf %249, %251 : vector<16x256xf32>
    %cst_114 = arith.constant 0.000000e+00 : f32
    %253 = vector.broadcast %cst_114 : f32 to vector<16x256xf32>
    %254 = arith.maximumf %252, %253 : vector<16x256xf32>
    %c4_115 = arith.constant 4 : index
    %c0_116 = arith.constant 0 : index
    %c0_117 = arith.constant 0 : index
    %255 = vector.load %arg5[%c4_115, %c0_116, %c0_117] : memref<11x256x128xbf16, #tpu.memory_space<vmem>>, vector<1x256x128xbf16>
    %256 = vector.shape_cast %255 : vector<1x256x128xbf16> to vector<256x128xbf16>
    %c18 = arith.constant 18 : index
    %c0_118 = arith.constant 0 : index
    %257 = vector.load %arg9[%c18, %c0_118] : memref<44x256xf32, #tpu.memory_space<vmem>>, vector<1x128xf32>
    %258 = vector.shape_cast %257 : vector<1x128xf32> to vector<128xf32>
    %259 = arith.truncf %254 : vector<16x256xf32> to vector<16x256xbf16>
    %cst_119 = arith.constant dense<0.000000e+00> : vector<16x128xf32>
    %260 = tpu.matmul %259, %256, %cst_119 {dimension_numbers = #tpu.dot_dimension_numbers<[1], [0], [0], [1], [0, 0, 1, 1], [], []>} : vector<16x256xbf16>, vector<256x128xbf16>, vector<16x128xf32> -> vector<16x128xf32>
    %261 = vector.shape_cast %258 : vector<128xf32> to vector<1x128xf32>
    %262 = vector.broadcast %261 : vector<1x128xf32> to vector<16x128xf32>
    %263 = arith.addf %260, %262 : vector<16x128xf32>
    %cst_120 = arith.constant 0.000000e+00 : f32
    %264 = vector.broadcast %cst_120 : f32 to vector<16x128xf32>
    %265 = arith.maximumf %263, %264 : vector<16x128xf32>
    %c4_121 = arith.constant 4 : index
    %c0_122 = arith.constant 0 : index
    %c0_123 = arith.constant 0 : index
    %266 = vector.load %arg6[%c4_121, %c0_122, %c0_123] : memref<10x128x32xbf16, #tpu.memory_space<vmem>>, vector<1x128x32xbf16>
    %267 = vector.shape_cast %266 : vector<1x128x32xbf16> to vector<128x32xbf16>
    %c19 = arith.constant 19 : index
    %c0_124 = arith.constant 0 : index
    %268 = vector.load %arg9[%c19, %c0_124] : memref<44x256xf32, #tpu.memory_space<vmem>>, vector<1x32xf32>
    %269 = vector.shape_cast %268 : vector<1x32xf32> to vector<32xf32>
    %270 = arith.truncf %265 : vector<16x128xf32> to vector<16x128xbf16>
    %cst_125 = arith.constant dense<0.000000e+00> : vector<16x32xf32>
    %271 = tpu.matmul %270, %267, %cst_125 {dimension_numbers = #tpu.dot_dimension_numbers<[1], [0], [0], [1], [0, 0, 1, 1], [], []>} : vector<16x128xbf16>, vector<128x32xbf16>, vector<16x32xf32> -> vector<16x32xf32>
    %272 = vector.shape_cast %269 : vector<32xf32> to vector<1x32xf32>
    %273 = vector.broadcast %272 : vector<1x32xf32> to vector<16x32xf32>
    %274 = arith.addf %271, %273 : vector<16x32xf32>
    %cst_126 = arith.constant 0.000000e+00 : f32
    %275 = vector.broadcast %cst_126 : f32 to vector<16x32xf32>
    %276 = arith.maximumf %274, %275 : vector<16x32xf32>
    %c4_127 = arith.constant 4 : index
    %c0_128 = arith.constant 0 : index
    %c0_129 = arith.constant 0 : index
    %277 = vector.load %arg7[%c4_127, %c0_128, %c0_129] : memref<10x32x128xbf16, #tpu.memory_space<vmem>>, vector<1x32x128xbf16>
    %278 = vector.shape_cast %277 : vector<1x32x128xbf16> to vector<32x128xbf16>
    %c20 = arith.constant 20 : index
    %c0_130 = arith.constant 0 : index
    %279 = vector.load %arg9[%c20, %c0_130] : memref<44x256xf32, #tpu.memory_space<vmem>>, vector<1x128xf32>
    %280 = vector.shape_cast %279 : vector<1x128xf32> to vector<128xf32>
    %281 = arith.truncf %232 : vector<16x32xf32> to vector<16x32xbf16>
    %cst_131 = arith.constant dense<0.000000e+00> : vector<16x128xf32>
    %282 = tpu.matmul %281, %278, %cst_131 {dimension_numbers = #tpu.dot_dimension_numbers<[1], [0], [0], [1], [0, 0, 1, 1], [], []>} : vector<16x32xbf16>, vector<32x128xbf16>, vector<16x128xf32> -> vector<16x128xf32>
    %283 = vector.shape_cast %280 : vector<128xf32> to vector<1x128xf32>
    %284 = vector.broadcast %283 : vector<1x128xf32> to vector<16x128xf32>
    %285 = arith.addf %282, %284 : vector<16x128xf32>
    %cst_132 = arith.constant 0.000000e+00 : f32
    %286 = vector.broadcast %cst_132 : f32 to vector<16x128xf32>
    %287 = arith.maximumf %285, %286 : vector<16x128xf32>
    %c5_133 = arith.constant 5 : index
    %c0_134 = arith.constant 0 : index
    %c0_135 = arith.constant 0 : index
    %288 = vector.load %arg4[%c5_133, %c0_134, %c0_135] : memref<11x128x256xbf16, #tpu.memory_space<vmem>>, vector<1x128x256xbf16>
    %289 = vector.shape_cast %288 : vector<1x128x256xbf16> to vector<128x256xbf16>
    %c21 = arith.constant 21 : index
    %c0_136 = arith.constant 0 : index
    %290 = vector.load %arg9[%c21, %c0_136] : memref<44x256xf32, #tpu.memory_space<vmem>>, vector<1x256xf32>
    %291 = vector.shape_cast %290 : vector<1x256xf32> to vector<256xf32>
    %292 = arith.truncf %287 : vector<16x128xf32> to vector<16x128xbf16>
    %cst_137 = arith.constant dense<0.000000e+00> : vector<16x256xf32>
    %293 = tpu.matmul %292, %289, %cst_137 {dimension_numbers = #tpu.dot_dimension_numbers<[1], [0], [0], [1], [0, 0, 1, 1], [], []>} : vector<16x128xbf16>, vector<128x256xbf16>, vector<16x256xf32> -> vector<16x256xf32>
    %294 = vector.shape_cast %291 : vector<256xf32> to vector<1x256xf32>
    %295 = vector.broadcast %294 : vector<1x256xf32> to vector<16x256xf32>
    %296 = arith.addf %293, %295 : vector<16x256xf32>
    %cst_138 = arith.constant 0.000000e+00 : f32
    %297 = vector.broadcast %cst_138 : f32 to vector<16x256xf32>
    %298 = arith.maximumf %296, %297 : vector<16x256xf32>
    %c5_139 = arith.constant 5 : index
    %c0_140 = arith.constant 0 : index
    %c0_141 = arith.constant 0 : index
    %299 = vector.load %arg5[%c5_139, %c0_140, %c0_141] : memref<11x256x128xbf16, #tpu.memory_space<vmem>>, vector<1x256x128xbf16>
    %300 = vector.shape_cast %299 : vector<1x256x128xbf16> to vector<256x128xbf16>
    %c22 = arith.constant 22 : index
    %c0_142 = arith.constant 0 : index
    %301 = vector.load %arg9[%c22, %c0_142] : memref<44x256xf32, #tpu.memory_space<vmem>>, vector<1x128xf32>
    %302 = vector.shape_cast %301 : vector<1x128xf32> to vector<128xf32>
    %303 = arith.truncf %298 : vector<16x256xf32> to vector<16x256xbf16>
    %cst_143 = arith.constant dense<0.000000e+00> : vector<16x128xf32>
    %304 = tpu.matmul %303, %300, %cst_143 {dimension_numbers = #tpu.dot_dimension_numbers<[1], [0], [0], [1], [0, 0, 1, 1], [], []>} : vector<16x256xbf16>, vector<256x128xbf16>, vector<16x128xf32> -> vector<16x128xf32>
    %305 = vector.shape_cast %302 : vector<128xf32> to vector<1x128xf32>
    %306 = vector.broadcast %305 : vector<1x128xf32> to vector<16x128xf32>
    %307 = arith.addf %304, %306 : vector<16x128xf32>
    %cst_144 = arith.constant 0.000000e+00 : f32
    %308 = vector.broadcast %cst_144 : f32 to vector<16x128xf32>
    %309 = arith.maximumf %307, %308 : vector<16x128xf32>
    %c5_145 = arith.constant 5 : index
    %c0_146 = arith.constant 0 : index
    %c0_147 = arith.constant 0 : index
    %310 = vector.load %arg6[%c5_145, %c0_146, %c0_147] : memref<10x128x32xbf16, #tpu.memory_space<vmem>>, vector<1x128x32xbf16>
    %311 = vector.shape_cast %310 : vector<1x128x32xbf16> to vector<128x32xbf16>
    %c23 = arith.constant 23 : index
    %c0_148 = arith.constant 0 : index
    %312 = vector.load %arg9[%c23, %c0_148] : memref<44x256xf32, #tpu.memory_space<vmem>>, vector<1x32xf32>
    %313 = vector.shape_cast %312 : vector<1x32xf32> to vector<32xf32>
    %314 = arith.truncf %309 : vector<16x128xf32> to vector<16x128xbf16>
    %cst_149 = arith.constant dense<0.000000e+00> : vector<16x32xf32>
    %315 = tpu.matmul %314, %311, %cst_149 {dimension_numbers = #tpu.dot_dimension_numbers<[1], [0], [0], [1], [0, 0, 1, 1], [], []>} : vector<16x128xbf16>, vector<128x32xbf16>, vector<16x32xf32> -> vector<16x32xf32>
    %316 = vector.shape_cast %313 : vector<32xf32> to vector<1x32xf32>
    %317 = vector.broadcast %316 : vector<1x32xf32> to vector<16x32xf32>
    %318 = arith.addf %315, %317 : vector<16x32xf32>
    %cst_150 = arith.constant 0.000000e+00 : f32
    %319 = vector.broadcast %cst_150 : f32 to vector<16x32xf32>
    %320 = arith.maximumf %318, %319 : vector<16x32xf32>
    %321 = vector.shape_cast %320 : vector<16x32xf32> to vector<2x8x32xf32>
    %cst_151 = arith.constant 0.000000e+00 : f32
    %322 = vector.broadcast %cst_151 : f32 to vector<2x8x32xf32>
    %323 = vector.extract_strided_slice %46 {offsets = [0, 0, 0], sizes = [2, 8, 1], strides = [1, 1, 1]} : vector<2x8x8xf32> to vector<2x8x1xf32>
    %324 = vector.extract_strided_slice %321 {offsets = [0, 0, 0], sizes = [2, 1, 32], strides = [1, 1, 1]} : vector<2x8x32xf32> to vector<2x1x32xf32>
    %325 = vector.broadcast %323 : vector<2x8x1xf32> to vector<2x8x32xf32>
    %326 = vector.broadcast %324 : vector<2x1x32xf32> to vector<2x8x32xf32>
    %327 = arith.mulf %325, %326 : vector<2x8x32xf32>
    %328 = arith.addf %322, %327 : vector<2x8x32xf32>
    %329 = vector.extract_strided_slice %46 {offsets = [0, 0, 1], sizes = [2, 8, 1], strides = [1, 1, 1]} : vector<2x8x8xf32> to vector<2x8x1xf32>
    %330 = vector.extract_strided_slice %321 {offsets = [0, 1, 0], sizes = [2, 1, 32], strides = [1, 1, 1]} : vector<2x8x32xf32> to vector<2x1x32xf32>
    %331 = vector.broadcast %329 : vector<2x8x1xf32> to vector<2x8x32xf32>
    %332 = vector.broadcast %330 : vector<2x1x32xf32> to vector<2x8x32xf32>
    %333 = arith.mulf %331, %332 : vector<2x8x32xf32>
    %334 = arith.addf %328, %333 : vector<2x8x32xf32>
    %335 = vector.extract_strided_slice %46 {offsets = [0, 0, 2], sizes = [2, 8, 1], strides = [1, 1, 1]} : vector<2x8x8xf32> to vector<2x8x1xf32>
    %336 = vector.extract_strided_slice %321 {offsets = [0, 2, 0], sizes = [2, 1, 32], strides = [1, 1, 1]} : vector<2x8x32xf32> to vector<2x1x32xf32>
    %337 = vector.broadcast %335 : vector<2x8x1xf32> to vector<2x8x32xf32>
    %338 = vector.broadcast %336 : vector<2x1x32xf32> to vector<2x8x32xf32>
    %339 = arith.mulf %337, %338 : vector<2x8x32xf32>
    %340 = arith.addf %334, %339 : vector<2x8x32xf32>
    %341 = vector.extract_strided_slice %46 {offsets = [0, 0, 3], sizes = [2, 8, 1], strides = [1, 1, 1]} : vector<2x8x8xf32> to vector<2x8x1xf32>
    %342 = vector.extract_strided_slice %321 {offsets = [0, 3, 0], sizes = [2, 1, 32], strides = [1, 1, 1]} : vector<2x8x32xf32> to vector<2x1x32xf32>
    %343 = vector.broadcast %341 : vector<2x8x1xf32> to vector<2x8x32xf32>
    %344 = vector.broadcast %342 : vector<2x1x32xf32> to vector<2x8x32xf32>
    %345 = arith.mulf %343, %344 : vector<2x8x32xf32>
    %346 = arith.addf %340, %345 : vector<2x8x32xf32>
    %347 = vector.extract_strided_slice %46 {offsets = [0, 0, 4], sizes = [2, 8, 1], strides = [1, 1, 1]} : vector<2x8x8xf32> to vector<2x8x1xf32>
    %348 = vector.extract_strided_slice %321 {offsets = [0, 4, 0], sizes = [2, 1, 32], strides = [1, 1, 1]} : vector<2x8x32xf32> to vector<2x1x32xf32>
    %349 = vector.broadcast %347 : vector<2x8x1xf32> to vector<2x8x32xf32>
    %350 = vector.broadcast %348 : vector<2x1x32xf32> to vector<2x8x32xf32>
    %351 = arith.mulf %349, %350 : vector<2x8x32xf32>
    %352 = arith.addf %346, %351 : vector<2x8x32xf32>
    %353 = vector.extract_strided_slice %46 {offsets = [0, 0, 5], sizes = [2, 8, 1], strides = [1, 1, 1]} : vector<2x8x8xf32> to vector<2x8x1xf32>
    %354 = vector.extract_strided_slice %321 {offsets = [0, 5, 0], sizes = [2, 1, 32], strides = [1, 1, 1]} : vector<2x8x32xf32> to vector<2x1x32xf32>
    %355 = vector.broadcast %353 : vector<2x8x1xf32> to vector<2x8x32xf32>
    %356 = vector.broadcast %354 : vector<2x1x32xf32> to vector<2x8x32xf32>
    %357 = arith.mulf %355, %356 : vector<2x8x32xf32>
    %358 = arith.addf %352, %357 : vector<2x8x32xf32>
    %359 = vector.extract_strided_slice %46 {offsets = [0, 0, 6], sizes = [2, 8, 1], strides = [1, 1, 1]} : vector<2x8x8xf32> to vector<2x8x1xf32>
    %360 = vector.extract_strided_slice %321 {offsets = [0, 6, 0], sizes = [2, 1, 32], strides = [1, 1, 1]} : vector<2x8x32xf32> to vector<2x1x32xf32>
    %361 = vector.broadcast %359 : vector<2x8x1xf32> to vector<2x8x32xf32>
    %362 = vector.broadcast %360 : vector<2x1x32xf32> to vector<2x8x32xf32>
    %363 = arith.mulf %361, %362 : vector<2x8x32xf32>
    %364 = arith.addf %358, %363 : vector<2x8x32xf32>
    %365 = vector.extract_strided_slice %46 {offsets = [0, 0, 7], sizes = [2, 8, 1], strides = [1, 1, 1]} : vector<2x8x8xf32> to vector<2x8x1xf32>
    %366 = vector.extract_strided_slice %321 {offsets = [0, 7, 0], sizes = [2, 1, 32], strides = [1, 1, 1]} : vector<2x8x32xf32> to vector<2x1x32xf32>
    %367 = vector.broadcast %365 : vector<2x8x1xf32> to vector<2x8x32xf32>
    %368 = vector.broadcast %366 : vector<2x1x32xf32> to vector<2x8x32xf32>
    %369 = arith.mulf %367, %368 : vector<2x8x32xf32>
    %370 = arith.addf %364, %369 : vector<2x8x32xf32>
    %371 = vector.shape_cast %370 : vector<2x8x32xf32> to vector<16x32xf32>
    %372 = arith.addf %276, %371 : vector<16x32xf32>
    %cst_152 = arith.constant 1.250000e-01 : f32
    %373 = vector.broadcast %cst_152 : f32 to vector<16x32xf32>
    %374 = arith.mulf %372, %373 : vector<16x32xf32>
    %c5_153 = arith.constant 5 : index
    %c0_154 = arith.constant 0 : index
    %c0_155 = arith.constant 0 : index
    %375 = vector.load %arg7[%c5_153, %c0_154, %c0_155] : memref<10x32x128xbf16, #tpu.memory_space<vmem>>, vector<1x32x128xbf16>
    %376 = vector.shape_cast %375 : vector<1x32x128xbf16> to vector<32x128xbf16>
    %c24 = arith.constant 24 : index
    %c0_156 = arith.constant 0 : index
    %377 = vector.load %arg9[%c24, %c0_156] : memref<44x256xf32, #tpu.memory_space<vmem>>, vector<1x128xf32>
    %378 = vector.shape_cast %377 : vector<1x128xf32> to vector<128xf32>
    %379 = arith.truncf %374 : vector<16x32xf32> to vector<16x32xbf16>
    %cst_157 = arith.constant dense<0.000000e+00> : vector<16x128xf32>
    %380 = tpu.matmul %379, %376, %cst_157 {dimension_numbers = #tpu.dot_dimension_numbers<[1], [0], [0], [1], [0, 0, 1, 1], [], []>} : vector<16x32xbf16>, vector<32x128xbf16>, vector<16x128xf32> -> vector<16x128xf32>
    %381 = vector.shape_cast %378 : vector<128xf32> to vector<1x128xf32>
    %382 = vector.broadcast %381 : vector<1x128xf32> to vector<16x128xf32>
    %383 = arith.addf %380, %382 : vector<16x128xf32>
    %cst_158 = arith.constant 0.000000e+00 : f32
    %384 = vector.broadcast %cst_158 : f32 to vector<16x128xf32>
    %385 = arith.maximumf %383, %384 : vector<16x128xf32>
    %c6_159 = arith.constant 6 : index
    %c0_160 = arith.constant 0 : index
    %c0_161 = arith.constant 0 : index
    %386 = vector.load %arg4[%c6_159, %c0_160, %c0_161] : memref<11x128x256xbf16, #tpu.memory_space<vmem>>, vector<1x128x256xbf16>
    %387 = vector.shape_cast %386 : vector<1x128x256xbf16> to vector<128x256xbf16>
    %c25 = arith.constant 25 : index
    %c0_162 = arith.constant 0 : index
    %388 = vector.load %arg9[%c25, %c0_162] : memref<44x256xf32, #tpu.memory_space<vmem>>, vector<1x256xf32>
    %389 = vector.shape_cast %388 : vector<1x256xf32> to vector<256xf32>
    %390 = arith.truncf %385 : vector<16x128xf32> to vector<16x128xbf16>
    %cst_163 = arith.constant dense<0.000000e+00> : vector<16x256xf32>
    %391 = tpu.matmul %390, %387, %cst_163 {dimension_numbers = #tpu.dot_dimension_numbers<[1], [0], [0], [1], [0, 0, 1, 1], [], []>} : vector<16x128xbf16>, vector<128x256xbf16>, vector<16x256xf32> -> vector<16x256xf32>
    %392 = vector.shape_cast %389 : vector<256xf32> to vector<1x256xf32>
    %393 = vector.broadcast %392 : vector<1x256xf32> to vector<16x256xf32>
    %394 = arith.addf %391, %393 : vector<16x256xf32>
    %cst_164 = arith.constant 0.000000e+00 : f32
    %395 = vector.broadcast %cst_164 : f32 to vector<16x256xf32>
    %396 = arith.maximumf %394, %395 : vector<16x256xf32>
    %c6_165 = arith.constant 6 : index
    %c0_166 = arith.constant 0 : index
    %c0_167 = arith.constant 0 : index
    %397 = vector.load %arg5[%c6_165, %c0_166, %c0_167] : memref<11x256x128xbf16, #tpu.memory_space<vmem>>, vector<1x256x128xbf16>
    %398 = vector.shape_cast %397 : vector<1x256x128xbf16> to vector<256x128xbf16>
    %c26 = arith.constant 26 : index
    %c0_168 = arith.constant 0 : index
    %399 = vector.load %arg9[%c26, %c0_168] : memref<44x256xf32, #tpu.memory_space<vmem>>, vector<1x128xf32>
    %400 = vector.shape_cast %399 : vector<1x128xf32> to vector<128xf32>
    %401 = arith.truncf %396 : vector<16x256xf32> to vector<16x256xbf16>
    %cst_169 = arith.constant dense<0.000000e+00> : vector<16x128xf32>
    %402 = tpu.matmul %401, %398, %cst_169 {dimension_numbers = #tpu.dot_dimension_numbers<[1], [0], [0], [1], [0, 0, 1, 1], [], []>} : vector<16x256xbf16>, vector<256x128xbf16>, vector<16x128xf32> -> vector<16x128xf32>
    %403 = vector.shape_cast %400 : vector<128xf32> to vector<1x128xf32>
    %404 = vector.broadcast %403 : vector<1x128xf32> to vector<16x128xf32>
    %405 = arith.addf %402, %404 : vector<16x128xf32>
    %cst_170 = arith.constant 0.000000e+00 : f32
    %406 = vector.broadcast %cst_170 : f32 to vector<16x128xf32>
    %407 = arith.maximumf %405, %406 : vector<16x128xf32>
    %c6_171 = arith.constant 6 : index
    %c0_172 = arith.constant 0 : index
    %c0_173 = arith.constant 0 : index
    %408 = vector.load %arg6[%c6_171, %c0_172, %c0_173] : memref<10x128x32xbf16, #tpu.memory_space<vmem>>, vector<1x128x32xbf16>
    %409 = vector.shape_cast %408 : vector<1x128x32xbf16> to vector<128x32xbf16>
    %c27 = arith.constant 27 : index
    %c0_174 = arith.constant 0 : index
    %410 = vector.load %arg9[%c27, %c0_174] : memref<44x256xf32, #tpu.memory_space<vmem>>, vector<1x32xf32>
    %411 = vector.shape_cast %410 : vector<1x32xf32> to vector<32xf32>
    %412 = arith.truncf %407 : vector<16x128xf32> to vector<16x128xbf16>
    %cst_175 = arith.constant dense<0.000000e+00> : vector<16x32xf32>
    %413 = tpu.matmul %412, %409, %cst_175 {dimension_numbers = #tpu.dot_dimension_numbers<[1], [0], [0], [1], [0, 0, 1, 1], [], []>} : vector<16x128xbf16>, vector<128x32xbf16>, vector<16x32xf32> -> vector<16x32xf32>
    %414 = vector.shape_cast %411 : vector<32xf32> to vector<1x32xf32>
    %415 = vector.broadcast %414 : vector<1x32xf32> to vector<16x32xf32>
    %416 = arith.addf %413, %415 : vector<16x32xf32>
    %cst_176 = arith.constant 0.000000e+00 : f32
    %417 = vector.broadcast %cst_176 : f32 to vector<16x32xf32>
    %418 = arith.maximumf %416, %417 : vector<16x32xf32>
    %c6_177 = arith.constant 6 : index
    %c0_178 = arith.constant 0 : index
    %c0_179 = arith.constant 0 : index
    %419 = vector.load %arg7[%c6_177, %c0_178, %c0_179] : memref<10x32x128xbf16, #tpu.memory_space<vmem>>, vector<1x32x128xbf16>
    %420 = vector.shape_cast %419 : vector<1x32x128xbf16> to vector<32x128xbf16>
    %c28 = arith.constant 28 : index
    %c0_180 = arith.constant 0 : index
    %421 = vector.load %arg9[%c28, %c0_180] : memref<44x256xf32, #tpu.memory_space<vmem>>, vector<1x128xf32>
    %422 = vector.shape_cast %421 : vector<1x128xf32> to vector<128xf32>
    %423 = arith.truncf %418 : vector<16x32xf32> to vector<16x32xbf16>
    %cst_181 = arith.constant dense<0.000000e+00> : vector<16x128xf32>
    %424 = tpu.matmul %423, %420, %cst_181 {dimension_numbers = #tpu.dot_dimension_numbers<[1], [0], [0], [1], [0, 0, 1, 1], [], []>} : vector<16x32xbf16>, vector<32x128xbf16>, vector<16x128xf32> -> vector<16x128xf32>
    %425 = vector.shape_cast %422 : vector<128xf32> to vector<1x128xf32>
    %426 = vector.broadcast %425 : vector<1x128xf32> to vector<16x128xf32>
    %427 = arith.addf %424, %426 : vector<16x128xf32>
    %cst_182 = arith.constant 0.000000e+00 : f32
    %428 = vector.broadcast %cst_182 : f32 to vector<16x128xf32>
    %429 = arith.maximumf %427, %428 : vector<16x128xf32>
    %c7_183 = arith.constant 7 : index
    %c0_184 = arith.constant 0 : index
    %c0_185 = arith.constant 0 : index
    %430 = vector.load %arg4[%c7_183, %c0_184, %c0_185] : memref<11x128x256xbf16, #tpu.memory_space<vmem>>, vector<1x128x256xbf16>
    %431 = vector.shape_cast %430 : vector<1x128x256xbf16> to vector<128x256xbf16>
    %c29 = arith.constant 29 : index
    %c0_186 = arith.constant 0 : index
    %432 = vector.load %arg9[%c29, %c0_186] : memref<44x256xf32, #tpu.memory_space<vmem>>, vector<1x256xf32>
    %433 = vector.shape_cast %432 : vector<1x256xf32> to vector<256xf32>
    %434 = arith.truncf %429 : vector<16x128xf32> to vector<16x128xbf16>
    %cst_187 = arith.constant dense<0.000000e+00> : vector<16x256xf32>
    %435 = tpu.matmul %434, %431, %cst_187 {dimension_numbers = #tpu.dot_dimension_numbers<[1], [0], [0], [1], [0, 0, 1, 1], [], []>} : vector<16x128xbf16>, vector<128x256xbf16>, vector<16x256xf32> -> vector<16x256xf32>
    %436 = vector.shape_cast %433 : vector<256xf32> to vector<1x256xf32>
    %437 = vector.broadcast %436 : vector<1x256xf32> to vector<16x256xf32>
    %438 = arith.addf %435, %437 : vector<16x256xf32>
    %cst_188 = arith.constant 0.000000e+00 : f32
    %439 = vector.broadcast %cst_188 : f32 to vector<16x256xf32>
    %440 = arith.maximumf %438, %439 : vector<16x256xf32>
    %c7_189 = arith.constant 7 : index
    %c0_190 = arith.constant 0 : index
    %c0_191 = arith.constant 0 : index
    %441 = vector.load %arg5[%c7_189, %c0_190, %c0_191] : memref<11x256x128xbf16, #tpu.memory_space<vmem>>, vector<1x256x128xbf16>
    %442 = vector.shape_cast %441 : vector<1x256x128xbf16> to vector<256x128xbf16>
    %c30 = arith.constant 30 : index
    %c0_192 = arith.constant 0 : index
    %443 = vector.load %arg9[%c30, %c0_192] : memref<44x256xf32, #tpu.memory_space<vmem>>, vector<1x128xf32>
    %444 = vector.shape_cast %443 : vector<1x128xf32> to vector<128xf32>
    %445 = arith.truncf %440 : vector<16x256xf32> to vector<16x256xbf16>
    %cst_193 = arith.constant dense<0.000000e+00> : vector<16x128xf32>
    %446 = tpu.matmul %445, %442, %cst_193 {dimension_numbers = #tpu.dot_dimension_numbers<[1], [0], [0], [1], [0, 0, 1, 1], [], []>} : vector<16x256xbf16>, vector<256x128xbf16>, vector<16x128xf32> -> vector<16x128xf32>
    %447 = vector.shape_cast %444 : vector<128xf32> to vector<1x128xf32>
    %448 = vector.broadcast %447 : vector<1x128xf32> to vector<16x128xf32>
    %449 = arith.addf %446, %448 : vector<16x128xf32>
    %cst_194 = arith.constant 0.000000e+00 : f32
    %450 = vector.broadcast %cst_194 : f32 to vector<16x128xf32>
    %451 = arith.maximumf %449, %450 : vector<16x128xf32>
    %c7_195 = arith.constant 7 : index
    %c0_196 = arith.constant 0 : index
    %c0_197 = arith.constant 0 : index
    %452 = vector.load %arg6[%c7_195, %c0_196, %c0_197] : memref<10x128x32xbf16, #tpu.memory_space<vmem>>, vector<1x128x32xbf16>
    %453 = vector.shape_cast %452 : vector<1x128x32xbf16> to vector<128x32xbf16>
    %c31 = arith.constant 31 : index
    %c0_198 = arith.constant 0 : index
    %454 = vector.load %arg9[%c31, %c0_198] : memref<44x256xf32, #tpu.memory_space<vmem>>, vector<1x32xf32>
    %455 = vector.shape_cast %454 : vector<1x32xf32> to vector<32xf32>
    %456 = arith.truncf %451 : vector<16x128xf32> to vector<16x128xbf16>
    %cst_199 = arith.constant dense<0.000000e+00> : vector<16x32xf32>
    %457 = tpu.matmul %456, %453, %cst_199 {dimension_numbers = #tpu.dot_dimension_numbers<[1], [0], [0], [1], [0, 0, 1, 1], [], []>} : vector<16x128xbf16>, vector<128x32xbf16>, vector<16x32xf32> -> vector<16x32xf32>
    %458 = vector.shape_cast %455 : vector<32xf32> to vector<1x32xf32>
    %459 = vector.broadcast %458 : vector<1x32xf32> to vector<16x32xf32>
    %460 = arith.addf %457, %459 : vector<16x32xf32>
    %cst_200 = arith.constant 0.000000e+00 : f32
    %461 = vector.broadcast %cst_200 : f32 to vector<16x32xf32>
    %462 = arith.maximumf %460, %461 : vector<16x32xf32>
    %c7_201 = arith.constant 7 : index
    %c0_202 = arith.constant 0 : index
    %c0_203 = arith.constant 0 : index
    %463 = vector.load %arg7[%c7_201, %c0_202, %c0_203] : memref<10x32x128xbf16, #tpu.memory_space<vmem>>, vector<1x32x128xbf16>
    %464 = vector.shape_cast %463 : vector<1x32x128xbf16> to vector<32x128xbf16>
    %c32 = arith.constant 32 : index
    %c0_204 = arith.constant 0 : index
    %465 = vector.load %arg9[%c32, %c0_204] : memref<44x256xf32, #tpu.memory_space<vmem>>, vector<1x128xf32>
    %466 = vector.shape_cast %465 : vector<1x128xf32> to vector<128xf32>
    %467 = arith.truncf %418 : vector<16x32xf32> to vector<16x32xbf16>
    %cst_205 = arith.constant dense<0.000000e+00> : vector<16x128xf32>
    %468 = tpu.matmul %467, %464, %cst_205 {dimension_numbers = #tpu.dot_dimension_numbers<[1], [0], [0], [1], [0, 0, 1, 1], [], []>} : vector<16x32xbf16>, vector<32x128xbf16>, vector<16x128xf32> -> vector<16x128xf32>
    %469 = vector.shape_cast %466 : vector<128xf32> to vector<1x128xf32>
    %470 = vector.broadcast %469 : vector<1x128xf32> to vector<16x128xf32>
    %471 = arith.addf %468, %470 : vector<16x128xf32>
    %cst_206 = arith.constant 0.000000e+00 : f32
    %472 = vector.broadcast %cst_206 : f32 to vector<16x128xf32>
    %473 = arith.maximumf %471, %472 : vector<16x128xf32>
    %c8_207 = arith.constant 8 : index
    %c0_208 = arith.constant 0 : index
    %c0_209 = arith.constant 0 : index
    %474 = vector.load %arg4[%c8_207, %c0_208, %c0_209] : memref<11x128x256xbf16, #tpu.memory_space<vmem>>, vector<1x128x256xbf16>
    %475 = vector.shape_cast %474 : vector<1x128x256xbf16> to vector<128x256xbf16>
    %c33 = arith.constant 33 : index
    %c0_210 = arith.constant 0 : index
    %476 = vector.load %arg9[%c33, %c0_210] : memref<44x256xf32, #tpu.memory_space<vmem>>, vector<1x256xf32>
    %477 = vector.shape_cast %476 : vector<1x256xf32> to vector<256xf32>
    %478 = arith.truncf %473 : vector<16x128xf32> to vector<16x128xbf16>
    %cst_211 = arith.constant dense<0.000000e+00> : vector<16x256xf32>
    %479 = tpu.matmul %478, %475, %cst_211 {dimension_numbers = #tpu.dot_dimension_numbers<[1], [0], [0], [1], [0, 0, 1, 1], [], []>} : vector<16x128xbf16>, vector<128x256xbf16>, vector<16x256xf32> -> vector<16x256xf32>
    %480 = vector.shape_cast %477 : vector<256xf32> to vector<1x256xf32>
    %481 = vector.broadcast %480 : vector<1x256xf32> to vector<16x256xf32>
    %482 = arith.addf %479, %481 : vector<16x256xf32>
    %cst_212 = arith.constant 0.000000e+00 : f32
    %483 = vector.broadcast %cst_212 : f32 to vector<16x256xf32>
    %484 = arith.maximumf %482, %483 : vector<16x256xf32>
    %c8_213 = arith.constant 8 : index
    %c0_214 = arith.constant 0 : index
    %c0_215 = arith.constant 0 : index
    %485 = vector.load %arg5[%c8_213, %c0_214, %c0_215] : memref<11x256x128xbf16, #tpu.memory_space<vmem>>, vector<1x256x128xbf16>
    %486 = vector.shape_cast %485 : vector<1x256x128xbf16> to vector<256x128xbf16>
    %c34 = arith.constant 34 : index
    %c0_216 = arith.constant 0 : index
    %487 = vector.load %arg9[%c34, %c0_216] : memref<44x256xf32, #tpu.memory_space<vmem>>, vector<1x128xf32>
    %488 = vector.shape_cast %487 : vector<1x128xf32> to vector<128xf32>
    %489 = arith.truncf %484 : vector<16x256xf32> to vector<16x256xbf16>
    %cst_217 = arith.constant dense<0.000000e+00> : vector<16x128xf32>
    %490 = tpu.matmul %489, %486, %cst_217 {dimension_numbers = #tpu.dot_dimension_numbers<[1], [0], [0], [1], [0, 0, 1, 1], [], []>} : vector<16x256xbf16>, vector<256x128xbf16>, vector<16x128xf32> -> vector<16x128xf32>
    %491 = vector.shape_cast %488 : vector<128xf32> to vector<1x128xf32>
    %492 = vector.broadcast %491 : vector<1x128xf32> to vector<16x128xf32>
    %493 = arith.addf %490, %492 : vector<16x128xf32>
    %cst_218 = arith.constant 0.000000e+00 : f32
    %494 = vector.broadcast %cst_218 : f32 to vector<16x128xf32>
    %495 = arith.maximumf %493, %494 : vector<16x128xf32>
    %c8_219 = arith.constant 8 : index
    %c0_220 = arith.constant 0 : index
    %c0_221 = arith.constant 0 : index
    %496 = vector.load %arg6[%c8_219, %c0_220, %c0_221] : memref<10x128x32xbf16, #tpu.memory_space<vmem>>, vector<1x128x32xbf16>
    %497 = vector.shape_cast %496 : vector<1x128x32xbf16> to vector<128x32xbf16>
    %c35 = arith.constant 35 : index
    %c0_222 = arith.constant 0 : index
    %498 = vector.load %arg9[%c35, %c0_222] : memref<44x256xf32, #tpu.memory_space<vmem>>, vector<1x32xf32>
    %499 = vector.shape_cast %498 : vector<1x32xf32> to vector<32xf32>
    %500 = arith.truncf %495 : vector<16x128xf32> to vector<16x128xbf16>
    %cst_223 = arith.constant dense<0.000000e+00> : vector<16x32xf32>
    %501 = tpu.matmul %500, %497, %cst_223 {dimension_numbers = #tpu.dot_dimension_numbers<[1], [0], [0], [1], [0, 0, 1, 1], [], []>} : vector<16x128xbf16>, vector<128x32xbf16>, vector<16x32xf32> -> vector<16x32xf32>
    %502 = vector.shape_cast %499 : vector<32xf32> to vector<1x32xf32>
    %503 = vector.broadcast %502 : vector<1x32xf32> to vector<16x32xf32>
    %504 = arith.addf %501, %503 : vector<16x32xf32>
    %cst_224 = arith.constant 0.000000e+00 : f32
    %505 = vector.broadcast %cst_224 : f32 to vector<16x32xf32>
    %506 = arith.maximumf %504, %505 : vector<16x32xf32>
    %507 = vector.shape_cast %506 : vector<16x32xf32> to vector<2x8x32xf32>
    %cst_225 = arith.constant 0.000000e+00 : f32
    %508 = vector.broadcast %cst_225 : f32 to vector<2x8x32xf32>
    %509 = vector.extract_strided_slice %46 {offsets = [0, 0, 0], sizes = [2, 8, 1], strides = [1, 1, 1]} : vector<2x8x8xf32> to vector<2x8x1xf32>
    %510 = vector.extract_strided_slice %507 {offsets = [0, 0, 0], sizes = [2, 1, 32], strides = [1, 1, 1]} : vector<2x8x32xf32> to vector<2x1x32xf32>
    %511 = vector.broadcast %509 : vector<2x8x1xf32> to vector<2x8x32xf32>
    %512 = vector.broadcast %510 : vector<2x1x32xf32> to vector<2x8x32xf32>
    %513 = arith.mulf %511, %512 : vector<2x8x32xf32>
    %514 = arith.addf %508, %513 : vector<2x8x32xf32>
    %515 = vector.extract_strided_slice %46 {offsets = [0, 0, 1], sizes = [2, 8, 1], strides = [1, 1, 1]} : vector<2x8x8xf32> to vector<2x8x1xf32>
    %516 = vector.extract_strided_slice %507 {offsets = [0, 1, 0], sizes = [2, 1, 32], strides = [1, 1, 1]} : vector<2x8x32xf32> to vector<2x1x32xf32>
    %517 = vector.broadcast %515 : vector<2x8x1xf32> to vector<2x8x32xf32>
    %518 = vector.broadcast %516 : vector<2x1x32xf32> to vector<2x8x32xf32>
    %519 = arith.mulf %517, %518 : vector<2x8x32xf32>
    %520 = arith.addf %514, %519 : vector<2x8x32xf32>
    %521 = vector.extract_strided_slice %46 {offsets = [0, 0, 2], sizes = [2, 8, 1], strides = [1, 1, 1]} : vector<2x8x8xf32> to vector<2x8x1xf32>
    %522 = vector.extract_strided_slice %507 {offsets = [0, 2, 0], sizes = [2, 1, 32], strides = [1, 1, 1]} : vector<2x8x32xf32> to vector<2x1x32xf32>
    %523 = vector.broadcast %521 : vector<2x8x1xf32> to vector<2x8x32xf32>
    %524 = vector.broadcast %522 : vector<2x1x32xf32> to vector<2x8x32xf32>
    %525 = arith.mulf %523, %524 : vector<2x8x32xf32>
    %526 = arith.addf %520, %525 : vector<2x8x32xf32>
    %527 = vector.extract_strided_slice %46 {offsets = [0, 0, 3], sizes = [2, 8, 1], strides = [1, 1, 1]} : vector<2x8x8xf32> to vector<2x8x1xf32>
    %528 = vector.extract_strided_slice %507 {offsets = [0, 3, 0], sizes = [2, 1, 32], strides = [1, 1, 1]} : vector<2x8x32xf32> to vector<2x1x32xf32>
    %529 = vector.broadcast %527 : vector<2x8x1xf32> to vector<2x8x32xf32>
    %530 = vector.broadcast %528 : vector<2x1x32xf32> to vector<2x8x32xf32>
    %531 = arith.mulf %529, %530 : vector<2x8x32xf32>
    %532 = arith.addf %526, %531 : vector<2x8x32xf32>
    %533 = vector.extract_strided_slice %46 {offsets = [0, 0, 4], sizes = [2, 8, 1], strides = [1, 1, 1]} : vector<2x8x8xf32> to vector<2x8x1xf32>
    %534 = vector.extract_strided_slice %507 {offsets = [0, 4, 0], sizes = [2, 1, 32], strides = [1, 1, 1]} : vector<2x8x32xf32> to vector<2x1x32xf32>
    %535 = vector.broadcast %533 : vector<2x8x1xf32> to vector<2x8x32xf32>
    %536 = vector.broadcast %534 : vector<2x1x32xf32> to vector<2x8x32xf32>
    %537 = arith.mulf %535, %536 : vector<2x8x32xf32>
    %538 = arith.addf %532, %537 : vector<2x8x32xf32>
    %539 = vector.extract_strided_slice %46 {offsets = [0, 0, 5], sizes = [2, 8, 1], strides = [1, 1, 1]} : vector<2x8x8xf32> to vector<2x8x1xf32>
    %540 = vector.extract_strided_slice %507 {offsets = [0, 5, 0], sizes = [2, 1, 32], strides = [1, 1, 1]} : vector<2x8x32xf32> to vector<2x1x32xf32>
    %541 = vector.broadcast %539 : vector<2x8x1xf32> to vector<2x8x32xf32>
    %542 = vector.broadcast %540 : vector<2x1x32xf32> to vector<2x8x32xf32>
    %543 = arith.mulf %541, %542 : vector<2x8x32xf32>
    %544 = arith.addf %538, %543 : vector<2x8x32xf32>
    %545 = vector.extract_strided_slice %46 {offsets = [0, 0, 6], sizes = [2, 8, 1], strides = [1, 1, 1]} : vector<2x8x8xf32> to vector<2x8x1xf32>
    %546 = vector.extract_strided_slice %507 {offsets = [0, 6, 0], sizes = [2, 1, 32], strides = [1, 1, 1]} : vector<2x8x32xf32> to vector<2x1x32xf32>
    %547 = vector.broadcast %545 : vector<2x8x1xf32> to vector<2x8x32xf32>
    %548 = vector.broadcast %546 : vector<2x1x32xf32> to vector<2x8x32xf32>
    %549 = arith.mulf %547, %548 : vector<2x8x32xf32>
    %550 = arith.addf %544, %549 : vector<2x8x32xf32>
    %551 = vector.extract_strided_slice %46 {offsets = [0, 0, 7], sizes = [2, 8, 1], strides = [1, 1, 1]} : vector<2x8x8xf32> to vector<2x8x1xf32>
    %552 = vector.extract_strided_slice %507 {offsets = [0, 7, 0], sizes = [2, 1, 32], strides = [1, 1, 1]} : vector<2x8x32xf32> to vector<2x1x32xf32>
    %553 = vector.broadcast %551 : vector<2x8x1xf32> to vector<2x8x32xf32>
    %554 = vector.broadcast %552 : vector<2x1x32xf32> to vector<2x8x32xf32>
    %555 = arith.mulf %553, %554 : vector<2x8x32xf32>
    %556 = arith.addf %550, %555 : vector<2x8x32xf32>
    %557 = vector.shape_cast %556 : vector<2x8x32xf32> to vector<16x32xf32>
    %558 = arith.addf %462, %557 : vector<16x32xf32>
    %cst_226 = arith.constant 1.250000e-01 : f32
    %559 = vector.broadcast %cst_226 : f32 to vector<16x32xf32>
    %560 = arith.mulf %558, %559 : vector<16x32xf32>
    %c8_227 = arith.constant 8 : index
    %c0_228 = arith.constant 0 : index
    %c0_229 = arith.constant 0 : index
    %561 = vector.load %arg7[%c8_227, %c0_228, %c0_229] : memref<10x32x128xbf16, #tpu.memory_space<vmem>>, vector<1x32x128xbf16>
    %562 = vector.shape_cast %561 : vector<1x32x128xbf16> to vector<32x128xbf16>
    %c36 = arith.constant 36 : index
    %c0_230 = arith.constant 0 : index
    %563 = vector.load %arg9[%c36, %c0_230] : memref<44x256xf32, #tpu.memory_space<vmem>>, vector<1x128xf32>
    %564 = vector.shape_cast %563 : vector<1x128xf32> to vector<128xf32>
    %565 = arith.truncf %560 : vector<16x32xf32> to vector<16x32xbf16>
    %cst_231 = arith.constant dense<0.000000e+00> : vector<16x128xf32>
    %566 = tpu.matmul %565, %562, %cst_231 {dimension_numbers = #tpu.dot_dimension_numbers<[1], [0], [0], [1], [0, 0, 1, 1], [], []>} : vector<16x32xbf16>, vector<32x128xbf16>, vector<16x128xf32> -> vector<16x128xf32>
    %567 = vector.shape_cast %564 : vector<128xf32> to vector<1x128xf32>
    %568 = vector.broadcast %567 : vector<1x128xf32> to vector<16x128xf32>
    %569 = arith.addf %566, %568 : vector<16x128xf32>
    %cst_232 = arith.constant 0.000000e+00 : f32
    %570 = vector.broadcast %cst_232 : f32 to vector<16x128xf32>
    %571 = arith.maximumf %569, %570 : vector<16x128xf32>
    %c9_233 = arith.constant 9 : index
    %c0_234 = arith.constant 0 : index
    %c0_235 = arith.constant 0 : index
    %572 = vector.load %arg4[%c9_233, %c0_234, %c0_235] : memref<11x128x256xbf16, #tpu.memory_space<vmem>>, vector<1x128x256xbf16>
    %573 = vector.shape_cast %572 : vector<1x128x256xbf16> to vector<128x256xbf16>
    %c37 = arith.constant 37 : index
    %c0_236 = arith.constant 0 : index
    %574 = vector.load %arg9[%c37, %c0_236] : memref<44x256xf32, #tpu.memory_space<vmem>>, vector<1x256xf32>
    %575 = vector.shape_cast %574 : vector<1x256xf32> to vector<256xf32>
    %576 = arith.truncf %571 : vector<16x128xf32> to vector<16x128xbf16>
    %cst_237 = arith.constant dense<0.000000e+00> : vector<16x256xf32>
    %577 = tpu.matmul %576, %573, %cst_237 {dimension_numbers = #tpu.dot_dimension_numbers<[1], [0], [0], [1], [0, 0, 1, 1], [], []>} : vector<16x128xbf16>, vector<128x256xbf16>, vector<16x256xf32> -> vector<16x256xf32>
    %578 = vector.shape_cast %575 : vector<256xf32> to vector<1x256xf32>
    %579 = vector.broadcast %578 : vector<1x256xf32> to vector<16x256xf32>
    %580 = arith.addf %577, %579 : vector<16x256xf32>
    %cst_238 = arith.constant 0.000000e+00 : f32
    %581 = vector.broadcast %cst_238 : f32 to vector<16x256xf32>
    %582 = arith.maximumf %580, %581 : vector<16x256xf32>
    %c9_239 = arith.constant 9 : index
    %c0_240 = arith.constant 0 : index
    %c0_241 = arith.constant 0 : index
    %583 = vector.load %arg5[%c9_239, %c0_240, %c0_241] : memref<11x256x128xbf16, #tpu.memory_space<vmem>>, vector<1x256x128xbf16>
    %584 = vector.shape_cast %583 : vector<1x256x128xbf16> to vector<256x128xbf16>
    %c38 = arith.constant 38 : index
    %c0_242 = arith.constant 0 : index
    %585 = vector.load %arg9[%c38, %c0_242] : memref<44x256xf32, #tpu.memory_space<vmem>>, vector<1x128xf32>
    %586 = vector.shape_cast %585 : vector<1x128xf32> to vector<128xf32>
    %587 = arith.truncf %582 : vector<16x256xf32> to vector<16x256xbf16>
    %cst_243 = arith.constant dense<0.000000e+00> : vector<16x128xf32>
    %588 = tpu.matmul %587, %584, %cst_243 {dimension_numbers = #tpu.dot_dimension_numbers<[1], [0], [0], [1], [0, 0, 1, 1], [], []>} : vector<16x256xbf16>, vector<256x128xbf16>, vector<16x128xf32> -> vector<16x128xf32>
    %589 = vector.shape_cast %586 : vector<128xf32> to vector<1x128xf32>
    %590 = vector.broadcast %589 : vector<1x128xf32> to vector<16x128xf32>
    %591 = arith.addf %588, %590 : vector<16x128xf32>
    %cst_244 = arith.constant 0.000000e+00 : f32
    %592 = vector.broadcast %cst_244 : f32 to vector<16x128xf32>
    %593 = arith.maximumf %591, %592 : vector<16x128xf32>
    %c9_245 = arith.constant 9 : index
    %c0_246 = arith.constant 0 : index
    %c0_247 = arith.constant 0 : index
    %594 = vector.load %arg6[%c9_245, %c0_246, %c0_247] : memref<10x128x32xbf16, #tpu.memory_space<vmem>>, vector<1x128x32xbf16>
    %595 = vector.shape_cast %594 : vector<1x128x32xbf16> to vector<128x32xbf16>
    %c39 = arith.constant 39 : index
    %c0_248 = arith.constant 0 : index
    %596 = vector.load %arg9[%c39, %c0_248] : memref<44x256xf32, #tpu.memory_space<vmem>>, vector<1x32xf32>
    %597 = vector.shape_cast %596 : vector<1x32xf32> to vector<32xf32>
    %598 = arith.truncf %593 : vector<16x128xf32> to vector<16x128xbf16>
    %cst_249 = arith.constant dense<0.000000e+00> : vector<16x32xf32>
    %599 = tpu.matmul %598, %595, %cst_249 {dimension_numbers = #tpu.dot_dimension_numbers<[1], [0], [0], [1], [0, 0, 1, 1], [], []>} : vector<16x128xbf16>, vector<128x32xbf16>, vector<16x32xf32> -> vector<16x32xf32>
    %600 = vector.shape_cast %597 : vector<32xf32> to vector<1x32xf32>
    %601 = vector.broadcast %600 : vector<1x32xf32> to vector<16x32xf32>
    %602 = arith.addf %599, %601 : vector<16x32xf32>
    %cst_250 = arith.constant 0.000000e+00 : f32
    %603 = vector.broadcast %cst_250 : f32 to vector<16x32xf32>
    %604 = arith.maximumf %602, %603 : vector<16x32xf32>
    %c9_251 = arith.constant 9 : index
    %c0_252 = arith.constant 0 : index
    %c0_253 = arith.constant 0 : index
    %605 = vector.load %arg7[%c9_251, %c0_252, %c0_253] : memref<10x32x128xbf16, #tpu.memory_space<vmem>>, vector<1x32x128xbf16>
    %606 = vector.shape_cast %605 : vector<1x32x128xbf16> to vector<32x128xbf16>
    %c40 = arith.constant 40 : index
    %c0_254 = arith.constant 0 : index
    %607 = vector.load %arg9[%c40, %c0_254] : memref<44x256xf32, #tpu.memory_space<vmem>>, vector<1x128xf32>
    %608 = vector.shape_cast %607 : vector<1x128xf32> to vector<128xf32>
    %609 = arith.truncf %604 : vector<16x32xf32> to vector<16x32xbf16>
    %cst_255 = arith.constant dense<0.000000e+00> : vector<16x128xf32>
    %610 = tpu.matmul %609, %606, %cst_255 {dimension_numbers = #tpu.dot_dimension_numbers<[1], [0], [0], [1], [0, 0, 1, 1], [], []>} : vector<16x32xbf16>, vector<32x128xbf16>, vector<16x128xf32> -> vector<16x128xf32>
    %611 = vector.shape_cast %608 : vector<128xf32> to vector<1x128xf32>
    %612 = vector.broadcast %611 : vector<1x128xf32> to vector<16x128xf32>
    %613 = arith.addf %610, %612 : vector<16x128xf32>
    %cst_256 = arith.constant 0.000000e+00 : f32
    %614 = vector.broadcast %cst_256 : f32 to vector<16x128xf32>
    %615 = arith.maximumf %613, %614 : vector<16x128xf32>
    %c10_257 = arith.constant 10 : index
    %c0_258 = arith.constant 0 : index
    %c0_259 = arith.constant 0 : index
    %616 = vector.load %arg4[%c10_257, %c0_258, %c0_259] : memref<11x128x256xbf16, #tpu.memory_space<vmem>>, vector<1x128x256xbf16>
    %617 = vector.shape_cast %616 : vector<1x128x256xbf16> to vector<128x256xbf16>
    %c41 = arith.constant 41 : index
    %c0_260 = arith.constant 0 : index
    %618 = vector.load %arg9[%c41, %c0_260] : memref<44x256xf32, #tpu.memory_space<vmem>>, vector<1x256xf32>
    %619 = vector.shape_cast %618 : vector<1x256xf32> to vector<256xf32>
    %620 = arith.truncf %615 : vector<16x128xf32> to vector<16x128xbf16>
    %cst_261 = arith.constant dense<0.000000e+00> : vector<16x256xf32>
    %621 = tpu.matmul %620, %617, %cst_261 {dimension_numbers = #tpu.dot_dimension_numbers<[1], [0], [0], [1], [0, 0, 1, 1], [], []>} : vector<16x128xbf16>, vector<128x256xbf16>, vector<16x256xf32> -> vector<16x256xf32>
    %622 = vector.shape_cast %619 : vector<256xf32> to vector<1x256xf32>
    %623 = vector.broadcast %622 : vector<1x256xf32> to vector<16x256xf32>
    %624 = arith.addf %621, %623 : vector<16x256xf32>
    %cst_262 = arith.constant 0.000000e+00 : f32
    %625 = vector.broadcast %cst_262 : f32 to vector<16x256xf32>
    %626 = arith.maximumf %624, %625 : vector<16x256xf32>
    %c10_263 = arith.constant 10 : index
    %c0_264 = arith.constant 0 : index
    %c0_265 = arith.constant 0 : index
    %627 = vector.load %arg5[%c10_263, %c0_264, %c0_265] : memref<11x256x128xbf16, #tpu.memory_space<vmem>>, vector<1x256x128xbf16>
    %628 = vector.shape_cast %627 : vector<1x256x128xbf16> to vector<256x128xbf16>
    %c42 = arith.constant 42 : index
    %c0_266 = arith.constant 0 : index
    %629 = vector.load %arg9[%c42, %c0_266] : memref<44x256xf32, #tpu.memory_space<vmem>>, vector<1x128xf32>
    %630 = vector.shape_cast %629 : vector<1x128xf32> to vector<128xf32>
    %631 = arith.truncf %626 : vector<16x256xf32> to vector<16x256xbf16>
    %cst_267 = arith.constant dense<0.000000e+00> : vector<16x128xf32>
    %632 = tpu.matmul %631, %628, %cst_267 {dimension_numbers = #tpu.dot_dimension_numbers<[1], [0], [0], [1], [0, 0, 1, 1], [], []>} : vector<16x256xbf16>, vector<256x128xbf16>, vector<16x128xf32> -> vector<16x128xf32>
    %633 = vector.shape_cast %630 : vector<128xf32> to vector<1x128xf32>
    %634 = vector.broadcast %633 : vector<1x128xf32> to vector<16x128xf32>
    %635 = arith.addf %632, %634 : vector<16x128xf32>
    %cst_268 = arith.constant 0.000000e+00 : f32
    %636 = vector.broadcast %cst_268 : f32 to vector<16x128xf32>
    %637 = arith.maximumf %635, %636 : vector<16x128xf32>
    %c0_269 = arith.constant 0 : index
    %c0_270 = arith.constant 0 : index
    %c0_271 = arith.constant 0 : index
    %638 = vector.load %arg8[%c0_269, %c0_270, %c0_271] : memref<1x128x8xbf16, #tpu.memory_space<vmem>>, vector<1x128x8xbf16>
    %639 = vector.shape_cast %638 : vector<1x128x8xbf16> to vector<128x8xbf16>
    %c43 = arith.constant 43 : index
    %c0_272 = arith.constant 0 : index
    %640 = vector.load %arg9[%c43, %c0_272] : memref<44x256xf32, #tpu.memory_space<vmem>>, vector<1x8xf32>
    %641 = vector.shape_cast %640 : vector<1x8xf32> to vector<8xf32>
    %642 = arith.truncf %637 : vector<16x128xf32> to vector<16x128xbf16>
    %cst_273 = arith.constant dense<0.000000e+00> : vector<16x8xf32>
    %643 = tpu.matmul %642, %639, %cst_273 {dimension_numbers = #tpu.dot_dimension_numbers<[1], [0], [0], [1], [0, 0, 1, 1], [], []>} : vector<16x128xbf16>, vector<128x8xbf16>, vector<16x8xf32> -> vector<16x8xf32>
    %644 = vector.shape_cast %641 : vector<8xf32> to vector<1x8xf32>
    %645 = vector.broadcast %644 : vector<1x8xf32> to vector<16x8xf32>
    %646 = arith.addf %643, %645 : vector<16x8xf32>
    %647 = arith.negf %646 : vector<16x8xf32>
    %648 = math.exp %647 : vector<16x8xf32>
    %cst_274 = arith.constant 1.000000e+00 : f32
    %649 = vector.broadcast %cst_274 : f32 to vector<16x8xf32>
    %650 = arith.addf %649, %648 : vector<16x8xf32>
    %651 = arith.divf %649, %650 : vector<16x8xf32>
    %652 = tpu.iota {dimensions = array<i32: 1>} : vector<16x8xi32>
    %c1_i32 = arith.constant 1 : i32
    %653 = vector.broadcast %c1_i32 : i32 to vector<16x8xi32>
    %654 = arith.cmpi slt, %652, %653 : vector<16x8xi32>
    %cst_275 = arith.constant 0.000000e+00 : f32
    %655 = vector.broadcast %cst_275 : f32 to vector<16x8xf32>
    %656 = arith.select %654, %651, %655 : vector<16x8xi1>, vector<16x8xf32>
    %657 = vector.shape_cast %656 : vector<16x8xf32> to vector<2x8x8xf32>
    %c0_276 = arith.constant 0 : index
    %c0_277 = arith.constant 0 : index
    %c0_278 = arith.constant 0 : index
    %658 = vector.load %arg10[%c0_276, %c0_277, %c0_278] : memref<2x8x8xf32, #tpu.memory_space<vmem>>, vector<2x8x8xf32>
    tpu.vector_store %arg10[%c0_276, %c0_277, %c0_278], %657 {strides = array<i32>} : memref<2x8x8xf32, #tpu.memory_space<vmem>>, vector<2x8x8xf32>,
    return
  }
  func.func @transform_0(%arg0: i32) -> (i32, i32, i32) {
    %c0_i32 = arith.constant 0 : i32
    %c0_i32_0 = arith.constant 0 : i32
    %c0_i32_1 = arith.constant 0 : i32
    return %arg0, %c0_i32, %c0_i32_0 : i32, i32, i32
  }
  func.func @transform_1(%arg0: i32) -> (i32, i32, i32) {
    %c0_i32 = arith.constant 0 : i32
    %c0_i32_0 = arith.constant 0 : i32
    %c0_i32_1 = arith.constant 0 : i32
    return %arg0, %c0_i32, %c0_i32_0 : i32, i32, i32
  }
  func.func @transform_2(%arg0: i32) -> (i32, i32, i32) {
    %c0_i32 = arith.constant 0 : i32
    %c0_i32_0 = arith.constant 0 : i32
    %c0_i32_1 = arith.constant 0 : i32
    %c0_i32_2 = arith.constant 0 : i32
    return %c0_i32, %c0_i32_0, %c0_i32_1 : i32, i32, i32
  }
  func.func @transform_3(%arg0: i32) -> (i32, i32, i32) {
    %c0_i32 = arith.constant 0 : i32
    %c0_i32_0 = arith.constant 0 : i32
    %c0_i32_1 = arith.constant 0 : i32
    %c0_i32_2 = arith.constant 0 : i32
    return %c0_i32, %c0_i32_0, %c0_i32_1 : i32, i32, i32
  }
  func.func @transform_4(%arg0: i32) -> (i32, i32, i32) {
    %c0_i32 = arith.constant 0 : i32
    %c0_i32_0 = arith.constant 0 : i32
    %c0_i32_1 = arith.constant 0 : i32
    %c0_i32_2 = arith.constant 0 : i32
    return %c0_i32, %c0_i32_0, %c0_i32_1 : i32, i32, i32
  }
  func.func @transform_5(%arg0: i32) -> (i32, i32, i32) {
    %c0_i32 = arith.constant 0 : i32
    %c0_i32_0 = arith.constant 0 : i32
    %c0_i32_1 = arith.constant 0 : i32
    %c0_i32_2 = arith.constant 0 : i32
    return %c0_i32, %c0_i32_0, %c0_i32_1 : i32, i32, i32
  }
  func.func @transform_6(%arg0: i32) -> (i32, i32, i32) {
    %c0_i32 = arith.constant 0 : i32
    %c0_i32_0 = arith.constant 0 : i32
    %c0_i32_1 = arith.constant 0 : i32
    %c0_i32_2 = arith.constant 0 : i32
    return %c0_i32, %c0_i32_0, %c0_i32_1 : i32, i32, i32
  }
  func.func @transform_7(%arg0: i32) -> (i32, i32, i32) {
    %c0_i32 = arith.constant 0 : i32
    %c0_i32_0 = arith.constant 0 : i32
    %c0_i32_1 = arith.constant 0 : i32
    %c0_i32_2 = arith.constant 0 : i32
    return %c0_i32, %c0_i32_0, %c0_i32_1 : i32, i32, i32
  }
  func.func @transform_8(%arg0: i32) -> (i32, i32) {
    %c0_i32 = arith.constant 0 : i32
    %c0_i32_0 = arith.constant 0 : i32
    %c0_i32_1 = arith.constant 0 : i32
    return %c0_i32, %c0_i32_0 : i32, i32
  }
  func.func @transform_9(%arg0: i32) -> (i32, i32, i32) {
    %c0_i32 = arith.constant 0 : i32
    %c0_i32_0 = arith.constant 0 : i32
    %c0_i32_1 = arith.constant 0 : i32
    return %arg0, %c0_i32, %c0_i32_0 : i32, i32, i32
  }
}

</mosaic_0001>

<llo_original>
// kernel: tpu_custom_call.1
$region0: #{tpu_custom_call.1}
  #allocation0 [shape = 'u32[]', space=smem, size = 0x4, offset = 0x4, fixed_abs, tag = 'smem constant byte address 0x4 - core index']
  #allocation1 [shape = 'u32[144,128]{1,0:T(1,128)}', space=vmem, size = 0x12000, scoped, tag = 'internal scratch']
  %s0 = inlined_call_operand.vmem [shape: bf16[2,8,16], index: 0, kind: input, shape index: {}]
  %s1 = inlined_call_operand.vmem [shape: bf16[2,8,8], index: 1, kind: input, shape index: {}]
  %s2 = inlined_call_operand.vmem [shape: bf16[1,16,128], index: 2, kind: input, shape index: {}]
  %s3 = inlined_call_operand.hbm [shape: bf16[11,128,256], index: 3, kind: input, shape index: {}]
  %s4 = inlined_call_operand.hbm [shape: bf16[11,256,128], index: 4, kind: input, shape index: {}]
  %s5 = inlined_call_operand.vmem [shape: bf16[10,128,32], index: 5, kind: input, shape index: {}]
  %s6 = inlined_call_operand.vmem [shape: bf16[10,32,128], index: 6, kind: input, shape index: {}]
  %s7 = inlined_call_operand.vmem [shape: bf16[1,128,8], index: 7, kind: input, shape index: {}]
  %s8 = inlined_call_operand.vmem [shape: f32[44,256], index: 8, kind: input, shape index: {}]
  %s9 = inlined_call_operand.hbm [shape: f32[2,8,8], index: 9, kind: output, shape index: {}]
  %s10 = sld [smem:[#allocation0]]
  $region54: #{tpu_custom_call.1} parent=0
    _
  %s12 = ssub.s32 1, %s10
  %s13 = scalar_select 0, %s12, %s10
  $region1: #{tpu_custom_call.1} parent=0
    #allocation2 [shape = 'u8[720896]{0}', space=vmem, size = 0xb0000, scoped, tag = 'input window, operand 3, single buffered']
    #allocation3 [shape = 's32[1]{0}', space=sflag, size = 0x4, scoped, tag = 'scoped memory for tpu_custom_call.1']
    #allocation4 [shape = 's32[1]{0}', space=sflag, size = 0x4, scoped, tag = 'scoped memory for tpu_custom_call.1']
    #allocation5 [shape = 'u8[720896]{0}', space=vmem, size = 0xb0000, scoped, tag = 'input window, operand 4, single buffered']
    #allocation6 [shape = 's32[1]{0}', space=sflag, size = 0x4, scoped, tag = 'scoped memory for tpu_custom_call.1']
    #allocation7 [shape = 'u8[8192]{0}', space=vmem, size = 0x2000, scoped, tag = 'output window, operand 0, single buffered']
    %14 = vsyncpa [#allocation3], 0
    %15 = vsyncpa [#allocation6], 0
    %16 = vsyncpa [#allocation4], 0
    // Predicated region
    $region2: #{tpu_custom_call.1} parent=1 // pred_check
      _
    $region3: #{tpu_custom_call.1} parent=1 // pred_check_branch
      %18 = sbr.rel (0) target = $region5
    $region4: #{tpu_custom_call.1} parent=1 // pred_region
      _
    $region5: #{tpu_custom_call.1} parent=1 // pred_fallthru
      _
    // Predicated region
    $region6: #{tpu_custom_call.1} parent=1 // pred_check
      _
    $region7: #{tpu_custom_call.1} parent=1 // pred_check_branch
      %20 = sbr.rel (0) target = $region9
    $region8: #{tpu_custom_call.1} parent=1 // pred_region
      _
    $region9: #{tpu_custom_call.1} parent=1 // pred_fallthru
      _
    // Predicated region
    $region10: #{tpu_custom_call.1} parent=1 // pred_check
      _
    $region11: #{tpu_custom_call.1} parent=1 // pred_check_branch
      %22 = sbr.rel (0) target = $region13
    $region12: #{tpu_custom_call.1} parent=1 // pred_region
      _
    $region13: #{tpu_custom_call.1} parent=1 // pred_fallthru
      _
    // Predicated region
    $region14: #{tpu_custom_call.1} parent=1 // pred_check
      _
    $region15: #{tpu_custom_call.1} parent=1 // pred_check_branch
      %24 = sbr.rel (0) target = $region17
    $region16: #{tpu_custom_call.1} parent=1 // pred_region
      %s26 = ssub.s32 22528, 22528
      %27 = vsyncadd [#allocation3], %s26
      %s28 = sshll.u32 [#allocation2], 4
      %s29 = int_to_ptr.vmem [resolvable:$true] %s28
      %34 = dma.hbm_to_vmem [thread:$0]  %s3, 22528, %s29, [#allocation3], 128, 128, 8
    $region17: #{tpu_custom_call.1} parent=1 // pred_fallthru
      _
    // Predicated region
    $region18: #{tpu_custom_call.1} parent=1 // pred_check
      _
    $region19: #{tpu_custom_call.1} parent=1 // pred_check_branch
      %36 = sbr.rel (0) target = $region21
    $region20: #{tpu_custom_call.1} parent=1 // pred_region
      %s38 = ssub.s32 22528, 22528
      %39 = vsyncadd [#allocation6], %s38
      %s40 = sshll.u32 [#allocation5], 4
      %s41 = int_to_ptr.vmem [resolvable:$true] %s40
      %46 = dma.hbm_to_vmem [thread:$0]  %s4, 22528, %s41, [#allocation6], 64, 64, 4
    $region21: #{tpu_custom_call.1} parent=1 // pred_fallthru
      _
    // Predicated region
    $region22: #{tpu_custom_call.1} parent=1 // pred_check
      _
    $region23: #{tpu_custom_call.1} parent=1 // pred_check_branch
      %48 = sbr.rel (0) target = $region25
    $region24: #{tpu_custom_call.1} parent=1 // pred_region
      _
    $region25: #{tpu_custom_call.1} parent=1 // pred_fallthru
      _
    // Predicated region
    $region26: #{tpu_custom_call.1} parent=1 // pred_check
      _
    $region27: #{tpu_custom_call.1} parent=1 // pred_check_branch
      %50 = sbr.rel (0) target = $region29
    $region28: #{tpu_custom_call.1} parent=1 // pred_region
      _
    $region29: #{tpu_custom_call.1} parent=1 // pred_fallthru
      _
    // Predicated region
    $region30: #{tpu_custom_call.1} parent=1 // pred_check
      _
    $region31: #{tpu_custom_call.1} parent=1 // pred_check_branch
      %52 = sbr.rel (0) target = $region33
    $region32: #{tpu_custom_call.1} parent=1 // pred_region
      _
    $region33: #{tpu_custom_call.1} parent=1 // pred_fallthru
      _
    // Predicated region
    $region34: #{tpu_custom_call.1} parent=1 // pred_check
      _
    $region35: #{tpu_custom_call.1} parent=1 // pred_check_branch
      %54 = sbr.rel (0) target = $region37
    $region36: #{tpu_custom_call.1} parent=1 // pred_region
      _
    $region37: #{tpu_custom_call.1} parent=1 // pred_fallthru
      _
    // Predicated region
    $region38: #{tpu_custom_call.1} parent=1 // pred_check
      _
    $region39: #{tpu_custom_call.1} parent=1 // pred_check_branch
      %56 = sbr.rel (0) target = $region41
    $region40: #{tpu_custom_call.1} parent=1 // pred_region
      %57 = dma.done [#allocation3], 22528
    $region41: #{tpu_custom_call.1} parent=1 // pred_fallthru
      _
    // Predicated region
    $region42: #{tpu_custom_call.1} parent=1 // pred_check
      _
    $region43: #{tpu_custom_call.1} parent=1 // pred_check_branch
      %59 = sbr.rel (0) target = $region45
    $region44: #{tpu_custom_call.1} parent=1 // pred_region
      %60 = dma.done [#allocation6], 22528
    $region45: #{tpu_custom_call.1} parent=1 // pred_fallthru
      _
    %v62 = vld [vmem:[%s0] sm:$0xf]
    %v63 = vld [vmem:[%s0 + $0x4] sm:$0xf]
    %v64 = vld [vmem:[%s2] sm:$0xf]
    %v65 = vld [vmem:[%s2 + $0x4] sm:$0xf]
    %v66 = vld [vmem:[%s8] ss:$0 sm:$0xff]
    %v69 = vunpack.c.l.b16 %v62
    %v70 = vunpack.c.l.b16 %v63
    %v71 = vpack.c.b16 %v70, %v69
    %v74 = vunpack.c.l.b16 %v64
    %v75 = vunpack.c.l.b16 %v65
    %v76 = vpack.c.b16 %v75, %v74
    %vm78 = vcmask 130048
    %v80 = vsel %vm78, %v71, 0
    %82 = vmatprep.subr.bf16.mxu0 0
    %83 = vmatpush1.bf16.msra.mxu0 %v76
    %84 = vmatprep.subr.bf16.mxu0 0
    %85 = vmatpush1.bf16.msra.mxu0 0
    %86 = vmatprep.subr.bf16.mxu0 0
    %87 = vmatpush1.bf16.msra.mxu0 0
    %88 = vmatprep.subr.bf16.mxu0 0
    %89 = vmatpush1.bf16.msra.mxu0 0
    %90 = vmatprep.subr.bf16.mxu0 0
    %91 = vmatpush1.bf16.msra.mxu0 0
    %92 = vmatprep.subr.bf16.mxu0 0
    %93 = vmatpush1.bf16.msra.mxu0 0
    %94 = vmatprep.subr.bf16.mxu0 0
    %95 = vmatpush1.bf16.msra.mxu0 0
    %96 = vmatprep.subr.bf16.mxu0 0
    %97 = vmatpush1.bf16.msra.mxu0 0
    %98 = vmatprep.subr.bf16.mxu0 0
    %99 = vmatpush1.bf16.msra.mxu0 0
    %100 = vmatprep.subr.bf16.mxu0 0
    %101 = vmatpush1.bf16.msra.mxu0 0
    %102 = vmatprep.subr.bf16.mxu0 0
    %103 = vmatpush1.bf16.msra.mxu0 0
    %104 = vmatprep.subr.bf16.mxu0 0
    %105 = vmatpush1.bf16.msra.mxu0 0
    %106 = vmatprep.subr.bf16.mxu0 0
    %107 = vmatpush1.bf16.msra.mxu0 0
    %108 = vmatprep.subr.bf16.mxu0 0
    %109 = vmatpush1.bf16.msra.mxu0 0
    %110 = vmatprep.subr.bf16.mxu0 0
    %111 = vmatpush1.bf16.msra.mxu0 0
    %112 = vmatprep.subr.bf16.mxu0 0
    %113 = vmatpush1.bf16.msra.mxu0 0
    %114 = vmatprep.mubr.bf16.mxu0 0
    %115 = vmatmul.mubr.bf16.gmra.mrb[0].mxu0 %v80
    %v116 = vpop.f32.mrb[0].mxu0
    %v117 = vadd.f32 %v66, %v116
    %v118 = vpop.f32.mrb[0].mxu0
    %v119 = vpop.f32.mrb[0].mxu0
    %v120 = vadd.f32 %v66, %v119
    %v121 = vpop.f32.mrb[0].mxu0
    %122 = vdwg.mxu0
    %v123 = vmax.f32 %v117, 0.0
    %v124 = vmax.f32 %v120, 0.0
    %v125 = vld [vmem:[#allocation2] sm:$0xff]
    %v126 = vld [vmem:[#allocation2 + $0x8] sm:$0xff]
    %v127 = vld [vmem:[#allocation2 + $0x10] sm:$0xff]
    %v128 = vld [vmem:[#allocation2 + $0x18] sm:$0xff]
    %v129 = vld [vmem:[#allocation2 + $0x20] sm:$0xff]
    %v130 = vld [vmem:[#allocation2 + $0x28] sm:$0xff]
    %v131 = vld [vmem:[#allocation2 + $0x30] sm:$0xff]
    %v132 = vld [vmem:[#allocation2 + $0x38] sm:$0xff]
    %v133 = vld [vmem:[#allocation2 + $0x40] sm:$0xff]
    %v134 = vld [vmem:[#allocation2 + $0x48] sm:$0xff]
    %v135 = vld [vmem:[#allocation2 + $0x50] sm:$0xff]
    %v136 = vld [vmem:[#allocation2 + $0x58] sm:$0xff]
    %v137 = vld [vmem:[#allocation2 + $0x60] sm:$0xff]
    %v138 = vld [vmem:[#allocation2 + $0x68] sm:$0xff]
    %v139 = vld [vmem:[#allocation2 + $0x70] sm:$0xff]
    %v140 = vld [vmem:[#allocation2 + $0x78] sm:$0xff]
    %s141 = scalar_lea.vmem %s8, 1
    %v142 = vld [vmem:[%s141] ss:$8 sm:$0x3]
    %v143 = vpack.c.bf16 %v124, %v123
    %v145 = vlaneseq
    %v146 = vshrl.u32 %v145, 7
    %v147 = vsub.s32 0, %v146
    %v148 = vrot.slane %v142, %v147
    %v149 = vlaneseq
    %v150 = vshrl.u32 %v149, 7
    %v151 = vsub.s32 1, %v150
    %v152 = vrot.slane %v142, %v151
    %v171 = vunpack.c.l.b16 %v125
    %v172 = vunpack.c.h.b16 %v125
    %v173 = vunpack.c.l.b16 %v126
    %v174 = vunpack.c.h.b16 %v126
    %v175 = vunpack.c.l.b16 %v127
    %v176 = vunpack.c.h.b16 %v127
    %v177 = vunpack.c.l.b16 %v128
    %v178 = vunpack.c.h.b16 %v128
    %v179 = vunpack.c.l.b16 %v129
    %v180 = vunpack.c.h.b16 %v129
    %v181 = vunpack.c.l.b16 %v130
    %v182 = vunpack.c.h.b16 %v130
    %v183 = vunpack.c.l.b16 %v131
    %v184 = vunpack.c.h.b16 %v131
    %v185 = vunpack.c.l.b16 %v132
    %v186 = vunpack.c.h.b16 %v132
    %v187 = vunpack.c.l.b16 %v133
    %v188 = vunpack.c.h.b16 %v133
    %v189 = vunpack.c.l.b16 %v134
    %v190 = vunpack.c.h.b16 %v134
    %v191 = vunpack.c.l.b16 %v135
    %v192 = vunpack.c.h.b16 %v135
    %v193 = vunpack.c.l.b16 %v136
    %v194 = vunpack.c.h.b16 %v136
    %v195 = vunpack.c.l.b16 %v137
    %v196 = vunpack.c.h.b16 %v137
    %v197 = vunpack.c.l.b16 %v138
    %v198 = vunpack.c.h.b16 %v138
    %v199 = vunpack.c.l.b16 %v139
    %v200 = vunpack.c.h.b16 %v139
    %v201 = vunpack.c.l.b16 %v140
    %v202 = vunpack.c.h.b16 %v140
    %v203 = vpack.c.b16 %v173, %v171
    %v204 = vpack.c.b16 %v174, %v172
    %v205 = vpack.c.b16 %v177, %v175
    %v206 = vpack.c.b16 %v178, %v176
    %v207 = vpack.c.b16 %v181, %v179
    %v208 = vpack.c.b16 %v182, %v180
    %v209 = vpack.c.b16 %v185, %v183
    %v210 = vpack.c.b16 %v186, %v184
    %v211 = vpack.c.b16 %v189, %v187
    %v212 = vpack.c.b16 %v190, %v188
    %v213 = vpack.c.b16 %v193, %v191
    %v214 = vpack.c.b16 %v194, %v192
    %v215 = vpack.c.b16 %v197, %v195
    %v216 = vpack.c.b16 %v198, %v196
    %v217 = vpack.c.b16 %v201, %v199
    %v218 = vpack.c.b16 %v202, %v200
    %235 = vmatprep.subr.bf16.mxu0 %v204
    %236 = vmatpush1.bf16.msra.mxu0 %v203
    %237 = vmatprep.subr.bf16.mxu0 %v206
    %238 = vmatpush1.bf16.msra.mxu0 %v205
    %239 = vmatprep.subr.bf16.mxu0 %v208
    %240 = vmatpush1.bf16.msra.mxu0 %v207
    %241 = vmatprep.subr.bf16.mxu0 %v210
    %242 = vmatpush1.bf16.msra.mxu0 %v209
    %243 = vmatprep.subr.bf16.mxu0 %v212
    %244 = vmatpush1.bf16.msra.mxu0 %v211
    %245 = vmatprep.subr.bf16.mxu0 %v214
    %246 = vmatpush1.bf16.msra.mxu0 %v213
    %247 = vmatprep.subr.bf16.mxu0 %v216
    %248 = vmatpush1.bf16.msra.mxu0 %v215
    %249 = vmatprep.subr.bf16.mxu0 %v218
    %250 = vmatpush1.bf16.msra.mxu0 %v217
    %251 = vmatprep.subr.bf16.mxu0 0
    %252 = vmatpush1.bf16.msra.mxu0 0
    %253 = vmatprep.subr.bf16.mxu0 0
    %254 = vmatpush1.bf16.msra.mxu0 0
    %255 = vmatprep.subr.bf16.mxu0 0
    %256 = vmatpush1.bf16.msra.mxu0 0
    %257 = vmatprep.subr.bf16.mxu0 0
    %258 = vmatpush1.bf16.msra.mxu0 0
    %259 = vmatprep.subr.bf16.mxu0 0
    %260 = vmatpush1.bf16.msra.mxu0 0
    %261 = vmatprep.subr.bf16.mxu0 0
    %262 = vmatpush1.bf16.msra.mxu0 0
    %263 = vmatprep.subr.bf16.mxu0 0
    %264 = vmatpush1.bf16.msra.mxu0 0
    %265 = vmatprep.subr.bf16.mxu0 0
    %266 = vmatpush1.bf16.msra.mxu0 0
    %267 = vmatprep.mubr.bf16.mxu0 0
    %268 = vmatmul.mubr.bf16.gmra.mrb[0].mxu0 %v143
    %v269 = vpop.f32.mrb[0].mxu0
    %v270 = vadd.f32 %v148, %v269
    %v271 = vpop.f32.mrb[0].mxu0
    %v272 = vadd.f32 %v152, %v271
    %v273 = vpop.f32.mrb[0].mxu0
    %v274 = vadd.f32 %v148, %v273
    %v275 = vpop.f32.mrb[0].mxu0
    %v276 = vadd.f32 %v152, %v275
    %277 = vdwg.mxu0
    %v278 = vmax.f32 %v270, 0.0
    %v279 = vmax.f32 %v272, 0.0
    %v280 = vmax.f32 %v274, 0.0
    %v281 = vmax.f32 %v276, 0.0
    %v282 = vld [vmem:[#allocation5] sm:$0xf]
    %v283 = vld [vmem:[#allocation5 + $0x4] sm:$0xf]
    %v284 = vld [vmem:[#allocation5 + $0x8] sm:$0xf]
    %v285 = vld [vmem:[#allocation5 + $0xc] sm:$0xf]
    %v286 = vld [vmem:[#allocation5 + $0x10] sm:$0xf]
    %v287 = vld [vmem:[#allocation5 + $0x14] sm:$0xf]
    %v288 = vld [vmem:[#allocation5 + $0x18] sm:$0xf]
    %v289 = vld [vmem:[#allocation5 + $0x1c] sm:$0xf]
    %v290 = vld [vmem:[#allocation5 + $0x20] sm:$0xf]
    %v291 = vld [vmem:[#allocation5 + $0x24] sm:$0xf]
    %v292 = vld [vmem:[#allocation5 + $0x28] sm:$0xf]
    %v293 = vld [vmem:[#allocation5 + $0x2c] sm:$0xf]
    %v294 = vld [vmem:[#allocation5 + $0x30] sm:$0xf]
    %v295 = vld [vmem:[#allocation5 + $0x34] sm:$0xf]
    %v296 = vld [vmem:[#allocation5 + $0x38] sm:$0xf]
    %v297 = vld [vmem:[#allocation5 + $0x3c] sm:$0xf]
    %v298 = vld [vmem:[#allocation5 + $0x40] sm:$0xf]
    %v299 = vld [vmem:[#allocation5 + $0x44] sm:$0xf]
    %v300 = vld [vmem:[#allocation5 + $0x48] sm:$0xf]
    %v301 = vld [vmem:[#allocation5 + $0x4c] sm:$0xf]
    %v302 = vld [vmem:[#allocation5 + $0x50] sm:$0xf]
    %v303 = vld [vmem:[#allocation5 + $0x54] sm:$0xf]
    %v304 = vld [vmem:[#allocation5 + $0x58] sm:$0xf]
    %v305 = vld [vmem:[#allocation5 + $0x5c] sm:$0xf]
    %v306 = vld [vmem:[#allocation5 + $0x60] sm:$0xf]
    %v307 = vld [vmem:[#allocation5 + $0x64] sm:$0xf]
    %v308 = vld [vmem:[#allocation5 + $0x68] sm:$0xf]
    %v309 = vld [vmem:[#allocation5 + $0x6c] sm:$0xf]
    %v310 = vld [vmem:[#allocation5 + $0x70] sm:$0xf]
    %v311 = vld [vmem:[#allocation5 + $0x74] sm:$0xf]
    %v312 = vld [vmem:[#allocation5 + $0x78] sm:$0xf]
    %v313 = vld [vmem:[#allocation5 + $0x7c] sm:$0xf]
    %v314 = vld [vmem:[%s8 + $0x2] ss:$0 sm:$0xff]
    %v315 = vpack.c.bf16 %v280, %v278
    %v316 = vpack.c.bf16 %v281, %v279
    %v349 = vunpack.c.l.b16 %v282
    %v350 = vunpack.c.l.b16 %v283
    %v351 = vunpack.c.l.b16 %v284
    %v352 = vunpack.c.l.b16 %v285
    %v353 = vunpack.c.l.b16 %v286
    %v354 = vunpack.c.l.b16 %v287
    %v355 = vunpack.c.l.b16 %v288
    %v356 = vunpack.c.l.b16 %v289
    %v357 = vunpack.c.l.b16 %v290
    %v358 = vunpack.c.l.b16 %v291
    %v359 = vunpack.c.l.b16 %v292
    %v360 = vunpack.c.l.b16 %v293
    %v361 = vunpack.c.l.b16 %v294
    %v362 = vunpack.c.l.b16 %v295
    %v363 = vunpack.c.l.b16 %v296
    %v364 = vunpack.c.l.b16 %v297
    %v365 = vunpack.c.l.b16 %v298
    %v366 = vunpack.c.l.b16 %v299
    %v367 = vunpack.c.l.b16 %v300
    %v368 = vunpack.c.l.b16 %v301
    %v369 = vunpack.c.l.b16 %v302
    %v370 = vunpack.c.l.b16 %v303
    %v371 = vunpack.c.l.b16 %v304
    %v372 = vunpack.c.l.b16 %v305
    %v373 = vunpack.c.l.b16 %v306
    %v374 = vunpack.c.l.b16 %v307
    %v375 = vunpack.c.l.b16 %v308
    %v376 = vunpack.c.l.b16 %v309
    %v377 = vunpack.c.l.b16 %v310
    %v378 = vunpack.c.l.b16 %v311
    %v379 = vunpack.c.l.b16 %v312
    %v380 = vunpack.c.l.b16 %v313
    %v381 = vpack.c.b16 %v350, %v349
    %v382 = vpack.c.b16 %v352, %v351
    %v383 = vpack.c.b16 %v354, %v353
    %v384 = vpack.c.b16 %v356, %v355
    %v385 = vpack.c.b16 %v358, %v357
    %v386 = vpack.c.b16 %v360, %v359
    %v387 = vpack.c.b16 %v362, %v361
    %v388 = vpack.c.b16 %v364, %v363
    %v389 = vpack.c.b16 %v366, %v365
    %v390 = vpack.c.b16 %v368, %v367
    %v391 = vpack.c.b16 %v370, %v369
    %v392 = vpack.c.b16 %v372, %v371
    %v393 = vpack.c.b16 %v374, %v373
    %v394 = vpack.c.b16 %v376, %v375
    %v395 = vpack.c.b16 %v378, %v377
    %v396 = vpack.c.b16 %v380, %v379
    %413 = vmatprep.subr.bf16.mxu0 0
    %414 = vmatpush1.bf16.msra.mxu0 %v381
    %415 = vmatprep.subr.bf16.mxu0 0
    %416 = vmatpush1.bf16.msra.mxu0 %v382
    %417 = vmatprep.subr.bf16.mxu0 0
    %418 = vmatpush1.bf16.msra.mxu0 %v383
    %419 = vmatprep.subr.bf16.mxu0 0
    %420 = vmatpush1.bf16.msra.mxu0 %v384
    %421 = vmatprep.subr.bf16.mxu0 0
    %422 = vmatpush1.bf16.msra.mxu0 %v385
    %423 = vmatprep.subr.bf16.mxu0 0
    %424 = vmatpush1.bf16.msra.mxu0 %v386
    %425 = vmatprep.subr.bf16.mxu0 0
    %426 = vmatpush1.bf16.msra.mxu0 %v387
    %427 = vmatprep.subr.bf16.mxu0 0
    %428 = vmatpush1.bf16.msra.mxu0 %v388
    %429 = vmatprep.subr.bf16.mxu0 0
    %430 = vmatpush1.bf16.msra.mxu0 %v389
    %431 = vmatprep.subr.bf16.mxu0 0
    %432 = vmatpush1.bf16.msra.mxu0 %v390
    %433 = vmatprep.subr.bf16.mxu0 0
    %434 = vmatpush1.bf16.msra.mxu0 %v391
    %435 = vmatprep.subr.bf16.mxu0 0
    %436 = vmatpush1.bf16.msra.mxu0 %v392
    %437 = vmatprep.subr.bf16.mxu0 0
    %438 = vmatpush1.bf16.msra.mxu0 %v393
    %439 = vmatprep.subr.bf16.mxu0 0
    %440 = vmatpush1.bf16.msra.mxu0 %v394
    %441 = vmatprep.subr.bf16.mxu0 0
    %442 = vmatpush1.bf16.msra.mxu0 %v395
    %443 = vmatprep.subr.bf16.mxu0 0
    %444 = vmatpush1.bf16.msra.mxu0 %v396
    %445 = vmatprep.mubr.bf16.mxu0 %v316
    %446 = vmatmul.mubr.bf16.gmra.mrb[0].mxu0 %v315
    %v447 = vpop.f32.mrb[0].mxu0
    %v448 = vadd.f32 %v314, %v447
    %v449 = vpop.f32.mrb[0].mxu0
    %v450 = vpop.f32.mrb[0].mxu0
    %v451 = vadd.f32 %v314, %v450
    %v452 = vpop.f32.mrb[0].mxu0
    %453 = vdwg.mxu0
    %v454 = vmax.f32 %v448, 0.0
    %v455 = vmax.f32 %v451, 0.0
    %v456 = vld [vmem:[%s5] sm:$0xf]
    %v457 = vld [vmem:[%s5 + $0x4] sm:$0xf]
    %v458 = vld [vmem:[%s5 + $0x8] sm:$0xf]
    %v459 = vld [vmem:[%s5 + $0xc] sm:$0xf]
    %v460 = vld [vmem:[%s5 + $0x10] sm:$0xf]
    %v461 = vld [vmem:[%s5 + $0x14] sm:$0xf]
    %v462 = vld [vmem:[%s5 + $0x18] sm:$0xf]
    %v463 = vld [vmem:[%s5 + $0x1c] sm:$0xf]
    %v464 = vld [vmem:[%s5 + $0x20] sm:$0xf]
    %v465 = vld [vmem:[%s5 + $0x24] sm:$0xf]
    %v466 = vld [vmem:[%s5 + $0x28] sm:$0xf]
    %v467 = vld [vmem:[%s5 + $0x2c] sm:$0xf]
    %v468 = vld [vmem:[%s5 + $0x30] sm:$0xf]
    %v469 = vld [vmem:[%s5 + $0x34] sm:$0xf]
    %v470 = vld [vmem:[%s5 + $0x38] sm:$0xf]
    %v471 = vld [vmem:[%s5 + $0x3c] sm:$0xf]
    %v472 = vld [vmem:[%s8 + $0x3] ss:$0 sm:$0xff]
    %v473 = vpack.c.bf16 %v455, %v454
    %v490 = vunpack.c.l.b16 %v456
    %v491 = vunpack.c.l.b16 %v457
    %v492 = vunpack.c.l.b16 %v458
    %v493 = vunpack.c.l.b16 %v459
    %v494 = vunpack.c.l.b16 %v460
    %v495 = vunpack.c.l.b16 %v461
    %v496 = vunpack.c.l.b16 %v462
    %v497 = vunpack.c.l.b16 %v463
    %v498 = vunpack.c.l.b16 %v464
    %v499 = vunpack.c.l.b16 %v465
    %v500 = vunpack.c.l.b16 %v466
    %v501 = vunpack.c.l.b16 %v467
    %v502 = vunpack.c.l.b16 %v468
    %v503 = vunpack.c.l.b16 %v469
    %v504 = vunpack.c.l.b16 %v470
    %v505 = vunpack.c.l.b16 %v471
    %v506 = vpack.c.b16 %v491, %v490
    %v507 = vpack.c.b16 %v493, %v492
    %v508 = vpack.c.b16 %v495, %v494
    %v509 = vpack.c.b16 %v497, %v496
    %v510 = vpack.c.b16 %v499, %v498
    %v511 = vpack.c.b16 %v501, %v500
    %v512 = vpack.c.b16 %v503, %v502
    %v513 = vpack.c.b16 %v505, %v504
    %522 = vmatprep.subr.bf16.mxu0 0
    %523 = vmatpush1.bf16.msra.mxu0 %v506
    %524 = vmatprep.subr.bf16.mxu0 0
    %525 = vmatpush1.bf16.msra.mxu0 %v507
    %526 = vmatprep.subr.bf16.mxu0 0
    %527 = vmatpush1.bf16.msra.mxu0 %v508
    %528 = vmatprep.subr.bf16.mxu0 0
    %529 = vmatpush1.bf16.msra.mxu0 %v509
    %530 = vmatprep.subr.bf16.mxu0 0
    %531 = vmatpush1.bf16.msra.mxu0 %v510
    %532 = vmatprep.subr.bf16.mxu0 0
    %533 = vmatpush1.bf16.msra.mxu0 %v511
    %534 = vmatprep.subr.bf16.mxu0 0
    %535 = vmatpush1.bf16.msra.mxu0 %v512
    %536 = vmatprep.subr.bf16.mxu0 0
    %537 = vmatpush1.bf16.msra.mxu0 %v513
    %538 = vmatprep.subr.bf16.mxu0 0
    %539 = vmatpush1.bf16.msra.mxu0 0
    %540 = vmatprep.subr.bf16.mxu0 0
    %541 = vmatpush1.bf16.msra.mxu0 0
    %542 = vmatprep.subr.bf16.mxu0 0
    %543 = vmatpush1.bf16.msra.mxu0 0
    %544 = vmatprep.subr.bf16.mxu0 0
    %545 = vmatpush1.bf16.msra.mxu0 0
    %546 = vmatprep.subr.bf16.mxu0 0
    %547 = vmatpush1.bf16.msra.mxu0 0
    %548 = vmatprep.subr.bf16.mxu0 0
    %549 = vmatpush1.bf16.msra.mxu0 0
    %550 = vmatprep.subr.bf16.mxu0 0
    %551 = vmatpush1.bf16.msra.mxu0 0
    %552 = vmatprep.subr.bf16.mxu0 0
    %553 = vmatpush1.bf16.msra.mxu0 0
    %554 = vmatprep.mubr.bf16.mxu0 0
    %555 = vmatmul.mubr.bf16.gmra.mrb[0].mxu0 %v473
    %v556 = vpop.f32.mrb[0].mxu0
    %v557 = vadd.f32 %v472, %v556
    %v558 = vpop.f32.mrb[0].mxu0
    %v559 = vpop.f32.mrb[0].mxu0
    %v560 = vadd.f32 %v472, %v559
    %v561 = vpop.f32.mrb[0].mxu0
    %562 = vdwg.mxu0
    %v563 = vmax.f32 %v557, 0.0
    %v564 = vmax.f32 %v560, 0.0
    %v565 = vld [vmem:[%s1] sm:$0xf]
    %v566 = vld [vmem:[%s1 + $0x4] sm:$0xf]
    %v567 = vunpack.c.l.bf16 %v565
    %v568 = vunpack.c.l.bf16 %v566
    %v569 = vld [vmem:[%s6] sm:$0xf]
    %v570 = vld [vmem:[%s6 + $0x4] sm:$0xf]
    %v571 = vld [vmem:[%s6 + $0x8] sm:$0xf]
    %v572 = vld [vmem:[%s6 + $0xc] sm:$0xf]
    %v573 = vld [vmem:[%s8 + $0x4] ss:$0 sm:$0xff]
    %v574 = vpack.c.bf16 %v564, %v563
    %v579 = vunpack.c.l.b16 %v569
    %v580 = vunpack.c.l.b16 %v570
    %v581 = vunpack.c.l.b16 %v571
    %v582 = vunpack.c.l.b16 %v572
    %v583 = vpack.c.b16 %v580, %v579
    %v584 = vpack.c.b16 %v582, %v581
    %vm587 = vcmask 261120
    %v589 = vsel %vm587, %v574, 0
    %591 = vmatprep.subr.bf16.mxu0 0
    %592 = vmatpush1.bf16.msra.mxu0 %v583
    %593 = vmatprep.subr.bf16.mxu0 0
    %594 = vmatpush1.bf16.msra.mxu0 %v584
    %595 = vmatprep.subr.bf16.mxu0 0
    %596 = vmatpush1.bf16.msra.mxu0 0
    %597 = vmatprep.subr.bf16.mxu0 0
    %598 = vmatpush1.bf16.msra.mxu0 0
    %599 = vmatprep.subr.bf16.mxu0 0
    %600 = vmatpush1.bf16.msra.mxu0 0
    %601 = vmatprep.subr.bf16.mxu0 0
    %602 = vmatpush1.bf16.msra.mxu0 0
    %603 = vmatprep.subr.bf16.mxu0 0
    %604 = vmatpush1.bf16.msra.mxu0 0
    %605 = vmatprep.subr.bf16.mxu0 0
    %606 = vmatpush1.bf16.msra.mxu0 0
    %607 = vmatprep.subr.bf16.mxu0 0
    %608 = vmatpush1.bf16.msra.mxu0 0
    %609 = vmatprep.subr.bf16.mxu0 0
    %610 = vmatpush1.bf16.msra.mxu0 0
    %611 = vmatprep.subr.bf16.mxu0 0
    %612 = vmatpush1.bf16.msra.mxu0 0
    %613 = vmatprep.subr.bf16.mxu0 0
    %614 = vmatpush1.bf16.msra.mxu0 0
    %615 = vmatprep.subr.bf16.mxu0 0
    %616 = vmatpush1.bf16.msra.mxu0 0
    %617 = vmatprep.subr.bf16.mxu0 0
    %618 = vmatpush1.bf16.msra.mxu0 0
    %619 = vmatprep.subr.bf16.mxu0 0
    %620 = vmatpush1.bf16.msra.mxu0 0
    %621 = vmatprep.subr.bf16.mxu0 0
    %622 = vmatpush1.bf16.msra.mxu0 0
    %623 = vmatprep.mubr.bf16.mxu0 0
    %624 = vmatmul.mubr.bf16.gmra.mrb[0].mxu0 %v589
    %v625 = vpop.f32.mrb[0].mxu0
    %v626 = vadd.f32 %v573, %v625
    %v627 = vpop.f32.mrb[0].mxu0
    %v628 = vpop.f32.mrb[0].mxu0
    %v629 = vadd.f32 %v573, %v628
    %v630 = vpop.f32.mrb[0].mxu0
    %631 = vdwg.mxu0
    %v632 = vmax.f32 %v626, 0.0
    %v633 = vmax.f32 %v629, 0.0
    %s634 = scalar_lea.vmem [#allocation2], 128
    %v635 = vld [vmem:[%s634] sm:$0xff]
    %v636 = vld [vmem:[%s634 + $0x8] sm:$0xff]
    %v637 = vld [vmem:[%s634 + $0x10] sm:$0xff]
    %v638 = vld [vmem:[%s634 + $0x18] sm:$0xff]
    %v639 = vld [vmem:[%s634 + $0x20] sm:$0xff]
    %v640 = vld [vmem:[%s634 + $0x28] sm:$0xff]
    %v641 = vld [vmem:[%s634 + $0x30] sm:$0xff]
    %v642 = vld [vmem:[%s634 + $0x38] sm:$0xff]
    %v643 = vld [vmem:[%s634 + $0x40] sm:$0xff]
    %v644 = vld [vmem:[%s634 + $0x48] sm:$0xff]
    %v645 = vld [vmem:[%s634 + $0x50] sm:$0xff]
    %v646 = vld [vmem:[%s634 + $0x58] sm:$0xff]
    %v647 = vld [vmem:[%s634 + $0x60] sm:$0xff]
    %v648 = vld [vmem:[%s634 + $0x68] sm:$0xff]
    %v649 = vld [vmem:[%s634 + $0x70] sm:$0xff]
    %v650 = vld [vmem:[%s634 + $0x78] sm:$0xff]
    %s651 = scalar_lea.vmem %s8, 5
    %v652 = vld [vmem:[%s651] ss:$8 sm:$0x3]
    %v653 = vpack.c.bf16 %v633, %v632
    %v655 = vlaneseq
    %v656 = vshrl.u32 %v655, 7
    %v657 = vsub.s32 0, %v656
    %v658 = vrot.slane %v652, %v657
    %v659 = vlaneseq
    %v660 = vshrl.u32 %v659, 7
    %v661 = vsub.s32 1, %v660
    %v662 = vrot.slane %v652, %v661
    %v681 = vunpack.c.l.b16 %v635
    %v682 = vunpack.c.h.b16 %v635
    %v683 = vunpack.c.l.b16 %v636
    %v684 = vunpack.c.h.b16 %v636
    %v685 = vunpack.c.l.b16 %v637
    %v686 = vunpack.c.h.b16 %v637
    %v687 = vunpack.c.l.b16 %v638
    %v688 = vunpack.c.h.b16 %v638
    %v689 = vunpack.c.l.b16 %v639
    %v690 = vunpack.c.h.b16 %v639
    %v691 = vunpack.c.l.b16 %v640
    %v692 = vunpack.c.h.b16 %v640
    %v693 = vunpack.c.l.b16 %v641
    %v694 = vunpack.c.h.b16 %v641
    %v695 = vunpack.c.l.b16 %v642
    %v696 = vunpack.c.h.b16 %v642
    %v697 = vunpack.c.l.b16 %v643
    %v698 = vunpack.c.h.b16 %v643
    %v699 = vunpack.c.l.b16 %v644
    %v700 = vunpack.c.h.b16 %v644
    %v701 = vunpack.c.l.b16 %v645
    %v702 = vunpack.c.h.b16 %v645
    %v703 = vunpack.c.l.b16 %v646
    %v704 = vunpack.c.h.b16 %v646
    %v705 = vunpack.c.l.b16 %v647
    %v706 = vunpack.c.h.b16 %v647
    %v707 = vunpack.c.l.b16 %v648
    %v708 = vunpack.c.h.b16 %v648
    %v709 = vunpack.c.l.b16 %v649
    %v710 = vunpack.c.h.b16 %v649
    %v711 = vunpack.c.l.b16 %v650
    %v712 = vunpack.c.h.b16 %v650
    %v713 = vpack.c.b16 %v683, %v681
    %v714 = vpack.c.b16 %v684, %v682
    %v715 = vpack.c.b16 %v687, %v685
    %v716 = vpack.c.b16 %v688, %v686
    %v717 = vpack.c.b16 %v691, %v689
    %v718 = vpack.c.b16 %v692, %v690
    %v719 = vpack.c.b16 %v695, %v693
    %v720 = vpack.c.b16 %v696, %v694
    %v721 = vpack.c.b16 %v699, %v697
    %v722 = vpack.c.b16 %v700, %v698
    %v723 = vpack.c.b16 %v703, %v701
    %v724 = vpack.c.b16 %v704, %v702
    %v725 = vpack.c.b16 %v707, %v705
    %v726 = vpack.c.b16 %v708, %v706
    %v727 = vpack.c.b16 %v711, %v709
    %v728 = vpack.c.b16 %v712, %v710
    %745 = vmatprep.subr.bf16.mxu0 %v714
    %746 = vmatpush1.bf16.msra.mxu0 %v713
    %747 = vmatprep.subr.bf16.mxu0 %v716
    %748 = vmatpush1.bf16.msra.mxu0 %v715
    %749 = vmatprep.subr.bf16.mxu0 %v718
    %750 = vmatpush1.bf16.msra.mxu0 %v717
    %751 = vmatprep.subr.bf16.mxu0 %v720
    %752 = vmatpush1.bf16.msra.mxu0 %v719
    %753 = vmatprep.subr.bf16.mxu0 %v722
    %754 = vmatpush1.bf16.msra.mxu0 %v721
    %755 = vmatprep.subr.bf16.mxu0 %v724
    %756 = vmatpush1.bf16.msra.mxu0 %v723
    %757 = vmatprep.subr.bf16.mxu0 %v726
    %758 = vmatpush1.bf16.msra.mxu0 %v725
    %759 = vmatprep.subr.bf16.mxu0 %v728
    %760 = vmatpush1.bf16.msra.mxu0 %v727
    %761 = vmatprep.subr.bf16.mxu0 0
    %762 = vmatpush1.bf16.msra.mxu0 0
    %763 = vmatprep.subr.bf16.mxu0 0
    %764 = vmatpush1.bf16.msra.mxu0 0
    %765 = vmatprep.subr.bf16.mxu0 0
    %766 = vmatpush1.bf16.msra.mxu0 0
    %767 = vmatprep.subr.bf16.mxu0 0
    %768 = vmatpush1.bf16.msra.mxu0 0
    %769 = vmatprep.subr.bf16.mxu0 0
    %770 = vmatpush1.bf16.msra.mxu0 0
    %771 = vmatprep.subr.bf16.mxu0 0
    %772 = vmatpush1.bf16.msra.mxu0 0
    %773 = vmatprep.subr.bf16.mxu0 0
    %774 = vmatpush1.bf16.msra.mxu0 0
    %775 = vmatprep.subr.bf16.mxu0 0
    %776 = vmatpush1.bf16.msra.mxu0 0
    %777 = vmatprep.mubr.bf16.mxu0 0
    %778 = vmatmul.mubr.bf16.gmra.mrb[0].mxu0 %v653
    %v779 = vpop.f32.mrb[0].mxu0
    %v780 = vadd.f32 %v658, %v779
    %v781 = vpop.f32.mrb[0].mxu0
    %v782 = vadd.f32 %v662, %v781
    %v783 = vpop.f32.mrb[0].mxu0
    %v784 = vadd.f32 %v658, %v783
    %v785 = vpop.f32.mrb[0].mxu0
    %v786 = vadd.f32 %v662, %v785
    %787 = vdwg.mxu0
    %v788 = vmax.f32 %v780, 0.0
    %v789 = vmax.f32 %v782, 0.0
    %v790 = vmax.f32 %v784, 0.0
    %v791 = vmax.f32 %v786, 0.0
    %s792 = scalar_lea.vmem [#allocation5], 128
    %v793 = vld [vmem:[%s792] sm:$0xf]
    %v794 = vld [vmem:[%s792 + $0x4] sm:$0xf]
    %v795 = vld [vmem:[%s792 + $0x8] sm:$0xf]
    %v796 = vld [vmem:[%s792 + $0xc] sm:$0xf]
    %v797 = vld [vmem:[%s792 + $0x10] sm:$0xf]
    %v798 = vld [vmem:[%s792 + $0x14] sm:$0xf]
    %v799 = vld [vmem:[%s792 + $0x18] sm:$0xf]
    %v800 = vld [vmem:[%s792 + $0x1c] sm:$0xf]
    %v801 = vld [vmem:[%s792 + $0x20] sm:$0xf]
    %v802 = vld [vmem:[%s792 + $0x24] sm:$0xf]
    %v803 = vld [vmem:[%s792 + $0x28] sm:$0xf]
    %v804 = vld [vmem:[%s792 + $0x2c] sm:$0xf]
    %v805 = vld [vmem:[%s792 + $0x30] sm:$0xf]
    %v806 = vld [vmem:[%s792 + $0x34] sm:$0xf]
    %v807 = vld [vmem:[%s792 + $0x38] sm:$0xf]
    %v808 = vld [vmem:[%s792 + $0x3c] sm:$0xf]
    %v809 = vld [vmem:[%s792 + $0x40] sm:$0xf]
    %v810 = vld [vmem:[%s792 + $0x44] sm:$0xf]
    %v811 = vld [vmem:[%s792 + $0x48] sm:$0xf]
    %v812 = vld [vmem:[%s792 + $0x4c] sm:$0xf]
    %v813 = vld [vmem:[%s792 + $0x50] sm:$0xf]
    %v814 = vld [vmem:[%s792 + $0x54] sm:$0xf]
    %v815 = vld [vmem:[%s792 + $0x58] sm:$0xf]
    %v816 = vld [vmem:[%s792 + $0x5c] sm:$0xf]
    %v817 = vld [vmem:[%s792 + $0x60] sm:$0xf]
    %v818 = vld [vmem:[%s792 + $0x64] sm:$0xf]
    %v819 = vld [vmem:[%s792 + $0x68] sm:$0xf]
    %v820 = vld [vmem:[%s792 + $0x6c] sm:$0xf]
    %v821 = vld [vmem:[%s792 + $0x70] sm:$0xf]
    %v822 = vld [vmem:[%s792 + $0x74] sm:$0xf]
    %v823 = vld [vmem:[%s792 + $0x78] sm:$0xf]
    %v824 = vld [vmem:[%s792 + $0x7c] sm:$0xf]
    %v825 = vld [vmem:[%s8 + $0x6] ss:$0 sm:$0xff]
    %v826 = vpack.c.bf16 %v790, %v788
    %v827 = vpack.c.bf16 %v791, %v789
    %v860 = vunpack.c.l.b16 %v793
    %v861 = vunpack.c.l.b16 %v794
    %v862 = vunpack.c.l.b16 %v795
    %v863 = vunpack.c.l.b16 %v796
    %v864 = vunpack.c.l.b16 %v797
    %v865 = vunpack.c.l.b16 %v798
    %v866 = vunpack.c.l.b16 %v799
    %v867 = vunpack.c.l.b16 %v800
    %v868 = vunpack.c.l.b16 %v801
    %v869 = vunpack.c.l.b16 %v802
    %v870 = vunpack.c.l.b16 %v803
    %v871 = vunpack.c.l.b16 %v804
    %v872 = vunpack.c.l.b16 %v805
    %v873 = vunpack.c.l.b16 %v806
    %v874 = vunpack.c.l.b16 %v807
    %v875 = vunpack.c.l.b16 %v808
    %v876 = vunpack.c.l.b16 %v809
    %v877 = vunpack.c.l.b16 %v810
    %v878 = vunpack.c.l.b16 %v811
    %v879 = vunpack.c.l.b16 %v812
    %v880 = vunpack.c.l.b16 %v813
    %v881 = vunpack.c.l.b16 %v814
    %v882 = vunpack.c.l.b16 %v815
    %v883 = vunpack.c.l.b16 %v816
    %v884 = vunpack.c.l.b16 %v817
    %v885 = vunpack.c.l.b16 %v818
    %v886 = vunpack.c.l.b16 %v819
    %v887 = vunpack.c.l.b16 %v820
    %v888 = vunpack.c.l.b16 %v821
    %v889 = vunpack.c.l.b16 %v822
    %v890 = vunpack.c.l.b16 %v823
    %v891 = vunpack.c.l.b16 %v824
    %v892 = vpack.c.b16 %v861, %v860
    %v893 = vpack.c.b16 %v863, %v862
    %v894 = vpack.c.b16 %v865, %v864
    %v895 = vpack.c.b16 %v867, %v866
    %v896 = vpack.c.b16 %v869, %v868
    %v897 = vpack.c.b16 %v871, %v870
    %v898 = vpack.c.b16 %v873, %v872
    %v899 = vpack.c.b16 %v875, %v874
    %v900 = vpack.c.b16 %v877, %v876
    %v901 = vpack.c.b16 %v879, %v878
    %v902 = vpack.c.b16 %v881, %v880
    %v903 = vpack.c.b16 %v883, %v882
    %v904 = vpack.c.b16 %v885, %v884
    %v905 = vpack.c.b16 %v887, %v886
    %v906 = vpack.c.b16 %v889, %v888
    %v907 = vpack.c.b16 %v891, %v890
    %924 = vmatprep.subr.bf16.mxu0 0
    %925 = vmatpush1.bf16.msra.mxu0 %v892
    %926 = vmatprep.subr.bf16.mxu0 0
    %927 = vmatpush1.bf16.msra.mxu0 %v893
    %928 = vmatprep.subr.bf16.mxu0 0
    %929 = vmatpush1.bf16.msra.mxu0 %v894
    %930 = vmatprep.subr.bf16.mxu0 0
    %931 = vmatpush1.bf16.msra.mxu0 %v895
    %932 = vmatprep.subr.bf16.mxu0 0
    %933 = vmatpush1.bf16.msra.mxu0 %v896
    %934 = vmatprep.subr.bf16.mxu0 0
    %935 = vmatpush1.bf16.msra.mxu0 %v897
    %936 = vmatprep.subr.bf16.mxu0 0
    %937 = vmatpush1.bf16.msra.mxu0 %v898
    %938 = vmatprep.subr.bf16.mxu0 0
    %939 = vmatpush1.bf16.msra.mxu0 %v899
    %940 = vmatprep.subr.bf16.mxu0 0
    %941 = vmatpush1.bf16.msra.mxu0 %v900
    %942 = vmatprep.subr.bf16.mxu0 0
    %943 = vmatpush1.bf16.msra.mxu0 %v901
    %944 = vmatprep.subr.bf16.mxu0 0
    %945 = vmatpush1.bf16.msra.mxu0 %v902
    %946 = vmatprep.subr.bf16.mxu0 0
    %947 = vmatpush1.bf16.msra.mxu0 %v903
    %948 = vmatprep.subr.bf16.mxu0 0
    %949 = vmatpush1.bf16.msra.mxu0 %v904
    %950 = vmatprep.subr.bf16.mxu0 0
    %951 = vmatpush1.bf16.msra.mxu0 %v905
    %952 = vmatprep.subr.bf16.mxu0 0
    %953 = vmatpush1.bf16.msra.mxu0 %v906
    %954 = vmatprep.subr.bf16.mxu0 0
    %955 = vmatpush1.bf16.msra.mxu0 %v907
    %956 = vmatprep.mubr.bf16.mxu0 %v827
    %957 = vmatmul.mubr.bf16.gmra.mrb[0].mxu0 %v826
    %v958 = vpop.f32.mrb[0].mxu0
    %v959 = vadd.f32 %v825, %v958
    %v960 = vpop.f32.mrb[0].mxu0
    %v961 = vpop.f32.mrb[0].mxu0
    %v962 = vadd.f32 %v825, %v961
    %v963 = vpop.f32.mrb[0].mxu0
    %964 = vdwg.mxu0
    %v965 = vmax.f32 %v959, 0.0
    %v966 = vmax.f32 %v962, 0.0
    %s967 = scalar_lea.vmem %s5, 64
    %v968 = vld [vmem:[%s967] sm:$0xf]
    %v969 = vld [vmem:[%s967 + $0x4] sm:$0xf]
    %v970 = vld [vmem:[%s967 + $0x8] sm:$0xf]
    %v971 = vld [vmem:[%s967 + $0xc] sm:$0xf]
    %v972 = vld [vmem:[%s967 + $0x10] sm:$0xf]
    %v973 = vld [vmem:[%s967 + $0x14] sm:$0xf]
    %v974 = vld [vmem:[%s967 + $0x18] sm:$0xf]
    %v975 = vld [vmem:[%s967 + $0x1c] sm:$0xf]
    %v976 = vld [vmem:[%s967 + $0x20] sm:$0xf]
    %v977 = vld [vmem:[%s967 + $0x24] sm:$0xf]
    %v978 = vld [vmem:[%s967 + $0x28] sm:$0xf]
    %v979 = vld [vmem:[%s967 + $0x2c] sm:$0xf]
    %v980 = vld [vmem:[%s967 + $0x30] sm:$0xf]
    %v981 = vld [vmem:[%s967 + $0x34] sm:$0xf]
    %v982 = vld [vmem:[%s967 + $0x38] sm:$0xf]
    %v983 = vld [vmem:[%s967 + $0x3c] sm:$0xf]
    %v984 = vld [vmem:[%s8 + $0x7] ss:$0 sm:$0xff]
    %v985 = vpack.c.bf16 %v966, %v965
    %v1002 = vunpack.c.l.b16 %v968
    %v1003 = vunpack.c.l.b16 %v969
    %v1004 = vunpack.c.l.b16 %v970
    %v1005 = vunpack.c.l.b16 %v971
    %v1006 = vunpack.c.l.b16 %v972
    %v1007 = vunpack.c.l.b16 %v973
    %v1008 = vunpack.c.l.b16 %v974
    %v1009 = vunpack.c.l.b16 %v975
    %v1010 = vunpack.c.l.b16 %v976
    %v1011 = vunpack.c.l.b16 %v977
    %v1012 = vunpack.c.l.b16 %v978
    %v1013 = vunpack.c.l.b16 %v979
    %v1014 = vunpack.c.l.b16 %v980
    %v1015 = vunpack.c.l.b16 %v981
    %v1016 = vunpack.c.l.b16 %v982
    %v1017 = vunpack.c.l.b16 %v983
    %v1018 = vpack.c.b16 %v1003, %v1002
    %v1019 = vpack.c.b16 %v1005, %v1004
    %v1020 = vpack.c.b16 %v1007, %v1006
    %v1021 = vpack.c.b16 %v1009, %v1008
    %v1022 = vpack.c.b16 %v1011, %v1010
    %v1023 = vpack.c.b16 %v1013, %v1012
    %v1024 = vpack.c.b16 %v1015, %v1014
    %v1025 = vpack.c.b16 %v1017, %v1016
    %1034 = vmatprep.subr.bf16.mxu0 0
    %1035 = vmatpush1.bf16.msra.mxu0 %v1018
    %1036 = vmatprep.subr.bf16.mxu0 0
    %1037 = vmatpush1.bf16.msra.mxu0 %v1019
    %1038 = vmatprep.subr.bf16.mxu0 0
    %1039 = vmatpush1.bf16.msra.mxu0 %v1020
    %1040 = vmatprep.subr.bf16.mxu0 0
    %1041 = vmatpush1.bf16.msra.mxu0 %v1021
    %1042 = vmatprep.subr.bf16.mxu0 0
    %1043 = vmatpush1.bf16.msra.mxu0 %v1022
    %1044 = vmatprep.subr.bf16.mxu0 0
    %1045 = vmatpush1.bf16.msra.mxu0 %v1023
    %1046 = vmatprep.subr.bf16.mxu0 0
    %1047 = vmatpush1.bf16.msra.mxu0 %v1024
    %1048 = vmatprep.subr.bf16.mxu0 0
    %1049 = vmatpush1.bf16.msra.mxu0 %v1025
    %1050 = vmatprep.subr.bf16.mxu0 0
    %1051 = vmatpush1.bf16.msra.mxu0 0
    %1052 = vmatprep.subr.bf16.mxu0 0
    %1053 = vmatpush1.bf16.msra.mxu0 0
    %1054 = vmatprep.subr.bf16.mxu0 0
    %1055 = vmatpush1.bf16.msra.mxu0 0
    %1056 = vmatprep.subr.bf16.mxu0 0
    %1057 = vmatpush1.bf16.msra.mxu0 0
    %1058 = vmatprep.subr.bf16.mxu0 0
    %1059 = vmatpush1.bf16.msra.mxu0 0
    %1060 = vmatprep.subr.bf16.mxu0 0
    %1061 = vmatpush1.bf16.msra.mxu0 0
    %1062 = vmatprep.subr.bf16.mxu0 0
    %1063 = vmatpush1.bf16.msra.mxu0 0
    %1064 = vmatprep.subr.bf16.mxu0 0
    %1065 = vmatpush1.bf16.msra.mxu0 0
    %1066 = vmatprep.mubr.bf16.mxu0 0
    %1067 = vmatmul.mubr.bf16.gmra.mrb[0].mxu0 %v985
    %v1068 = vpop.f32.mrb[0].mxu0
    %v1069 = vadd.f32 %v984, %v1068
    %v1070 = vpop.f32.mrb[0].mxu0
    %v1071 = vpop.f32.mrb[0].mxu0
    %v1072 = vadd.f32 %v984, %v1071
    %v1073 = vpop.f32.mrb[0].mxu0
    %1074 = vdwg.mxu0
    %v1075 = vmax.f32 %v1069, 0.0
    %v1076 = vmax.f32 %v1072, 0.0
    %s1077 = scalar_lea.vmem %s6, 16
    %v1078 = vld [vmem:[%s1077] sm:$0xf]
    %v1079 = vld [vmem:[%s1077 + $0x4] sm:$0xf]
    %v1080 = vld [vmem:[%s1077 + $0x8] sm:$0xf]
    %v1081 = vld [vmem:[%s1077 + $0xc] sm:$0xf]
    %v1082 = vld [vmem:[%s8 + $0x10] ss:$0 sm:$0xff]
    %v1087 = vunpack.c.l.b16 %v1078
    %v1088 = vunpack.c.l.b16 %v1079
    %v1089 = vunpack.c.l.b16 %v1080
    %v1090 = vunpack.c.l.b16 %v1081
    %v1091 = vpack.c.b16 %v1088, %v1087
    %v1092 = vpack.c.b16 %v1090, %v1089
    %1095 = vmatprep.subr.bf16.mxu0 0
    %1096 = vmatpush1.bf16.msra.mxu0 %v1091
    %1097 = vmatprep.subr.bf16.mxu0 0
    %1098 = vmatpush1.bf16.msra.mxu0 %v1092
    %1099 = vmatprep.subr.bf16.mxu0 0
    %1100 = vmatpush1.bf16.msra.mxu0 0
    %1101 = vmatprep.subr.bf16.mxu0 0
    %1102 = vmatpush1.bf16.msra.mxu0 0
    %1103 = vmatprep.subr.bf16.mxu0 0
    %1104 = vmatpush1.bf16.msra.mxu0 0
    %1105 = vmatprep.subr.bf16.mxu0 0
    %1106 = vmatpush1.bf16.msra.mxu0 0
    %1107 = vmatprep.subr.bf16.mxu0 0
    %1108 = vmatpush1.bf16.msra.mxu0 0
    %1109 = vmatprep.subr.bf16.mxu0 0
    %1110 = vmatpush1.bf16.msra.mxu0 0
    %1111 = vmatprep.subr.bf16.mxu0 0
    %1112 = vmatpush1.bf16.msra.mxu0 0
    %1113 = vmatprep.subr.bf16.mxu0 0
    %1114 = vmatpush1.bf16.msra.mxu0 0
    %1115 = vmatprep.subr.bf16.mxu0 0
    %1116 = vmatpush1.bf16.msra.mxu0 0
    %1117 = vmatprep.subr.bf16.mxu0 0
    %1118 = vmatpush1.bf16.msra.mxu0 0
    %1119 = vmatprep.subr.bf16.mxu0 0
    %1120 = vmatpush1.bf16.msra.mxu0 0
    %1121 = vmatprep.subr.bf16.mxu0 0
    %1122 = vmatpush1.bf16.msra.mxu0 0
    %1123 = vmatprep.subr.bf16.mxu0 0
    %1124 = vmatpush1.bf16.msra.mxu0 0
    %1125 = vmatprep.subr.bf16.mxu0 0
    %1126 = vmatpush1.bf16.msra.mxu0 0
    %1127 = vmatprep.mubr.bf16.mxu0 0
    %1128 = vmatmul.mubr.bf16.gmra.mrb[0].mxu0 %v589
    %v1129 = vpop.f32.mrb[0].mxu0
    %v1130 = vadd.f32 %v1082, %v1129
    %v1131 = vpop.f32.mrb[0].mxu0
    %v1132 = vpop.f32.mrb[0].mxu0
    %v1133 = vadd.f32 %v1082, %v1132
    %v1134 = vpop.f32.mrb[0].mxu0
    %1135 = vdwg.mxu0
    %v1136 = vmax.f32 %v1130, 0.0
    %v1137 = vmax.f32 %v1133, 0.0
    %s1138 = scalar_lea.vmem [#allocation2], 256
    %v1139 = vld [vmem:[%s1138] sm:$0xff]
    %v1140 = vld [vmem:[%s1138 + $0x8] sm:$0xff]
    %v1141 = vld [vmem:[%s1138 + $0x10] sm:$0xff]
    %v1142 = vld [vmem:[%s1138 + $0x18] sm:$0xff]
    %v1143 = vld [vmem:[%s1138 + $0x20] sm:$0xff]
    %v1144 = vld [vmem:[%s1138 + $0x28] sm:$0xff]
    %v1145 = vld [vmem:[%s1138 + $0x30] sm:$0xff]
    %v1146 = vld [vmem:[%s1138 + $0x38] sm:$0xff]
    %v1147 = vld [vmem:[%s1138 + $0x40] sm:$0xff]
    %v1148 = vld [vmem:[%s1138 + $0x48] sm:$0xff]
    %v1149 = vld [vmem:[%s1138 + $0x50] sm:$0xff]
    %v1150 = vld [vmem:[%s1138 + $0x58] sm:$0xff]
    %v1151 = vld [vmem:[%s1138 + $0x60] sm:$0xff]
    %v1152 = vld [vmem:[%s1138 + $0x68] sm:$0xff]
    %v1153 = vld [vmem:[%s1138 + $0x70] sm:$0xff]
    %v1154 = vld [vmem:[%s1138 + $0x78] sm:$0xff]
    %s1155 = scalar_lea.vmem %s8, 17
    %v1156 = vld [vmem:[%s1155] ss:$8 sm:$0x3]
    %v1157 = vpack.c.bf16 %v1137, %v1136
    %v1159 = vlaneseq
    %v1160 = vshrl.u32 %v1159, 7
    %v1161 = vsub.s32 0, %v1160
    %v1162 = vrot.slane %v1156, %v1161
    %v1163 = vlaneseq
    %v1164 = vshrl.u32 %v1163, 7
    %v1165 = vsub.s32 1, %v1164
    %v1166 = vrot.slane %v1156, %v1165
    %v1185 = vunpack.c.l.b16 %v1139
    %v1186 = vunpack.c.h.b16 %v1139
    %v1187 = vunpack.c.l.b16 %v1140
    %v1188 = vunpack.c.h.b16 %v1140
    %v1189 = vunpack.c.l.b16 %v1141
    %v1190 = vunpack.c.h.b16 %v1141
    %v1191 = vunpack.c.l.b16 %v1142
    %v1192 = vunpack.c.h.b16 %v1142
    %v1193 = vunpack.c.l.b16 %v1143
    %v1194 = vunpack.c.h.b16 %v1143
    %v1195 = vunpack.c.l.b16 %v1144
    %v1196 = vunpack.c.h.b16 %v1144
    %v1197 = vunpack.c.l.b16 %v1145
    %v1198 = vunpack.c.h.b16 %v1145
    %v1199 = vunpack.c.l.b16 %v1146
    %v1200 = vunpack.c.h.b16 %v1146
    %v1201 = vunpack.c.l.b16 %v1147
    %v1202 = vunpack.c.h.b16 %v1147
    %v1203 = vunpack.c.l.b16 %v1148
    %v1204 = vunpack.c.h.b16 %v1148
    %v1205 = vunpack.c.l.b16 %v1149
    %v1206 = vunpack.c.h.b16 %v1149
    %v1207 = vunpack.c.l.b16 %v1150
    %v1208 = vunpack.c.h.b16 %v1150
    %v1209 = vunpack.c.l.b16 %v1151
    %v1210 = vunpack.c.h.b16 %v1151
    %v1211 = vunpack.c.l.b16 %v1152
    %v1212 = vunpack.c.h.b16 %v1152
    %v1213 = vunpack.c.l.b16 %v1153
    %v1214 = vunpack.c.h.b16 %v1153
    %v1215 = vunpack.c.l.b16 %v1154
    %v1216 = vunpack.c.h.b16 %v1154
    %v1217 = vpack.c.b16 %v1187, %v1185
    %v1218 = vpack.c.b16 %v1188, %v1186
    %v1219 = vpack.c.b16 %v1191, %v1189
    %v1220 = vpack.c.b16 %v1192, %v1190
    %v1221 = vpack.c.b16 %v1195, %v1193
    %v1222 = vpack.c.b16 %v1196, %v1194
    %v1223 = vpack.c.b16 %v1199, %v1197
    %v1224 = vpack.c.b16 %v1200, %v1198
    %v1225 = vpack.c.b16 %v1203, %v1201
    %v1226 = vpack.c.b16 %v1204, %v1202
    %v1227 = vpack.c.b16 %v1207, %v1205
    %v1228 = vpack.c.b16 %v1208, %v1206
    %v1229 = vpack.c.b16 %v1211, %v1209
    %v1230 = vpack.c.b16 %v1212, %v1210
    %v1231 = vpack.c.b16 %v1215, %v1213
    %v1232 = vpack.c.b16 %v1216, %v1214
    %1249 = vmatprep.subr.bf16.mxu0 %v1218
    %1250 = vmatpush1.bf16.msra.mxu0 %v1217
    %1251 = vmatprep.subr.bf16.mxu0 %v1220
    %1252 = vmatpush1.bf16.msra.mxu0 %v1219
    %1253 = vmatprep.subr.bf16.mxu0 %v1222
    %1254 = vmatpush1.bf16.msra.mxu0 %v1221
    %1255 = vmatprep.subr.bf16.mxu0 %v1224
    %1256 = vmatpush1.bf16.msra.mxu0 %v1223
    %1257 = vmatprep.subr.bf16.mxu0 %v1226
    %1258 = vmatpush1.bf16.msra.mxu0 %v1225
    %1259 = vmatprep.subr.bf16.mxu0 %v1228
    %1260 = vmatpush1.bf16.msra.mxu0 %v1227
    %1261 = vmatprep.subr.bf16.mxu0 %v1230
    %1262 = vmatpush1.bf16.msra.mxu0 %v1229
    %1263 = vmatprep.subr.bf16.mxu0 %v1232
    %1264 = vmatpush1.bf16.msra.mxu0 %v1231
    %1265 = vmatprep.subr.bf16.mxu0 0
    %1266 = vmatpush1.bf16.msra.mxu0 0
    %1267 = vmatprep.subr.bf16.mxu0 0
    %1268 = vmatpush1.bf16.msra.mxu0 0
    %1269 = vmatprep.subr.bf16.mxu0 0
    %1270 = vmatpush1.bf16.msra.mxu0 0
    %1271 = vmatprep.subr.bf16.mxu0 0
    %1272 = vmatpush1.bf16.msra.mxu0 0
    %1273 = vmatprep.subr.bf16.mxu0 0
    %1274 = vmatpush1.bf16.msra.mxu0 0
    %1275 = vmatprep.subr.bf16.mxu0 0
    %1276 = vmatpush1.bf16.msra.mxu0 0
    %1277 = vmatprep.subr.bf16.mxu0 0
    %1278 = vmatpush1.bf16.msra.mxu0 0
    %1279 = vmatprep.subr.bf16.mxu0 0
    %1280 = vmatpush1.bf16.msra.mxu0 0
    %1281 = vmatprep.mubr.bf16.mxu0 0
    %1282 = vmatmul.mubr.bf16.gmra.mrb[0].mxu0 %v1157
    %v1283 = vpop.f32.mrb[0].mxu0
    %v1284 = vadd.f32 %v1162, %v1283
    %v1285 = vpop.f32.mrb[0].mxu0
    %v1286 = vadd.f32 %v1166, %v1285
    %v1287 = vpop.f32.mrb[0].mxu0
    %v1288 = vadd.f32 %v1162, %v1287
    %v1289 = vpop.f32.mrb[0].mxu0
    %v1290 = vadd.f32 %v1166, %v1289
    %1291 = vdwg.mxu0
    %v1292 = vmax.f32 %v1284, 0.0
    %v1293 = vmax.f32 %v1286, 0.0
    %v1294 = vmax.f32 %v1288, 0.0
    %v1295 = vmax.f32 %v1290, 0.0
    %s1296 = scalar_lea.vmem [#allocation5], 256
    %v1297 = vld [vmem:[%s1296] sm:$0xf]
    %v1298 = vld [vmem:[%s1296 + $0x4] sm:$0xf]
    %v1299 = vld [vmem:[%s1296 + $0x8] sm:$0xf]
    %v1300 = vld [vmem:[%s1296 + $0xc] sm:$0xf]
    %v1301 = vld [vmem:[%s1296 + $0x10] sm:$0xf]
    %v1302 = vld [vmem:[%s1296 + $0x14] sm:$0xf]
    %v1303 = vld [vmem:[%s1296 + $0x18] sm:$0xf]
    %v1304 = vld [vmem:[%s1296 + $0x1c] sm:$0xf]
    %v1305 = vld [vmem:[%s1296 + $0x20] sm:$0xf]
    %v1306 = vld [vmem:[%s1296 + $0x24] sm:$0xf]
    %v1307 = vld [vmem:[%s1296 + $0x28] sm:$0xf]
    %v1308 = vld [vmem:[%s1296 + $0x2c] sm:$0xf]
    %v1309 = vld [vmem:[%s1296 + $0x30] sm:$0xf]
    %v1310 = vld [vmem:[%s1296 + $0x34] sm:$0xf]
    %v1311 = vld [vmem:[%s1296 + $0x38] sm:$0xf]
    %v1312 = vld [vmem:[%s1296 + $0x3c] sm:$0xf]
    %v1313 = vld [vmem:[%s1296 + $0x40] sm:$0xf]
    %v1314 = vld [vmem:[%s1296 + $0x44] sm:$0xf]
    %v1315 = vld [vmem:[%s1296 + $0x48] sm:$0xf]
    %v1316 = vld [vmem:[%s1296 + $0x4c] sm:$0xf]
    %v1317 = vld [vmem:[%s1296 + $0x50] sm:$0xf]
    %v1318 = vld [vmem:[%s1296 + $0x54] sm:$0xf]
    %v1319 = vld [vmem:[%s1296 + $0x58] sm:$0xf]
    %v1320 = vld [vmem:[%s1296 + $0x5c] sm:$0xf]
    %v1321 = vld [vmem:[%s1296 + $0x60] sm:$0xf]
    %v1322 = vld [vmem:[%s1296 + $0x64] sm:$0xf]
    %v1323 = vld [vmem:[%s1296 + $0x68] sm:$0xf]
    %v1324 = vld [vmem:[%s1296 + $0x6c] sm:$0xf]
    %v1325 = vld [vmem:[%s1296 + $0x70] sm:$0xf]
    %v1326 = vld [vmem:[%s1296 + $0x74] sm:$0xf]
    %v1327 = vld [vmem:[%s1296 + $0x78] sm:$0xf]
    %v1328 = vld [vmem:[%s1296 + $0x7c] sm:$0xf]
    %v1329 = vld [vmem:[%s8 + $0x12] ss:$0 sm:$0xff]
    %v1330 = vpack.c.bf16 %v1294, %v1292
    %v1331 = vpack.c.bf16 %v1295, %v1293
    %v1364 = vunpack.c.l.b16 %v1297
    %v1365 = vunpack.c.l.b16 %v1298
    %v1366 = vunpack.c.l.b16 %v1299
    %v1367 = vunpack.c.l.b16 %v1300
    %v1368 = vunpack.c.l.b16 %v1301
    %v1369 = vunpack.c.l.b16 %v1302
    %v1370 = vunpack.c.l.b16 %v1303
    %v1371 = vunpack.c.l.b16 %v1304
    %v1372 = vunpack.c.l.b16 %v1305
    %v1373 = vunpack.c.l.b16 %v1306
    %v1374 = vunpack.c.l.b16 %v1307
    %v1375 = vunpack.c.l.b16 %v1308
    %v1376 = vunpack.c.l.b16 %v1309
    %v1377 = vunpack.c.l.b16 %v1310
    %v1378 = vunpack.c.l.b16 %v1311
    %v1379 = vunpack.c.l.b16 %v1312
    %v1380 = vunpack.c.l.b16 %v1313
    %v1381 = vunpack.c.l.b16 %v1314
    %v1382 = vunpack.c.l.b16 %v1315
    %v1383 = vunpack.c.l.b16 %v1316
    %v1384 = vunpack.c.l.b16 %v1317
    %v1385 = vunpack.c.l.b16 %v1318
    %v1386 = vunpack.c.l.b16 %v1319
    %v1387 = vunpack.c.l.b16 %v1320
    %v1388 = vunpack.c.l.b16 %v1321
    %v1389 = vunpack.c.l.b16 %v1322
    %v1390 = vunpack.c.l.b16 %v1323
    %v1391 = vunpack.c.l.b16 %v1324
    %v1392 = vunpack.c.l.b16 %v1325
    %v1393 = vunpack.c.l.b16 %v1326
    %v1394 = vunpack.c.l.b16 %v1327
    %v1395 = vunpack.c.l.b16 %v1328
    %v1396 = vpack.c.b16 %v1365, %v1364
    %v1397 = vpack.c.b16 %v1367, %v1366
    %v1398 = vpack.c.b16 %v1369, %v1368
    %v1399 = vpack.c.b16 %v1371, %v1370
    %v1400 = vpack.c.b16 %v1373, %v1372
    %v1401 = vpack.c.b16 %v1375, %v1374
    %v1402 = vpack.c.b16 %v1377, %v1376
    %v1403 = vpack.c.b16 %v1379, %v1378
    %v1404 = vpack.c.b16 %v1381, %v1380
    %v1405 = vpack.c.b16 %v1383, %v1382
    %v1406 = vpack.c.b16 %v1385, %v1384
    %v1407 = vpack.c.b16 %v1387, %v1386
    %v1408 = vpack.c.b16 %v1389, %v1388
    %v1409 = vpack.c.b16 %v1391, %v1390
    %v1410 = vpack.c.b16 %v1393, %v1392
    %v1411 = vpack.c.b16 %v1395, %v1394
    %1428 = vmatprep.subr.bf16.mxu0 0
    %1429 = vmatpush1.bf16.msra.mxu0 %v1396
    %1430 = vmatprep.subr.bf16.mxu0 0
    %1431 = vmatpush1.bf16.msra.mxu0 %v1397
    %1432 = vmatprep.subr.bf16.mxu0 0
    %1433 = vmatpush1.bf16.msra.mxu0 %v1398
    %1434 = vmatprep.subr.bf16.mxu0 0
    %1435 = vmatpush1.bf16.msra.mxu0 %v1399
    %1436 = vmatprep.subr.bf16.mxu0 0
    %1437 = vmatpush1.bf16.msra.mxu0 %v1400
    %1438 = vmatprep.subr.bf16.mxu0 0
    %1439 = vmatpush1.bf16.msra.mxu0 %v1401
    %1440 = vmatprep.subr.bf16.mxu0 0
    %1441 = vmatpush1.bf16.msra.mxu0 %v1402
    %1442 = vmatprep.subr.bf16.mxu0 0
    %1443 = vmatpush1.bf16.msra.mxu0 %v1403
    %1444 = vmatprep.subr.bf16.mxu0 0
    %1445 = vmatpush1.bf16.msra.mxu0 %v1404
    %1446 = vmatprep.subr.bf16.mxu0 0
    %1447 = vmatpush1.bf16.msra.mxu0 %v1405
    %1448 = vmatprep.subr.bf16.mxu0 0
    %1449 = vmatpush1.bf16.msra.mxu0 %v1406
    %1450 = vmatprep.subr.bf16.mxu0 0
    %1451 = vmatpush1.bf16.msra.mxu0 %v1407
    %1452 = vmatprep.subr.bf16.mxu0 0
    %1453 = vmatpush1.bf16.msra.mxu0 %v1408
    %1454 = vmatprep.subr.bf16.mxu0 0
    %1455 = vmatpush1.bf16.msra.mxu0 %v1409
    %1456 = vmatprep.subr.bf16.mxu0 0
    %1457 = vmatpush1.bf16.msra.mxu0 %v1410
    %1458 = vmatprep.subr.bf16.mxu0 0
    %1459 = vmatpush1.bf16.msra.mxu0 %v1411
    %1460 = vmatprep.mubr.bf16.mxu0 %v1331
    %1461 = vmatmul.mubr.bf16.gmra.mrb[0].mxu0 %v1330
    %v1462 = vpop.f32.mrb[0].mxu0
    %v1463 = vadd.f32 %v1329, %v1462
    %v1464 = vpop.f32.mrb[0].mxu0
    %v1465 = vpop.f32.mrb[0].mxu0
    %v1466 = vadd.f32 %v1329, %v1465
    %v1467 = vpop.f32.mrb[0].mxu0
    %1468 = vdwg.mxu0
    %v1469 = vmax.f32 %v1463, 0.0
    %v1470 = vmax.f32 %v1466, 0.0
    %s1471 = scalar_lea.vmem %s5, 128
    %v1472 = vld [vmem:[%s1471] sm:$0xf]
    %v1473 = vld [vmem:[%s1471 + $0x4] sm:$0xf]
    %v1474 = vld [vmem:[%s1471 + $0x8] sm:$0xf]
    %v1475 = vld [vmem:[%s1471 + $0xc] sm:$0xf]
    %v1476 = vld [vmem:[%s1471 + $0x10] sm:$0xf]
    %v1477 = vld [vmem:[%s1471 + $0x14] sm:$0xf]
    %v1478 = vld [vmem:[%s1471 + $0x18] sm:$0xf]
    %v1479 = vld [vmem:[%s1471 + $0x1c] sm:$0xf]
    %v1480 = vld [vmem:[%s1471 + $0x20] sm:$0xf]
    %v1481 = vld [vmem:[%s1471 + $0x24] sm:$0xf]
    %v1482 = vld [vmem:[%s1471 + $0x28] sm:$0xf]
    %v1483 = vld [vmem:[%s1471 + $0x2c] sm:$0xf]
    %v1484 = vld [vmem:[%s1471 + $0x30] sm:$0xf]
    %v1485 = vld [vmem:[%s1471 + $0x34] sm:$0xf]
    %v1486 = vld [vmem:[%s1471 + $0x38] sm:$0xf]
    %v1487 = vld [vmem:[%s1471 + $0x3c] sm:$0xf]
    %v1488 = vld [vmem:[%s8 + $0x13] ss:$0 sm:$0xff]
    %v1489 = vpack.c.bf16 %v1470, %v1469
    %v1506 = vunpack.c.l.b16 %v1472
    %v1507 = vunpack.c.l.b16 %v1473
    %v1508 = vunpack.c.l.b16 %v1474
    %v1509 = vunpack.c.l.b16 %v1475
    %v1510 = vunpack.c.l.b16 %v1476
    %v1511 = vunpack.c.l.b16 %v1477
    %v1512 = vunpack.c.l.b16 %v1478
    %v1513 = vunpack.c.l.b16 %v1479
    %v1514 = vunpack.c.l.b16 %v1480
    %v1515 = vunpack.c.l.b16 %v1481
    %v1516 = vunpack.c.l.b16 %v1482
    %v1517 = vunpack.c.l.b16 %v1483
    %v1518 = vunpack.c.l.b16 %v1484
    %v1519 = vunpack.c.l.b16 %v1485
    %v1520 = vunpack.c.l.b16 %v1486
    %v1521 = vunpack.c.l.b16 %v1487
    %v1522 = vpack.c.b16 %v1507, %v1506
    %v1523 = vpack.c.b16 %v1509, %v1508
    %v1524 = vpack.c.b16 %v1511, %v1510
    %v1525 = vpack.c.b16 %v1513, %v1512
    %v1526 = vpack.c.b16 %v1515, %v1514
    %v1527 = vpack.c.b16 %v1517, %v1516
    %v1528 = vpack.c.b16 %v1519, %v1518
    %v1529 = vpack.c.b16 %v1521, %v1520
    %1538 = vmatprep.subr.bf16.mxu0 0
    %1539 = vmatpush1.bf16.msra.mxu0 %v1522
    %1540 = vmatprep.subr.bf16.mxu0 0
    %1541 = vmatpush1.bf16.msra.mxu0 %v1523
    %1542 = vmatprep.subr.bf16.mxu0 0
    %1543 = vmatpush1.bf16.msra.mxu0 %v1524
    %1544 = vmatprep.subr.bf16.mxu0 0
    %1545 = vmatpush1.bf16.msra.mxu0 %v1525
    %1546 = vmatprep.subr.bf16.mxu0 0
    %1547 = vmatpush1.bf16.msra.mxu0 %v1526
    %1548 = vmatprep.subr.bf16.mxu0 0
    %1549 = vmatpush1.bf16.msra.mxu0 %v1527
    %1550 = vmatprep.subr.bf16.mxu0 0
    %1551 = vmatpush1.bf16.msra.mxu0 %v1528
    %1552 = vmatprep.subr.bf16.mxu0 0
    %1553 = vmatpush1.bf16.msra.mxu0 %v1529
    %1554 = vmatprep.subr.bf16.mxu0 0
    %1555 = vmatpush1.bf16.msra.mxu0 0
    %1556 = vmatprep.subr.bf16.mxu0 0
    %1557 = vmatpush1.bf16.msra.mxu0 0
    %1558 = vmatprep.subr.bf16.mxu0 0
    %1559 = vmatpush1.bf16.msra.mxu0 0
    %1560 = vmatprep.subr.bf16.mxu0 0
    %1561 = vmatpush1.bf16.msra.mxu0 0
    %1562 = vmatprep.subr.bf16.mxu0 0
    %1563 = vmatpush1.bf16.msra.mxu0 0
    %1564 = vmatprep.subr.bf16.mxu0 0
    %1565 = vmatpush1.bf16.msra.mxu0 0
    %1566 = vmatprep.subr.bf16.mxu0 0
    %1567 = vmatpush1.bf16.msra.mxu0 0
    %1568 = vmatprep.subr.bf16.mxu0 0
    %1569 = vmatpush1.bf16.msra.mxu0 0
    %1570 = vmatprep.mubr.bf16.mxu0 0
    %1571 = vmatmul.mubr.bf16.gmra.mrb[0].mxu0 %v1489
    %v1572 = vpop.f32.mrb[0].mxu0
    %v1573 = vadd.f32 %v1488, %v1572
    %v1574 = vpop.f32.mrb[0].mxu0
    %v1575 = vpop.f32.mrb[0].mxu0
    %v1576 = vadd.f32 %v1488, %v1575
    %v1577 = vpop.f32.mrb[0].mxu0
    %1578 = vdwg.mxu0
    %v1579 = vmax.f32 %v1573, 0.0
    %v1580 = vmax.f32 %v1576, 0.0
    %1582 = vset.pattern.permute.xlu0 0
    %1583 = vperm.xlu0 %1582, %v567
    %v1584 = vpop.permute.xlu0 %1583
    %1587 = vset.pattern.permute.xlu0 0
    %1588 = vperm.xlu0 %1587, %v568
    %v1589 = vpop.permute.xlu0 %1588
    %v1591 = vlaneseq
    %v1592 = vshrl.u32 %v1591, 7
    %v1593 = vsub.s32 0, %v1592
    %v1594 = vrot.slane %v1579, %v1593
    %v1595 = vlaneseq
    %v1596 = vshrl.u32 %v1595, 7
    %v1597 = vsub.s32 0, %v1596
    %v1598 = vrot.slane %v1580, %v1597
    %v1599 = vmul.f32 %v1584, %v1594
    %v1600 = vmul.f32 %v1589, %v1598
    %v1601 = vadd.f32 %v1599, 0.0
    %v1602 = vadd.f32 %v1600, 0.0
    %1603 = vset.pattern.permute.xlu0 1
    %1604 = vperm.xlu0 %1603, %v567
    %v1605 = vpop.permute.xlu0 %1604
    %1607 = vset.pattern.permute.xlu0 1
    %1608 = vperm.xlu0 %1607, %v568
    %v1609 = vpop.permute.xlu0 %1608
    %v1611 = vlaneseq
    %v1612 = vshrl.u32 %v1611, 7
    %v1613 = vsub.s32 1, %v1612
    %v1614 = vrot.slane %v1579, %v1613
    %v1615 = vlaneseq
    %v1616 = vshrl.u32 %v1615, 7
    %v1617 = vsub.s32 1, %v1616
    %v1618 = vrot.slane %v1580, %v1617
    %v1619 = vmul.f32 %v1605, %v1614
    %v1620 = vmul.f32 %v1609, %v1618
    %v1621 = vadd.f32 %v1601, %v1619
    %v1622 = vadd.f32 %v1602, %v1620
    %1623 = vset.pattern.permute.xlu0 2
    %1624 = vperm.xlu0 %1623, %v567
    %v1625 = vpop.permute.xlu0 %1624
    %1627 = vset.pattern.permute.xlu0 2
    %1628 = vperm.xlu0 %1627, %v568
    %v1629 = vpop.permute.xlu0 %1628
    %v1631 = vlaneseq
    %v1632 = vshrl.u32 %v1631, 7
    %v1633 = vsub.s32 2, %v1632
    %v1634 = vrot.slane %v1579, %v1633
    %v1635 = vlaneseq
    %v1636 = vshrl.u32 %v1635, 7
    %v1637 = vsub.s32 2, %v1636
    %v1638 = vrot.slane %v1580, %v1637
    %v1639 = vmul.f32 %v1625, %v1634
    %v1640 = vmul.f32 %v1629, %v1638
    %v1641 = vadd.f32 %v1621, %v1639
    %v1642 = vadd.f32 %v1622, %v1640
    %1643 = vset.pattern.permute.xlu0 3
    %1644 = vperm.xlu0 %1643, %v567
    %v1645 = vpop.permute.xlu0 %1644
    %1647 = vset.pattern.permute.xlu0 3
    %1648 = vperm.xlu0 %1647, %v568
    %v1649 = vpop.permute.xlu0 %1648
    %v1651 = vlaneseq
    %v1652 = vshrl.u32 %v1651, 7
    %v1653 = vsub.s32 3, %v1652
    %v1654 = vrot.slane %v1579, %v1653
    %v1655 = vlaneseq
    %v1656 = vshrl.u32 %v1655, 7
    %v1657 = vsub.s32 3, %v1656
    %v1658 = vrot.slane %v1580, %v1657
    %v1659 = vmul.f32 %v1645, %v1654
    %v1660 = vmul.f32 %v1649, %v1658
    %v1661 = vadd.f32 %v1641, %v1659
    %v1662 = vadd.f32 %v1642, %v1660
    %1663 = vset.pattern.permute.xlu0 4
    %1664 = vperm.xlu0 %1663, %v567
    %v1665 = vpop.permute.xlu0 %1664
    %1667 = vset.pattern.permute.xlu0 4
    %1668 = vperm.xlu0 %1667, %v568
    %v1669 = vpop.permute.xlu0 %1668
    %v1671 = vlaneseq
    %v1672 = vshrl.u32 %v1671, 7
    %v1673 = vsub.s32 4, %v1672
    %v1674 = vrot.slane %v1579, %v1673
    %v1675 = vlaneseq
    %v1676 = vshrl.u32 %v1675, 7
    %v1677 = vsub.s32 4, %v1676
    %v1678 = vrot.slane %v1580, %v1677
    %v1679 = vmul.f32 %v1665, %v1674
    %v1680 = vmul.f32 %v1669, %v1678
    %v1681 = vadd.f32 %v1661, %v1679
    %v1682 = vadd.f32 %v1662, %v1680
    %1683 = vset.pattern.permute.xlu0 5
    %1684 = vperm.xlu0 %1683, %v567
    %v1685 = vpop.permute.xlu0 %1684
    %1687 = vset.pattern.permute.xlu0 5
    %1688 = vperm.xlu0 %1687, %v568
    %v1689 = vpop.permute.xlu0 %1688
    %v1691 = vlaneseq
    %v1692 = vshrl.u32 %v1691, 7
    %v1693 = vsub.s32 5, %v1692
    %v1694 = vrot.slane %v1579, %v1693
    %v1695 = vlaneseq
    %v1696 = vshrl.u32 %v1695, 7
    %v1697 = vsub.s32 5, %v1696
    %v1698 = vrot.slane %v1580, %v1697
    %v1699 = vmul.f32 %v1685, %v1694
    %v1700 = vmul.f32 %v1689, %v1698
    %v1701 = vadd.f32 %v1681, %v1699
    %v1702 = vadd.f32 %v1682, %v1700
    %1703 = vset.pattern.permute.xlu0 6
    %1704 = vperm.xlu0 %1703, %v567
    %v1705 = vpop.permute.xlu0 %1704
    %1707 = vset.pattern.permute.xlu0 6
    %1708 = vperm.xlu0 %1707, %v568
    %v1709 = vpop.permute.xlu0 %1708
    %v1711 = vlaneseq
    %v1712 = vshrl.u32 %v1711, 7
    %v1713 = vsub.s32 6, %v1712
    %v1714 = vrot.slane %v1579, %v1713
    %v1715 = vlaneseq
    %v1716 = vshrl.u32 %v1715, 7
    %v1717 = vsub.s32 6, %v1716
    %v1718 = vrot.slane %v1580, %v1717
    %v1719 = vmul.f32 %v1705, %v1714
    %v1720 = vmul.f32 %v1709, %v1718
    %v1721 = vadd.f32 %v1701, %v1719
    %v1722 = vadd.f32 %v1702, %v1720
    %1723 = vset.pattern.permute.xlu0 7
    %1724 = vperm.xlu0 %1723, %v567
    %v1725 = vpop.permute.xlu0 %1724
    %1727 = vset.pattern.permute.xlu0 7
    %1728 = vperm.xlu0 %1727, %v568
    %v1729 = vpop.permute.xlu0 %1728
    %v1731 = vlaneseq
    %v1732 = vshrl.u32 %v1731, 7
    %v1733 = vsub.s32 7, %v1732
    %v1734 = vrot.slane %v1579, %v1733
    %v1735 = vlaneseq
    %v1736 = vshrl.u32 %v1735, 7
    %v1737 = vsub.s32 7, %v1736
    %v1738 = vrot.slane %v1580, %v1737
    %v1739 = vmul.f32 %v1725, %v1734
    %v1740 = vmul.f32 %v1729, %v1738
    %v1741 = vadd.f32 %v1721, %v1739
    %v1742 = vadd.f32 %v1722, %v1740
    %v1743 = vadd.f32 %v1075, %v1741
    %v1744 = vadd.f32 %v1076, %v1742
    %v1745 = vmul.f32 %v1743, 0.125
    %v1746 = vmul.f32 %v1744, 0.125
    %s1747 = scalar_lea.vmem %s6, 32
    %v1748 = vld [vmem:[%s1747] sm:$0xf]
    %v1749 = vld [vmem:[%s1747 + $0x4] sm:$0xf]
    %v1750 = vld [vmem:[%s1747 + $0x8] sm:$0xf]
    %v1751 = vld [vmem:[%s1747 + $0xc] sm:$0xf]
    %v1752 = vld [vmem:[%s8 + $0x14] ss:$0 sm:$0xff]
    %v1753 = vpack.c.bf16 %v1746, %v1745
    %v1758 = vunpack.c.l.b16 %v1748
    %v1759 = vunpack.c.l.b16 %v1749
    %v1760 = vunpack.c.l.b16 %v1750
    %v1761 = vunpack.c.l.b16 %v1751
    %v1762 = vpack.c.b16 %v1759, %v1758
    %v1763 = vpack.c.b16 %v1761, %v1760
    %v1767 = vsel %vm587, %v1753, 0
    %1769 = vmatprep.subr.bf16.mxu0 0
    %1770 = vmatpush1.bf16.msra.mxu0 %v1762
    %1771 = vmatprep.subr.bf16.mxu0 0
    %1772 = vmatpush1.bf16.msra.mxu0 %v1763
    %1773 = vmatprep.subr.bf16.mxu0 0
    %1774 = vmatpush1.bf16.msra.mxu0 0
    %1775 = vmatprep.subr.bf16.mxu0 0
    %1776 = vmatpush1.bf16.msra.mxu0 0
    %1777 = vmatprep.subr.bf16.mxu0 0
    %1778 = vmatpush1.bf16.msra.mxu0 0
    %1779 = vmatprep.subr.bf16.mxu0 0
    %1780 = vmatpush1.bf16.msra.mxu0 0
    %1781 = vmatprep.subr.bf16.mxu0 0
    %1782 = vmatpush1.bf16.msra.mxu0 0
    %1783 = vmatprep.subr.bf16.mxu0 0
    %1784 = vmatpush1.bf16.msra.mxu0 0
    %1785 = vmatprep.subr.bf16.mxu0 0
    %1786 = vmatpush1.bf16.msra.mxu0 0
    %1787 = vmatprep.subr.bf16.mxu0 0
    %1788 = vmatpush1.bf16.msra.mxu0 0
    %1789 = vmatprep.subr.bf16.mxu0 0
    %1790 = vmatpush1.bf16.msra.mxu0 0
    %1791 = vmatprep.subr.bf16.mxu0 0
    %1792 = vmatpush1.bf16.msra.mxu0 0
    %1793 = vmatprep.subr.bf16.mxu0 0
    %1794 = vmatpush1.bf16.msra.mxu0 0
    %1795 = vmatprep.subr.bf16.mxu0 0
    %1796 = vmatpush1.bf16.msra.mxu0 0
    %1797 = vmatprep.subr.bf16.mxu0 0
    %1798 = vmatpush1.bf16.msra.mxu0 0
    %1799 = vmatprep.subr.bf16.mxu0 0
    %1800 = vmatpush1.bf16.msra.mxu0 0
    %1801 = vmatprep.mubr.bf16.mxu0 0
    %1802 = vmatmul.mubr.bf16.gmra.mrb[0].mxu0 %v1767
    %v1803 = vpop.f32.mrb[0].mxu0
    %v1804 = vadd.f32 %v1752, %v1803
    %v1805 = vpop.f32.mrb[0].mxu0
    %v1806 = vpop.f32.mrb[0].mxu0
    %v1807 = vadd.f32 %v1752, %v1806
    %v1808 = vpop.f32.mrb[0].mxu0
    %1809 = vdwg.mxu0
    %v1810 = vmax.f32 %v1804, 0.0
    %v1811 = vmax.f32 %v1807, 0.0
    %s1812 = scalar_lea.vmem [#allocation2], 384
    %v1813 = vld [vmem:[%s1812] sm:$0xff]
    %v1814 = vld [vmem:[%s1812 + $0x8] sm:$0xff]
    %v1815 = vld [vmem:[%s1812 + $0x10] sm:$0xff]
    %v1816 = vld [vmem:[%s1812 + $0x18] sm:$0xff]
    %v1817 = vld [vmem:[%s1812 + $0x20] sm:$0xff]
    %v1818 = vld [vmem:[%s1812 + $0x28] sm:$0xff]
    %v1819 = vld [vmem:[%s1812 + $0x30] sm:$0xff]
    %v1820 = vld [vmem:[%s1812 + $0x38] sm:$0xff]
    %v1821 = vld [vmem:[%s1812 + $0x40] sm:$0xff]
    %v1822 = vld [vmem:[%s1812 + $0x48] sm:$0xff]
    %v1823 = vld [vmem:[%s1812 + $0x50] sm:$0xff]
    %v1824 = vld [vmem:[%s1812 + $0x58] sm:$0xff]
    %v1825 = vld [vmem:[%s1812 + $0x60] sm:$0xff]
    %v1826 = vld [vmem:[%s1812 + $0x68] sm:$0xff]
    %v1827 = vld [vmem:[%s1812 + $0x70] sm:$0xff]
    %v1828 = vld [vmem:[%s1812 + $0x78] sm:$0xff]
    %s1829 = scalar_lea.vmem %s8, 21
    %v1830 = vld [vmem:[%s1829] ss:$8 sm:$0x3]
    %v1831 = vpack.c.bf16 %v1811, %v1810
    %v1833 = vlaneseq
    %v1834 = vshrl.u32 %v1833, 7
    %v1835 = vsub.s32 0, %v1834
    %v1836 = vrot.slane %v1830, %v1835
    %v1837 = vlaneseq
    %v1838 = vshrl.u32 %v1837, 7
    %v1839 = vsub.s32 1, %v1838
    %v1840 = vrot.slane %v1830, %v1839
    %v1859 = vunpack.c.l.b16 %v1813
    %v1860 = vunpack.c.h.b16 %v1813
    %v1861 = vunpack.c.l.b16 %v1814
    %v1862 = vunpack.c.h.b16 %v1814
    %v1863 = vunpack.c.l.b16 %v1815
    %v1864 = vunpack.c.h.b16 %v1815
    %v1865 = vunpack.c.l.b16 %v1816
    %v1866 = vunpack.c.h.b16 %v1816
    %v1867 = vunpack.c.l.b16 %v1817
    %v1868 = vunpack.c.h.b16 %v1817
    %v1869 = vunpack.c.l.b16 %v1818
    %v1870 = vunpack.c.h.b16 %v1818
    %v1871 = vunpack.c.l.b16 %v1819
    %v1872 = vunpack.c.h.b16 %v1819
    %v1873 = vunpack.c.l.b16 %v1820
    %v1874 = vunpack.c.h.b16 %v1820
    %v1875 = vunpack.c.l.b16 %v1821
    %v1876 = vunpack.c.h.b16 %v1821
    %v1877 = vunpack.c.l.b16 %v1822
    %v1878 = vunpack.c.h.b16 %v1822
    %v1879 = vunpack.c.l.b16 %v1823
    %v1880 = vunpack.c.h.b16 %v1823
    %v1881 = vunpack.c.l.b16 %v1824
    %v1882 = vunpack.c.h.b16 %v1824
    %v1883 = vunpack.c.l.b16 %v1825
    %v1884 = vunpack.c.h.b16 %v1825
    %v1885 = vunpack.c.l.b16 %v1826
    %v1886 = vunpack.c.h.b16 %v1826
    %v1887 = vunpack.c.l.b16 %v1827
    %v1888 = vunpack.c.h.b16 %v1827
    %v1889 = vunpack.c.l.b16 %v1828
    %v1890 = vunpack.c.h.b16 %v1828
    %v1891 = vpack.c.b16 %v1861, %v1859
    %v1892 = vpack.c.b16 %v1862, %v1860
    %v1893 = vpack.c.b16 %v1865, %v1863
    %v1894 = vpack.c.b16 %v1866, %v1864
    %v1895 = vpack.c.b16 %v1869, %v1867
    %v1896 = vpack.c.b16 %v1870, %v1868
    %v1897 = vpack.c.b16 %v1873, %v1871
    %v1898 = vpack.c.b16 %v1874, %v1872
    %v1899 = vpack.c.b16 %v1877, %v1875
    %v1900 = vpack.c.b16 %v1878, %v1876
    %v1901 = vpack.c.b16 %v1881, %v1879
    %v1902 = vpack.c.b16 %v1882, %v1880
    %v1903 = vpack.c.b16 %v1885, %v1883
    %v1904 = vpack.c.b16 %v1886, %v1884
    %v1905 = vpack.c.b16 %v1889, %v1887
    %v1906 = vpack.c.b16 %v1890, %v1888
    %1923 = vmatprep.subr.bf16.mxu0 %v1892
    %1924 = vmatpush1.bf16.msra.mxu0 %v1891
    %1925 = vmatprep.subr.bf16.mxu0 %v1894
    %1926 = vmatpush1.bf16.msra.mxu0 %v1893
    %1927 = vmatprep.subr.bf16.mxu0 %v1896
    %1928 = vmatpush1.bf16.msra.mxu0 %v1895
    %1929 = vmatprep.subr.bf16.mxu0 %v1898
    %1930 = vmatpush1.bf16.msra.mxu0 %v1897
    %1931 = vmatprep.subr.bf16.mxu0 %v1900
    %1932 = vmatpush1.bf16.msra.mxu0 %v1899
    %1933 = vmatprep.subr.bf16.mxu0 %v1902
    %1934 = vmatpush1.bf16.msra.mxu0 %v1901
    %1935 = vmatprep.subr.bf16.mxu0 %v1904
    %1936 = vmatpush1.bf16.msra.mxu0 %v1903
    %1937 = vmatprep.subr.bf16.mxu0 %v1906
    %1938 = vmatpush1.bf16.msra.mxu0 %v1905
    %1939 = vmatprep.subr.bf16.mxu0 0
    %1940 = vmatpush1.bf16.msra.mxu0 0
    %1941 = vmatprep.subr.bf16.mxu0 0
    %1942 = vmatpush1.bf16.msra.mxu0 0
    %1943 = vmatprep.subr.bf16.mxu0 0
    %1944 = vmatpush1.bf16.msra.mxu0 0
    %1945 = vmatprep.subr.bf16.mxu0 0
    %1946 = vmatpush1.bf16.msra.mxu0 0
    %1947 = vmatprep.subr.bf16.mxu0 0
    %1948 = vmatpush1.bf16.msra.mxu0 0
    %1949 = vmatprep.subr.bf16.mxu0 0
    %1950 = vmatpush1.bf16.msra.mxu0 0
    %1951 = vmatprep.subr.bf16.mxu0 0
    %1952 = vmatpush1.bf16.msra.mxu0 0
    %1953 = vmatprep.subr.bf16.mxu0 0
    %1954 = vmatpush1.bf16.msra.mxu0 0
    %1955 = vmatprep.mubr.bf16.mxu0 0
    %1956 = vmatmul.mubr.bf16.gmra.mrb[0].mxu0 %v1831
    %v1957 = vpop.f32.mrb[0].mxu0
    %v1958 = vadd.f32 %v1836, %v1957
    %v1959 = vpop.f32.mrb[0].mxu0
    %v1960 = vadd.f32 %v1840, %v1959
    %v1961 = vpop.f32.mrb[0].mxu0
    %v1962 = vadd.f32 %v1836, %v1961
    %v1963 = vpop.f32.mrb[0].mxu0
    %v1964 = vadd.f32 %v1840, %v1963
    %1965 = vdwg.mxu0
    %v1966 = vmax.f32 %v1958, 0.0
    %v1967 = vmax.f32 %v1960, 0.0
    %v1968 = vmax.f32 %v1962, 0.0
    %v1969 = vmax.f32 %v1964, 0.0
    %s1970 = scalar_lea.vmem [#allocation5], 384
    %v1971 = vld [vmem:[%s1970] sm:$0xf]
    %v1972 = vld [vmem:[%s1970 + $0x4] sm:$0xf]
    %v1973 = vld [vmem:[%s1970 + $0x8] sm:$0xf]
    %v1974 = vld [vmem:[%s1970 + $0xc] sm:$0xf]
    %v1975 = vld [vmem:[%s1970 + $0x10] sm:$0xf]
    %v1976 = vld [vmem:[%s1970 + $0x14] sm:$0xf]
    %v1977 = vld [vmem:[%s1970 + $0x18] sm:$0xf]
    %v1978 = vld [vmem:[%s1970 + $0x1c] sm:$0xf]
    %v1979 = vld [vmem:[%s1970 + $0x20] sm:$0xf]
    %v1980 = vld [vmem:[%s1970 + $0x24] sm:$0xf]
    %v1981 = vld [vmem:[%s1970 + $0x28] sm:$0xf]
    %v1982 = vld [vmem:[%s1970 + $0x2c] sm:$0xf]
    %v1983 = vld [vmem:[%s1970 + $0x30] sm:$0xf]
    %v1984 = vld [vmem:[%s1970 + $0x34] sm:$0xf]
    %v1985 = vld [vmem:[%s1970 + $0x38] sm:$0xf]
    %v1986 = vld [vmem:[%s1970 + $0x3c] sm:$0xf]
    %v1987 = vld [vmem:[%s1970 + $0x40] sm:$0xf]
    %v1988 = vld [vmem:[%s1970 + $0x44] sm:$0xf]
    %v1989 = vld [vmem:[%s1970 + $0x48] sm:$0xf]
    %v1990 = vld [vmem:[%s1970 + $0x4c] sm:$0xf]
    %v1991 = vld [vmem:[%s1970 + $0x50] sm:$0xf]
    %v1992 = vld [vmem:[%s1970 + $0x54] sm:$0xf]
    %v1993 = vld [vmem:[%s1970 + $0x58] sm:$0xf]
    %v1994 = vld [vmem:[%s1970 + $0x5c] sm:$0xf]
    %v1995 = vld [vmem:[%s1970 + $0x60] sm:$0xf]
    %v1996 = vld [vmem:[%s1970 + $0x64] sm:$0xf]
    %v1997 = vld [vmem:[%s1970 + $0x68] sm:$0xf]
    %v1998 = vld [vmem:[%s1970 + $0x6c] sm:$0xf]
    %v1999 = vld [vmem:[%s1970 + $0x70] sm:$0xf]
    %v2000 = vld [vmem:[%s1970 + $0x74] sm:$0xf]
    %v2001 = vld [vmem:[%s1970 + $0x78] sm:$0xf]
    %v2002 = vld [vmem:[%s1970 + $0x7c] sm:$0xf]
    %v2003 = vld [vmem:[%s8 + $0x16] ss:$0 sm:$0xff]
    %v2004 = vpack.c.bf16 %v1968, %v1966
    %v2005 = vpack.c.bf16 %v1969, %v1967
    %v2038 = vunpack.c.l.b16 %v1971
    %v2039 = vunpack.c.l.b16 %v1972
    %v2040 = vunpack.c.l.b16 %v1973
    %v2041 = vunpack.c.l.b16 %v1974
    %v2042 = vunpack.c.l.b16 %v1975
    %v2043 = vunpack.c.l.b16 %v1976
    %v2044 = vunpack.c.l.b16 %v1977
    %v2045 = vunpack.c.l.b16 %v1978
    %v2046 = vunpack.c.l.b16 %v1979
    %v2047 = vunpack.c.l.b16 %v1980
    %v2048 = vunpack.c.l.b16 %v1981
    %v2049 = vunpack.c.l.b16 %v1982
    %v2050 = vunpack.c.l.b16 %v1983
    %v2051 = vunpack.c.l.b16 %v1984
    %v2052 = vunpack.c.l.b16 %v1985
    %v2053 = vunpack.c.l.b16 %v1986
    %v2054 = vunpack.c.l.b16 %v1987
    %v2055 = vunpack.c.l.b16 %v1988
    %v2056 = vunpack.c.l.b16 %v1989
    %v2057 = vunpack.c.l.b16 %v1990
    %v2058 = vunpack.c.l.b16 %v1991
    %v2059 = vunpack.c.l.b16 %v1992
    %v2060 = vunpack.c.l.b16 %v1993
    %v2061 = vunpack.c.l.b16 %v1994
    %v2062 = vunpack.c.l.b16 %v1995
    %v2063 = vunpack.c.l.b16 %v1996
    %v2064 = vunpack.c.l.b16 %v1997
    %v2065 = vunpack.c.l.b16 %v1998
    %v2066 = vunpack.c.l.b16 %v1999
    %v2067 = vunpack.c.l.b16 %v2000
    %v2068 = vunpack.c.l.b16 %v2001
    %v2069 = vunpack.c.l.b16 %v2002
    %v2070 = vpack.c.b16 %v2039, %v2038
    %v2071 = vpack.c.b16 %v2041, %v2040
    %v2072 = vpack.c.b16 %v2043, %v2042
    %v2073 = vpack.c.b16 %v2045, %v2044
    %v2074 = vpack.c.b16 %v2047, %v2046
    %v2075 = vpack.c.b16 %v2049, %v2048
    %v2076 = vpack.c.b16 %v2051, %v2050
    %v2077 = vpack.c.b16 %v2053, %v2052
    %v2078 = vpack.c.b16 %v2055, %v2054
    %v2079 = vpack.c.b16 %v2057, %v2056
    %v2080 = vpack.c.b16 %v2059, %v2058
    %v2081 = vpack.c.b16 %v2061, %v2060
    %v2082 = vpack.c.b16 %v2063, %v2062
    %v2083 = vpack.c.b16 %v2065, %v2064
    %v2084 = vpack.c.b16 %v2067, %v2066
    %v2085 = vpack.c.b16 %v2069, %v2068
    %2102 = vmatprep.subr.bf16.mxu0 0
    %2103 = vmatpush1.bf16.msra.mxu0 %v2070
    %2104 = vmatprep.subr.bf16.mxu0 0
    %2105 = vmatpush1.bf16.msra.mxu0 %v2071
    %2106 = vmatprep.subr.bf16.mxu0 0
    %2107 = vmatpush1.bf16.msra.mxu0 %v2072
    %2108 = vmatprep.subr.bf16.mxu0 0
    %2109 = vmatpush1.bf16.msra.mxu0 %v2073
    %2110 = vmatprep.subr.bf16.mxu0 0
    %2111 = vmatpush1.bf16.msra.mxu0 %v2074
    %2112 = vmatprep.subr.bf16.mxu0 0
    %2113 = vmatpush1.bf16.msra.mxu0 %v2075
    %2114 = vmatprep.subr.bf16.mxu0 0
    %2115 = vmatpush1.bf16.msra.mxu0 %v2076
    %2116 = vmatprep.subr.bf16.mxu0 0
    %2117 = vmatpush1.bf16.msra.mxu0 %v2077
    %2118 = vmatprep.subr.bf16.mxu0 0
    %2119 = vmatpush1.bf16.msra.mxu0 %v2078
    %2120 = vmatprep.subr.bf16.mxu0 0
    %2121 = vmatpush1.bf16.msra.mxu0 %v2079
    %2122 = vmatprep.subr.bf16.mxu0 0
    %2123 = vmatpush1.bf16.msra.mxu0 %v2080
    %2124 = vmatprep.subr.bf16.mxu0 0
    %2125 = vmatpush1.bf16.msra.mxu0 %v2081
    %2126 = vmatprep.subr.bf16.mxu0 0
    %2127 = vmatpush1.bf16.msra.mxu0 %v2082
    %2128 = vmatprep.subr.bf16.mxu0 0
    %2129 = vmatpush1.bf16.msra.mxu0 %v2083
    %2130 = vmatprep.subr.bf16.mxu0 0
    %2131 = vmatpush1.bf16.msra.mxu0 %v2084
    %2132 = vmatprep.subr.bf16.mxu0 0
    %2133 = vmatpush1.bf16.msra.mxu0 %v2085
    %2134 = vmatprep.mubr.bf16.mxu0 %v2005
    %2135 = vmatmul.mubr.bf16.gmra.mrb[0].mxu0 %v2004
    %v2136 = vpop.f32.mrb[0].mxu0
    %v2137 = vadd.f32 %v2003, %v2136
    %v2138 = vpop.f32.mrb[0].mxu0
    %v2139 = vpop.f32.mrb[0].mxu0
    %v2140 = vadd.f32 %v2003, %v2139
    %v2141 = vpop.f32.mrb[0].mxu0
    %2142 = vdwg.mxu0
    %v2143 = vmax.f32 %v2137, 0.0
    %v2144 = vmax.f32 %v2140, 0.0
    %s2145 = scalar_lea.vmem %s5, 192
    %v2146 = vld [vmem:[%s2145] sm:$0xf]
    %v2147 = vld [vmem:[%s2145 + $0x4] sm:$0xf]
    %v2148 = vld [vmem:[%s2145 + $0x8] sm:$0xf]
    %v2149 = vld [vmem:[%s2145 + $0xc] sm:$0xf]
    %v2150 = vld [vmem:[%s2145 + $0x10] sm:$0xf]
    %v2151 = vld [vmem:[%s2145 + $0x14] sm:$0xf]
    %v2152 = vld [vmem:[%s2145 + $0x18] sm:$0xf]
    %v2153 = vld [vmem:[%s2145 + $0x1c] sm:$0xf]
    %v2154 = vld [vmem:[%s2145 + $0x20] sm:$0xf]
    %v2155 = vld [vmem:[%s2145 + $0x24] sm:$0xf]
    %v2156 = vld [vmem:[%s2145 + $0x28] sm:$0xf]
    %v2157 = vld [vmem:[%s2145 + $0x2c] sm:$0xf]
    %v2158 = vld [vmem:[%s2145 + $0x30] sm:$0xf]
    %v2159 = vld [vmem:[%s2145 + $0x34] sm:$0xf]
    %v2160 = vld [vmem:[%s2145 + $0x38] sm:$0xf]
    %v2161 = vld [vmem:[%s2145 + $0x3c] sm:$0xf]
    %v2162 = vld [vmem:[%s8 + $0x17] ss:$0 sm:$0xff]
    %v2163 = vpack.c.bf16 %v2144, %v2143
    %v2180 = vunpack.c.l.b16 %v2146
    %v2181 = vunpack.c.l.b16 %v2147
    %v2182 = vunpack.c.l.b16 %v2148
    %v2183 = vunpack.c.l.b16 %v2149
    %v2184 = vunpack.c.l.b16 %v2150
    %v2185 = vunpack.c.l.b16 %v2151
    %v2186 = vunpack.c.l.b16 %v2152
    %v2187 = vunpack.c.l.b16 %v2153
    %v2188 = vunpack.c.l.b16 %v2154
    %v2189 = vunpack.c.l.b16 %v2155
    %v2190 = vunpack.c.l.b16 %v2156
    %v2191 = vunpack.c.l.b16 %v2157
    %v2192 = vunpack.c.l.b16 %v2158
    %v2193 = vunpack.c.l.b16 %v2159
    %v2194 = vunpack.c.l.b16 %v2160
    %v2195 = vunpack.c.l.b16 %v2161
    %v2196 = vpack.c.b16 %v2181, %v2180
    %v2197 = vpack.c.b16 %v2183, %v2182
    %v2198 = vpack.c.b16 %v2185, %v2184
    %v2199 = vpack.c.b16 %v2187, %v2186
    %v2200 = vpack.c.b16 %v2189, %v2188
    %v2201 = vpack.c.b16 %v2191, %v2190
    %v2202 = vpack.c.b16 %v2193, %v2192
    %v2203 = vpack.c.b16 %v2195, %v2194
    %2212 = vmatprep.subr.bf16.mxu0 0
    %2213 = vmatpush1.bf16.msra.mxu0 %v2196
    %2214 = vmatprep.subr.bf16.mxu0 0
    %2215 = vmatpush1.bf16.msra.mxu0 %v2197
    %2216 = vmatprep.subr.bf16.mxu0 0
    %2217 = vmatpush1.bf16.msra.mxu0 %v2198
    %2218 = vmatprep.subr.bf16.mxu0 0
    %2219 = vmatpush1.bf16.msra.mxu0 %v2199
    %2220 = vmatprep.subr.bf16.mxu0 0
    %2221 = vmatpush1.bf16.msra.mxu0 %v2200
    %2222 = vmatprep.subr.bf16.mxu0 0
    %2223 = vmatpush1.bf16.msra.mxu0 %v2201
    %2224 = vmatprep.subr.bf16.mxu0 0
    %2225 = vmatpush1.bf16.msra.mxu0 %v2202
    %2226 = vmatprep.subr.bf16.mxu0 0
    %2227 = vmatpush1.bf16.msra.mxu0 %v2203
    %2228 = vmatprep.subr.bf16.mxu0 0
    %2229 = vmatpush1.bf16.msra.mxu0 0
    %2230 = vmatprep.subr.bf16.mxu0 0
    %2231 = vmatpush1.bf16.msra.mxu0 0
    %2232 = vmatprep.subr.bf16.mxu0 0
    %2233 = vmatpush1.bf16.msra.mxu0 0
    %2234 = vmatprep.subr.bf16.mxu0 0
    %2235 = vmatpush1.bf16.msra.mxu0 0
    %2236 = vmatprep.subr.bf16.mxu0 0
    %2237 = vmatpush1.bf16.msra.mxu0 0
    %2238 = vmatprep.subr.bf16.mxu0 0
    %2239 = vmatpush1.bf16.msra.mxu0 0
    %2240 = vmatprep.subr.bf16.mxu0 0
    %2241 = vmatpush1.bf16.msra.mxu0 0
    %2242 = vmatprep.subr.bf16.mxu0 0
    %2243 = vmatpush1.bf16.msra.mxu0 0
    %2244 = vmatprep.mubr.bf16.mxu0 0
    %2245 = vmatmul.mubr.bf16.gmra.mrb[0].mxu0 %v2163
    %v2246 = vpop.f32.mrb[0].mxu0
    %v2247 = vadd.f32 %v2162, %v2246
    %v2248 = vpop.f32.mrb[0].mxu0
    %v2249 = vpop.f32.mrb[0].mxu0
    %v2250 = vadd.f32 %v2162, %v2249
    %v2251 = vpop.f32.mrb[0].mxu0
    %2252 = vdwg.mxu0
    %v2253 = vmax.f32 %v2247, 0.0
    %v2254 = vmax.f32 %v2250, 0.0
    %s2255 = scalar_lea.vmem %s6, 48
    %v2256 = vld [vmem:[%s2255] sm:$0xf]
    %v2257 = vld [vmem:[%s2255 + $0x4] sm:$0xf]
    %v2258 = vld [vmem:[%s2255 + $0x8] sm:$0xf]
    %v2259 = vld [vmem:[%s2255 + $0xc] sm:$0xf]
    %v2260 = vld [vmem:[%s8 + $0x20] ss:$0 sm:$0xff]
    %v2261 = vpack.c.bf16 %v2254, %v2253
    %v2266 = vunpack.c.l.b16 %v2256
    %v2267 = vunpack.c.l.b16 %v2257
    %v2268 = vunpack.c.l.b16 %v2258
    %v2269 = vunpack.c.l.b16 %v2259
    %v2270 = vpack.c.b16 %v2267, %v2266
    %v2271 = vpack.c.b16 %v2269, %v2268
    %v2275 = vsel %vm587, %v2261, 0
    %2277 = vmatprep.subr.bf16.mxu0 0
    %2278 = vmatpush1.bf16.msra.mxu0 %v2270
    %2279 = vmatprep.subr.bf16.mxu0 0
    %2280 = vmatpush1.bf16.msra.mxu0 %v2271
    %2281 = vmatprep.subr.bf16.mxu0 0
    %2282 = vmatpush1.bf16.msra.mxu0 0
    %2283 = vmatprep.subr.bf16.mxu0 0
    %2284 = vmatpush1.bf16.msra.mxu0 0
    %2285 = vmatprep.subr.bf16.mxu0 0
    %2286 = vmatpush1.bf16.msra.mxu0 0
    %2287 = vmatprep.subr.bf16.mxu0 0
    %2288 = vmatpush1.bf16.msra.mxu0 0
    %2289 = vmatprep.subr.bf16.mxu0 0
    %2290 = vmatpush1.bf16.msra.mxu0 0
    %2291 = vmatprep.subr.bf16.mxu0 0
    %2292 = vmatpush1.bf16.msra.mxu0 0
    %2293 = vmatprep.subr.bf16.mxu0 0
    %2294 = vmatpush1.bf16.msra.mxu0 0
    %2295 = vmatprep.subr.bf16.mxu0 0
    %2296 = vmatpush1.bf16.msra.mxu0 0
    %2297 = vmatprep.subr.bf16.mxu0 0
    %2298 = vmatpush1.bf16.msra.mxu0 0
    %2299 = vmatprep.subr.bf16.mxu0 0
    %2300 = vmatpush1.bf16.msra.mxu0 0
    %2301 = vmatprep.subr.bf16.mxu0 0
    %2302 = vmatpush1.bf16.msra.mxu0 0
    %2303 = vmatprep.subr.bf16.mxu0 0
    %2304 = vmatpush1.bf16.msra.mxu0 0
    %2305 = vmatprep.subr.bf16.mxu0 0
    %2306 = vmatpush1.bf16.msra.mxu0 0
    %2307 = vmatprep.subr.bf16.mxu0 0
    %2308 = vmatpush1.bf16.msra.mxu0 0
    %2309 = vmatprep.mubr.bf16.mxu0 0
    %2310 = vmatmul.mubr.bf16.gmra.mrb[0].mxu0 %v2275
    %v2311 = vpop.f32.mrb[0].mxu0
    %v2312 = vadd.f32 %v2260, %v2311
    %v2313 = vpop.f32.mrb[0].mxu0
    %v2314 = vpop.f32.mrb[0].mxu0
    %v2315 = vadd.f32 %v2260, %v2314
    %v2316 = vpop.f32.mrb[0].mxu0
    %2317 = vdwg.mxu0
    %v2318 = vmax.f32 %v2312, 0.0
    %v2319 = vmax.f32 %v2315, 0.0
    %s2320 = scalar_lea.vmem [#allocation2], 512
    %v2321 = vld [vmem:[%s2320] sm:$0xff]
    %v2322 = vld [vmem:[%s2320 + $0x8] sm:$0xff]
    %v2323 = vld [vmem:[%s2320 + $0x10] sm:$0xff]
    %v2324 = vld [vmem:[%s2320 + $0x18] sm:$0xff]
    %v2325 = vld [vmem:[%s2320 + $0x20] sm:$0xff]
    %v2326 = vld [vmem:[%s2320 + $0x28] sm:$0xff]
    %v2327 = vld [vmem:[%s2320 + $0x30] sm:$0xff]
    %v2328 = vld [vmem:[%s2320 + $0x38] sm:$0xff]
    %v2329 = vld [vmem:[%s2320 + $0x40] sm:$0xff]
    %v2330 = vld [vmem:[%s2320 + $0x48] sm:$0xff]
    %v2331 = vld [vmem:[%s2320 + $0x50] sm:$0xff]
    %v2332 = vld [vmem:[%s2320 + $0x58] sm:$0xff]
    %v2333 = vld [vmem:[%s2320 + $0x60] sm:$0xff]
    %v2334 = vld [vmem:[%s2320 + $0x68] sm:$0xff]
    %v2335 = vld [vmem:[%s2320 + $0x70] sm:$0xff]
    %v2336 = vld [vmem:[%s2320 + $0x78] sm:$0xff]
    %s2337 = scalar_lea.vmem %s8, 33
    %v2338 = vld [vmem:[%s2337] ss:$8 sm:$0x3]
    %v2339 = vpack.c.bf16 %v2319, %v2318
    %v2341 = vlaneseq
    %v2342 = vshrl.u32 %v2341, 7
    %v2343 = vsub.s32 0, %v2342
    %v2344 = vrot.slane %v2338, %v2343
    %v2345 = vlaneseq
    %v2346 = vshrl.u32 %v2345, 7
    %v2347 = vsub.s32 1, %v2346
    %v2348 = vrot.slane %v2338, %v2347
    %v2367 = vunpack.c.l.b16 %v2321
    %v2368 = vunpack.c.h.b16 %v2321
    %v2369 = vunpack.c.l.b16 %v2322
    %v2370 = vunpack.c.h.b16 %v2322
    %v2371 = vunpack.c.l.b16 %v2323
    %v2372 = vunpack.c.h.b16 %v2323
    %v2373 = vunpack.c.l.b16 %v2324
    %v2374 = vunpack.c.h.b16 %v2324
    %v2375 = vunpack.c.l.b16 %v2325
    %v2376 = vunpack.c.h.b16 %v2325
    %v2377 = vunpack.c.l.b16 %v2326
    %v2378 = vunpack.c.h.b16 %v2326
    %v2379 = vunpack.c.l.b16 %v2327
    %v2380 = vunpack.c.h.b16 %v2327
    %v2381 = vunpack.c.l.b16 %v2328
    %v2382 = vunpack.c.h.b16 %v2328
    %v2383 = vunpack.c.l.b16 %v2329
    %v2384 = vunpack.c.h.b16 %v2329
    %v2385 = vunpack.c.l.b16 %v2330
    %v2386 = vunpack.c.h.b16 %v2330
    %v2387 = vunpack.c.l.b16 %v2331
    %v2388 = vunpack.c.h.b16 %v2331
    %v2389 = vunpack.c.l.b16 %v2332
    %v2390 = vunpack.c.h.b16 %v2332
    %v2391 = vunpack.c.l.b16 %v2333
    %v2392 = vunpack.c.h.b16 %v2333
    %v2393 = vunpack.c.l.b16 %v2334
    %v2394 = vunpack.c.h.b16 %v2334
    %v2395 = vunpack.c.l.b16 %v2335
    %v2396 = vunpack.c.h.b16 %v2335
    %v2397 = vunpack.c.l.b16 %v2336
    %v2398 = vunpack.c.h.b16 %v2336
    %v2399 = vpack.c.b16 %v2369, %v2367
    %v2400 = vpack.c.b16 %v2370, %v2368
    %v2401 = vpack.c.b16 %v2373, %v2371
    %v2402 = vpack.c.b16 %v2374, %v2372
    %v2403 = vpack.c.b16 %v2377, %v2375
    %v2404 = vpack.c.b16 %v2378, %v2376
    %v2405 = vpack.c.b16 %v2381, %v2379
    %v2406 = vpack.c.b16 %v2382, %v2380
    %v2407 = vpack.c.b16 %v2385, %v2383
    %v2408 = vpack.c.b16 %v2386, %v2384
    %v2409 = vpack.c.b16 %v2389, %v2387
    %v2410 = vpack.c.b16 %v2390, %v2388
    %v2411 = vpack.c.b16 %v2393, %v2391
    %v2412 = vpack.c.b16 %v2394, %v2392
    %v2413 = vpack.c.b16 %v2397, %v2395
    %v2414 = vpack.c.b16 %v2398, %v2396
    %2431 = vmatprep.subr.bf16.mxu0 %v2400
    %2432 = vmatpush1.bf16.msra.mxu0 %v2399
    %2433 = vmatprep.subr.bf16.mxu0 %v2402
    %2434 = vmatpush1.bf16.msra.mxu0 %v2401
    %2435 = vmatprep.subr.bf16.mxu0 %v2404
    %2436 = vmatpush1.bf16.msra.mxu0 %v2403
    %2437 = vmatprep.subr.bf16.mxu0 %v2406
    %2438 = vmatpush1.bf16.msra.mxu0 %v2405
    %2439 = vmatprep.subr.bf16.mxu0 %v2408
    %2440 = vmatpush1.bf16.msra.mxu0 %v2407
    %2441 = vmatprep.subr.bf16.mxu0 %v2410
    %2442 = vmatpush1.bf16.msra.mxu0 %v2409
    %2443 = vmatprep.subr.bf16.mxu0 %v2412
    %2444 = vmatpush1.bf16.msra.mxu0 %v2411
    %2445 = vmatprep.subr.bf16.mxu0 %v2414
    %2446 = vmatpush1.bf16.msra.mxu0 %v2413
    %2447 = vmatprep.subr.bf16.mxu0 0
    %2448 = vmatpush1.bf16.msra.mxu0 0
    %2449 = vmatprep.subr.bf16.mxu0 0
    %2450 = vmatpush1.bf16.msra.mxu0 0
    %2451 = vmatprep.subr.bf16.mxu0 0
    %2452 = vmatpush1.bf16.msra.mxu0 0
    %2453 = vmatprep.subr.bf16.mxu0 0
    %2454 = vmatpush1.bf16.msra.mxu0 0
    %2455 = vmatprep.subr.bf16.mxu0 0
    %2456 = vmatpush1.bf16.msra.mxu0 0
    %2457 = vmatprep.subr.bf16.mxu0 0
    %2458 = vmatpush1.bf16.msra.mxu0 0
    %2459 = vmatprep.subr.bf16.mxu0 0
    %2460 = vmatpush1.bf16.msra.mxu0 0
    %2461 = vmatprep.subr.bf16.mxu0 0
    %2462 = vmatpush1.bf16.msra.mxu0 0
    %2463 = vmatprep.mubr.bf16.mxu0 0
    %2464 = vmatmul.mubr.bf16.gmra.mrb[0].mxu0 %v2339
    %v2465 = vpop.f32.mrb[0].mxu0
    %v2466 = vadd.f32 %v2344, %v2465
    %v2467 = vpop.f32.mrb[0].mxu0
    %v2468 = vadd.f32 %v2348, %v2467
    %v2469 = vpop.f32.mrb[0].mxu0
    %v2470 = vadd.f32 %v2344, %v2469
    %v2471 = vpop.f32.mrb[0].mxu0
    %v2472 = vadd.f32 %v2348, %v2471
    %2473 = vdwg.mxu0
    %v2474 = vmax.f32 %v2466, 0.0
    %v2475 = vmax.f32 %v2468, 0.0
    %v2476 = vmax.f32 %v2470, 0.0
    %v2477 = vmax.f32 %v2472, 0.0
    %s2478 = scalar_lea.vmem [#allocation5], 512
    %v2479 = vld [vmem:[%s2478] sm:$0xf]
    %v2480 = vld [vmem:[%s2478 + $0x4] sm:$0xf]
    %v2481 = vld [vmem:[%s2478 + $0x8] sm:$0xf]
    %v2482 = vld [vmem:[%s2478 + $0xc] sm:$0xf]
    %v2483 = vld [vmem:[%s2478 + $0x10] sm:$0xf]
    %v2484 = vld [vmem:[%s2478 + $0x14] sm:$0xf]
    %v2485 = vld [vmem:[%s2478 + $0x18] sm:$0xf]
    %v2486 = vld [vmem:[%s2478 + $0x1c] sm:$0xf]
    %v2487 = vld [vmem:[%s2478 + $0x20] sm:$0xf]
    %v2488 = vld [vmem:[%s2478 + $0x24] sm:$0xf]
    %v2489 = vld [vmem:[%s2478 + $0x28] sm:$0xf]
    %v2490 = vld [vmem:[%s2478 + $0x2c] sm:$0xf]
    %v2491 = vld [vmem:[%s2478 + $0x30] sm:$0xf]
    %v2492 = vld [vmem:[%s2478 + $0x34] sm:$0xf]
    %v2493 = vld [vmem:[%s2478 + $0x38] sm:$0xf]
    %v2494 = vld [vmem:[%s2478 + $0x3c] sm:$0xf]
    %v2495 = vld [vmem:[%s2478 + $0x40] sm:$0xf]
    %v2496 = vld [vmem:[%s2478 + $0x44] sm:$0xf]
    %v2497 = vld [vmem:[%s2478 + $0x48] sm:$0xf]
    %v2498 = vld [vmem:[%s2478 + $0x4c] sm:$0xf]
    %v2499 = vld [vmem:[%s2478 + $0x50] sm:$0xf]
    %v2500 = vld [vmem:[%s2478 + $0x54] sm:$0xf]
    %v2501 = vld [vmem:[%s2478 + $0x58] sm:$0xf]
    %v2502 = vld [vmem:[%s2478 + $0x5c] sm:$0xf]
    %v2503 = vld [vmem:[%s2478 + $0x60] sm:$0xf]
    %v2504 = vld [vmem:[%s2478 + $0x64] sm:$0xf]
    %v2505 = vld [vmem:[%s2478 + $0x68] sm:$0xf]
    %v2506 = vld [vmem:[%s2478 + $0x6c] sm:$0xf]
    %v2507 = vld [vmem:[%s2478 + $0x70] sm:$0xf]
    %v2508 = vld [vmem:[%s2478 + $0x74] sm:$0xf]
    %v2509 = vld [vmem:[%s2478 + $0x78] sm:$0xf]
    %v2510 = vld [vmem:[%s2478 + $0x7c] sm:$0xf]
    %v2511 = vld [vmem:[%s8 + $0x22] ss:$0 sm:$0xff]
    %v2512 = vpack.c.bf16 %v2476, %v2474
    %v2513 = vpack.c.bf16 %v2477, %v2475
    %v2546 = vunpack.c.l.b16 %v2479
    %v2547 = vunpack.c.l.b16 %v2480
    %v2548 = vunpack.c.l.b16 %v2481
    %v2549 = vunpack.c.l.b16 %v2482
    %v2550 = vunpack.c.l.b16 %v2483
    %v2551 = vunpack.c.l.b16 %v2484
    %v2552 = vunpack.c.l.b16 %v2485
    %v2553 = vunpack.c.l.b16 %v2486
    %v2554 = vunpack.c.l.b16 %v2487
    %v2555 = vunpack.c.l.b16 %v2488
    %v2556 = vunpack.c.l.b16 %v2489
    %v2557 = vunpack.c.l.b16 %v2490
    %v2558 = vunpack.c.l.b16 %v2491
    %v2559 = vunpack.c.l.b16 %v2492
    %v2560 = vunpack.c.l.b16 %v2493
    %v2561 = vunpack.c.l.b16 %v2494
    %v2562 = vunpack.c.l.b16 %v2495
    %v2563 = vunpack.c.l.b16 %v2496
    %v2564 = vunpack.c.l.b16 %v2497
    %v2565 = vunpack.c.l.b16 %v2498
    %v2566 = vunpack.c.l.b16 %v2499
    %v2567 = vunpack.c.l.b16 %v2500
    %v2568 = vunpack.c.l.b16 %v2501
    %v2569 = vunpack.c.l.b16 %v2502
    %v2570 = vunpack.c.l.b16 %v2503
    %v2571 = vunpack.c.l.b16 %v2504
    %v2572 = vunpack.c.l.b16 %v2505
    %v2573 = vunpack.c.l.b16 %v2506
    %v2574 = vunpack.c.l.b16 %v2507
    %v2575 = vunpack.c.l.b16 %v2508
    %v2576 = vunpack.c.l.b16 %v2509
    %v2577 = vunpack.c.l.b16 %v2510
    %v2578 = vpack.c.b16 %v2547, %v2546
    %v2579 = vpack.c.b16 %v2549, %v2548
    %v2580 = vpack.c.b16 %v2551, %v2550
    %v2581 = vpack.c.b16 %v2553, %v2552
    %v2582 = vpack.c.b16 %v2555, %v2554
    %v2583 = vpack.c.b16 %v2557, %v2556
    %v2584 = vpack.c.b16 %v2559, %v2558
    %v2585 = vpack.c.b16 %v2561, %v2560
    %v2586 = vpack.c.b16 %v2563, %v2562
    %v2587 = vpack.c.b16 %v2565, %v2564
    %v2588 = vpack.c.b16 %v2567, %v2566
    %v2589 = vpack.c.b16 %v2569, %v2568
    %v2590 = vpack.c.b16 %v2571, %v2570
    %v2591 = vpack.c.b16 %v2573, %v2572
    %v2592 = vpack.c.b16 %v2575, %v2574
    %v2593 = vpack.c.b16 %v2577, %v2576
    %2610 = vmatprep.subr.bf16.mxu0 0
    %2611 = vmatpush1.bf16.msra.mxu0 %v2578
    %2612 = vmatprep.subr.bf16.mxu0 0
    %2613 = vmatpush1.bf16.msra.mxu0 %v2579
    %2614 = vmatprep.subr.bf16.mxu0 0
    %2615 = vmatpush1.bf16.msra.mxu0 %v2580
    %2616 = vmatprep.subr.bf16.mxu0 0
    %2617 = vmatpush1.bf16.msra.mxu0 %v2581
    %2618 = vmatprep.subr.bf16.mxu0 0
    %2619 = vmatpush1.bf16.msra.mxu0 %v2582
    %2620 = vmatprep.subr.bf16.mxu0 0
    %2621 = vmatpush1.bf16.msra.mxu0 %v2583
    %2622 = vmatprep.subr.bf16.mxu0 0
    %2623 = vmatpush1.bf16.msra.mxu0 %v2584
    %2624 = vmatprep.subr.bf16.mxu0 0
    %2625 = vmatpush1.bf16.msra.mxu0 %v2585
    %2626 = vmatprep.subr.bf16.mxu0 0
    %2627 = vmatpush1.bf16.msra.mxu0 %v2586
    %2628 = vmatprep.subr.bf16.mxu0 0
    %2629 = vmatpush1.bf16.msra.mxu0 %v2587
    %2630 = vmatprep.subr.bf16.mxu0 0
    %2631 = vmatpush1.bf16.msra.mxu0 %v2588
    %2632 = vmatprep.subr.bf16.mxu0 0
    %2633 = vmatpush1.bf16.msra.mxu0 %v2589
    %2634 = vmatprep.subr.bf16.mxu0 0
    %2635 = vmatpush1.bf16.msra.mxu0 %v2590
    %2636 = vmatprep.subr.bf16.mxu0 0
    %2637 = vmatpush1.bf16.msra.mxu0 %v2591
    %2638 = vmatprep.subr.bf16.mxu0 0
    %2639 = vmatpush1.bf16.msra.mxu0 %v2592
    %2640 = vmatprep.subr.bf16.mxu0 0
    %2641 = vmatpush1.bf16.msra.mxu0 %v2593
    %2642 = vmatprep.mubr.bf16.mxu0 %v2513
    %2643 = vmatmul.mubr.bf16.gmra.mrb[0].mxu0 %v2512
    %v2644 = vpop.f32.mrb[0].mxu0
    %v2645 = vadd.f32 %v2511, %v2644
    %v2646 = vpop.f32.mrb[0].mxu0
    %v2647 = vpop.f32.mrb[0].mxu0
    %v2648 = vadd.f32 %v2511, %v2647
    %v2649 = vpop.f32.mrb[0].mxu0
    %2650 = vdwg.mxu0
    %v2651 = vmax.f32 %v2645, 0.0
    %v2652 = vmax.f32 %v2648, 0.0
    %s2653 = scalar_lea.vmem %s5, 256
    %v2654 = vld [vmem:[%s2653] sm:$0xf]
    %v2655 = vld [vmem:[%s2653 + $0x4] sm:$0xf]
    %v2656 = vld [vmem:[%s2653 + $0x8] sm:$0xf]
    %v2657 = vld [vmem:[%s2653 + $0xc] sm:$0xf]
    %v2658 = vld [vmem:[%s2653 + $0x10] sm:$0xf]
    %v2659 = vld [vmem:[%s2653 + $0x14] sm:$0xf]
    %v2660 = vld [vmem:[%s2653 + $0x18] sm:$0xf]
    %v2661 = vld [vmem:[%s2653 + $0x1c] sm:$0xf]
    %v2662 = vld [vmem:[%s2653 + $0x20] sm:$0xf]
    %v2663 = vld [vmem:[%s2653 + $0x24] sm:$0xf]
    %v2664 = vld [vmem:[%s2653 + $0x28] sm:$0xf]
    %v2665 = vld [vmem:[%s2653 + $0x2c] sm:$0xf]
    %v2666 = vld [vmem:[%s2653 + $0x30] sm:$0xf]
    %v2667 = vld [vmem:[%s2653 + $0x34] sm:$0xf]
    %v2668 = vld [vmem:[%s2653 + $0x38] sm:$0xf]
    %v2669 = vld [vmem:[%s2653 + $0x3c] sm:$0xf]
    %v2670 = vld [vmem:[%s8 + $0x23] ss:$0 sm:$0xff]
    %v2671 = vpack.c.bf16 %v2652, %v2651
    %v2688 = vunpack.c.l.b16 %v2654
    %v2689 = vunpack.c.l.b16 %v2655
    %v2690 = vunpack.c.l.b16 %v2656
    %v2691 = vunpack.c.l.b16 %v2657
    %v2692 = vunpack.c.l.b16 %v2658
    %v2693 = vunpack.c.l.b16 %v2659
    %v2694 = vunpack.c.l.b16 %v2660
    %v2695 = vunpack.c.l.b16 %v2661
    %v2696 = vunpack.c.l.b16 %v2662
    %v2697 = vunpack.c.l.b16 %v2663
    %v2698 = vunpack.c.l.b16 %v2664
    %v2699 = vunpack.c.l.b16 %v2665
    %v2700 = vunpack.c.l.b16 %v2666
    %v2701 = vunpack.c.l.b16 %v2667
    %v2702 = vunpack.c.l.b16 %v2668
    %v2703 = vunpack.c.l.b16 %v2669
    %v2704 = vpack.c.b16 %v2689, %v2688
    %v2705 = vpack.c.b16 %v2691, %v2690
    %v2706 = vpack.c.b16 %v2693, %v2692
    %v2707 = vpack.c.b16 %v2695, %v2694
    %v2708 = vpack.c.b16 %v2697, %v2696
    %v2709 = vpack.c.b16 %v2699, %v2698
    %v2710 = vpack.c.b16 %v2701, %v2700
    %v2711 = vpack.c.b16 %v2703, %v2702
    %2720 = vmatprep.subr.bf16.mxu0 0
    %2721 = vmatpush1.bf16.msra.mxu0 %v2704
    %2722 = vmatprep.subr.bf16.mxu0 0
    %2723 = vmatpush1.bf16.msra.mxu0 %v2705
    %2724 = vmatprep.subr.bf16.mxu0 0
    %2725 = vmatpush1.bf16.msra.mxu0 %v2706
    %2726 = vmatprep.subr.bf16.mxu0 0
    %2727 = vmatpush1.bf16.msra.mxu0 %v2707
    %2728 = vmatprep.subr.bf16.mxu0 0
    %2729 = vmatpush1.bf16.msra.mxu0 %v2708
    %2730 = vmatprep.subr.bf16.mxu0 0
    %2731 = vmatpush1.bf16.msra.mxu0 %v2709
    %2732 = vmatprep.subr.bf16.mxu0 0
    %2733 = vmatpush1.bf16.msra.mxu0 %v2710
    %2734 = vmatprep.subr.bf16.mxu0 0
    %2735 = vmatpush1.bf16.msra.mxu0 %v2711
    %2736 = vmatprep.subr.bf16.mxu0 0
    %2737 = vmatpush1.bf16.msra.mxu0 0
    %2738 = vmatprep.subr.bf16.mxu0 0
    %2739 = vmatpush1.bf16.msra.mxu0 0
    %2740 = vmatprep.subr.bf16.mxu0 0
    %2741 = vmatpush1.bf16.msra.mxu0 0
    %2742 = vmatprep.subr.bf16.mxu0 0
    %2743 = vmatpush1.bf16.msra.mxu0 0
    %2744 = vmatprep.subr.bf16.mxu0 0
    %2745 = vmatpush1.bf16.msra.mxu0 0
    %2746 = vmatprep.subr.bf16.mxu0 0
    %2747 = vmatpush1.bf16.msra.mxu0 0
    %2748 = vmatprep.subr.bf16.mxu0 0
    %2749 = vmatpush1.bf16.msra.mxu0 0
    %2750 = vmatprep.subr.bf16.mxu0 0
    %2751 = vmatpush1.bf16.msra.mxu0 0
    %2752 = vmatprep.mubr.bf16.mxu0 0
    %2753 = vmatmul.mubr.bf16.gmra.mrb[0].mxu0 %v2671
    %v2754 = vpop.f32.mrb[0].mxu0
    %v2755 = vadd.f32 %v2670, %v2754
    %v2756 = vpop.f32.mrb[0].mxu0
    %v2757 = vpop.f32.mrb[0].mxu0
    %v2758 = vadd.f32 %v2670, %v2757
    %v2759 = vpop.f32.mrb[0].mxu0
    %2760 = vdwg.mxu0
    %v2761 = vmax.f32 %v2755, 0.0
    %v2762 = vmax.f32 %v2758, 0.0
    %s2763 = scalar_lea.vmem %s6, 64
    %v2764 = vld [vmem:[%s2763] sm:$0xf]
    %v2765 = vld [vmem:[%s2763 + $0x4] sm:$0xf]
    %v2766 = vld [vmem:[%s2763 + $0x8] sm:$0xf]
    %v2767 = vld [vmem:[%s2763 + $0xc] sm:$0xf]
    %v2768 = vld [vmem:[%s8 + $0x24] ss:$0 sm:$0xff]
    %v2773 = vunpack.c.l.b16 %v2764
    %v2774 = vunpack.c.l.b16 %v2765
    %v2775 = vunpack.c.l.b16 %v2766
    %v2776 = vunpack.c.l.b16 %v2767
    %v2777 = vpack.c.b16 %v2774, %v2773
    %v2778 = vpack.c.b16 %v2776, %v2775
    %2781 = vmatprep.subr.bf16.mxu0 0
    %2782 = vmatpush1.bf16.msra.mxu0 %v2777
    %2783 = vmatprep.subr.bf16.mxu0 0
    %2784 = vmatpush1.bf16.msra.mxu0 %v2778
    %2785 = vmatprep.subr.bf16.mxu0 0
    %2786 = vmatpush1.bf16.msra.mxu0 0
    %2787 = vmatprep.subr.bf16.mxu0 0
    %2788 = vmatpush1.bf16.msra.mxu0 0
    %2789 = vmatprep.subr.bf16.mxu0 0
    %2790 = vmatpush1.bf16.msra.mxu0 0
    %2791 = vmatprep.subr.bf16.mxu0 0
    %2792 = vmatpush1.bf16.msra.mxu0 0
    %2793 = vmatprep.subr.bf16.mxu0 0
    %2794 = vmatpush1.bf16.msra.mxu0 0
    %2795 = vmatprep.subr.bf16.mxu0 0
    %2796 = vmatpush1.bf16.msra.mxu0 0
    %2797 = vmatprep.subr.bf16.mxu0 0
    %2798 = vmatpush1.bf16.msra.mxu0 0
    %2799 = vmatprep.subr.bf16.mxu0 0
    %2800 = vmatpush1.bf16.msra.mxu0 0
    %2801 = vmatprep.subr.bf16.mxu0 0
    %2802 = vmatpush1.bf16.msra.mxu0 0
    %2803 = vmatprep.subr.bf16.mxu0 0
    %2804 = vmatpush1.bf16.msra.mxu0 0
    %2805 = vmatprep.subr.bf16.mxu0 0
    %2806 = vmatpush1.bf16.msra.mxu0 0
    %2807 = vmatprep.subr.bf16.mxu0 0
    %2808 = vmatpush1.bf16.msra.mxu0 0
    %2809 = vmatprep.subr.bf16.mxu0 0
    %2810 = vmatpush1.bf16.msra.mxu0 0
    %2811 = vmatprep.subr.bf16.mxu0 0
    %2812 = vmatpush1.bf16.msra.mxu0 0
    %2813 = vmatprep.mubr.bf16.mxu0 0
    %2814 = vmatmul.mubr.bf16.gmra.mrb[0].mxu0 %v2275
    %v2815 = vpop.f32.mrb[0].mxu0
    %v2816 = vadd.f32 %v2768, %v2815
    %v2817 = vpop.f32.mrb[0].mxu0
    %v2818 = vpop.f32.mrb[0].mxu0
    %v2819 = vadd.f32 %v2768, %v2818
    %v2820 = vpop.f32.mrb[0].mxu0
    %2821 = vdwg.mxu0
    %v2822 = vmax.f32 %v2816, 0.0
    %v2823 = vmax.f32 %v2819, 0.0
    %s2824 = scalar_lea.vmem [#allocation2], 640
    %v2825 = vld [vmem:[%s2824] sm:$0xff]
    %v2826 = vld [vmem:[%s2824 + $0x8] sm:$0xff]
    %v2827 = vld [vmem:[%s2824 + $0x10] sm:$0xff]
    %v2828 = vld [vmem:[%s2824 + $0x18] sm:$0xff]
    %v2829 = vld [vmem:[%s2824 + $0x20] sm:$0xff]
    %v2830 = vld [vmem:[%s2824 + $0x28] sm:$0xff]
    %v2831 = vld [vmem:[%s2824 + $0x30] sm:$0xff]
    %v2832 = vld [vmem:[%s2824 + $0x38] sm:$0xff]
    %v2833 = vld [vmem:[%s2824 + $0x40] sm:$0xff]
    %v2834 = vld [vmem:[%s2824 + $0x48] sm:$0xff]
    %v2835 = vld [vmem:[%s2824 + $0x50] sm:$0xff]
    %v2836 = vld [vmem:[%s2824 + $0x58] sm:$0xff]
    %v2837 = vld [vmem:[%s2824 + $0x60] sm:$0xff]
    %v2838 = vld [vmem:[%s2824 + $0x68] sm:$0xff]
    %v2839 = vld [vmem:[%s2824 + $0x70] sm:$0xff]
    %v2840 = vld [vmem:[%s2824 + $0x78] sm:$0xff]
    %s2841 = scalar_lea.vmem %s8, 37
    %v2842 = vld [vmem:[%s2841] ss:$8 sm:$0x3]
    %v2843 = vpack.c.bf16 %v2823, %v2822
    %v2845 = vlaneseq
    %v2846 = vshrl.u32 %v2845, 7
    %v2847 = vsub.s32 0, %v2846
    %v2848 = vrot.slane %v2842, %v2847
    %v2849 = vlaneseq
    %v2850 = vshrl.u32 %v2849, 7
    %v2851 = vsub.s32 1, %v2850
    %v2852 = vrot.slane %v2842, %v2851
    %v2871 = vunpack.c.l.b16 %v2825
    %v2872 = vunpack.c.h.b16 %v2825
    %v2873 = vunpack.c.l.b16 %v2826
    %v2874 = vunpack.c.h.b16 %v2826
    %v2875 = vunpack.c.l.b16 %v2827
    %v2876 = vunpack.c.h.b16 %v2827
    %v2877 = vunpack.c.l.b16 %v2828
    %v2878 = vunpack.c.h.b16 %v2828
    %v2879 = vunpack.c.l.b16 %v2829
    %v2880 = vunpack.c.h.b16 %v2829
    %v2881 = vunpack.c.l.b16 %v2830
    %v2882 = vunpack.c.h.b16 %v2830
    %v2883 = vunpack.c.l.b16 %v2831
    %v2884 = vunpack.c.h.b16 %v2831
    %v2885 = vunpack.c.l.b16 %v2832
    %v2886 = vunpack.c.h.b16 %v2832
    %v2887 = vunpack.c.l.b16 %v2833
    %v2888 = vunpack.c.h.b16 %v2833
    %v2889 = vunpack.c.l.b16 %v2834
    %v2890 = vunpack.c.h.b16 %v2834
    %v2891 = vunpack.c.l.b16 %v2835
    %v2892 = vunpack.c.h.b16 %v2835
    %v2893 = vunpack.c.l.b16 %v2836
    %v2894 = vunpack.c.h.b16 %v2836
    %v2895 = vunpack.c.l.b16 %v2837
    %v2896 = vunpack.c.h.b16 %v2837
    %v2897 = vunpack.c.l.b16 %v2838
    %v2898 = vunpack.c.h.b16 %v2838
    %v2899 = vunpack.c.l.b16 %v2839
    %v2900 = vunpack.c.h.b16 %v2839
    %v2901 = vunpack.c.l.b16 %v2840
    %v2902 = vunpack.c.h.b16 %v2840
    %v2903 = vpack.c.b16 %v2873, %v2871
    %v2904 = vpack.c.b16 %v2874, %v2872
    %v2905 = vpack.c.b16 %v2877, %v2875
    %v2906 = vpack.c.b16 %v2878, %v2876
    %v2907 = vpack.c.b16 %v2881, %v2879
    %v2908 = vpack.c.b16 %v2882, %v2880
    %v2909 = vpack.c.b16 %v2885, %v2883
    %v2910 = vpack.c.b16 %v2886, %v2884
    %v2911 = vpack.c.b16 %v2889, %v2887
    %v2912 = vpack.c.b16 %v2890, %v2888
    %v2913 = vpack.c.b16 %v2893, %v2891
    %v2914 = vpack.c.b16 %v2894, %v2892
    %v2915 = vpack.c.b16 %v2897, %v2895
    %v2916 = vpack.c.b16 %v2898, %v2896
    %v2917 = vpack.c.b16 %v2901, %v2899
    %v2918 = vpack.c.b16 %v2902, %v2900
    %2935 = vmatprep.subr.bf16.mxu0 %v2904
    %2936 = vmatpush1.bf16.msra.mxu0 %v2903
    %2937 = vmatprep.subr.bf16.mxu0 %v2906
    %2938 = vmatpush1.bf16.msra.mxu0 %v2905
    %2939 = vmatprep.subr.bf16.mxu0 %v2908
    %2940 = vmatpush1.bf16.msra.mxu0 %v2907
    %2941 = vmatprep.subr.bf16.mxu0 %v2910
    %2942 = vmatpush1.bf16.msra.mxu0 %v2909
    %2943 = vmatprep.subr.bf16.mxu0 %v2912
    %2944 = vmatpush1.bf16.msra.mxu0 %v2911
    %2945 = vmatprep.subr.bf16.mxu0 %v2914
    %2946 = vmatpush1.bf16.msra.mxu0 %v2913
    %2947 = vmatprep.subr.bf16.mxu0 %v2916
    %2948 = vmatpush1.bf16.msra.mxu0 %v2915
    %2949 = vmatprep.subr.bf16.mxu0 %v2918
    %2950 = vmatpush1.bf16.msra.mxu0 %v2917
    %2951 = vmatprep.subr.bf16.mxu0 0
    %2952 = vmatpush1.bf16.msra.mxu0 0
    %2953 = vmatprep.subr.bf16.mxu0 0
    %2954 = vmatpush1.bf16.msra.mxu0 0
    %2955 = vmatprep.subr.bf16.mxu0 0
    %2956 = vmatpush1.bf16.msra.mxu0 0
    %2957 = vmatprep.subr.bf16.mxu0 0
    %2958 = vmatpush1.bf16.msra.mxu0 0
    %2959 = vmatprep.subr.bf16.mxu0 0
    %2960 = vmatpush1.bf16.msra.mxu0 0
    %2961 = vmatprep.subr.bf16.mxu0 0
    %2962 = vmatpush1.bf16.msra.mxu0 0
    %2963 = vmatprep.subr.bf16.mxu0 0
    %2964 = vmatpush1.bf16.msra.mxu0 0
    %2965 = vmatprep.subr.bf16.mxu0 0
    %2966 = vmatpush1.bf16.msra.mxu0 0
    %2967 = vmatprep.mubr.bf16.mxu0 0
    %2968 = vmatmul.mubr.bf16.gmra.mrb[0].mxu0 %v2843
    %v2969 = vpop.f32.mrb[0].mxu0
    %v2970 = vadd.f32 %v2848, %v2969
    %v2971 = vpop.f32.mrb[0].mxu0
    %v2972 = vadd.f32 %v2852, %v2971
    %v2973 = vpop.f32.mrb[0].mxu0
    %v2974 = vadd.f32 %v2848, %v2973
    %v2975 = vpop.f32.mrb[0].mxu0
    %v2976 = vadd.f32 %v2852, %v2975
    %2977 = vdwg.mxu0
    %v2978 = vmax.f32 %v2970, 0.0
    %v2979 = vmax.f32 %v2972, 0.0
    %v2980 = vmax.f32 %v2974, 0.0
    %v2981 = vmax.f32 %v2976, 0.0
    %s2982 = scalar_lea.vmem [#allocation5], 640
    %v2983 = vld [vmem:[%s2982] sm:$0xf]
    %v2984 = vld [vmem:[%s2982 + $0x4] sm:$0xf]
    %v2985 = vld [vmem:[%s2982 + $0x8] sm:$0xf]
    %v2986 = vld [vmem:[%s2982 + $0xc] sm:$0xf]
    %v2987 = vld [vmem:[%s2982 + $0x10] sm:$0xf]
    %v2988 = vld [vmem:[%s2982 + $0x14] sm:$0xf]
    %v2989 = vld [vmem:[%s2982 + $0x18] sm:$0xf]
    %v2990 = vld [vmem:[%s2982 + $0x1c] sm:$0xf]
    %v2991 = vld [vmem:[%s2982 + $0x20] sm:$0xf]
    %v2992 = vld [vmem:[%s2982 + $0x24] sm:$0xf]
    %v2993 = vld [vmem:[%s2982 + $0x28] sm:$0xf]
    %v2994 = vld [vmem:[%s2982 + $0x2c] sm:$0xf]
    %v2995 = vld [vmem:[%s2982 + $0x30] sm:$0xf]
    %v2996 = vld [vmem:[%s2982 + $0x34] sm:$0xf]
    %v2997 = vld [vmem:[%s2982 + $0x38] sm:$0xf]
    %v2998 = vld [vmem:[%s2982 + $0x3c] sm:$0xf]
    %v2999 = vld [vmem:[%s2982 + $0x40] sm:$0xf]
    %v3000 = vld [vmem:[%s2982 + $0x44] sm:$0xf]
    %v3001 = vld [vmem:[%s2982 + $0x48] sm:$0xf]
    %v3002 = vld [vmem:[%s2982 + $0x4c] sm:$0xf]
    %v3003 = vld [vmem:[%s2982 + $0x50] sm:$0xf]
    %v3004 = vld [vmem:[%s2982 + $0x54] sm:$0xf]
    %v3005 = vld [vmem:[%s2982 + $0x58] sm:$0xf]
    %v3006 = vld [vmem:[%s2982 + $0x5c] sm:$0xf]
    %v3007 = vld [vmem:[%s2982 + $0x60] sm:$0xf]
    %v3008 = vld [vmem:[%s2982 + $0x64] sm:$0xf]
    %v3009 = vld [vmem:[%s2982 + $0x68] sm:$0xf]
    %v3010 = vld [vmem:[%s2982 + $0x6c] sm:$0xf]
    %v3011 = vld [vmem:[%s2982 + $0x70] sm:$0xf]
    %v3012 = vld [vmem:[%s2982 + $0x74] sm:$0xf]
    %v3013 = vld [vmem:[%s2982 + $0x78] sm:$0xf]
    %v3014 = vld [vmem:[%s2982 + $0x7c] sm:$0xf]
    %v3015 = vld [vmem:[%s8 + $0x26] ss:$0 sm:$0xff]
    %v3016 = vpack.c.bf16 %v2980, %v2978
    %v3017 = vpack.c.bf16 %v2981, %v2979
    %v3050 = vunpack.c.l.b16 %v2983
    %v3051 = vunpack.c.l.b16 %v2984
    %v3052 = vunpack.c.l.b16 %v2985
    %v3053 = vunpack.c.l.b16 %v2986
    %v3054 = vunpack.c.l.b16 %v2987
    %v3055 = vunpack.c.l.b16 %v2988
    %v3056 = vunpack.c.l.b16 %v2989
    %v3057 = vunpack.c.l.b16 %v2990
    %v3058 = vunpack.c.l.b16 %v2991
    %v3059 = vunpack.c.l.b16 %v2992
    %v3060 = vunpack.c.l.b16 %v2993
    %v3061 = vunpack.c.l.b16 %v2994
    %v3062 = vunpack.c.l.b16 %v2995
    %v3063 = vunpack.c.l.b16 %v2996
    %v3064 = vunpack.c.l.b16 %v2997
    %v3065 = vunpack.c.l.b16 %v2998
    %v3066 = vunpack.c.l.b16 %v2999
    %v3067 = vunpack.c.l.b16 %v3000
    %v3068 = vunpack.c.l.b16 %v3001
    %v3069 = vunpack.c.l.b16 %v3002
    %v3070 = vunpack.c.l.b16 %v3003
    %v3071 = vunpack.c.l.b16 %v3004
    %v3072 = vunpack.c.l.b16 %v3005
    %v3073 = vunpack.c.l.b16 %v3006
    %v3074 = vunpack.c.l.b16 %v3007
    %v3075 = vunpack.c.l.b16 %v3008
    %v3076 = vunpack.c.l.b16 %v3009
    %v3077 = vunpack.c.l.b16 %v3010
    %v3078 = vunpack.c.l.b16 %v3011
    %v3079 = vunpack.c.l.b16 %v3012
    %v3080 = vunpack.c.l.b16 %v3013
    %v3081 = vunpack.c.l.b16 %v3014
    %v3082 = vpack.c.b16 %v3051, %v3050
    %v3083 = vpack.c.b16 %v3053, %v3052
    %v3084 = vpack.c.b16 %v3055, %v3054
    %v3085 = vpack.c.b16 %v3057, %v3056
    %v3086 = vpack.c.b16 %v3059, %v3058
    %v3087 = vpack.c.b16 %v3061, %v3060
    %v3088 = vpack.c.b16 %v3063, %v3062
    %v3089 = vpack.c.b16 %v3065, %v3064
    %v3090 = vpack.c.b16 %v3067, %v3066
    %v3091 = vpack.c.b16 %v3069, %v3068
    %v3092 = vpack.c.b16 %v3071, %v3070
    %v3093 = vpack.c.b16 %v3073, %v3072
    %v3094 = vpack.c.b16 %v3075, %v3074
    %v3095 = vpack.c.b16 %v3077, %v3076
    %v3096 = vpack.c.b16 %v3079, %v3078
    %v3097 = vpack.c.b16 %v3081, %v3080
    %3114 = vmatprep.subr.bf16.mxu0 0
    %3115 = vmatpush1.bf16.msra.mxu0 %v3082
    %3116 = vmatprep.subr.bf16.mxu0 0
    %3117 = vmatpush1.bf16.msra.mxu0 %v3083
    %3118 = vmatprep.subr.bf16.mxu0 0
    %3119 = vmatpush1.bf16.msra.mxu0 %v3084
    %3120 = vmatprep.subr.bf16.mxu0 0
    %3121 = vmatpush1.bf16.msra.mxu0 %v3085
    %3122 = vmatprep.subr.bf16.mxu0 0
    %3123 = vmatpush1.bf16.msra.mxu0 %v3086
    %3124 = vmatprep.subr.bf16.mxu0 0
    %3125 = vmatpush1.bf16.msra.mxu0 %v3087
    %3126 = vmatprep.subr.bf16.mxu0 0
    %3127 = vmatpush1.bf16.msra.mxu0 %v3088
    %3128 = vmatprep.subr.bf16.mxu0 0
    %3129 = vmatpush1.bf16.msra.mxu0 %v3089
    %3130 = vmatprep.subr.bf16.mxu0 0
    %3131 = vmatpush1.bf16.msra.mxu0 %v3090
    %3132 = vmatprep.subr.bf16.mxu0 0
    %3133 = vmatpush1.bf16.msra.mxu0 %v3091
    %3134 = vmatprep.subr.bf16.mxu0 0
    %3135 = vmatpush1.bf16.msra.mxu0 %v3092
    %3136 = vmatprep.subr.bf16.mxu0 0
    %3137 = vmatpush1.bf16.msra.mxu0 %v3093
    %3138 = vmatprep.subr.bf16.mxu0 0
    %3139 = vmatpush1.bf16.msra.mxu0 %v3094
    %3140 = vmatprep.subr.bf16.mxu0 0
    %3141 = vmatpush1.bf16.msra.mxu0 %v3095
    %3142 = vmatprep.subr.bf16.mxu0 0
    %3143 = vmatpush1.bf16.msra.mxu0 %v3096
    %3144 = vmatprep.subr.bf16.mxu0 0
    %3145 = vmatpush1.bf16.msra.mxu0 %v3097
    %3146 = vmatprep.mubr.bf16.mxu0 %v3017
    %3147 = vmatmul.mubr.bf16.gmra.mrb[0].mxu0 %v3016
    %v3148 = vpop.f32.mrb[0].mxu0
    %v3149 = vadd.f32 %v3015, %v3148
    %v3150 = vpop.f32.mrb[0].mxu0
    %v3151 = vpop.f32.mrb[0].mxu0
    %v3152 = vadd.f32 %v3015, %v3151
    %v3153 = vpop.f32.mrb[0].mxu0
    %3154 = vdwg.mxu0
    %v3155 = vmax.f32 %v3149, 0.0
    %v3156 = vmax.f32 %v3152, 0.0
    %s3157 = scalar_lea.vmem %s5, 320
    %v3158 = vld [vmem:[%s3157] sm:$0xf]
    %v3159 = vld [vmem:[%s3157 + $0x4] sm:$0xf]
    %v3160 = vld [vmem:[%s3157 + $0x8] sm:$0xf]
    %v3161 = vld [vmem:[%s3157 + $0xc] sm:$0xf]
    %v3162 = vld [vmem:[%s3157 + $0x10] sm:$0xf]
    %v3163 = vld [vmem:[%s3157 + $0x14] sm:$0xf]
    %v3164 = vld [vmem:[%s3157 + $0x18] sm:$0xf]
    %v3165 = vld [vmem:[%s3157 + $0x1c] sm:$0xf]
    %v3166 = vld [vmem:[%s3157 + $0x20] sm:$0xf]
    %v3167 = vld [vmem:[%s3157 + $0x24] sm:$0xf]
    %v3168 = vld [vmem:[%s3157 + $0x28] sm:$0xf]
    %v3169 = vld [vmem:[%s3157 + $0x2c] sm:$0xf]
    %v3170 = vld [vmem:[%s3157 + $0x30] sm:$0xf]
    %v3171 = vld [vmem:[%s3157 + $0x34] sm:$0xf]
    %v3172 = vld [vmem:[%s3157 + $0x38] sm:$0xf]
    %v3173 = vld [vmem:[%s3157 + $0x3c] sm:$0xf]
    %v3174 = vld [vmem:[%s8 + $0x27] ss:$0 sm:$0xff]
    %v3175 = vpack.c.bf16 %v3156, %v3155
    %v3192 = vunpack.c.l.b16 %v3158
    %v3193 = vunpack.c.l.b16 %v3159
    %v3194 = vunpack.c.l.b16 %v3160
    %v3195 = vunpack.c.l.b16 %v3161
    %v3196 = vunpack.c.l.b16 %v3162
    %v3197 = vunpack.c.l.b16 %v3163
    %v3198 = vunpack.c.l.b16 %v3164
    %v3199 = vunpack.c.l.b16 %v3165
    %v3200 = vunpack.c.l.b16 %v3166
    %v3201 = vunpack.c.l.b16 %v3167
    %v3202 = vunpack.c.l.b16 %v3168
    %v3203 = vunpack.c.l.b16 %v3169
    %v3204 = vunpack.c.l.b16 %v3170
    %v3205 = vunpack.c.l.b16 %v3171
    %v3206 = vunpack.c.l.b16 %v3172
    %v3207 = vunpack.c.l.b16 %v3173
    %v3208 = vpack.c.b16 %v3193, %v3192
    %v3209 = vpack.c.b16 %v3195, %v3194
    %v3210 = vpack.c.b16 %v3197, %v3196
    %v3211 = vpack.c.b16 %v3199, %v3198
    %v3212 = vpack.c.b16 %v3201, %v3200
    %v3213 = vpack.c.b16 %v3203, %v3202
    %v3214 = vpack.c.b16 %v3205, %v3204
    %v3215 = vpack.c.b16 %v3207, %v3206
    %3224 = vmatprep.subr.bf16.mxu0 0
    %3225 = vmatpush1.bf16.msra.mxu0 %v3208
    %3226 = vmatprep.subr.bf16.mxu0 0
    %3227 = vmatpush1.bf16.msra.mxu0 %v3209
    %3228 = vmatprep.subr.bf16.mxu0 0
    %3229 = vmatpush1.bf16.msra.mxu0 %v3210
    %3230 = vmatprep.subr.bf16.mxu0 0
    %3231 = vmatpush1.bf16.msra.mxu0 %v3211
    %3232 = vmatprep.subr.bf16.mxu0 0
    %3233 = vmatpush1.bf16.msra.mxu0 %v3212
    %3234 = vmatprep.subr.bf16.mxu0 0
    %3235 = vmatpush1.bf16.msra.mxu0 %v3213
    %3236 = vmatprep.subr.bf16.mxu0 0
    %3237 = vmatpush1.bf16.msra.mxu0 %v3214
    %3238 = vmatprep.subr.bf16.mxu0 0
    %3239 = vmatpush1.bf16.msra.mxu0 %v3215
    %3240 = vmatprep.subr.bf16.mxu0 0
    %3241 = vmatpush1.bf16.msra.mxu0 0
    %3242 = vmatprep.subr.bf16.mxu0 0
    %3243 = vmatpush1.bf16.msra.mxu0 0
    %3244 = vmatprep.subr.bf16.mxu0 0
    %3245 = vmatpush1.bf16.msra.mxu0 0
    %3246 = vmatprep.subr.bf16.mxu0 0
    %3247 = vmatpush1.bf16.msra.mxu0 0
    %3248 = vmatprep.subr.bf16.mxu0 0
    %3249 = vmatpush1.bf16.msra.mxu0 0
    %3250 = vmatprep.subr.bf16.mxu0 0
    %3251 = vmatpush1.bf16.msra.mxu0 0
    %3252 = vmatprep.subr.bf16.mxu0 0
    %3253 = vmatpush1.bf16.msra.mxu0 0
    %3254 = vmatprep.subr.bf16.mxu0 0
    %3255 = vmatpush1.bf16.msra.mxu0 0
    %3256 = vmatprep.mubr.bf16.mxu0 0
    %3257 = vmatmul.mubr.bf16.gmra.mrb[0].mxu0 %v3175
    %v3258 = vpop.f32.mrb[0].mxu0
    %v3259 = vadd.f32 %v3174, %v3258
    %v3260 = vpop.f32.mrb[0].mxu0
    %v3261 = vpop.f32.mrb[0].mxu0
    %v3262 = vadd.f32 %v3174, %v3261
    %v3263 = vpop.f32.mrb[0].mxu0
    %3264 = vdwg.mxu0
    %v3265 = vmax.f32 %v3259, 0.0
    %v3266 = vmax.f32 %v3262, 0.0
    %v3267 = vlaneseq
    %v3268 = vshrl.u32 %v3267, 7
    %v3269 = vsub.s32 0, %v3268
    %v3270 = vrot.slane %v3265, %v3269
    %v3271 = vlaneseq
    %v3272 = vshrl.u32 %v3271, 7
    %v3273 = vsub.s32 0, %v3272
    %v3274 = vrot.slane %v3266, %v3273
    %v3275 = vmul.f32 %v1584, %v3270
    %v3276 = vmul.f32 %v1589, %v3274
    %v3277 = vadd.f32 %v3275, 0.0
    %v3278 = vadd.f32 %v3276, 0.0
    %v3279 = vlaneseq
    %v3280 = vshrl.u32 %v3279, 7
    %v3281 = vsub.s32 1, %v3280
    %v3282 = vrot.slane %v3265, %v3281
    %v3283 = vlaneseq
    %v3284 = vshrl.u32 %v3283, 7
    %v3285 = vsub.s32 1, %v3284
    %v3286 = vrot.slane %v3266, %v3285
    %v3287 = vmul.f32 %v1605, %v3282
    %v3288 = vmul.f32 %v1609, %v3286
    %v3289 = vadd.f32 %v3277, %v3287
    %v3290 = vadd.f32 %v3278, %v3288
    %v3291 = vlaneseq
    %v3292 = vshrl.u32 %v3291, 7
    %v3293 = vsub.s32 2, %v3292
    %v3294 = vrot.slane %v3265, %v3293
    %v3295 = vlaneseq
    %v3296 = vshrl.u32 %v3295, 7
    %v3297 = vsub.s32 2, %v3296
    %v3298 = vrot.slane %v3266, %v3297
    %v3299 = vmul.f32 %v1625, %v3294
    %v3300 = vmul.f32 %v1629, %v3298
    %v3301 = vadd.f32 %v3289, %v3299
    %v3302 = vadd.f32 %v3290, %v3300
    %v3303 = vlaneseq
    %v3304 = vshrl.u32 %v3303, 7
    %v3305 = vsub.s32 3, %v3304
    %v3306 = vrot.slane %v3265, %v3305
    %v3307 = vlaneseq
    %v3308 = vshrl.u32 %v3307, 7
    %v3309 = vsub.s32 3, %v3308
    %v3310 = vrot.slane %v3266, %v3309
    %v3311 = vmul.f32 %v1645, %v3306
    %v3312 = vmul.f32 %v1649, %v3310
    %v3313 = vadd.f32 %v3301, %v3311
    %v3314 = vadd.f32 %v3302, %v3312
    %v3315 = vlaneseq
    %v3316 = vshrl.u32 %v3315, 7
    %v3317 = vsub.s32 4, %v3316
    %v3318 = vrot.slane %v3265, %v3317
    %v3319 = vlaneseq
    %v3320 = vshrl.u32 %v3319, 7
    %v3321 = vsub.s32 4, %v3320
    %v3322 = vrot.slane %v3266, %v3321
    %v3323 = vmul.f32 %v1665, %v3318
    %v3324 = vmul.f32 %v1669, %v3322
    %v3325 = vadd.f32 %v3313, %v3323
    %v3326 = vadd.f32 %v3314, %v3324
    %v3327 = vlaneseq
    %v3328 = vshrl.u32 %v3327, 7
    %v3329 = vsub.s32 5, %v3328
    %v3330 = vrot.slane %v3265, %v3329
    %v3331 = vlaneseq
    %v3332 = vshrl.u32 %v3331, 7
    %v3333 = vsub.s32 5, %v3332
    %v3334 = vrot.slane %v3266, %v3333
    %v3335 = vmul.f32 %v1685, %v3330
    %v3336 = vmul.f32 %v1689, %v3334
    %v3337 = vadd.f32 %v3325, %v3335
    %v3338 = vadd.f32 %v3326, %v3336
    %v3339 = vlaneseq
    %v3340 = vshrl.u32 %v3339, 7
    %v3341 = vsub.s32 6, %v3340
    %v3342 = vrot.slane %v3265, %v3341
    %v3343 = vlaneseq
    %v3344 = vshrl.u32 %v3343, 7
    %v3345 = vsub.s32 6, %v3344
    %v3346 = vrot.slane %v3266, %v3345
    %v3347 = vmul.f32 %v1705, %v3342
    %v3348 = vmul.f32 %v1709, %v3346
    %v3349 = vadd.f32 %v3337, %v3347
    %v3350 = vadd.f32 %v3338, %v3348
    %v3351 = vlaneseq
    %v3352 = vshrl.u32 %v3351, 7
    %v3353 = vsub.s32 7, %v3352
    %v3354 = vrot.slane %v3265, %v3353
    %v3355 = vlaneseq
    %v3356 = vshrl.u32 %v3355, 7
    %v3357 = vsub.s32 7, %v3356
    %v3358 = vrot.slane %v3266, %v3357
    %v3359 = vmul.f32 %v1725, %v3354
    %v3360 = vmul.f32 %v1729, %v3358
    %v3361 = vadd.f32 %v3349, %v3359
    %v3362 = vadd.f32 %v3350, %v3360
    %v3363 = vadd.f32 %v2761, %v3361
    %v3364 = vadd.f32 %v2762, %v3362
    %v3365 = vmul.f32 %v3363, 0.125
    %v3366 = vmul.f32 %v3364, 0.125
    %s3367 = scalar_lea.vmem %s6, 80
    %v3368 = vld [vmem:[%s3367] sm:$0xf]
    %v3369 = vld [vmem:[%s3367 + $0x4] sm:$0xf]
    %v3370 = vld [vmem:[%s3367 + $0x8] sm:$0xf]
    %v3371 = vld [vmem:[%s3367 + $0xc] sm:$0xf]
    %v3372 = vld [vmem:[%s8 + $0x30] ss:$0 sm:$0xff]
    %v3373 = vpack.c.bf16 %v3366, %v3365
    %v3378 = vunpack.c.l.b16 %v3368
    %v3379 = vunpack.c.l.b16 %v3369
    %v3380 = vunpack.c.l.b16 %v3370
    %v3381 = vunpack.c.l.b16 %v3371
    %v3382 = vpack.c.b16 %v3379, %v3378
    %v3383 = vpack.c.b16 %v3381, %v3380
    %v3387 = vsel %vm587, %v3373, 0
    %3389 = vmatprep.subr.bf16.mxu0 0
    %3390 = vmatpush1.bf16.msra.mxu0 %v3382
    %3391 = vmatprep.subr.bf16.mxu0 0
    %3392 = vmatpush1.bf16.msra.mxu0 %v3383
    %3393 = vmatprep.subr.bf16.mxu0 0
    %3394 = vmatpush1.bf16.msra.mxu0 0
    %3395 = vmatprep.subr.bf16.mxu0 0
    %3396 = vmatpush1.bf16.msra.mxu0 0
    %3397 = vmatprep.subr.bf16.mxu0 0
    %3398 = vmatpush1.bf16.msra.mxu0 0
    %3399 = vmatprep.subr.bf16.mxu0 0
    %3400 = vmatpush1.bf16.msra.mxu0 0
    %3401 = vmatprep.subr.bf16.mxu0 0
    %3402 = vmatpush1.bf16.msra.mxu0 0
    %3403 = vmatprep.subr.bf16.mxu0 0
    %3404 = vmatpush1.bf16.msra.mxu0 0
    %3405 = vmatprep.subr.bf16.mxu0 0
    %3406 = vmatpush1.bf16.msra.mxu0 0
    %3407 = vmatprep.subr.bf16.mxu0 0
    %3408 = vmatpush1.bf16.msra.mxu0 0
    %3409 = vmatprep.subr.bf16.mxu0 0
    %3410 = vmatpush1.bf16.msra.mxu0 0
    %3411 = vmatprep.subr.bf16.mxu0 0
    %3412 = vmatpush1.bf16.msra.mxu0 0
    %3413 = vmatprep.subr.bf16.mxu0 0
    %3414 = vmatpush1.bf16.msra.mxu0 0
    %3415 = vmatprep.subr.bf16.mxu0 0
    %3416 = vmatpush1.bf16.msra.mxu0 0
    %3417 = vmatprep.subr.bf16.mxu0 0
    %3418 = vmatpush1.bf16.msra.mxu0 0
    %3419 = vmatprep.subr.bf16.mxu0 0
    %3420 = vmatpush1.bf16.msra.mxu0 0
    %3421 = vmatprep.mubr.bf16.mxu0 0
    %3422 = vmatmul.mubr.bf16.gmra.mrb[0].mxu0 %v3387
    %v3423 = vpop.f32.mrb[0].mxu0
    %v3424 = vadd.f32 %v3372, %v3423
    %v3425 = vpop.f32.mrb[0].mxu0
    %v3426 = vpop.f32.mrb[0].mxu0
    %v3427 = vadd.f32 %v3372, %v3426
    %v3428 = vpop.f32.mrb[0].mxu0
    %3429 = vdwg.mxu0
    %v3430 = vmax.f32 %v3424, 0.0
    %v3431 = vmax.f32 %v3427, 0.0
    %s3432 = scalar_lea.vmem [#allocation2], 768
    %v3433 = vld [vmem:[%s3432] sm:$0xff]
    %v3434 = vld [vmem:[%s3432 + $0x8] sm:$0xff]
    %v3435 = vld [vmem:[%s3432 + $0x10] sm:$0xff]
    %v3436 = vld [vmem:[%s3432 + $0x18] sm:$0xff]
    %v3437 = vld [vmem:[%s3432 + $0x20] sm:$0xff]
    %v3438 = vld [vmem:[%s3432 + $0x28] sm:$0xff]
    %v3439 = vld [vmem:[%s3432 + $0x30] sm:$0xff]
    %v3440 = vld [vmem:[%s3432 + $0x38] sm:$0xff]
    %v3441 = vld [vmem:[%s3432 + $0x40] sm:$0xff]
    %v3442 = vld [vmem:[%s3432 + $0x48] sm:$0xff]
    %v3443 = vld [vmem:[%s3432 + $0x50] sm:$0xff]
    %v3444 = vld [vmem:[%s3432 + $0x58] sm:$0xff]
    %v3445 = vld [vmem:[%s3432 + $0x60] sm:$0xff]
    %v3446 = vld [vmem:[%s3432 + $0x68] sm:$0xff]
    %v3447 = vld [vmem:[%s3432 + $0x70] sm:$0xff]
    %v3448 = vld [vmem:[%s3432 + $0x78] sm:$0xff]
    %s3449 = scalar_lea.vmem %s8, 49
    %v3450 = vld [vmem:[%s3449] ss:$8 sm:$0x3]
    %v3451 = vpack.c.bf16 %v3431, %v3430
    %v3453 = vlaneseq
    %v3454 = vshrl.u32 %v3453, 7
    %v3455 = vsub.s32 0, %v3454
    %v3456 = vrot.slane %v3450, %v3455
    %v3457 = vlaneseq
    %v3458 = vshrl.u32 %v3457, 7
    %v3459 = vsub.s32 1, %v3458
    %v3460 = vrot.slane %v3450, %v3459
    %v3479 = vunpack.c.l.b16 %v3433
    %v3480 = vunpack.c.h.b16 %v3433
    %v3481 = vunpack.c.l.b16 %v3434
    %v3482 = vunpack.c.h.b16 %v3434
    %v3483 = vunpack.c.l.b16 %v3435
    %v3484 = vunpack.c.h.b16 %v3435
    %v3485 = vunpack.c.l.b16 %v3436
    %v3486 = vunpack.c.h.b16 %v3436
    %v3487 = vunpack.c.l.b16 %v3437
    %v3488 = vunpack.c.h.b16 %v3437
    %v3489 = vunpack.c.l.b16 %v3438
    %v3490 = vunpack.c.h.b16 %v3438
    %v3491 = vunpack.c.l.b16 %v3439
    %v3492 = vunpack.c.h.b16 %v3439
    %v3493 = vunpack.c.l.b16 %v3440
    %v3494 = vunpack.c.h.b16 %v3440
    %v3495 = vunpack.c.l.b16 %v3441
    %v3496 = vunpack.c.h.b16 %v3441
    %v3497 = vunpack.c.l.b16 %v3442
    %v3498 = vunpack.c.h.b16 %v3442
    %v3499 = vunpack.c.l.b16 %v3443
    %v3500 = vunpack.c.h.b16 %v3443
    %v3501 = vunpack.c.l.b16 %v3444
    %v3502 = vunpack.c.h.b16 %v3444
    %v3503 = vunpack.c.l.b16 %v3445
    %v3504 = vunpack.c.h.b16 %v3445
    %v3505 = vunpack.c.l.b16 %v3446
    %v3506 = vunpack.c.h.b16 %v3446
    %v3507 = vunpack.c.l.b16 %v3447
    %v3508 = vunpack.c.h.b16 %v3447
    %v3509 = vunpack.c.l.b16 %v3448
    %v3510 = vunpack.c.h.b16 %v3448
    %v3511 = vpack.c.b16 %v3481, %v3479
    %v3512 = vpack.c.b16 %v3482, %v3480
    %v3513 = vpack.c.b16 %v3485, %v3483
    %v3514 = vpack.c.b16 %v3486, %v3484
    %v3515 = vpack.c.b16 %v3489, %v3487
    %v3516 = vpack.c.b16 %v3490, %v3488
    %v3517 = vpack.c.b16 %v3493, %v3491
    %v3518 = vpack.c.b16 %v3494, %v3492
    %v3519 = vpack.c.b16 %v3497, %v3495
    %v3520 = vpack.c.b16 %v3498, %v3496
    %v3521 = vpack.c.b16 %v3501, %v3499
    %v3522 = vpack.c.b16 %v3502, %v3500
    %v3523 = vpack.c.b16 %v3505, %v3503
    %v3524 = vpack.c.b16 %v3506, %v3504
    %v3525 = vpack.c.b16 %v3509, %v3507
    %v3526 = vpack.c.b16 %v3510, %v3508
    %3543 = vmatprep.subr.bf16.mxu0 %v3512
    %3544 = vmatpush1.bf16.msra.mxu0 %v3511
    %3545 = vmatprep.subr.bf16.mxu0 %v3514
    %3546 = vmatpush1.bf16.msra.mxu0 %v3513
    %3547 = vmatprep.subr.bf16.mxu0 %v3516
    %3548 = vmatpush1.bf16.msra.mxu0 %v3515
    %3549 = vmatprep.subr.bf16.mxu0 %v3518
    %3550 = vmatpush1.bf16.msra.mxu0 %v3517
    %3551 = vmatprep.subr.bf16.mxu0 %v3520
    %3552 = vmatpush1.bf16.msra.mxu0 %v3519
    %3553 = vmatprep.subr.bf16.mxu0 %v3522
    %3554 = vmatpush1.bf16.msra.mxu0 %v3521
    %3555 = vmatprep.subr.bf16.mxu0 %v3524
    %3556 = vmatpush1.bf16.msra.mxu0 %v3523
    %3557 = vmatprep.subr.bf16.mxu0 %v3526
    %3558 = vmatpush1.bf16.msra.mxu0 %v3525
    %3559 = vmatprep.subr.bf16.mxu0 0
    %3560 = vmatpush1.bf16.msra.mxu0 0
    %3561 = vmatprep.subr.bf16.mxu0 0
    %3562 = vmatpush1.bf16.msra.mxu0 0
    %3563 = vmatprep.subr.bf16.mxu0 0
    %3564 = vmatpush1.bf16.msra.mxu0 0
    %3565 = vmatprep.subr.bf16.mxu0 0
    %3566 = vmatpush1.bf16.msra.mxu0 0
    %3567 = vmatprep.subr.bf16.mxu0 0
    %3568 = vmatpush1.bf16.msra.mxu0 0
    %3569 = vmatprep.subr.bf16.mxu0 0
    %3570 = vmatpush1.bf16.msra.mxu0 0
    %3571 = vmatprep.subr.bf16.mxu0 0
    %3572 = vmatpush1.bf16.msra.mxu0 0
    %3573 = vmatprep.subr.bf16.mxu0 0
    %3574 = vmatpush1.bf16.msra.mxu0 0
    %3575 = vmatprep.mubr.bf16.mxu0 0
    %3576 = vmatmul.mubr.bf16.gmra.mrb[0].mxu0 %v3451
    %v3577 = vpop.f32.mrb[0].mxu0
    %v3578 = vadd.f32 %v3456, %v3577
    %v3579 = vpop.f32.mrb[0].mxu0
    %v3580 = vadd.f32 %v3460, %v3579
    %v3581 = vpop.f32.mrb[0].mxu0
    %v3582 = vadd.f32 %v3456, %v3581
    %v3583 = vpop.f32.mrb[0].mxu0
    %v3584 = vadd.f32 %v3460, %v3583
    %3585 = vdwg.mxu0
    %v3586 = vmax.f32 %v3578, 0.0
    %v3587 = vmax.f32 %v3580, 0.0
    %v3588 = vmax.f32 %v3582, 0.0
    %v3589 = vmax.f32 %v3584, 0.0
    %s3590 = scalar_lea.vmem [#allocation5], 768
    %v3591 = vld [vmem:[%s3590] sm:$0xf]
    %v3592 = vld [vmem:[%s3590 + $0x4] sm:$0xf]
    %v3593 = vld [vmem:[%s3590 + $0x8] sm:$0xf]
    %v3594 = vld [vmem:[%s3590 + $0xc] sm:$0xf]
    %v3595 = vld [vmem:[%s3590 + $0x10] sm:$0xf]
    %v3596 = vld [vmem:[%s3590 + $0x14] sm:$0xf]
    %v3597 = vld [vmem:[%s3590 + $0x18] sm:$0xf]
    %v3598 = vld [vmem:[%s3590 + $0x1c] sm:$0xf]
    %v3599 = vld [vmem:[%s3590 + $0x20] sm:$0xf]
    %v3600 = vld [vmem:[%s3590 + $0x24] sm:$0xf]
    %v3601 = vld [vmem:[%s3590 + $0x28] sm:$0xf]
    %v3602 = vld [vmem:[%s3590 + $0x2c] sm:$0xf]
    %v3603 = vld [vmem:[%s3590 + $0x30] sm:$0xf]
    %v3604 = vld [vmem:[%s3590 + $0x34] sm:$0xf]
    %v3605 = vld [vmem:[%s3590 + $0x38] sm:$0xf]
    %v3606 = vld [vmem:[%s3590 + $0x3c] sm:$0xf]
    %v3607 = vld [vmem:[%s3590 + $0x40] sm:$0xf]
    %v3608 = vld [vmem:[%s3590 + $0x44] sm:$0xf]
    %v3609 = vld [vmem:[%s3590 + $0x48] sm:$0xf]
    %v3610 = vld [vmem:[%s3590 + $0x4c] sm:$0xf]
    %v3611 = vld [vmem:[%s3590 + $0x50] sm:$0xf]
    %v3612 = vld [vmem:[%s3590 + $0x54] sm:$0xf]
    %v3613 = vld [vmem:[%s3590 + $0x58] sm:$0xf]
    %v3614 = vld [vmem:[%s3590 + $0x5c] sm:$0xf]
    %v3615 = vld [vmem:[%s3590 + $0x60] sm:$0xf]
    %v3616 = vld [vmem:[%s3590 + $0x64] sm:$0xf]
    %v3617 = vld [vmem:[%s3590 + $0x68] sm:$0xf]
    %v3618 = vld [vmem:[%s3590 + $0x6c] sm:$0xf]
    %v3619 = vld [vmem:[%s3590 + $0x70] sm:$0xf]
    %v3620 = vld [vmem:[%s3590 + $0x74] sm:$0xf]
    %v3621 = vld [vmem:[%s3590 + $0x78] sm:$0xf]
    %v3622 = vld [vmem:[%s3590 + $0x7c] sm:$0xf]
    %v3623 = vld [vmem:[%s8 + $0x32] ss:$0 sm:$0xff]
    %v3624 = vpack.c.bf16 %v3588, %v3586
    %v3625 = vpack.c.bf16 %v3589, %v3587
    %v3658 = vunpack.c.l.b16 %v3591
    %v3659 = vunpack.c.l.b16 %v3592
    %v3660 = vunpack.c.l.b16 %v3593
    %v3661 = vunpack.c.l.b16 %v3594
    %v3662 = vunpack.c.l.b16 %v3595
    %v3663 = vunpack.c.l.b16 %v3596
    %v3664 = vunpack.c.l.b16 %v3597
    %v3665 = vunpack.c.l.b16 %v3598
    %v3666 = vunpack.c.l.b16 %v3599
    %v3667 = vunpack.c.l.b16 %v3600
    %v3668 = vunpack.c.l.b16 %v3601
    %v3669 = vunpack.c.l.b16 %v3602
    %v3670 = vunpack.c.l.b16 %v3603
    %v3671 = vunpack.c.l.b16 %v3604
    %v3672 = vunpack.c.l.b16 %v3605
    %v3673 = vunpack.c.l.b16 %v3606
    %v3674 = vunpack.c.l.b16 %v3607
    %v3675 = vunpack.c.l.b16 %v3608
    %v3676 = vunpack.c.l.b16 %v3609
    %v3677 = vunpack.c.l.b16 %v3610
    %v3678 = vunpack.c.l.b16 %v3611
    %v3679 = vunpack.c.l.b16 %v3612
    %v3680 = vunpack.c.l.b16 %v3613
    %v3681 = vunpack.c.l.b16 %v3614
    %v3682 = vunpack.c.l.b16 %v3615
    %v3683 = vunpack.c.l.b16 %v3616
    %v3684 = vunpack.c.l.b16 %v3617
    %v3685 = vunpack.c.l.b16 %v3618
    %v3686 = vunpack.c.l.b16 %v3619
    %v3687 = vunpack.c.l.b16 %v3620
    %v3688 = vunpack.c.l.b16 %v3621
    %v3689 = vunpack.c.l.b16 %v3622
    %v3690 = vpack.c.b16 %v3659, %v3658
    %v3691 = vpack.c.b16 %v3661, %v3660
    %v3692 = vpack.c.b16 %v3663, %v3662
    %v3693 = vpack.c.b16 %v3665, %v3664
    %v3694 = vpack.c.b16 %v3667, %v3666
    %v3695 = vpack.c.b16 %v3669, %v3668
    %v3696 = vpack.c.b16 %v3671, %v3670
    %v3697 = vpack.c.b16 %v3673, %v3672
    %v3698 = vpack.c.b16 %v3675, %v3674
    %v3699 = vpack.c.b16 %v3677, %v3676
    %v3700 = vpack.c.b16 %v3679, %v3678
    %v3701 = vpack.c.b16 %v3681, %v3680
    %v3702 = vpack.c.b16 %v3683, %v3682
    %v3703 = vpack.c.b16 %v3685, %v3684
    %v3704 = vpack.c.b16 %v3687, %v3686
    %v3705 = vpack.c.b16 %v3689, %v3688
    %3722 = vmatprep.subr.bf16.mxu0 0
    %3723 = vmatpush1.bf16.msra.mxu0 %v3690
    %3724 = vmatprep.subr.bf16.mxu0 0
    %3725 = vmatpush1.bf16.msra.mxu0 %v3691
    %3726 = vmatprep.subr.bf16.mxu0 0
    %3727 = vmatpush1.bf16.msra.mxu0 %v3692
    %3728 = vmatprep.subr.bf16.mxu0 0
    %3729 = vmatpush1.bf16.msra.mxu0 %v3693
    %3730 = vmatprep.subr.bf16.mxu0 0
    %3731 = vmatpush1.bf16.msra.mxu0 %v3694
    %3732 = vmatprep.subr.bf16.mxu0 0
    %3733 = vmatpush1.bf16.msra.mxu0 %v3695
    %3734 = vmatprep.subr.bf16.mxu0 0
    %3735 = vmatpush1.bf16.msra.mxu0 %v3696
    %3736 = vmatprep.subr.bf16.mxu0 0
    %3737 = vmatpush1.bf16.msra.mxu0 %v3697
    %3738 = vmatprep.subr.bf16.mxu0 0
    %3739 = vmatpush1.bf16.msra.mxu0 %v3698
    %3740 = vmatprep.subr.bf16.mxu0 0
    %3741 = vmatpush1.bf16.msra.mxu0 %v3699
    %3742 = vmatprep.subr.bf16.mxu0 0
    %3743 = vmatpush1.bf16.msra.mxu0 %v3700
    %3744 = vmatprep.subr.bf16.mxu0 0
    %3745 = vmatpush1.bf16.msra.mxu0 %v3701
    %3746 = vmatprep.subr.bf16.mxu0 0
    %3747 = vmatpush1.bf16.msra.mxu0 %v3702
    %3748 = vmatprep.subr.bf16.mxu0 0
    %3749 = vmatpush1.bf16.msra.mxu0 %v3703
    %3750 = vmatprep.subr.bf16.mxu0 0
    %3751 = vmatpush1.bf16.msra.mxu0 %v3704
    %3752 = vmatprep.subr.bf16.mxu0 0
    %3753 = vmatpush1.bf16.msra.mxu0 %v3705
    %3754 = vmatprep.mubr.bf16.mxu0 %v3625
    %3755 = vmatmul.mubr.bf16.gmra.mrb[0].mxu0 %v3624
    %v3756 = vpop.f32.mrb[0].mxu0
    %v3757 = vadd.f32 %v3623, %v3756
    %v3758 = vpop.f32.mrb[0].mxu0
    %v3759 = vpop.f32.mrb[0].mxu0
    %v3760 = vadd.f32 %v3623, %v3759
    %v3761 = vpop.f32.mrb[0].mxu0
    %3762 = vdwg.mxu0
    %v3763 = vmax.f32 %v3757, 0.0
    %v3764 = vmax.f32 %v3760, 0.0
    %s3765 = scalar_lea.vmem %s5, 384
    %v3766 = vld [vmem:[%s3765] sm:$0xf]
    %v3767 = vld [vmem:[%s3765 + $0x4] sm:$0xf]
    %v3768 = vld [vmem:[%s3765 + $0x8] sm:$0xf]
    %v3769 = vld [vmem:[%s3765 + $0xc] sm:$0xf]
    %v3770 = vld [vmem:[%s3765 + $0x10] sm:$0xf]
    %v3771 = vld [vmem:[%s3765 + $0x14] sm:$0xf]
    %v3772 = vld [vmem:[%s3765 + $0x18] sm:$0xf]
    %v3773 = vld [vmem:[%s3765 + $0x1c] sm:$0xf]
    %v3774 = vld [vmem:[%s3765 + $0x20] sm:$0xf]
    %v3775 = vld [vmem:[%s3765 + $0x24] sm:$0xf]
    %v3776 = vld [vmem:[%s3765 + $0x28] sm:$0xf]
    %v3777 = vld [vmem:[%s3765 + $0x2c] sm:$0xf]
    %v3778 = vld [vmem:[%s3765 + $0x30] sm:$0xf]
    %v3779 = vld [vmem:[%s3765 + $0x34] sm:$0xf]
    %v3780 = vld [vmem:[%s3765 + $0x38] sm:$0xf]
    %v3781 = vld [vmem:[%s3765 + $0x3c] sm:$0xf]
    %v3782 = vld [vmem:[%s8 + $0x33] ss:$0 sm:$0xff]
    %v3783 = vpack.c.bf16 %v3764, %v3763
    %v3800 = vunpack.c.l.b16 %v3766
    %v3801 = vunpack.c.l.b16 %v3767
    %v3802 = vunpack.c.l.b16 %v3768
    %v3803 = vunpack.c.l.b16 %v3769
    %v3804 = vunpack.c.l.b16 %v3770
    %v3805 = vunpack.c.l.b16 %v3771
    %v3806 = vunpack.c.l.b16 %v3772
    %v3807 = vunpack.c.l.b16 %v3773
    %v3808 = vunpack.c.l.b16 %v3774
    %v3809 = vunpack.c.l.b16 %v3775
    %v3810 = vunpack.c.l.b16 %v3776
    %v3811 = vunpack.c.l.b16 %v3777
    %v3812 = vunpack.c.l.b16 %v3778
    %v3813 = vunpack.c.l.b16 %v3779
    %v3814 = vunpack.c.l.b16 %v3780
    %v3815 = vunpack.c.l.b16 %v3781
    %v3816 = vpack.c.b16 %v3801, %v3800
    %v3817 = vpack.c.b16 %v3803, %v3802
    %v3818 = vpack.c.b16 %v3805, %v3804
    %v3819 = vpack.c.b16 %v3807, %v3806
    %v3820 = vpack.c.b16 %v3809, %v3808
    %v3821 = vpack.c.b16 %v3811, %v3810
    %v3822 = vpack.c.b16 %v3813, %v3812
    %v3823 = vpack.c.b16 %v3815, %v3814
    %3832 = vmatprep.subr.bf16.mxu0 0
    %3833 = vmatpush1.bf16.msra.mxu0 %v3816
    %3834 = vmatprep.subr.bf16.mxu0 0
    %3835 = vmatpush1.bf16.msra.mxu0 %v3817
    %3836 = vmatprep.subr.bf16.mxu0 0
    %3837 = vmatpush1.bf16.msra.mxu0 %v3818
    %3838 = vmatprep.subr.bf16.mxu0 0
    %3839 = vmatpush1.bf16.msra.mxu0 %v3819
    %3840 = vmatprep.subr.bf16.mxu0 0
    %3841 = vmatpush1.bf16.msra.mxu0 %v3820
    %3842 = vmatprep.subr.bf16.mxu0 0
    %3843 = vmatpush1.bf16.msra.mxu0 %v3821
    %3844 = vmatprep.subr.bf16.mxu0 0
    %3845 = vmatpush1.bf16.msra.mxu0 %v3822
    %3846 = vmatprep.subr.bf16.mxu0 0
    %3847 = vmatpush1.bf16.msra.mxu0 %v3823
    %3848 = vmatprep.subr.bf16.mxu0 0
    %3849 = vmatpush1.bf16.msra.mxu0 0
    %3850 = vmatprep.subr.bf16.mxu0 0
    %3851 = vmatpush1.bf16.msra.mxu0 0
    %3852 = vmatprep.subr.bf16.mxu0 0
    %3853 = vmatpush1.bf16.msra.mxu0 0
    %3854 = vmatprep.subr.bf16.mxu0 0
    %3855 = vmatpush1.bf16.msra.mxu0 0
    %3856 = vmatprep.subr.bf16.mxu0 0
    %3857 = vmatpush1.bf16.msra.mxu0 0
    %3858 = vmatprep.subr.bf16.mxu0 0
    %3859 = vmatpush1.bf16.msra.mxu0 0
    %3860 = vmatprep.subr.bf16.mxu0 0
    %3861 = vmatpush1.bf16.msra.mxu0 0
    %3862 = vmatprep.subr.bf16.mxu0 0
    %3863 = vmatpush1.bf16.msra.mxu0 0
    %3864 = vmatprep.mubr.bf16.mxu0 0
    %3865 = vmatmul.mubr.bf16.gmra.mrb[0].mxu0 %v3783
    %v3866 = vpop.f32.mrb[0].mxu0
    %v3867 = vadd.f32 %v3782, %v3866
    %v3868 = vpop.f32.mrb[0].mxu0
    %v3869 = vpop.f32.mrb[0].mxu0
    %v3870 = vadd.f32 %v3782, %v3869
    %v3871 = vpop.f32.mrb[0].mxu0
    %3872 = vdwg.mxu0
    %v3873 = vmax.f32 %v3867, 0.0
    %v3874 = vmax.f32 %v3870, 0.0
    %s3875 = scalar_lea.vmem %s6, 96
    %v3876 = vld [vmem:[%s3875] sm:$0xf]
    %v3877 = vld [vmem:[%s3875 + $0x4] sm:$0xf]
    %v3878 = vld [vmem:[%s3875 + $0x8] sm:$0xf]
    %v3879 = vld [vmem:[%s3875 + $0xc] sm:$0xf]
    %v3880 = vld [vmem:[%s8 + $0x34] ss:$0 sm:$0xff]
    %v3881 = vpack.c.bf16 %v3874, %v3873
    %v3886 = vunpack.c.l.b16 %v3876
    %v3887 = vunpack.c.l.b16 %v3877
    %v3888 = vunpack.c.l.b16 %v3878
    %v3889 = vunpack.c.l.b16 %v3879
    %v3890 = vpack.c.b16 %v3887, %v3886
    %v3891 = vpack.c.b16 %v3889, %v3888
    %v3895 = vsel %vm587, %v3881, 0
    %3897 = vmatprep.subr.bf16.mxu0 0
    %3898 = vmatpush1.bf16.msra.mxu0 %v3890
    %3899 = vmatprep.subr.bf16.mxu0 0
    %3900 = vmatpush1.bf16.msra.mxu0 %v3891
    %3901 = vmatprep.subr.bf16.mxu0 0
    %3902 = vmatpush1.bf16.msra.mxu0 0
    %3903 = vmatprep.subr.bf16.mxu0 0
    %3904 = vmatpush1.bf16.msra.mxu0 0
    %3905 = vmatprep.subr.bf16.mxu0 0
    %3906 = vmatpush1.bf16.msra.mxu0 0
    %3907 = vmatprep.subr.bf16.mxu0 0
    %3908 = vmatpush1.bf16.msra.mxu0 0
    %3909 = vmatprep.subr.bf16.mxu0 0
    %3910 = vmatpush1.bf16.msra.mxu0 0
    %3911 = vmatprep.subr.bf16.mxu0 0
    %3912 = vmatpush1.bf16.msra.mxu0 0
    %3913 = vmatprep.subr.bf16.mxu0 0
    %3914 = vmatpush1.bf16.msra.mxu0 0
    %3915 = vmatprep.subr.bf16.mxu0 0
    %3916 = vmatpush1.bf16.msra.mxu0 0
    %3917 = vmatprep.subr.bf16.mxu0 0
    %3918 = vmatpush1.bf16.msra.mxu0 0
    %3919 = vmatprep.subr.bf16.mxu0 0
    %3920 = vmatpush1.bf16.msra.mxu0 0
    %3921 = vmatprep.subr.bf16.mxu0 0
    %3922 = vmatpush1.bf16.msra.mxu0 0
    %3923 = vmatprep.subr.bf16.mxu0 0
    %3924 = vmatpush1.bf16.msra.mxu0 0
    %3925 = vmatprep.subr.bf16.mxu0 0
    %3926 = vmatpush1.bf16.msra.mxu0 0
    %3927 = vmatprep.subr.bf16.mxu0 0
    %3928 = vmatpush1.bf16.msra.mxu0 0
    %3929 = vmatprep.mubr.bf16.mxu0 0
    %3930 = vmatmul.mubr.bf16.gmra.mrb[0].mxu0 %v3895
    %v3931 = vpop.f32.mrb[0].mxu0
    %v3932 = vadd.f32 %v3880, %v3931
    %v3933 = vpop.f32.mrb[0].mxu0
    %v3934 = vpop.f32.mrb[0].mxu0
    %v3935 = vadd.f32 %v3880, %v3934
    %v3936 = vpop.f32.mrb[0].mxu0
    %3937 = vdwg.mxu0
    %v3938 = vmax.f32 %v3932, 0.0
    %v3939 = vmax.f32 %v3935, 0.0
    %s3940 = scalar_lea.vmem [#allocation2], 896
    %v3941 = vld [vmem:[%s3940] sm:$0xff]
    %v3942 = vld [vmem:[%s3940 + $0x8] sm:$0xff]
    %v3943 = vld [vmem:[%s3940 + $0x10] sm:$0xff]
    %v3944 = vld [vmem:[%s3940 + $0x18] sm:$0xff]
    %v3945 = vld [vmem:[%s3940 + $0x20] sm:$0xff]
    %v3946 = vld [vmem:[%s3940 + $0x28] sm:$0xff]
    %v3947 = vld [vmem:[%s3940 + $0x30] sm:$0xff]
    %v3948 = vld [vmem:[%s3940 + $0x38] sm:$0xff]
    %v3949 = vld [vmem:[%s3940 + $0x40] sm:$0xff]
    %v3950 = vld [vmem:[%s3940 + $0x48] sm:$0xff]
    %v3951 = vld [vmem:[%s3940 + $0x50] sm:$0xff]
    %v3952 = vld [vmem:[%s3940 + $0x58] sm:$0xff]
    %v3953 = vld [vmem:[%s3940 + $0x60] sm:$0xff]
    %v3954 = vld [vmem:[%s3940 + $0x68] sm:$0xff]
    %v3955 = vld [vmem:[%s3940 + $0x70] sm:$0xff]
    %v3956 = vld [vmem:[%s3940 + $0x78] sm:$0xff]
    %s3957 = scalar_lea.vmem %s8, 53
    %v3958 = vld [vmem:[%s3957] ss:$8 sm:$0x3]
    %v3959 = vpack.c.bf16 %v3939, %v3938
    %v3961 = vlaneseq
    %v3962 = vshrl.u32 %v3961, 7
    %v3963 = vsub.s32 0, %v3962
    %v3964 = vrot.slane %v3958, %v3963
    %v3965 = vlaneseq
    %v3966 = vshrl.u32 %v3965, 7
    %v3967 = vsub.s32 1, %v3966
    %v3968 = vrot.slane %v3958, %v3967
    %v3987 = vunpack.c.l.b16 %v3941
    %v3988 = vunpack.c.h.b16 %v3941
    %v3989 = vunpack.c.l.b16 %v3942
    %v3990 = vunpack.c.h.b16 %v3942
    %v3991 = vunpack.c.l.b16 %v3943
    %v3992 = vunpack.c.h.b16 %v3943
    %v3993 = vunpack.c.l.b16 %v3944
    %v3994 = vunpack.c.h.b16 %v3944
    %v3995 = vunpack.c.l.b16 %v3945
    %v3996 = vunpack.c.h.b16 %v3945
    %v3997 = vunpack.c.l.b16 %v3946
    %v3998 = vunpack.c.h.b16 %v3946
    %v3999 = vunpack.c.l.b16 %v3947
    %v4000 = vunpack.c.h.b16 %v3947
    %v4001 = vunpack.c.l.b16 %v3948
    %v4002 = vunpack.c.h.b16 %v3948
    %v4003 = vunpack.c.l.b16 %v3949
    %v4004 = vunpack.c.h.b16 %v3949
    %v4005 = vunpack.c.l.b16 %v3950
    %v4006 = vunpack.c.h.b16 %v3950
    %v4007 = vunpack.c.l.b16 %v3951
    %v4008 = vunpack.c.h.b16 %v3951
    %v4009 = vunpack.c.l.b16 %v3952
    %v4010 = vunpack.c.h.b16 %v3952
    %v4011 = vunpack.c.l.b16 %v3953
    %v4012 = vunpack.c.h.b16 %v3953
    %v4013 = vunpack.c.l.b16 %v3954
    %v4014 = vunpack.c.h.b16 %v3954
    %v4015 = vunpack.c.l.b16 %v3955
    %v4016 = vunpack.c.h.b16 %v3955
    %v4017 = vunpack.c.l.b16 %v3956
    %v4018 = vunpack.c.h.b16 %v3956
    %v4019 = vpack.c.b16 %v3989, %v3987
    %v4020 = vpack.c.b16 %v3990, %v3988
    %v4021 = vpack.c.b16 %v3993, %v3991
    %v4022 = vpack.c.b16 %v3994, %v3992
    %v4023 = vpack.c.b16 %v3997, %v3995
    %v4024 = vpack.c.b16 %v3998, %v3996
    %v4025 = vpack.c.b16 %v4001, %v3999
    %v4026 = vpack.c.b16 %v4002, %v4000
    %v4027 = vpack.c.b16 %v4005, %v4003
    %v4028 = vpack.c.b16 %v4006, %v4004
    %v4029 = vpack.c.b16 %v4009, %v4007
    %v4030 = vpack.c.b16 %v4010, %v4008
    %v4031 = vpack.c.b16 %v4013, %v4011
    %v4032 = vpack.c.b16 %v4014, %v4012
    %v4033 = vpack.c.b16 %v4017, %v4015
    %v4034 = vpack.c.b16 %v4018, %v4016
    %4051 = vmatprep.subr.bf16.mxu0 %v4020
    %4052 = vmatpush1.bf16.msra.mxu0 %v4019
    %4053 = vmatprep.subr.bf16.mxu0 %v4022
    %4054 = vmatpush1.bf16.msra.mxu0 %v4021
    %4055 = vmatprep.subr.bf16.mxu0 %v4024
    %4056 = vmatpush1.bf16.msra.mxu0 %v4023
    %4057 = vmatprep.subr.bf16.mxu0 %v4026
    %4058 = vmatpush1.bf16.msra.mxu0 %v4025
    %4059 = vmatprep.subr.bf16.mxu0 %v4028
    %4060 = vmatpush1.bf16.msra.mxu0 %v4027
    %4061 = vmatprep.subr.bf16.mxu0 %v4030
    %4062 = vmatpush1.bf16.msra.mxu0 %v4029
    %4063 = vmatprep.subr.bf16.mxu0 %v4032
    %4064 = vmatpush1.bf16.msra.mxu0 %v4031
    %4065 = vmatprep.subr.bf16.mxu0 %v4034
    %4066 = vmatpush1.bf16.msra.mxu0 %v4033
    %4067 = vmatprep.subr.bf16.mxu0 0
    %4068 = vmatpush1.bf16.msra.mxu0 0
    %4069 = vmatprep.subr.bf16.mxu0 0
    %4070 = vmatpush1.bf16.msra.mxu0 0
    %4071 = vmatprep.subr.bf16.mxu0 0
    %4072 = vmatpush1.bf16.msra.mxu0 0
    %4073 = vmatprep.subr.bf16.mxu0 0
    %4074 = vmatpush1.bf16.msra.mxu0 0
    %4075 = vmatprep.subr.bf16.mxu0 0
    %4076 = vmatpush1.bf16.msra.mxu0 0
    %4077 = vmatprep.subr.bf16.mxu0 0
    %4078 = vmatpush1.bf16.msra.mxu0 0
    %4079 = vmatprep.subr.bf16.mxu0 0
    %4080 = vmatpush1.bf16.msra.mxu0 0
    %4081 = vmatprep.subr.bf16.mxu0 0
    %4082 = vmatpush1.bf16.msra.mxu0 0
    %4083 = vmatprep.mubr.bf16.mxu0 0
    %4084 = vmatmul.mubr.bf16.gmra.mrb[0].mxu0 %v3959
    %v4085 = vpop.f32.mrb[0].mxu0
    %v4086 = vadd.f32 %v3964, %v4085
    %v4087 = vpop.f32.mrb[0].mxu0
    %v4088 = vadd.f32 %v3968, %v4087
    %v4089 = vpop.f32.mrb[0].mxu0
    %v4090 = vadd.f32 %v3964, %v4089
    %v4091 = vpop.f32.mrb[0].mxu0
    %v4092 = vadd.f32 %v3968, %v4091
    %4093 = vdwg.mxu0
    %v4094 = vmax.f32 %v4086, 0.0
    %v4095 = vmax.f32 %v4088, 0.0
    %v4096 = vmax.f32 %v4090, 0.0
    %v4097 = vmax.f32 %v4092, 0.0
    %s4098 = scalar_lea.vmem [#allocation5], 896
    %v4099 = vld [vmem:[%s4098] sm:$0xf]
    %v4100 = vld [vmem:[%s4098 + $0x4] sm:$0xf]
    %v4101 = vld [vmem:[%s4098 + $0x8] sm:$0xf]
    %v4102 = vld [vmem:[%s4098 + $0xc] sm:$0xf]
    %v4103 = vld [vmem:[%s4098 + $0x10] sm:$0xf]
    %v4104 = vld [vmem:[%s4098 + $0x14] sm:$0xf]
    %v4105 = vld [vmem:[%s4098 + $0x18] sm:$0xf]
    %v4106 = vld [vmem:[%s4098 + $0x1c] sm:$0xf]
    %v4107 = vld [vmem:[%s4098 + $0x20] sm:$0xf]
    %v4108 = vld [vmem:[%s4098 + $0x24] sm:$0xf]
    %v4109 = vld [vmem:[%s4098 + $0x28] sm:$0xf]
    %v4110 = vld [vmem:[%s4098 + $0x2c] sm:$0xf]
    %v4111 = vld [vmem:[%s4098 + $0x30] sm:$0xf]
    %v4112 = vld [vmem:[%s4098 + $0x34] sm:$0xf]
    %v4113 = vld [vmem:[%s4098 + $0x38] sm:$0xf]
    %v4114 = vld [vmem:[%s4098 + $0x3c] sm:$0xf]
    %v4115 = vld [vmem:[%s4098 + $0x40] sm:$0xf]
    %v4116 = vld [vmem:[%s4098 + $0x44] sm:$0xf]
    %v4117 = vld [vmem:[%s4098 + $0x48] sm:$0xf]
    %v4118 = vld [vmem:[%s4098 + $0x4c] sm:$0xf]
    %v4119 = vld [vmem:[%s4098 + $0x50] sm:$0xf]
    %v4120 = vld [vmem:[%s4098 + $0x54] sm:$0xf]
    %v4121 = vld [vmem:[%s4098 + $0x58] sm:$0xf]
    %v4122 = vld [vmem:[%s4098 + $0x5c] sm:$0xf]
    %v4123 = vld [vmem:[%s4098 + $0x60] sm:$0xf]
    %v4124 = vld [vmem:[%s4098 + $0x64] sm:$0xf]
    %v4125 = vld [vmem:[%s4098 + $0x68] sm:$0xf]
    %v4126 = vld [vmem:[%s4098 + $0x6c] sm:$0xf]
    %v4127 = vld [vmem:[%s4098 + $0x70] sm:$0xf]
    %v4128 = vld [vmem:[%s4098 + $0x74] sm:$0xf]
    %v4129 = vld [vmem:[%s4098 + $0x78] sm:$0xf]
    %v4130 = vld [vmem:[%s4098 + $0x7c] sm:$0xf]
    %v4131 = vld [vmem:[%s8 + $0x36] ss:$0 sm:$0xff]
    %v4132 = vpack.c.bf16 %v4096, %v4094
    %v4133 = vpack.c.bf16 %v4097, %v4095
    %v4166 = vunpack.c.l.b16 %v4099
    %v4167 = vunpack.c.l.b16 %v4100
    %v4168 = vunpack.c.l.b16 %v4101
    %v4169 = vunpack.c.l.b16 %v4102
    %v4170 = vunpack.c.l.b16 %v4103
    %v4171 = vunpack.c.l.b16 %v4104
    %v4172 = vunpack.c.l.b16 %v4105
    %v4173 = vunpack.c.l.b16 %v4106
    %v4174 = vunpack.c.l.b16 %v4107
    %v4175 = vunpack.c.l.b16 %v4108
    %v4176 = vunpack.c.l.b16 %v4109
    %v4177 = vunpack.c.l.b16 %v4110
    %v4178 = vunpack.c.l.b16 %v4111
    %v4179 = vunpack.c.l.b16 %v4112
    %v4180 = vunpack.c.l.b16 %v4113
    %v4181 = vunpack.c.l.b16 %v4114
    %v4182 = vunpack.c.l.b16 %v4115
    %v4183 = vunpack.c.l.b16 %v4116
    %v4184 = vunpack.c.l.b16 %v4117
    %v4185 = vunpack.c.l.b16 %v4118
    %v4186 = vunpack.c.l.b16 %v4119
    %v4187 = vunpack.c.l.b16 %v4120
    %v4188 = vunpack.c.l.b16 %v4121
    %v4189 = vunpack.c.l.b16 %v4122
    %v4190 = vunpack.c.l.b16 %v4123
    %v4191 = vunpack.c.l.b16 %v4124
    %v4192 = vunpack.c.l.b16 %v4125
    %v4193 = vunpack.c.l.b16 %v4126
    %v4194 = vunpack.c.l.b16 %v4127
    %v4195 = vunpack.c.l.b16 %v4128
    %v4196 = vunpack.c.l.b16 %v4129
    %v4197 = vunpack.c.l.b16 %v4130
    %v4198 = vpack.c.b16 %v4167, %v4166
    %v4199 = vpack.c.b16 %v4169, %v4168
    %v4200 = vpack.c.b16 %v4171, %v4170
    %v4201 = vpack.c.b16 %v4173, %v4172
    %v4202 = vpack.c.b16 %v4175, %v4174
    %v4203 = vpack.c.b16 %v4177, %v4176
    %v4204 = vpack.c.b16 %v4179, %v4178
    %v4205 = vpack.c.b16 %v4181, %v4180
    %v4206 = vpack.c.b16 %v4183, %v4182
    %v4207 = vpack.c.b16 %v4185, %v4184
    %v4208 = vpack.c.b16 %v4187, %v4186
    %v4209 = vpack.c.b16 %v4189, %v4188
    %v4210 = vpack.c.b16 %v4191, %v4190
    %v4211 = vpack.c.b16 %v4193, %v4192
    %v4212 = vpack.c.b16 %v4195, %v4194
    %v4213 = vpack.c.b16 %v4197, %v4196
    %4230 = vmatprep.subr.bf16.mxu0 0
    %4231 = vmatpush1.bf16.msra.mxu0 %v4198
    %4232 = vmatprep.subr.bf16.mxu0 0
    %4233 = vmatpush1.bf16.msra.mxu0 %v4199
    %4234 = vmatprep.subr.bf16.mxu0 0
    %4235 = vmatpush1.bf16.msra.mxu0 %v4200
    %4236 = vmatprep.subr.bf16.mxu0 0
    %4237 = vmatpush1.bf16.msra.mxu0 %v4201
    %4238 = vmatprep.subr.bf16.mxu0 0
    %4239 = vmatpush1.bf16.msra.mxu0 %v4202
    %4240 = vmatprep.subr.bf16.mxu0 0
    %4241 = vmatpush1.bf16.msra.mxu0 %v4203
    %4242 = vmatprep.subr.bf16.mxu0 0
    %4243 = vmatpush1.bf16.msra.mxu0 %v4204
    %4244 = vmatprep.subr.bf16.mxu0 0
    %4245 = vmatpush1.bf16.msra.mxu0 %v4205
    %4246 = vmatprep.subr.bf16.mxu0 0
    %4247 = vmatpush1.bf16.msra.mxu0 %v4206
    %4248 = vmatprep.subr.bf16.mxu0 0
    %4249 = vmatpush1.bf16.msra.mxu0 %v4207
    %4250 = vmatprep.subr.bf16.mxu0 0
    %4251 = vmatpush1.bf16.msra.mxu0 %v4208
    %4252 = vmatprep.subr.bf16.mxu0 0
    %4253 = vmatpush1.bf16.msra.mxu0 %v4209
    %4254 = vmatprep.subr.bf16.mxu0 0
    %4255 = vmatpush1.bf16.msra.mxu0 %v4210
    %4256 = vmatprep.subr.bf16.mxu0 0
    %4257 = vmatpush1.bf16.msra.mxu0 %v4211
    %4258 = vmatprep.subr.bf16.mxu0 0
    %4259 = vmatpush1.bf16.msra.mxu0 %v4212
    %4260 = vmatprep.subr.bf16.mxu0 0
    %4261 = vmatpush1.bf16.msra.mxu0 %v4213
    %4262 = vmatprep.mubr.bf16.mxu0 %v4133
    %4263 = vmatmul.mubr.bf16.gmra.mrb[0].mxu0 %v4132
    %v4264 = vpop.f32.mrb[0].mxu0
    %v4265 = vadd.f32 %v4131, %v4264
    %v4266 = vpop.f32.mrb[0].mxu0
    %v4267 = vpop.f32.mrb[0].mxu0
    %v4268 = vadd.f32 %v4131, %v4267
    %v4269 = vpop.f32.mrb[0].mxu0
    %4270 = vdwg.mxu0
    %v4271 = vmax.f32 %v4265, 0.0
    %v4272 = vmax.f32 %v4268, 0.0
    %s4273 = scalar_lea.vmem %s5, 448
    %v4274 = vld [vmem:[%s4273] sm:$0xf]
    %v4275 = vld [vmem:[%s4273 + $0x4] sm:$0xf]
    %v4276 = vld [vmem:[%s4273 + $0x8] sm:$0xf]
    %v4277 = vld [vmem:[%s4273 + $0xc] sm:$0xf]
    %v4278 = vld [vmem:[%s4273 + $0x10] sm:$0xf]
    %v4279 = vld [vmem:[%s4273 + $0x14] sm:$0xf]
    %v4280 = vld [vmem:[%s4273 + $0x18] sm:$0xf]
    %v4281 = vld [vmem:[%s4273 + $0x1c] sm:$0xf]
    %v4282 = vld [vmem:[%s4273 + $0x20] sm:$0xf]
    %v4283 = vld [vmem:[%s4273 + $0x24] sm:$0xf]
    %v4284 = vld [vmem:[%s4273 + $0x28] sm:$0xf]
    %v4285 = vld [vmem:[%s4273 + $0x2c] sm:$0xf]
    %v4286 = vld [vmem:[%s4273 + $0x30] sm:$0xf]
    %v4287 = vld [vmem:[%s4273 + $0x34] sm:$0xf]
    %v4288 = vld [vmem:[%s4273 + $0x38] sm:$0xf]
    %v4289 = vld [vmem:[%s4273 + $0x3c] sm:$0xf]
    %v4290 = vld [vmem:[%s8 + $0x37] ss:$0 sm:$0xff]
    %v4291 = vpack.c.bf16 %v4272, %v4271
    %v4308 = vunpack.c.l.b16 %v4274
    %v4309 = vunpack.c.l.b16 %v4275
    %v4310 = vunpack.c.l.b16 %v4276
    %v4311 = vunpack.c.l.b16 %v4277
    %v4312 = vunpack.c.l.b16 %v4278
    %v4313 = vunpack.c.l.b16 %v4279
    %v4314 = vunpack.c.l.b16 %v4280
    %v4315 = vunpack.c.l.b16 %v4281
    %v4316 = vunpack.c.l.b16 %v4282
    %v4317 = vunpack.c.l.b16 %v4283
    %v4318 = vunpack.c.l.b16 %v4284
    %v4319 = vunpack.c.l.b16 %v4285
    %v4320 = vunpack.c.l.b16 %v4286
    %v4321 = vunpack.c.l.b16 %v4287
    %v4322 = vunpack.c.l.b16 %v4288
    %v4323 = vunpack.c.l.b16 %v4289
    %v4324 = vpack.c.b16 %v4309, %v4308
    %v4325 = vpack.c.b16 %v4311, %v4310
    %v4326 = vpack.c.b16 %v4313, %v4312
    %v4327 = vpack.c.b16 %v4315, %v4314
    %v4328 = vpack.c.b16 %v4317, %v4316
    %v4329 = vpack.c.b16 %v4319, %v4318
    %v4330 = vpack.c.b16 %v4321, %v4320
    %v4331 = vpack.c.b16 %v4323, %v4322
    %4340 = vmatprep.subr.bf16.mxu0 0
    %4341 = vmatpush1.bf16.msra.mxu0 %v4324
    %4342 = vmatprep.subr.bf16.mxu0 0
    %4343 = vmatpush1.bf16.msra.mxu0 %v4325
    %4344 = vmatprep.subr.bf16.mxu0 0
    %4345 = vmatpush1.bf16.msra.mxu0 %v4326
    %4346 = vmatprep.subr.bf16.mxu0 0
    %4347 = vmatpush1.bf16.msra.mxu0 %v4327
    %4348 = vmatprep.subr.bf16.mxu0 0
    %4349 = vmatpush1.bf16.msra.mxu0 %v4328
    %4350 = vmatprep.subr.bf16.mxu0 0
    %4351 = vmatpush1.bf16.msra.mxu0 %v4329
    %4352 = vmatprep.subr.bf16.mxu0 0
    %4353 = vmatpush1.bf16.msra.mxu0 %v4330
    %4354 = vmatprep.subr.bf16.mxu0 0
    %4355 = vmatpush1.bf16.msra.mxu0 %v4331
    %4356 = vmatprep.subr.bf16.mxu0 0
    %4357 = vmatpush1.bf16.msra.mxu0 0
    %4358 = vmatprep.subr.bf16.mxu0 0
    %4359 = vmatpush1.bf16.msra.mxu0 0
    %4360 = vmatprep.subr.bf16.mxu0 0
    %4361 = vmatpush1.bf16.msra.mxu0 0
    %4362 = vmatprep.subr.bf16.mxu0 0
    %4363 = vmatpush1.bf16.msra.mxu0 0
    %4364 = vmatprep.subr.bf16.mxu0 0
    %4365 = vmatpush1.bf16.msra.mxu0 0
    %4366 = vmatprep.subr.bf16.mxu0 0
    %4367 = vmatpush1.bf16.msra.mxu0 0
    %4368 = vmatprep.subr.bf16.mxu0 0
    %4369 = vmatpush1.bf16.msra.mxu0 0
    %4370 = vmatprep.subr.bf16.mxu0 0
    %4371 = vmatpush1.bf16.msra.mxu0 0
    %4372 = vmatprep.mubr.bf16.mxu0 0
    %4373 = vmatmul.mubr.bf16.gmra.mrb[0].mxu0 %v4291
    %v4374 = vpop.f32.mrb[0].mxu0
    %v4375 = vadd.f32 %v4290, %v4374
    %v4376 = vpop.f32.mrb[0].mxu0
    %v4377 = vpop.f32.mrb[0].mxu0
    %v4378 = vadd.f32 %v4290, %v4377
    %v4379 = vpop.f32.mrb[0].mxu0
    %4380 = vdwg.mxu0
    %v4381 = vmax.f32 %v4375, 0.0
    %v4382 = vmax.f32 %v4378, 0.0
    %s4383 = scalar_lea.vmem %s6, 112
    %v4384 = vld [vmem:[%s4383] sm:$0xf]
    %v4385 = vld [vmem:[%s4383 + $0x4] sm:$0xf]
    %v4386 = vld [vmem:[%s4383 + $0x8] sm:$0xf]
    %v4387 = vld [vmem:[%s4383 + $0xc] sm:$0xf]
    %v4388 = vld [vmem:[%s8 + $0x40] ss:$0 sm:$0xff]
    %v4393 = vunpack.c.l.b16 %v4384
    %v4394 = vunpack.c.l.b16 %v4385
    %v4395 = vunpack.c.l.b16 %v4386
    %v4396 = vunpack.c.l.b16 %v4387
    %v4397 = vpack.c.b16 %v4394, %v4393
    %v4398 = vpack.c.b16 %v4396, %v4395
    %4401 = vmatprep.subr.bf16.mxu0 0
    %4402 = vmatpush1.bf16.msra.mxu0 %v4397
    %4403 = vmatprep.subr.bf16.mxu0 0
    %4404 = vmatpush1.bf16.msra.mxu0 %v4398
    %4405 = vmatprep.subr.bf16.mxu0 0
    %4406 = vmatpush1.bf16.msra.mxu0 0
    %4407 = vmatprep.subr.bf16.mxu0 0
    %4408 = vmatpush1.bf16.msra.mxu0 0
    %4409 = vmatprep.subr.bf16.mxu0 0
    %4410 = vmatpush1.bf16.msra.mxu0 0
    %4411 = vmatprep.subr.bf16.mxu0 0
    %4412 = vmatpush1.bf16.msra.mxu0 0
    %4413 = vmatprep.subr.bf16.mxu0 0
    %4414 = vmatpush1.bf16.msra.mxu0 0
    %4415 = vmatprep.subr.bf16.mxu0 0
    %4416 = vmatpush1.bf16.msra.mxu0 0
    %4417 = vmatprep.subr.bf16.mxu0 0
    %4418 = vmatpush1.bf16.msra.mxu0 0
    %4419 = vmatprep.subr.bf16.mxu0 0
    %4420 = vmatpush1.bf16.msra.mxu0 0
    %4421 = vmatprep.subr.bf16.mxu0 0
    %4422 = vmatpush1.bf16.msra.mxu0 0
    %4423 = vmatprep.subr.bf16.mxu0 0
    %4424 = vmatpush1.bf16.msra.mxu0 0
    %4425 = vmatprep.subr.bf16.mxu0 0
    %4426 = vmatpush1.bf16.msra.mxu0 0
    %4427 = vmatprep.subr.bf16.mxu0 0
    %4428 = vmatpush1.bf16.msra.mxu0 0
    %4429 = vmatprep.subr.bf16.mxu0 0
    %4430 = vmatpush1.bf16.msra.mxu0 0
    %4431 = vmatprep.subr.bf16.mxu0 0
    %4432 = vmatpush1.bf16.msra.mxu0 0
    %4433 = vmatprep.mubr.bf16.mxu0 0
    %4434 = vmatmul.mubr.bf16.gmra.mrb[0].mxu0 %v3895
    %v4435 = vpop.f32.mrb[0].mxu0
    %v4436 = vadd.f32 %v4388, %v4435
    %v4437 = vpop.f32.mrb[0].mxu0
    %v4438 = vpop.f32.mrb[0].mxu0
    %v4439 = vadd.f32 %v4388, %v4438
    %v4440 = vpop.f32.mrb[0].mxu0
    %4441 = vdwg.mxu0
    %v4442 = vmax.f32 %v4436, 0.0
    %v4443 = vmax.f32 %v4439, 0.0
    %s4444 = scalar_lea.vmem [#allocation2], 1024
    %v4445 = vld [vmem:[%s4444] sm:$0xff]
    %v4446 = vld [vmem:[%s4444 + $0x8] sm:$0xff]
    %v4447 = vld [vmem:[%s4444 + $0x10] sm:$0xff]
    %v4448 = vld [vmem:[%s4444 + $0x18] sm:$0xff]
    %v4449 = vld [vmem:[%s4444 + $0x20] sm:$0xff]
    %v4450 = vld [vmem:[%s4444 + $0x28] sm:$0xff]
    %v4451 = vld [vmem:[%s4444 + $0x30] sm:$0xff]
    %v4452 = vld [vmem:[%s4444 + $0x38] sm:$0xff]
    %v4453 = vld [vmem:[%s4444 + $0x40] sm:$0xff]
    %v4454 = vld [vmem:[%s4444 + $0x48] sm:$0xff]
    %v4455 = vld [vmem:[%s4444 + $0x50] sm:$0xff]
    %v4456 = vld [vmem:[%s4444 + $0x58] sm:$0xff]
    %v4457 = vld [vmem:[%s4444 + $0x60] sm:$0xff]
    %v4458 = vld [vmem:[%s4444 + $0x68] sm:$0xff]
    %v4459 = vld [vmem:[%s4444 + $0x70] sm:$0xff]
    %v4460 = vld [vmem:[%s4444 + $0x78] sm:$0xff]
    %s4461 = scalar_lea.vmem %s8, 65
    %v4462 = vld [vmem:[%s4461] ss:$8 sm:$0x3]
    %v4463 = vpack.c.bf16 %v4443, %v4442
    %v4465 = vlaneseq
    %v4466 = vshrl.u32 %v4465, 7
    %v4467 = vsub.s32 0, %v4466
    %v4468 = vrot.slane %v4462, %v4467
    %v4469 = vlaneseq
    %v4470 = vshrl.u32 %v4469, 7
    %v4471 = vsub.s32 1, %v4470
    %v4472 = vrot.slane %v4462, %v4471
    %v4491 = vunpack.c.l.b16 %v4445
    %v4492 = vunpack.c.h.b16 %v4445
    %v4493 = vunpack.c.l.b16 %v4446
    %v4494 = vunpack.c.h.b16 %v4446
    %v4495 = vunpack.c.l.b16 %v4447
    %v4496 = vunpack.c.h.b16 %v4447
    %v4497 = vunpack.c.l.b16 %v4448
    %v4498 = vunpack.c.h.b16 %v4448
    %v4499 = vunpack.c.l.b16 %v4449
    %v4500 = vunpack.c.h.b16 %v4449
    %v4501 = vunpack.c.l.b16 %v4450
    %v4502 = vunpack.c.h.b16 %v4450
    %v4503 = vunpack.c.l.b16 %v4451
    %v4504 = vunpack.c.h.b16 %v4451
    %v4505 = vunpack.c.l.b16 %v4452
    %v4506 = vunpack.c.h.b16 %v4452
    %v4507 = vunpack.c.l.b16 %v4453
    %v4508 = vunpack.c.h.b16 %v4453
    %v4509 = vunpack.c.l.b16 %v4454
    %v4510 = vunpack.c.h.b16 %v4454
    %v4511 = vunpack.c.l.b16 %v4455
    %v4512 = vunpack.c.h.b16 %v4455
    %v4513 = vunpack.c.l.b16 %v4456
    %v4514 = vunpack.c.h.b16 %v4456
    %v4515 = vunpack.c.l.b16 %v4457
    %v4516 = vunpack.c.h.b16 %v4457
    %v4517 = vunpack.c.l.b16 %v4458
    %v4518 = vunpack.c.h.b16 %v4458
    %v4519 = vunpack.c.l.b16 %v4459
    %v4520 = vunpack.c.h.b16 %v4459
    %v4521 = vunpack.c.l.b16 %v4460
    %v4522 = vunpack.c.h.b16 %v4460
    %v4523 = vpack.c.b16 %v4493, %v4491
    %v4524 = vpack.c.b16 %v4494, %v4492
    %v4525 = vpack.c.b16 %v4497, %v4495
    %v4526 = vpack.c.b16 %v4498, %v4496
    %v4527 = vpack.c.b16 %v4501, %v4499
    %v4528 = vpack.c.b16 %v4502, %v4500
    %v4529 = vpack.c.b16 %v4505, %v4503
    %v4530 = vpack.c.b16 %v4506, %v4504
    %v4531 = vpack.c.b16 %v4509, %v4507
    %v4532 = vpack.c.b16 %v4510, %v4508
    %v4533 = vpack.c.b16 %v4513, %v4511
    %v4534 = vpack.c.b16 %v4514, %v4512
    %v4535 = vpack.c.b16 %v4517, %v4515
    %v4536 = vpack.c.b16 %v4518, %v4516
    %v4537 = vpack.c.b16 %v4521, %v4519
    %v4538 = vpack.c.b16 %v4522, %v4520
    %4555 = vmatprep.subr.bf16.mxu0 %v4524
    %4556 = vmatpush1.bf16.msra.mxu0 %v4523
    %4557 = vmatprep.subr.bf16.mxu0 %v4526
    %4558 = vmatpush1.bf16.msra.mxu0 %v4525
    %4559 = vmatprep.subr.bf16.mxu0 %v4528
    %4560 = vmatpush1.bf16.msra.mxu0 %v4527
    %4561 = vmatprep.subr.bf16.mxu0 %v4530
    %4562 = vmatpush1.bf16.msra.mxu0 %v4529
    %4563 = vmatprep.subr.bf16.mxu0 %v4532
    %4564 = vmatpush1.bf16.msra.mxu0 %v4531
    %4565 = vmatprep.subr.bf16.mxu0 %v4534
    %4566 = vmatpush1.bf16.msra.mxu0 %v4533
    %4567 = vmatprep.subr.bf16.mxu0 %v4536
    %4568 = vmatpush1.bf16.msra.mxu0 %v4535
    %4569 = vmatprep.subr.bf16.mxu0 %v4538
    %4570 = vmatpush1.bf16.msra.mxu0 %v4537
    %4571 = vmatprep.subr.bf16.mxu0 0
    %4572 = vmatpush1.bf16.msra.mxu0 0
    %4573 = vmatprep.subr.bf16.mxu0 0
    %4574 = vmatpush1.bf16.msra.mxu0 0
    %4575 = vmatprep.subr.bf16.mxu0 0
    %4576 = vmatpush1.bf16.msra.mxu0 0
    %4577 = vmatprep.subr.bf16.mxu0 0
    %4578 = vmatpush1.bf16.msra.mxu0 0
    %4579 = vmatprep.subr.bf16.mxu0 0
    %4580 = vmatpush1.bf16.msra.mxu0 0
    %4581 = vmatprep.subr.bf16.mxu0 0
    %4582 = vmatpush1.bf16.msra.mxu0 0
    %4583 = vmatprep.subr.bf16.mxu0 0
    %4584 = vmatpush1.bf16.msra.mxu0 0
    %4585 = vmatprep.subr.bf16.mxu0 0
    %4586 = vmatpush1.bf16.msra.mxu0 0
    %4587 = vmatprep.mubr.bf16.mxu0 0
    %4588 = vmatmul.mubr.bf16.gmra.mrb[0].mxu0 %v4463
    %v4589 = vpop.f32.mrb[0].mxu0
    %v4590 = vadd.f32 %v4468, %v4589
    %v4591 = vpop.f32.mrb[0].mxu0
    %v4592 = vadd.f32 %v4472, %v4591
    %v4593 = vpop.f32.mrb[0].mxu0
    %v4594 = vadd.f32 %v4468, %v4593
    %v4595 = vpop.f32.mrb[0].mxu0
    %v4596 = vadd.f32 %v4472, %v4595
    %4597 = vdwg.mxu0
    %v4598 = vmax.f32 %v4590, 0.0
    %v4599 = vmax.f32 %v4592, 0.0
    %v4600 = vmax.f32 %v4594, 0.0
    %v4601 = vmax.f32 %v4596, 0.0
    %s4602 = scalar_lea.vmem [#allocation5], 1024
    %v4603 = vld [vmem:[%s4602] sm:$0xf]
    %v4604 = vld [vmem:[%s4602 + $0x4] sm:$0xf]
    %v4605 = vld [vmem:[%s4602 + $0x8] sm:$0xf]
    %v4606 = vld [vmem:[%s4602 + $0xc] sm:$0xf]
    %v4607 = vld [vmem:[%s4602 + $0x10] sm:$0xf]
    %v4608 = vld [vmem:[%s4602 + $0x14] sm:$0xf]
    %v4609 = vld [vmem:[%s4602 + $0x18] sm:$0xf]
    %v4610 = vld [vmem:[%s4602 + $0x1c] sm:$0xf]
    %v4611 = vld [vmem:[%s4602 + $0x20] sm:$0xf]
    %v4612 = vld [vmem:[%s4602 + $0x24] sm:$0xf]
    %v4613 = vld [vmem:[%s4602 + $0x28] sm:$0xf]
    %v4614 = vld [vmem:[%s4602 + $0x2c] sm:$0xf]
    %v4615 = vld [vmem:[%s4602 + $0x30] sm:$0xf]
    %v4616 = vld [vmem:[%s4602 + $0x34] sm:$0xf]
    %v4617 = vld [vmem:[%s4602 + $0x38] sm:$0xf]
    %v4618 = vld [vmem:[%s4602 + $0x3c] sm:$0xf]
    %v4619 = vld [vmem:[%s4602 + $0x40] sm:$0xf]
    %v4620 = vld [vmem:[%s4602 + $0x44] sm:$0xf]
    %v4621 = vld [vmem:[%s4602 + $0x48] sm:$0xf]
    %v4622 = vld [vmem:[%s4602 + $0x4c] sm:$0xf]
    %v4623 = vld [vmem:[%s4602 + $0x50] sm:$0xf]
    %v4624 = vld [vmem:[%s4602 + $0x54] sm:$0xf]
    %v4625 = vld [vmem:[%s4602 + $0x58] sm:$0xf]
    %v4626 = vld [vmem:[%s4602 + $0x5c] sm:$0xf]
    %v4627 = vld [vmem:[%s4602 + $0x60] sm:$0xf]
    %v4628 = vld [vmem:[%s4602 + $0x64] sm:$0xf]
    %v4629 = vld [vmem:[%s4602 + $0x68] sm:$0xf]
    %v4630 = vld [vmem:[%s4602 + $0x6c] sm:$0xf]
    %v4631 = vld [vmem:[%s4602 + $0x70] sm:$0xf]
    %v4632 = vld [vmem:[%s4602 + $0x74] sm:$0xf]
    %v4633 = vld [vmem:[%s4602 + $0x78] sm:$0xf]
    %v4634 = vld [vmem:[%s4602 + $0x7c] sm:$0xf]
    %v4635 = vld [vmem:[%s8 + $0x42] ss:$0 sm:$0xff]
    %v4636 = vpack.c.bf16 %v4600, %v4598
    %v4637 = vpack.c.bf16 %v4601, %v4599
    %v4670 = vunpack.c.l.b16 %v4603
    %v4671 = vunpack.c.l.b16 %v4604
    %v4672 = vunpack.c.l.b16 %v4605
    %v4673 = vunpack.c.l.b16 %v4606
    %v4674 = vunpack.c.l.b16 %v4607
    %v4675 = vunpack.c.l.b16 %v4608
    %v4676 = vunpack.c.l.b16 %v4609
    %v4677 = vunpack.c.l.b16 %v4610
    %v4678 = vunpack.c.l.b16 %v4611
    %v4679 = vunpack.c.l.b16 %v4612
    %v4680 = vunpack.c.l.b16 %v4613
    %v4681 = vunpack.c.l.b16 %v4614
    %v4682 = vunpack.c.l.b16 %v4615
    %v4683 = vunpack.c.l.b16 %v4616
    %v4684 = vunpack.c.l.b16 %v4617
    %v4685 = vunpack.c.l.b16 %v4618
    %v4686 = vunpack.c.l.b16 %v4619
    %v4687 = vunpack.c.l.b16 %v4620
    %v4688 = vunpack.c.l.b16 %v4621
    %v4689 = vunpack.c.l.b16 %v4622
    %v4690 = vunpack.c.l.b16 %v4623
    %v4691 = vunpack.c.l.b16 %v4624
    %v4692 = vunpack.c.l.b16 %v4625
    %v4693 = vunpack.c.l.b16 %v4626
    %v4694 = vunpack.c.l.b16 %v4627
    %v4695 = vunpack.c.l.b16 %v4628
    %v4696 = vunpack.c.l.b16 %v4629
    %v4697 = vunpack.c.l.b16 %v4630
    %v4698 = vunpack.c.l.b16 %v4631
    %v4699 = vunpack.c.l.b16 %v4632
    %v4700 = vunpack.c.l.b16 %v4633
    %v4701 = vunpack.c.l.b16 %v4634
    %v4702 = vpack.c.b16 %v4671, %v4670
    %v4703 = vpack.c.b16 %v4673, %v4672
    %v4704 = vpack.c.b16 %v4675, %v4674
    %v4705 = vpack.c.b16 %v4677, %v4676
    %v4706 = vpack.c.b16 %v4679, %v4678
    %v4707 = vpack.c.b16 %v4681, %v4680
    %v4708 = vpack.c.b16 %v4683, %v4682
    %v4709 = vpack.c.b16 %v4685, %v4684
    %v4710 = vpack.c.b16 %v4687, %v4686
    %v4711 = vpack.c.b16 %v4689, %v4688
    %v4712 = vpack.c.b16 %v4691, %v4690
    %v4713 = vpack.c.b16 %v4693, %v4692
    %v4714 = vpack.c.b16 %v4695, %v4694
    %v4715 = vpack.c.b16 %v4697, %v4696
    %v4716 = vpack.c.b16 %v4699, %v4698
    %v4717 = vpack.c.b16 %v4701, %v4700
    %4734 = vmatprep.subr.bf16.mxu0 0
    %4735 = vmatpush1.bf16.msra.mxu0 %v4702
    %4736 = vmatprep.subr.bf16.mxu0 0
    %4737 = vmatpush1.bf16.msra.mxu0 %v4703
    %4738 = vmatprep.subr.bf16.mxu0 0
    %4739 = vmatpush1.bf16.msra.mxu0 %v4704
    %4740 = vmatprep.subr.bf16.mxu0 0
    %4741 = vmatpush1.bf16.msra.mxu0 %v4705
    %4742 = vmatprep.subr.bf16.mxu0 0
    %4743 = vmatpush1.bf16.msra.mxu0 %v4706
    %4744 = vmatprep.subr.bf16.mxu0 0
    %4745 = vmatpush1.bf16.msra.mxu0 %v4707
    %4746 = vmatprep.subr.bf16.mxu0 0
    %4747 = vmatpush1.bf16.msra.mxu0 %v4708
    %4748 = vmatprep.subr.bf16.mxu0 0
    %4749 = vmatpush1.bf16.msra.mxu0 %v4709
    %4750 = vmatprep.subr.bf16.mxu0 0
    %4751 = vmatpush1.bf16.msra.mxu0 %v4710
    %4752 = vmatprep.subr.bf16.mxu0 0
    %4753 = vmatpush1.bf16.msra.mxu0 %v4711
    %4754 = vmatprep.subr.bf16.mxu0 0
    %4755 = vmatpush1.bf16.msra.mxu0 %v4712
    %4756 = vmatprep.subr.bf16.mxu0 0
    %4757 = vmatpush1.bf16.msra.mxu0 %v4713
    %4758 = vmatprep.subr.bf16.mxu0 0
    %4759 = vmatpush1.bf16.msra.mxu0 %v4714
    %4760 = vmatprep.subr.bf16.mxu0 0
    %4761 = vmatpush1.bf16.msra.mxu0 %v4715
    %4762 = vmatprep.subr.bf16.mxu0 0
    %4763 = vmatpush1.bf16.msra.mxu0 %v4716
    %4764 = vmatprep.subr.bf16.mxu0 0
    %4765 = vmatpush1.bf16.msra.mxu0 %v4717
    %4766 = vmatprep.mubr.bf16.mxu0 %v4637
    %4767 = vmatmul.mubr.bf16.gmra.mrb[0].mxu0 %v4636
    %v4768 = vpop.f32.mrb[0].mxu0
    %v4769 = vadd.f32 %v4635, %v4768
    %v4770 = vpop.f32.mrb[0].mxu0
    %v4771 = vpop.f32.mrb[0].mxu0
    %v4772 = vadd.f32 %v4635, %v4771
    %v4773 = vpop.f32.mrb[0].mxu0
    %4774 = vdwg.mxu0
    %v4775 = vmax.f32 %v4769, 0.0
    %v4776 = vmax.f32 %v4772, 0.0
    %s4777 = scalar_lea.vmem %s5, 512
    %v4778 = vld [vmem:[%s4777] sm:$0xf]
    %v4779 = vld [vmem:[%s4777 + $0x4] sm:$0xf]
    %v4780 = vld [vmem:[%s4777 + $0x8] sm:$0xf]
    %v4781 = vld [vmem:[%s4777 + $0xc] sm:$0xf]
    %v4782 = vld [vmem:[%s4777 + $0x10] sm:$0xf]
    %v4783 = vld [vmem:[%s4777 + $0x14] sm:$0xf]
    %v4784 = vld [vmem:[%s4777 + $0x18] sm:$0xf]
    %v4785 = vld [vmem:[%s4777 + $0x1c] sm:$0xf]
    %v4786 = vld [vmem:[%s4777 + $0x20] sm:$0xf]
    %v4787 = vld [vmem:[%s4777 + $0x24] sm:$0xf]
    %v4788 = vld [vmem:[%s4777 + $0x28] sm:$0xf]
    %v4789 = vld [vmem:[%s4777 + $0x2c] sm:$0xf]
    %v4790 = vld [vmem:[%s4777 + $0x30] sm:$0xf]
    %v4791 = vld [vmem:[%s4777 + $0x34] sm:$0xf]
    %v4792 = vld [vmem:[%s4777 + $0x38] sm:$0xf]
    %v4793 = vld [vmem:[%s4777 + $0x3c] sm:$0xf]
    %v4794 = vld [vmem:[%s8 + $0x43] ss:$0 sm:$0xff]
    %v4795 = vpack.c.bf16 %v4776, %v4775
    %v4812 = vunpack.c.l.b16 %v4778
    %v4813 = vunpack.c.l.b16 %v4779
    %v4814 = vunpack.c.l.b16 %v4780
    %v4815 = vunpack.c.l.b16 %v4781
    %v4816 = vunpack.c.l.b16 %v4782
    %v4817 = vunpack.c.l.b16 %v4783
    %v4818 = vunpack.c.l.b16 %v4784
    %v4819 = vunpack.c.l.b16 %v4785
    %v4820 = vunpack.c.l.b16 %v4786
    %v4821 = vunpack.c.l.b16 %v4787
    %v4822 = vunpack.c.l.b16 %v4788
    %v4823 = vunpack.c.l.b16 %v4789
    %v4824 = vunpack.c.l.b16 %v4790
    %v4825 = vunpack.c.l.b16 %v4791
    %v4826 = vunpack.c.l.b16 %v4792
    %v4827 = vunpack.c.l.b16 %v4793
    %v4828 = vpack.c.b16 %v4813, %v4812
    %v4829 = vpack.c.b16 %v4815, %v4814
    %v4830 = vpack.c.b16 %v4817, %v4816
    %v4831 = vpack.c.b16 %v4819, %v4818
    %v4832 = vpack.c.b16 %v4821, %v4820
    %v4833 = vpack.c.b16 %v4823, %v4822
    %v4834 = vpack.c.b16 %v4825, %v4824
    %v4835 = vpack.c.b16 %v4827, %v4826
    %4844 = vmatprep.subr.bf16.mxu0 0
    %4845 = vmatpush1.bf16.msra.mxu0 %v4828
    %4846 = vmatprep.subr.bf16.mxu0 0
    %4847 = vmatpush1.bf16.msra.mxu0 %v4829
    %4848 = vmatprep.subr.bf16.mxu0 0
    %4849 = vmatpush1.bf16.msra.mxu0 %v4830
    %4850 = vmatprep.subr.bf16.mxu0 0
    %4851 = vmatpush1.bf16.msra.mxu0 %v4831
    %4852 = vmatprep.subr.bf16.mxu0 0
    %4853 = vmatpush1.bf16.msra.mxu0 %v4832
    %4854 = vmatprep.subr.bf16.mxu0 0
    %4855 = vmatpush1.bf16.msra.mxu0 %v4833
    %4856 = vmatprep.subr.bf16.mxu0 0
    %4857 = vmatpush1.bf16.msra.mxu0 %v4834
    %4858 = vmatprep.subr.bf16.mxu0 0
    %4859 = vmatpush1.bf16.msra.mxu0 %v4835
    %4860 = vmatprep.subr.bf16.mxu0 0
    %4861 = vmatpush1.bf16.msra.mxu0 0
    %4862 = vmatprep.subr.bf16.mxu0 0
    %4863 = vmatpush1.bf16.msra.mxu0 0
    %4864 = vmatprep.subr.bf16.mxu0 0
    %4865 = vmatpush1.bf16.msra.mxu0 0
    %4866 = vmatprep.subr.bf16.mxu0 0
    %4867 = vmatpush1.bf16.msra.mxu0 0
    %4868 = vmatprep.subr.bf16.mxu0 0
    %4869 = vmatpush1.bf16.msra.mxu0 0
    %4870 = vmatprep.subr.bf16.mxu0 0
    %4871 = vmatpush1.bf16.msra.mxu0 0
    %4872 = vmatprep.subr.bf16.mxu0 0
    %4873 = vmatpush1.bf16.msra.mxu0 0
    %4874 = vmatprep.subr.bf16.mxu0 0
    %4875 = vmatpush1.bf16.msra.mxu0 0
    %4876 = vmatprep.mubr.bf16.mxu0 0
    %4877 = vmatmul.mubr.bf16.gmra.mrb[0].mxu0 %v4795
    %v4878 = vpop.f32.mrb[0].mxu0
    %v4879 = vadd.f32 %v4794, %v4878
    %v4880 = vpop.f32.mrb[0].mxu0
    %v4881 = vpop.f32.mrb[0].mxu0
    %v4882 = vadd.f32 %v4794, %v4881
    %v4883 = vpop.f32.mrb[0].mxu0
    %4884 = vdwg.mxu0
    %v4885 = vmax.f32 %v4879, 0.0
    %v4886 = vmax.f32 %v4882, 0.0
    %v4887 = vlaneseq
    %v4888 = vshrl.u32 %v4887, 7
    %v4889 = vsub.s32 0, %v4888
    %v4890 = vrot.slane %v4885, %v4889
    %v4891 = vlaneseq
    %v4892 = vshrl.u32 %v4891, 7
    %v4893 = vsub.s32 0, %v4892
    %v4894 = vrot.slane %v4886, %v4893
    %v4895 = vmul.f32 %v1584, %v4890
    %v4896 = vmul.f32 %v1589, %v4894
    %v4897 = vadd.f32 %v4895, 0.0
    %v4898 = vadd.f32 %v4896, 0.0
    %v4899 = vlaneseq
    %v4900 = vshrl.u32 %v4899, 7
    %v4901 = vsub.s32 1, %v4900
    %v4902 = vrot.slane %v4885, %v4901
    %v4903 = vlaneseq
    %v4904 = vshrl.u32 %v4903, 7
    %v4905 = vsub.s32 1, %v4904
    %v4906 = vrot.slane %v4886, %v4905
    %v4907 = vmul.f32 %v1605, %v4902
    %v4908 = vmul.f32 %v1609, %v4906
    %v4909 = vadd.f32 %v4897, %v4907
    %v4910 = vadd.f32 %v4898, %v4908
    %v4911 = vlaneseq
    %v4912 = vshrl.u32 %v4911, 7
    %v4913 = vsub.s32 2, %v4912
    %v4914 = vrot.slane %v4885, %v4913
    %v4915 = vlaneseq
    %v4916 = vshrl.u32 %v4915, 7
    %v4917 = vsub.s32 2, %v4916
    %v4918 = vrot.slane %v4886, %v4917
    %v4919 = vmul.f32 %v1625, %v4914
    %v4920 = vmul.f32 %v1629, %v4918
    %v4921 = vadd.f32 %v4909, %v4919
    %v4922 = vadd.f32 %v4910, %v4920
    %v4923 = vlaneseq
    %v4924 = vshrl.u32 %v4923, 7
    %v4925 = vsub.s32 3, %v4924
    %v4926 = vrot.slane %v4885, %v4925
    %v4927 = vlaneseq
    %v4928 = vshrl.u32 %v4927, 7
    %v4929 = vsub.s32 3, %v4928
    %v4930 = vrot.slane %v4886, %v4929
    %v4931 = vmul.f32 %v1645, %v4926
    %v4932 = vmul.f32 %v1649, %v4930
    %v4933 = vadd.f32 %v4921, %v4931
    %v4934 = vadd.f32 %v4922, %v4932
    %v4935 = vlaneseq
    %v4936 = vshrl.u32 %v4935, 7
    %v4937 = vsub.s32 4, %v4936
    %v4938 = vrot.slane %v4885, %v4937
    %v4939 = vlaneseq
    %v4940 = vshrl.u32 %v4939, 7
    %v4941 = vsub.s32 4, %v4940
    %v4942 = vrot.slane %v4886, %v4941
    %v4943 = vmul.f32 %v1665, %v4938
    %v4944 = vmul.f32 %v1669, %v4942
    %v4945 = vadd.f32 %v4933, %v4943
    %v4946 = vadd.f32 %v4934, %v4944
    %v4947 = vlaneseq
    %v4948 = vshrl.u32 %v4947, 7
    %v4949 = vsub.s32 5, %v4948
    %v4950 = vrot.slane %v4885, %v4949
    %v4951 = vlaneseq
    %v4952 = vshrl.u32 %v4951, 7
    %v4953 = vsub.s32 5, %v4952
    %v4954 = vrot.slane %v4886, %v4953
    %v4955 = vmul.f32 %v1685, %v4950
    %v4956 = vmul.f32 %v1689, %v4954
    %v4957 = vadd.f32 %v4945, %v4955
    %v4958 = vadd.f32 %v4946, %v4956
    %v4959 = vlaneseq
    %v4960 = vshrl.u32 %v4959, 7
    %v4961 = vsub.s32 6, %v4960
    %v4962 = vrot.slane %v4885, %v4961
    %v4963 = vlaneseq
    %v4964 = vshrl.u32 %v4963, 7
    %v4965 = vsub.s32 6, %v4964
    %v4966 = vrot.slane %v4886, %v4965
    %v4967 = vmul.f32 %v1705, %v4962
    %v4968 = vmul.f32 %v1709, %v4966
    %v4969 = vadd.f32 %v4957, %v4967
    %v4970 = vadd.f32 %v4958, %v4968
    %v4971 = vlaneseq
    %v4972 = vshrl.u32 %v4971, 7
    %v4973 = vsub.s32 7, %v4972
    %v4974 = vrot.slane %v4885, %v4973
    %v4975 = vlaneseq
    %v4976 = vshrl.u32 %v4975, 7
    %v4977 = vsub.s32 7, %v4976
    %v4978 = vrot.slane %v4886, %v4977
    %v4979 = vmul.f32 %v1725, %v4974
    %v4980 = vmul.f32 %v1729, %v4978
    %v4981 = vadd.f32 %v4969, %v4979
    %v4982 = vadd.f32 %v4970, %v4980
    %v4983 = vadd.f32 %v4381, %v4981
    %v4984 = vadd.f32 %v4382, %v4982
    %v4985 = vmul.f32 %v4983, 0.125
    %v4986 = vmul.f32 %v4984, 0.125
    %s4987 = scalar_lea.vmem %s6, 128
    %v4988 = vld [vmem:[%s4987] sm:$0xf]
    %v4989 = vld [vmem:[%s4987 + $0x4] sm:$0xf]
    %v4990 = vld [vmem:[%s4987 + $0x8] sm:$0xf]
    %v4991 = vld [vmem:[%s4987 + $0xc] sm:$0xf]
    %v4992 = vld [vmem:[%s8 + $0x44] ss:$0 sm:$0xff]
    %v4993 = vpack.c.bf16 %v4986, %v4985
    %v4998 = vunpack.c.l.b16 %v4988
    %v4999 = vunpack.c.l.b16 %v4989
    %v5000 = vunpack.c.l.b16 %v4990
    %v5001 = vunpack.c.l.b16 %v4991
    %v5002 = vpack.c.b16 %v4999, %v4998
    %v5003 = vpack.c.b16 %v5001, %v5000
    %v5007 = vsel %vm587, %v4993, 0
    %5009 = vmatprep.subr.bf16.mxu0 0
    %5010 = vmatpush1.bf16.msra.mxu0 %v5002
    %5011 = vmatprep.subr.bf16.mxu0 0
    %5012 = vmatpush1.bf16.msra.mxu0 %v5003
    %5013 = vmatprep.subr.bf16.mxu0 0
    %5014 = vmatpush1.bf16.msra.mxu0 0
    %5015 = vmatprep.subr.bf16.mxu0 0
    %5016 = vmatpush1.bf16.msra.mxu0 0
    %5017 = vmatprep.subr.bf16.mxu0 0
    %5018 = vmatpush1.bf16.msra.mxu0 0
    %5019 = vmatprep.subr.bf16.mxu0 0
    %5020 = vmatpush1.bf16.msra.mxu0 0
    %5021 = vmatprep.subr.bf16.mxu0 0
    %5022 = vmatpush1.bf16.msra.mxu0 0
    %5023 = vmatprep.subr.bf16.mxu0 0
    %5024 = vmatpush1.bf16.msra.mxu0 0
    %5025 = vmatprep.subr.bf16.mxu0 0
    %5026 = vmatpush1.bf16.msra.mxu0 0
    %5027 = vmatprep.subr.bf16.mxu0 0
    %5028 = vmatpush1.bf16.msra.mxu0 0
    %5029 = vmatprep.subr.bf16.mxu0 0
    %5030 = vmatpush1.bf16.msra.mxu0 0
    %5031 = vmatprep.subr.bf16.mxu0 0
    %5032 = vmatpush1.bf16.msra.mxu0 0
    %5033 = vmatprep.subr.bf16.mxu0 0
    %5034 = vmatpush1.bf16.msra.mxu0 0
    %5035 = vmatprep.subr.bf16.mxu0 0
    %5036 = vmatpush1.bf16.msra.mxu0 0
    %5037 = vmatprep.subr.bf16.mxu0 0
    %5038 = vmatpush1.bf16.msra.mxu0 0
    %5039 = vmatprep.subr.bf16.mxu0 0
    %5040 = vmatpush1.bf16.msra.mxu0 0
    %5041 = vmatprep.mubr.bf16.mxu0 0
    %5042 = vmatmul.mubr.bf16.gmra.mrb[0].mxu0 %v5007
    %v5043 = vpop.f32.mrb[0].mxu0
    %v5044 = vadd.f32 %v4992, %v5043
    %v5045 = vpop.f32.mrb[0].mxu0
    %v5046 = vpop.f32.mrb[0].mxu0
    %v5047 = vadd.f32 %v4992, %v5046
    %v5048 = vpop.f32.mrb[0].mxu0
    %5049 = vdwg.mxu0
    %v5050 = vmax.f32 %v5044, 0.0
    %v5051 = vmax.f32 %v5047, 0.0
    %s5052 = scalar_lea.vmem [#allocation2], 1152
    %v5053 = vld [vmem:[%s5052] sm:$0xff]
    %v5054 = vld [vmem:[%s5052 + $0x8] sm:$0xff]
    %v5055 = vld [vmem:[%s5052 + $0x10] sm:$0xff]
    %v5056 = vld [vmem:[%s5052 + $0x18] sm:$0xff]
    %v5057 = vld [vmem:[%s5052 + $0x20] sm:$0xff]
    %v5058 = vld [vmem:[%s5052 + $0x28] sm:$0xff]
    %v5059 = vld [vmem:[%s5052 + $0x30] sm:$0xff]
    %v5060 = vld [vmem:[%s5052 + $0x38] sm:$0xff]
    %v5061 = vld [vmem:[%s5052 + $0x40] sm:$0xff]
    %v5062 = vld [vmem:[%s5052 + $0x48] sm:$0xff]
    %v5063 = vld [vmem:[%s5052 + $0x50] sm:$0xff]
    %v5064 = vld [vmem:[%s5052 + $0x58] sm:$0xff]
    %v5065 = vld [vmem:[%s5052 + $0x60] sm:$0xff]
    %v5066 = vld [vmem:[%s5052 + $0x68] sm:$0xff]
    %v5067 = vld [vmem:[%s5052 + $0x70] sm:$0xff]
    %v5068 = vld [vmem:[%s5052 + $0x78] sm:$0xff]
    %s5069 = scalar_lea.vmem %s8, 69
    %v5070 = vld [vmem:[%s5069] ss:$8 sm:$0x3]
    %v5071 = vpack.c.bf16 %v5051, %v5050
    %v5073 = vlaneseq
    %v5074 = vshrl.u32 %v5073, 7
    %v5075 = vsub.s32 0, %v5074
    %v5076 = vrot.slane %v5070, %v5075
    %v5077 = vlaneseq
    %v5078 = vshrl.u32 %v5077, 7
    %v5079 = vsub.s32 1, %v5078
    %v5080 = vrot.slane %v5070, %v5079
    %v5099 = vunpack.c.l.b16 %v5053
    %v5100 = vunpack.c.h.b16 %v5053
    %v5101 = vunpack.c.l.b16 %v5054
    %v5102 = vunpack.c.h.b16 %v5054
    %v5103 = vunpack.c.l.b16 %v5055
    %v5104 = vunpack.c.h.b16 %v5055
    %v5105 = vunpack.c.l.b16 %v5056
    %v5106 = vunpack.c.h.b16 %v5056
    %v5107 = vunpack.c.l.b16 %v5057
    %v5108 = vunpack.c.h.b16 %v5057
    %v5109 = vunpack.c.l.b16 %v5058
    %v5110 = vunpack.c.h.b16 %v5058
    %v5111 = vunpack.c.l.b16 %v5059
    %v5112 = vunpack.c.h.b16 %v5059
    %v5113 = vunpack.c.l.b16 %v5060
    %v5114 = vunpack.c.h.b16 %v5060
    %v5115 = vunpack.c.l.b16 %v5061
    %v5116 = vunpack.c.h.b16 %v5061
    %v5117 = vunpack.c.l.b16 %v5062
    %v5118 = vunpack.c.h.b16 %v5062
    %v5119 = vunpack.c.l.b16 %v5063
    %v5120 = vunpack.c.h.b16 %v5063
    %v5121 = vunpack.c.l.b16 %v5064
    %v5122 = vunpack.c.h.b16 %v5064
    %v5123 = vunpack.c.l.b16 %v5065
    %v5124 = vunpack.c.h.b16 %v5065
    %v5125 = vunpack.c.l.b16 %v5066
    %v5126 = vunpack.c.h.b16 %v5066
    %v5127 = vunpack.c.l.b16 %v5067
    %v5128 = vunpack.c.h.b16 %v5067
    %v5129 = vunpack.c.l.b16 %v5068
    %v5130 = vunpack.c.h.b16 %v5068
    %v5131 = vpack.c.b16 %v5101, %v5099
    %v5132 = vpack.c.b16 %v5102, %v5100
    %v5133 = vpack.c.b16 %v5105, %v5103
    %v5134 = vpack.c.b16 %v5106, %v5104
    %v5135 = vpack.c.b16 %v5109, %v5107
    %v5136 = vpack.c.b16 %v5110, %v5108
    %v5137 = vpack.c.b16 %v5113, %v5111
    %v5138 = vpack.c.b16 %v5114, %v5112
    %v5139 = vpack.c.b16 %v5117, %v5115
    %v5140 = vpack.c.b16 %v5118, %v5116
    %v5141 = vpack.c.b16 %v5121, %v5119
    %v5142 = vpack.c.b16 %v5122, %v5120
    %v5143 = vpack.c.b16 %v5125, %v5123
    %v5144 = vpack.c.b16 %v5126, %v5124
    %v5145 = vpack.c.b16 %v5129, %v5127
    %v5146 = vpack.c.b16 %v5130, %v5128
    %5163 = vmatprep.subr.bf16.mxu0 %v5132
    %5164 = vmatpush1.bf16.msra.mxu0 %v5131
    %5165 = vmatprep.subr.bf16.mxu0 %v5134
    %5166 = vmatpush1.bf16.msra.mxu0 %v5133
    %5167 = vmatprep.subr.bf16.mxu0 %v5136
    %5168 = vmatpush1.bf16.msra.mxu0 %v5135
    %5169 = vmatprep.subr.bf16.mxu0 %v5138
    %5170 = vmatpush1.bf16.msra.mxu0 %v5137
    %5171 = vmatprep.subr.bf16.mxu0 %v5140
    %5172 = vmatpush1.bf16.msra.mxu0 %v5139
    %5173 = vmatprep.subr.bf16.mxu0 %v5142
    %5174 = vmatpush1.bf16.msra.mxu0 %v5141
    %5175 = vmatprep.subr.bf16.mxu0 %v5144
    %5176 = vmatpush1.bf16.msra.mxu0 %v5143
    %5177 = vmatprep.subr.bf16.mxu0 %v5146
    %5178 = vmatpush1.bf16.msra.mxu0 %v5145
    %5179 = vmatprep.subr.bf16.mxu0 0
    %5180 = vmatpush1.bf16.msra.mxu0 0
    %5181 = vmatprep.subr.bf16.mxu0 0
    %5182 = vmatpush1.bf16.msra.mxu0 0
    %5183 = vmatprep.subr.bf16.mxu0 0
    %5184 = vmatpush1.bf16.msra.mxu0 0
    %5185 = vmatprep.subr.bf16.mxu0 0
    %5186 = vmatpush1.bf16.msra.mxu0 0
    %5187 = vmatprep.subr.bf16.mxu0 0
    %5188 = vmatpush1.bf16.msra.mxu0 0
    %5189 = vmatprep.subr.bf16.mxu0 0
    %5190 = vmatpush1.bf16.msra.mxu0 0
    %5191 = vmatprep.subr.bf16.mxu0 0
    %5192 = vmatpush1.bf16.msra.mxu0 0
    %5193 = vmatprep.subr.bf16.mxu0 0
    %5194 = vmatpush1.bf16.msra.mxu0 0
    %5195 = vmatprep.mubr.bf16.mxu0 0
    %5196 = vmatmul.mubr.bf16.gmra.mrb[0].mxu0 %v5071
    %v5197 = vpop.f32.mrb[0].mxu0
    %v5198 = vadd.f32 %v5076, %v5197
    %v5199 = vpop.f32.mrb[0].mxu0
    %v5200 = vadd.f32 %v5080, %v5199
    %v5201 = vpop.f32.mrb[0].mxu0
    %v5202 = vadd.f32 %v5076, %v5201
    %v5203 = vpop.f32.mrb[0].mxu0
    %v5204 = vadd.f32 %v5080, %v5203
    %5205 = vdwg.mxu0
    %v5206 = vmax.f32 %v5198, 0.0
    %v5207 = vmax.f32 %v5200, 0.0
    %v5208 = vmax.f32 %v5202, 0.0
    %v5209 = vmax.f32 %v5204, 0.0
    %s5210 = scalar_lea.vmem [#allocation5], 1152
    %v5211 = vld [vmem:[%s5210] sm:$0xf]
    %v5212 = vld [vmem:[%s5210 + $0x4] sm:$0xf]
    %v5213 = vld [vmem:[%s5210 + $0x8] sm:$0xf]
    %v5214 = vld [vmem:[%s5210 + $0xc] sm:$0xf]
    %v5215 = vld [vmem:[%s5210 + $0x10] sm:$0xf]
    %v5216 = vld [vmem:[%s5210 + $0x14] sm:$0xf]
    %v5217 = vld [vmem:[%s5210 + $0x18] sm:$0xf]
    %v5218 = vld [vmem:[%s5210 + $0x1c] sm:$0xf]
    %v5219 = vld [vmem:[%s5210 + $0x20] sm:$0xf]
    %v5220 = vld [vmem:[%s5210 + $0x24] sm:$0xf]
    %v5221 = vld [vmem:[%s5210 + $0x28] sm:$0xf]
    %v5222 = vld [vmem:[%s5210 + $0x2c] sm:$0xf]
    %v5223 = vld [vmem:[%s5210 + $0x30] sm:$0xf]
    %v5224 = vld [vmem:[%s5210 + $0x34] sm:$0xf]
    %v5225 = vld [vmem:[%s5210 + $0x38] sm:$0xf]
    %v5226 = vld [vmem:[%s5210 + $0x3c] sm:$0xf]
    %v5227 = vld [vmem:[%s5210 + $0x40] sm:$0xf]
    %v5228 = vld [vmem:[%s5210 + $0x44] sm:$0xf]
    %v5229 = vld [vmem:[%s5210 + $0x48] sm:$0xf]
    %v5230 = vld [vmem:[%s5210 + $0x4c] sm:$0xf]
    %v5231 = vld [vmem:[%s5210 + $0x50] sm:$0xf]
    %v5232 = vld [vmem:[%s5210 + $0x54] sm:$0xf]
    %v5233 = vld [vmem:[%s5210 + $0x58] sm:$0xf]
    %v5234 = vld [vmem:[%s5210 + $0x5c] sm:$0xf]
    %v5235 = vld [vmem:[%s5210 + $0x60] sm:$0xf]
    %v5236 = vld [vmem:[%s5210 + $0x64] sm:$0xf]
    %v5237 = vld [vmem:[%s5210 + $0x68] sm:$0xf]
    %v5238 = vld [vmem:[%s5210 + $0x6c] sm:$0xf]
    %v5239 = vld [vmem:[%s5210 + $0x70] sm:$0xf]
    %v5240 = vld [vmem:[%s5210 + $0x74] sm:$0xf]
    %v5241 = vld [vmem:[%s5210 + $0x78] sm:$0xf]
    %v5242 = vld [vmem:[%s5210 + $0x7c] sm:$0xf]
    %v5243 = vld [vmem:[%s8 + $0x46] ss:$0 sm:$0xff]
    %v5244 = vpack.c.bf16 %v5208, %v5206
    %v5245 = vpack.c.bf16 %v5209, %v5207
    %v5278 = vunpack.c.l.b16 %v5211
    %v5279 = vunpack.c.l.b16 %v5212
    %v5280 = vunpack.c.l.b16 %v5213
    %v5281 = vunpack.c.l.b16 %v5214
    %v5282 = vunpack.c.l.b16 %v5215
    %v5283 = vunpack.c.l.b16 %v5216
    %v5284 = vunpack.c.l.b16 %v5217
    %v5285 = vunpack.c.l.b16 %v5218
    %v5286 = vunpack.c.l.b16 %v5219
    %v5287 = vunpack.c.l.b16 %v5220
    %v5288 = vunpack.c.l.b16 %v5221
    %v5289 = vunpack.c.l.b16 %v5222
    %v5290 = vunpack.c.l.b16 %v5223
    %v5291 = vunpack.c.l.b16 %v5224
    %v5292 = vunpack.c.l.b16 %v5225
    %v5293 = vunpack.c.l.b16 %v5226
    %v5294 = vunpack.c.l.b16 %v5227
    %v5295 = vunpack.c.l.b16 %v5228
    %v5296 = vunpack.c.l.b16 %v5229
    %v5297 = vunpack.c.l.b16 %v5230
    %v5298 = vunpack.c.l.b16 %v5231
    %v5299 = vunpack.c.l.b16 %v5232
    %v5300 = vunpack.c.l.b16 %v5233
    %v5301 = vunpack.c.l.b16 %v5234
    %v5302 = vunpack.c.l.b16 %v5235
    %v5303 = vunpack.c.l.b16 %v5236
    %v5304 = vunpack.c.l.b16 %v5237
    %v5305 = vunpack.c.l.b16 %v5238
    %v5306 = vunpack.c.l.b16 %v5239
    %v5307 = vunpack.c.l.b16 %v5240
    %v5308 = vunpack.c.l.b16 %v5241
    %v5309 = vunpack.c.l.b16 %v5242
    %v5310 = vpack.c.b16 %v5279, %v5278
    %v5311 = vpack.c.b16 %v5281, %v5280
    %v5312 = vpack.c.b16 %v5283, %v5282
    %v5313 = vpack.c.b16 %v5285, %v5284
    %v5314 = vpack.c.b16 %v5287, %v5286
    %v5315 = vpack.c.b16 %v5289, %v5288
    %v5316 = vpack.c.b16 %v5291, %v5290
    %v5317 = vpack.c.b16 %v5293, %v5292
    %v5318 = vpack.c.b16 %v5295, %v5294
    %v5319 = vpack.c.b16 %v5297, %v5296
    %v5320 = vpack.c.b16 %v5299, %v5298
    %v5321 = vpack.c.b16 %v5301, %v5300
    %v5322 = vpack.c.b16 %v5303, %v5302
    %v5323 = vpack.c.b16 %v5305, %v5304
    %v5324 = vpack.c.b16 %v5307, %v5306
    %v5325 = vpack.c.b16 %v5309, %v5308
    %5342 = vmatprep.subr.bf16.mxu0 0
    %5343 = vmatpush1.bf16.msra.mxu0 %v5310
    %5344 = vmatprep.subr.bf16.mxu0 0
    %5345 = vmatpush1.bf16.msra.mxu0 %v5311
    %5346 = vmatprep.subr.bf16.mxu0 0
    %5347 = vmatpush1.bf16.msra.mxu0 %v5312
    %5348 = vmatprep.subr.bf16.mxu0 0
    %5349 = vmatpush1.bf16.msra.mxu0 %v5313
    %5350 = vmatprep.subr.bf16.mxu0 0
    %5351 = vmatpush1.bf16.msra.mxu0 %v5314
    %5352 = vmatprep.subr.bf16.mxu0 0
    %5353 = vmatpush1.bf16.msra.mxu0 %v5315
    %5354 = vmatprep.subr.bf16.mxu0 0
    %5355 = vmatpush1.bf16.msra.mxu0 %v5316
    %5356 = vmatprep.subr.bf16.mxu0 0
    %5357 = vmatpush1.bf16.msra.mxu0 %v5317
    %5358 = vmatprep.subr.bf16.mxu0 0
    %5359 = vmatpush1.bf16.msra.mxu0 %v5318
    %5360 = vmatprep.subr.bf16.mxu0 0
    %5361 = vmatpush1.bf16.msra.mxu0 %v5319
    %5362 = vmatprep.subr.bf16.mxu0 0
    %5363 = vmatpush1.bf16.msra.mxu0 %v5320
    %5364 = vmatprep.subr.bf16.mxu0 0
    %5365 = vmatpush1.bf16.msra.mxu0 %v5321
    %5366 = vmatprep.subr.bf16.mxu0 0
    %5367 = vmatpush1.bf16.msra.mxu0 %v5322
    %5368 = vmatprep.subr.bf16.mxu0 0
    %5369 = vmatpush1.bf16.msra.mxu0 %v5323
    %5370 = vmatprep.subr.bf16.mxu0 0
    %5371 = vmatpush1.bf16.msra.mxu0 %v5324
    %5372 = vmatprep.subr.bf16.mxu0 0
    %5373 = vmatpush1.bf16.msra.mxu0 %v5325
    %5374 = vmatprep.mubr.bf16.mxu0 %v5245
    %5375 = vmatmul.mubr.bf16.gmra.mrb[0].mxu0 %v5244
    %v5376 = vpop.f32.mrb[0].mxu0
    %v5377 = vadd.f32 %v5243, %v5376
    %v5378 = vpop.f32.mrb[0].mxu0
    %v5379 = vpop.f32.mrb[0].mxu0
    %v5380 = vadd.f32 %v5243, %v5379
    %v5381 = vpop.f32.mrb[0].mxu0
    %5382 = vdwg.mxu0
    %v5383 = vmax.f32 %v5377, 0.0
    %v5384 = vmax.f32 %v5380, 0.0
    %s5385 = scalar_lea.vmem %s5, 576
    %v5386 = vld [vmem:[%s5385] sm:$0xf]
    %v5387 = vld [vmem:[%s5385 + $0x4] sm:$0xf]
    %v5388 = vld [vmem:[%s5385 + $0x8] sm:$0xf]
    %v5389 = vld [vmem:[%s5385 + $0xc] sm:$0xf]
    %v5390 = vld [vmem:[%s5385 + $0x10] sm:$0xf]
    %v5391 = vld [vmem:[%s5385 + $0x14] sm:$0xf]
    %v5392 = vld [vmem:[%s5385 + $0x18] sm:$0xf]
    %v5393 = vld [vmem:[%s5385 + $0x1c] sm:$0xf]
    %v5394 = vld [vmem:[%s5385 + $0x20] sm:$0xf]
    %v5395 = vld [vmem:[%s5385 + $0x24] sm:$0xf]
    %v5396 = vld [vmem:[%s5385 + $0x28] sm:$0xf]
    %v5397 = vld [vmem:[%s5385 + $0x2c] sm:$0xf]
    %v5398 = vld [vmem:[%s5385 + $0x30] sm:$0xf]
    %v5399 = vld [vmem:[%s5385 + $0x34] sm:$0xf]
    %v5400 = vld [vmem:[%s5385 + $0x38] sm:$0xf]
    %v5401 = vld [vmem:[%s5385 + $0x3c] sm:$0xf]
    %v5402 = vld [vmem:[%s8 + $0x47] ss:$0 sm:$0xff]
    %v5403 = vpack.c.bf16 %v5384, %v5383
    %v5420 = vunpack.c.l.b16 %v5386
    %v5421 = vunpack.c.l.b16 %v5387
    %v5422 = vunpack.c.l.b16 %v5388
    %v5423 = vunpack.c.l.b16 %v5389
    %v5424 = vunpack.c.l.b16 %v5390
    %v5425 = vunpack.c.l.b16 %v5391
    %v5426 = vunpack.c.l.b16 %v5392
    %v5427 = vunpack.c.l.b16 %v5393
    %v5428 = vunpack.c.l.b16 %v5394
    %v5429 = vunpack.c.l.b16 %v5395
    %v5430 = vunpack.c.l.b16 %v5396
    %v5431 = vunpack.c.l.b16 %v5397
    %v5432 = vunpack.c.l.b16 %v5398
    %v5433 = vunpack.c.l.b16 %v5399
    %v5434 = vunpack.c.l.b16 %v5400
    %v5435 = vunpack.c.l.b16 %v5401
    %v5436 = vpack.c.b16 %v5421, %v5420
    %v5437 = vpack.c.b16 %v5423, %v5422
    %v5438 = vpack.c.b16 %v5425, %v5424
    %v5439 = vpack.c.b16 %v5427, %v5426
    %v5440 = vpack.c.b16 %v5429, %v5428
    %v5441 = vpack.c.b16 %v5431, %v5430
    %v5442 = vpack.c.b16 %v5433, %v5432
    %v5443 = vpack.c.b16 %v5435, %v5434
    %5452 = vmatprep.subr.bf16.mxu0 0
    %5453 = vmatpush1.bf16.msra.mxu0 %v5436
    %5454 = vmatprep.subr.bf16.mxu0 0
    %5455 = vmatpush1.bf16.msra.mxu0 %v5437
    %5456 = vmatprep.subr.bf16.mxu0 0
    %5457 = vmatpush1.bf16.msra.mxu0 %v5438
    %5458 = vmatprep.subr.bf16.mxu0 0
    %5459 = vmatpush1.bf16.msra.mxu0 %v5439
    %5460 = vmatprep.subr.bf16.mxu0 0
    %5461 = vmatpush1.bf16.msra.mxu0 %v5440
    %5462 = vmatprep.subr.bf16.mxu0 0
    %5463 = vmatpush1.bf16.msra.mxu0 %v5441
    %5464 = vmatprep.subr.bf16.mxu0 0
    %5465 = vmatpush1.bf16.msra.mxu0 %v5442
    %5466 = vmatprep.subr.bf16.mxu0 0
    %5467 = vmatpush1.bf16.msra.mxu0 %v5443
    %5468 = vmatprep.subr.bf16.mxu0 0
    %5469 = vmatpush1.bf16.msra.mxu0 0
    %5470 = vmatprep.subr.bf16.mxu0 0
    %5471 = vmatpush1.bf16.msra.mxu0 0
    %5472 = vmatprep.subr.bf16.mxu0 0
    %5473 = vmatpush1.bf16.msra.mxu0 0
    %5474 = vmatprep.subr.bf16.mxu0 0
    %5475 = vmatpush1.bf16.msra.mxu0 0
    %5476 = vmatprep.subr.bf16.mxu0 0
    %5477 = vmatpush1.bf16.msra.mxu0 0
    %5478 = vmatprep.subr.bf16.mxu0 0
    %5479 = vmatpush1.bf16.msra.mxu0 0
    %5480 = vmatprep.subr.bf16.mxu0 0
    %5481 = vmatpush1.bf16.msra.mxu0 0
    %5482 = vmatprep.subr.bf16.mxu0 0
    %5483 = vmatpush1.bf16.msra.mxu0 0
    %5484 = vmatprep.mubr.bf16.mxu0 0
    %5485 = vmatmul.mubr.bf16.gmra.mrb[0].mxu0 %v5403
    %v5486 = vpop.f32.mrb[0].mxu0
    %v5487 = vadd.f32 %v5402, %v5486
    %v5488 = vpop.f32.mrb[0].mxu0
    %v5489 = vpop.f32.mrb[0].mxu0
    %v5490 = vadd.f32 %v5402, %v5489
    %v5491 = vpop.f32.mrb[0].mxu0
    %5492 = vdwg.mxu0
    %v5493 = vmax.f32 %v5487, 0.0
    %v5494 = vmax.f32 %v5490, 0.0
    %s5495 = scalar_lea.vmem %s6, 144
    %v5496 = vld [vmem:[%s5495] sm:$0xf]
    %v5497 = vld [vmem:[%s5495 + $0x4] sm:$0xf]
    %v5498 = vld [vmem:[%s5495 + $0x8] sm:$0xf]
    %v5499 = vld [vmem:[%s5495 + $0xc] sm:$0xf]
    %v5500 = vld [vmem:[%s8 + $0x50] ss:$0 sm:$0xff]
    %v5501 = vpack.c.bf16 %v5494, %v5493
    %v5506 = vunpack.c.l.b16 %v5496
    %v5507 = vunpack.c.l.b16 %v5497
    %v5508 = vunpack.c.l.b16 %v5498
    %v5509 = vunpack.c.l.b16 %v5499
    %v5510 = vpack.c.b16 %v5507, %v5506
    %v5511 = vpack.c.b16 %v5509, %v5508
    %v5515 = vsel %vm587, %v5501, 0
    %5517 = vmatprep.subr.bf16.mxu0 0
    %5518 = vmatpush1.bf16.msra.mxu0 %v5510
    %5519 = vmatprep.subr.bf16.mxu0 0
    %5520 = vmatpush1.bf16.msra.mxu0 %v5511
    %5521 = vmatprep.subr.bf16.mxu0 0
    %5522 = vmatpush1.bf16.msra.mxu0 0
    %5523 = vmatprep.subr.bf16.mxu0 0
    %5524 = vmatpush1.bf16.msra.mxu0 0
    %5525 = vmatprep.subr.bf16.mxu0 0
    %5526 = vmatpush1.bf16.msra.mxu0 0
    %5527 = vmatprep.subr.bf16.mxu0 0
    %5528 = vmatpush1.bf16.msra.mxu0 0
    %5529 = vmatprep.subr.bf16.mxu0 0
    %5530 = vmatpush1.bf16.msra.mxu0 0
    %5531 = vmatprep.subr.bf16.mxu0 0
    %5532 = vmatpush1.bf16.msra.mxu0 0
    %5533 = vmatprep.subr.bf16.mxu0 0
    %5534 = vmatpush1.bf16.msra.mxu0 0
    %5535 = vmatprep.subr.bf16.mxu0 0
    %5536 = vmatpush1.bf16.msra.mxu0 0
    %5537 = vmatprep.subr.bf16.mxu0 0
    %5538 = vmatpush1.bf16.msra.mxu0 0
    %5539 = vmatprep.subr.bf16.mxu0 0
    %5540 = vmatpush1.bf16.msra.mxu0 0
    %5541 = vmatprep.subr.bf16.mxu0 0
    %5542 = vmatpush1.bf16.msra.mxu0 0
    %5543 = vmatprep.subr.bf16.mxu0 0
    %5544 = vmatpush1.bf16.msra.mxu0 0
    %5545 = vmatprep.subr.bf16.mxu0 0
    %5546 = vmatpush1.bf16.msra.mxu0 0
    %5547 = vmatprep.subr.bf16.mxu0 0
    %5548 = vmatpush1.bf16.msra.mxu0 0
    %5549 = vmatprep.mubr.bf16.mxu0 0
    %5550 = vmatmul.mubr.bf16.gmra.mrb[0].mxu0 %v5515
    %v5551 = vpop.f32.mrb[0].mxu0
    %v5552 = vadd.f32 %v5500, %v5551
    %v5553 = vpop.f32.mrb[0].mxu0
    %v5554 = vpop.f32.mrb[0].mxu0
    %v5555 = vadd.f32 %v5500, %v5554
    %v5556 = vpop.f32.mrb[0].mxu0
    %5557 = vdwg.mxu0
    %v5558 = vmax.f32 %v5552, 0.0
    %v5559 = vmax.f32 %v5555, 0.0
    %s5560 = scalar_lea.vmem [#allocation2], 1280
    %v5561 = vld [vmem:[%s5560] sm:$0xff]
    %v5562 = vld [vmem:[%s5560 + $0x8] sm:$0xff]
    %v5563 = vld [vmem:[%s5560 + $0x10] sm:$0xff]
    %v5564 = vld [vmem:[%s5560 + $0x18] sm:$0xff]
    %v5565 = vld [vmem:[%s5560 + $0x20] sm:$0xff]
    %v5566 = vld [vmem:[%s5560 + $0x28] sm:$0xff]
    %v5567 = vld [vmem:[%s5560 + $0x30] sm:$0xff]
    %v5568 = vld [vmem:[%s5560 + $0x38] sm:$0xff]
    %v5569 = vld [vmem:[%s5560 + $0x40] sm:$0xff]
    %v5570 = vld [vmem:[%s5560 + $0x48] sm:$0xff]
    %v5571 = vld [vmem:[%s5560 + $0x50] sm:$0xff]
    %v5572 = vld [vmem:[%s5560 + $0x58] sm:$0xff]
    %v5573 = vld [vmem:[%s5560 + $0x60] sm:$0xff]
    %v5574 = vld [vmem:[%s5560 + $0x68] sm:$0xff]
    %v5575 = vld [vmem:[%s5560 + $0x70] sm:$0xff]
    %v5576 = vld [vmem:[%s5560 + $0x78] sm:$0xff]
    %s5577 = scalar_lea.vmem %s8, 81
    %v5578 = vld [vmem:[%s5577] ss:$8 sm:$0x3]
    %v5579 = vpack.c.bf16 %v5559, %v5558
    %v5581 = vlaneseq
    %v5582 = vshrl.u32 %v5581, 7
    %v5583 = vsub.s32 0, %v5582
    %v5584 = vrot.slane %v5578, %v5583
    %v5585 = vlaneseq
    %v5586 = vshrl.u32 %v5585, 7
    %v5587 = vsub.s32 1, %v5586
    %v5588 = vrot.slane %v5578, %v5587
    %v5607 = vunpack.c.l.b16 %v5561
    %v5608 = vunpack.c.h.b16 %v5561
    %v5609 = vunpack.c.l.b16 %v5562
    %v5610 = vunpack.c.h.b16 %v5562
    %v5611 = vunpack.c.l.b16 %v5563
    %v5612 = vunpack.c.h.b16 %v5563
    %v5613 = vunpack.c.l.b16 %v5564
    %v5614 = vunpack.c.h.b16 %v5564
    %v5615 = vunpack.c.l.b16 %v5565
    %v5616 = vunpack.c.h.b16 %v5565
    %v5617 = vunpack.c.l.b16 %v5566
    %v5618 = vunpack.c.h.b16 %v5566
    %v5619 = vunpack.c.l.b16 %v5567
    %v5620 = vunpack.c.h.b16 %v5567
    %v5621 = vunpack.c.l.b16 %v5568
    %v5622 = vunpack.c.h.b16 %v5568
    %v5623 = vunpack.c.l.b16 %v5569
    %v5624 = vunpack.c.h.b16 %v5569
    %v5625 = vunpack.c.l.b16 %v5570
    %v5626 = vunpack.c.h.b16 %v5570
    %v5627 = vunpack.c.l.b16 %v5571
    %v5628 = vunpack.c.h.b16 %v5571
    %v5629 = vunpack.c.l.b16 %v5572
    %v5630 = vunpack.c.h.b16 %v5572
    %v5631 = vunpack.c.l.b16 %v5573
    %v5632 = vunpack.c.h.b16 %v5573
    %v5633 = vunpack.c.l.b16 %v5574
    %v5634 = vunpack.c.h.b16 %v5574
    %v5635 = vunpack.c.l.b16 %v5575
    %v5636 = vunpack.c.h.b16 %v5575
    %v5637 = vunpack.c.l.b16 %v5576
    %v5638 = vunpack.c.h.b16 %v5576
    %v5639 = vpack.c.b16 %v5609, %v5607
    %v5640 = vpack.c.b16 %v5610, %v5608
    %v5641 = vpack.c.b16 %v5613, %v5611
    %v5642 = vpack.c.b16 %v5614, %v5612
    %v5643 = vpack.c.b16 %v5617, %v5615
    %v5644 = vpack.c.b16 %v5618, %v5616
    %v5645 = vpack.c.b16 %v5621, %v5619
    %v5646 = vpack.c.b16 %v5622, %v5620
    %v5647 = vpack.c.b16 %v5625, %v5623
    %v5648 = vpack.c.b16 %v5626, %v5624
    %v5649 = vpack.c.b16 %v5629, %v5627
    %v5650 = vpack.c.b16 %v5630, %v5628
    %v5651 = vpack.c.b16 %v5633, %v5631
    %v5652 = vpack.c.b16 %v5634, %v5632
    %v5653 = vpack.c.b16 %v5637, %v5635
    %v5654 = vpack.c.b16 %v5638, %v5636
    %5671 = vmatprep.subr.bf16.mxu0 %v5640
    %5672 = vmatpush1.bf16.msra.mxu0 %v5639
    %5673 = vmatprep.subr.bf16.mxu0 %v5642
    %5674 = vmatpush1.bf16.msra.mxu0 %v5641
    %5675 = vmatprep.subr.bf16.mxu0 %v5644
    %5676 = vmatpush1.bf16.msra.mxu0 %v5643
    %5677 = vmatprep.subr.bf16.mxu0 %v5646
    %5678 = vmatpush1.bf16.msra.mxu0 %v5645
    %5679 = vmatprep.subr.bf16.mxu0 %v5648
    %5680 = vmatpush1.bf16.msra.mxu0 %v5647
    %5681 = vmatprep.subr.bf16.mxu0 %v5650
    %5682 = vmatpush1.bf16.msra.mxu0 %v5649
    %5683 = vmatprep.subr.bf16.mxu0 %v5652
    %5684 = vmatpush1.bf16.msra.mxu0 %v5651
    %5685 = vmatprep.subr.bf16.mxu0 %v5654
    %5686 = vmatpush1.bf16.msra.mxu0 %v5653
    %5687 = vmatprep.subr.bf16.mxu0 0
    %5688 = vmatpush1.bf16.msra.mxu0 0
    %5689 = vmatprep.subr.bf16.mxu0 0
    %5690 = vmatpush1.bf16.msra.mxu0 0
    %5691 = vmatprep.subr.bf16.mxu0 0
    %5692 = vmatpush1.bf16.msra.mxu0 0
    %5693 = vmatprep.subr.bf16.mxu0 0
    %5694 = vmatpush1.bf16.msra.mxu0 0
    %5695 = vmatprep.subr.bf16.mxu0 0
    %5696 = vmatpush1.bf16.msra.mxu0 0
    %5697 = vmatprep.subr.bf16.mxu0 0
    %5698 = vmatpush1.bf16.msra.mxu0 0
    %5699 = vmatprep.subr.bf16.mxu0 0
    %5700 = vmatpush1.bf16.msra.mxu0 0
    %5701 = vmatprep.subr.bf16.mxu0 0
    %5702 = vmatpush1.bf16.msra.mxu0 0
    %5703 = vmatprep.mubr.bf16.mxu0 0
    %5704 = vmatmul.mubr.bf16.gmra.mrb[0].mxu0 %v5579
    %v5705 = vpop.f32.mrb[0].mxu0
    %v5706 = vadd.f32 %v5584, %v5705
    %v5707 = vpop.f32.mrb[0].mxu0
    %v5708 = vadd.f32 %v5588, %v5707
    %v5709 = vpop.f32.mrb[0].mxu0
    %v5710 = vadd.f32 %v5584, %v5709
    %v5711 = vpop.f32.mrb[0].mxu0
    %v5712 = vadd.f32 %v5588, %v5711
    %5713 = vdwg.mxu0
    %v5714 = vmax.f32 %v5706, 0.0
    %v5715 = vmax.f32 %v5708, 0.0
    %v5716 = vmax.f32 %v5710, 0.0
    %v5717 = vmax.f32 %v5712, 0.0
    %s5718 = scalar_lea.vmem [#allocation5], 1280
    %v5719 = vld [vmem:[%s5718] sm:$0xf]
    %v5720 = vld [vmem:[%s5718 + $0x4] sm:$0xf]
    %v5721 = vld [vmem:[%s5718 + $0x8] sm:$0xf]
    %v5722 = vld [vmem:[%s5718 + $0xc] sm:$0xf]
    %v5723 = vld [vmem:[%s5718 + $0x10] sm:$0xf]
    %v5724 = vld [vmem:[%s5718 + $0x14] sm:$0xf]
    %v5725 = vld [vmem:[%s5718 + $0x18] sm:$0xf]
    %v5726 = vld [vmem:[%s5718 + $0x1c] sm:$0xf]
    %v5727 = vld [vmem:[%s5718 + $0x20] sm:$0xf]
    %v5728 = vld [vmem:[%s5718 + $0x24] sm:$0xf]
    %v5729 = vld [vmem:[%s5718 + $0x28] sm:$0xf]
    %v5730 = vld [vmem:[%s5718 + $0x2c] sm:$0xf]
    %v5731 = vld [vmem:[%s5718 + $0x30] sm:$0xf]
    %v5732 = vld [vmem:[%s5718 + $0x34] sm:$0xf]
    %v5733 = vld [vmem:[%s5718 + $0x38] sm:$0xf]
    %v5734 = vld [vmem:[%s5718 + $0x3c] sm:$0xf]
    %v5735 = vld [vmem:[%s5718 + $0x40] sm:$0xf]
    %v5736 = vld [vmem:[%s5718 + $0x44] sm:$0xf]
    %v5737 = vld [vmem:[%s5718 + $0x48] sm:$0xf]
    %v5738 = vld [vmem:[%s5718 + $0x4c] sm:$0xf]
    %v5739 = vld [vmem:[%s5718 + $0x50] sm:$0xf]
    %v5740 = vld [vmem:[%s5718 + $0x54] sm:$0xf]
    %v5741 = vld [vmem:[%s5718 + $0x58] sm:$0xf]
    %v5742 = vld [vmem:[%s5718 + $0x5c] sm:$0xf]
    %v5743 = vld [vmem:[%s5718 + $0x60] sm:$0xf]
    %v5744 = vld [vmem:[%s5718 + $0x64] sm:$0xf]
    %v5745 = vld [vmem:[%s5718 + $0x68] sm:$0xf]
    %v5746 = vld [vmem:[%s5718 + $0x6c] sm:$0xf]
    %v5747 = vld [vmem:[%s5718 + $0x70] sm:$0xf]
    %v5748 = vld [vmem:[%s5718 + $0x74] sm:$0xf]
    %v5749 = vld [vmem:[%s5718 + $0x78] sm:$0xf]
    %v5750 = vld [vmem:[%s5718 + $0x7c] sm:$0xf]
    %v5751 = vld [vmem:[%s8 + $0x52] ss:$0 sm:$0xff]
    %v5752 = vpack.c.bf16 %v5716, %v5714
    %v5753 = vpack.c.bf16 %v5717, %v5715
    %v5786 = vunpack.c.l.b16 %v5719
    %v5787 = vunpack.c.l.b16 %v5720
    %v5788 = vunpack.c.l.b16 %v5721
    %v5789 = vunpack.c.l.b16 %v5722
    %v5790 = vunpack.c.l.b16 %v5723
    %v5791 = vunpack.c.l.b16 %v5724
    %v5792 = vunpack.c.l.b16 %v5725
    %v5793 = vunpack.c.l.b16 %v5726
    %v5794 = vunpack.c.l.b16 %v5727
    %v5795 = vunpack.c.l.b16 %v5728
    %v5796 = vunpack.c.l.b16 %v5729
    %v5797 = vunpack.c.l.b16 %v5730
    %v5798 = vunpack.c.l.b16 %v5731
    %v5799 = vunpack.c.l.b16 %v5732
    %v5800 = vunpack.c.l.b16 %v5733
    %v5801 = vunpack.c.l.b16 %v5734
    %v5802 = vunpack.c.l.b16 %v5735
    %v5803 = vunpack.c.l.b16 %v5736
    %v5804 = vunpack.c.l.b16 %v5737
    %v5805 = vunpack.c.l.b16 %v5738
    %v5806 = vunpack.c.l.b16 %v5739
    %v5807 = vunpack.c.l.b16 %v5740
    %v5808 = vunpack.c.l.b16 %v5741
    %v5809 = vunpack.c.l.b16 %v5742
    %v5810 = vunpack.c.l.b16 %v5743
    %v5811 = vunpack.c.l.b16 %v5744
    %v5812 = vunpack.c.l.b16 %v5745
    %v5813 = vunpack.c.l.b16 %v5746
    %v5814 = vunpack.c.l.b16 %v5747
    %v5815 = vunpack.c.l.b16 %v5748
    %v5816 = vunpack.c.l.b16 %v5749
    %v5817 = vunpack.c.l.b16 %v5750
    %v5818 = vpack.c.b16 %v5787, %v5786
    %v5819 = vpack.c.b16 %v5789, %v5788
    %v5820 = vpack.c.b16 %v5791, %v5790
    %v5821 = vpack.c.b16 %v5793, %v5792
    %v5822 = vpack.c.b16 %v5795, %v5794
    %v5823 = vpack.c.b16 %v5797, %v5796
    %v5824 = vpack.c.b16 %v5799, %v5798
    %v5825 = vpack.c.b16 %v5801, %v5800
    %v5826 = vpack.c.b16 %v5803, %v5802
    %v5827 = vpack.c.b16 %v5805, %v5804
    %v5828 = vpack.c.b16 %v5807, %v5806
    %v5829 = vpack.c.b16 %v5809, %v5808
    %v5830 = vpack.c.b16 %v5811, %v5810
    %v5831 = vpack.c.b16 %v5813, %v5812
    %v5832 = vpack.c.b16 %v5815, %v5814
    %v5833 = vpack.c.b16 %v5817, %v5816
    %5850 = vmatprep.subr.bf16.mxu0 0
    %5851 = vmatpush1.bf16.msra.mxu0 %v5818
    %5852 = vmatprep.subr.bf16.mxu0 0
    %5853 = vmatpush1.bf16.msra.mxu0 %v5819
    %5854 = vmatprep.subr.bf16.mxu0 0
    %5855 = vmatpush1.bf16.msra.mxu0 %v5820
    %5856 = vmatprep.subr.bf16.mxu0 0
    %5857 = vmatpush1.bf16.msra.mxu0 %v5821
    %5858 = vmatprep.subr.bf16.mxu0 0
    %5859 = vmatpush1.bf16.msra.mxu0 %v5822
    %5860 = vmatprep.subr.bf16.mxu0 0
    %5861 = vmatpush1.bf16.msra.mxu0 %v5823
    %5862 = vmatprep.subr.bf16.mxu0 0
    %5863 = vmatpush1.bf16.msra.mxu0 %v5824
    %5864 = vmatprep.subr.bf16.mxu0 0
    %5865 = vmatpush1.bf16.msra.mxu0 %v5825
    %5866 = vmatprep.subr.bf16.mxu0 0
    %5867 = vmatpush1.bf16.msra.mxu0 %v5826
    %5868 = vmatprep.subr.bf16.mxu0 0
    %5869 = vmatpush1.bf16.msra.mxu0 %v5827
    %5870 = vmatprep.subr.bf16.mxu0 0
    %5871 = vmatpush1.bf16.msra.mxu0 %v5828
    %5872 = vmatprep.subr.bf16.mxu0 0
    %5873 = vmatpush1.bf16.msra.mxu0 %v5829
    %5874 = vmatprep.subr.bf16.mxu0 0
    %5875 = vmatpush1.bf16.msra.mxu0 %v5830
    %5876 = vmatprep.subr.bf16.mxu0 0
    %5877 = vmatpush1.bf16.msra.mxu0 %v5831
    %5878 = vmatprep.subr.bf16.mxu0 0
    %5879 = vmatpush1.bf16.msra.mxu0 %v5832
    %5880 = vmatprep.subr.bf16.mxu0 0
    %5881 = vmatpush1.bf16.msra.mxu0 %v5833
    %5882 = vmatprep.mubr.bf16.mxu0 %v5753
    %5883 = vmatmul.mubr.bf16.gmra.mrb[0].mxu0 %v5752
    %v5884 = vpop.f32.mrb[0].mxu0
    %v5885 = vadd.f32 %v5751, %v5884
    %v5886 = vpop.f32.mrb[0].mxu0
    %v5887 = vpop.f32.mrb[0].mxu0
    %v5888 = vadd.f32 %v5751, %v5887
    %v5889 = vpop.f32.mrb[0].mxu0
    %5890 = vdwg.mxu0
    %v5891 = vmax.f32 %v5885, 0.0
    %v5892 = vmax.f32 %v5888, 0.0
    %v5893 = vld [vmem:[%s7] sm:$0xf]
    %v5894 = vld [vmem:[%s7 + $0x4] sm:$0xf]
    %v5895 = vld [vmem:[%s7 + $0x8] sm:$0xf]
    %v5896 = vld [vmem:[%s7 + $0xc] sm:$0xf]
    %v5897 = vld [vmem:[%s7 + $0x10] sm:$0xf]
    %v5898 = vld [vmem:[%s7 + $0x14] sm:$0xf]
    %v5899 = vld [vmem:[%s7 + $0x18] sm:$0xf]
    %v5900 = vld [vmem:[%s7 + $0x1c] sm:$0xf]
    %v5901 = vld [vmem:[%s7 + $0x20] sm:$0xf]
    %v5902 = vld [vmem:[%s7 + $0x24] sm:$0xf]
    %v5903 = vld [vmem:[%s7 + $0x28] sm:$0xf]
    %v5904 = vld [vmem:[%s7 + $0x2c] sm:$0xf]
    %v5905 = vld [vmem:[%s7 + $0x30] sm:$0xf]
    %v5906 = vld [vmem:[%s7 + $0x34] sm:$0xf]
    %v5907 = vld [vmem:[%s7 + $0x38] sm:$0xf]
    %v5908 = vld [vmem:[%s7 + $0x3c] sm:$0xf]
    %v5909 = vld [vmem:[%s8 + $0x53] ss:$0 sm:$0xff]
    %v5910 = vpack.c.bf16 %v5892, %v5891
    %v5927 = vunpack.c.l.b16 %v5893
    %v5928 = vunpack.c.l.b16 %v5894
    %v5929 = vunpack.c.l.b16 %v5895
    %v5930 = vunpack.c.l.b16 %v5896
    %v5931 = vunpack.c.l.b16 %v5897
    %v5932 = vunpack.c.l.b16 %v5898
    %v5933 = vunpack.c.l.b16 %v5899
    %v5934 = vunpack.c.l.b16 %v5900
    %v5935 = vunpack.c.l.b16 %v5901
    %v5936 = vunpack.c.l.b16 %v5902
    %v5937 = vunpack.c.l.b16 %v5903
    %v5938 = vunpack.c.l.b16 %v5904
    %v5939 = vunpack.c.l.b16 %v5905
    %v5940 = vunpack.c.l.b16 %v5906
    %v5941 = vunpack.c.l.b16 %v5907
    %v5942 = vunpack.c.l.b16 %v5908
    %v5943 = vpack.c.b16 %v5928, %v5927
    %v5944 = vpack.c.b16 %v5930, %v5929
    %v5945 = vpack.c.b16 %v5932, %v5931
    %v5946 = vpack.c.b16 %v5934, %v5933
    %v5947 = vpack.c.b16 %v5936, %v5935
    %v5948 = vpack.c.b16 %v5938, %v5937
    %v5949 = vpack.c.b16 %v5940, %v5939
    %v5950 = vpack.c.b16 %v5942, %v5941
    %5959 = vmatprep.subr.bf16.mxu0 0
    %5960 = vmatpush1.bf16.msra.mxu0 %v5943
    %5961 = vmatprep.subr.bf16.mxu0 0
    %5962 = vmatpush1.bf16.msra.mxu0 %v5944
    %5963 = vmatprep.subr.bf16.mxu0 0
    %5964 = vmatpush1.bf16.msra.mxu0 %v5945
    %5965 = vmatprep.subr.bf16.mxu0 0
    %5966 = vmatpush1.bf16.msra.mxu0 %v5946
    %5967 = vmatprep.subr.bf16.mxu0 0
    %5968 = vmatpush1.bf16.msra.mxu0 %v5947
    %5969 = vmatprep.subr.bf16.mxu0 0
    %5970 = vmatpush1.bf16.msra.mxu0 %v5948
    %5971 = vmatprep.subr.bf16.mxu0 0
    %5972 = vmatpush1.bf16.msra.mxu0 %v5949
    %5973 = vmatprep.subr.bf16.mxu0 0
    %5974 = vmatpush1.bf16.msra.mxu0 %v5950
    %5975 = vmatprep.subr.bf16.mxu0 0
    %5976 = vmatpush1.bf16.msra.mxu0 0
    %5977 = vmatprep.subr.bf16.mxu0 0
    %5978 = vmatpush1.bf16.msra.mxu0 0
    %5979 = vmatprep.subr.bf16.mxu0 0
    %5980 = vmatpush1.bf16.msra.mxu0 0
    %5981 = vmatprep.subr.bf16.mxu0 0
    %5982 = vmatpush1.bf16.msra.mxu0 0
    %5983 = vmatprep.subr.bf16.mxu0 0
    %5984 = vmatpush1.bf16.msra.mxu0 0
    %5985 = vmatprep.subr.bf16.mxu0 0
    %5986 = vmatpush1.bf16.msra.mxu0 0
    %5987 = vmatprep.subr.bf16.mxu0 0
    %5988 = vmatpush1.bf16.msra.mxu0 0
    %5989 = vmatprep.subr.bf16.mxu0 0
    %5990 = vmatpush1.bf16.msra.mxu0 0
    %5991 = vmatprep.mubr.bf16.mxu0 0
    %5992 = vmatmul.mubr.bf16.gmra.mrb[0].mxu0 %v5910
    %v5993 = vpop.f32.mrb[0].mxu0
    %v5994 = vadd.f32 %v5909, %v5993
    %v5995 = vpop.f32.mrb[0].mxu0
    %v5996 = vpop.f32.mrb[0].mxu0
    %v5997 = vadd.f32 %v5909, %v5996
    %v5998 = vpop.f32.mrb[0].mxu0
    %5999 = vdwg.mxu0
    %v6000 = vxor.u32 %v5994, 2147483648
    %v6001 = vxor.u32 %v5997, 2147483648
    %v6002 = vmul.f32 %v6000, 1.442695
    %v6003 = vpow.pop %v6002
    %v6004 = vmul.f32 %v6001, 1.442695
    %v6005 = vpow.pop %v6004
    %v6006 = vadd.f32 %v6003, 1.0
    %v6007 = vadd.f32 %v6005, 1.0
    %v6008 = vrcp.pop %v6006
    %v6009 = vmul.f32 1.0, %v6008
    %v6010 = vrcp.pop %v6007
    %v6011 = vmul.f32 1.0, %v6010
    %v6012 = vlaneseq
    %v6013 = vand.u32 %v6012, 127
    %vm6014 = vcmp.lt.s32.totalorder %v6013, 1
    %v6015 = vsel %vm6014, %v6009, 0.0
    %v6016 = vsel %vm6014, %v6011, 0.0
    %vm6017 = vcmask 64512
    %6018 = vst.msk [vmem:[#allocation7] sm:$0xff] %vm6017, %v6015
    %6019 = vst.msk [vmem:[#allocation7 + $0x8] sm:$0xff] %vm6017, %v6016
    // Predicated region
    $region46: #{tpu_custom_call.1} parent=1 // pred_check
      _
    $region47: #{tpu_custom_call.1} parent=1 // pred_check_branch
      %6021 = sbr.rel (0) target = $region49
    $region48: #{tpu_custom_call.1} parent=1 // pred_region
      %s6023 = ssub.s32 256, 256
      %6024 = vsyncadd [#allocation4], %s6023
      %s6025 = sshll.u32 [#allocation7], 4
      %s6026 = int_to_ptr.vmem [resolvable:$true] %s6025
      %6031 = dma.vmem_to_hbm [thread:$0]  %s6026, 256, %s9, [#allocation4], 128, 128, 8
    $region49: #{tpu_custom_call.1} parent=1 // pred_fallthru
      _
    // Predicated region
    $region50: #{tpu_custom_call.1} parent=1 // pred_check
      _
    $region51: #{tpu_custom_call.1} parent=1 // pred_check_branch
      %6033 = sbr.rel (0) target = $region53
    $region52: #{tpu_custom_call.1} parent=1 // pred_region
      %6034 = dma.done [#allocation4], 256
    $region53: #{tpu_custom_call.1} parent=1 // pred_fallthru
      _
    %6035 = vsyncpa [#allocation3], 1
    %6036 = vsyncpa [#allocation6], 1
    %6037 = vsyncpa [#allocation4], 1

</llo_original>
